<compile_context>
chip_gen: v5e
topology: v5e:2x2
jax: 0.10.0
libtpu: 0.0.40
codegen_flags: <defaults>
</compile_context>

<pallas_src>
import functools
import math

import jax
import jax.numpy as jnp
from jax.experimental import pallas as pl
from jax.experimental.pallas import tpu as pltpu

_VMEM_LIMIT = 32 * 1024 * 1024   # scoped-VMEM cap; safe on v5e/v6e (128 MiB) and v7x (64 MiB)


# ---------------------------------------------------------------------------
# helpers
# ---------------------------------------------------------------------------
def _pick_tile(dim: int, max_tile: int, align: int) -> int:
    """Largest tile <= max_tile that divides `dim` and is a multiple of `align`.
    Falls back to the full dimension (full-extent escape of the (8, 128) constraint)."""
    if dim <= max_tile:
        return dim
    t = (max_tile // align) * align
    while t >= align:
        if dim % t == 0:
            return t
        t -= align
    return dim


def make_positional_encoding(d_model: int, max_len: int = 5000) -> jnp.ndarray:
    """Deterministic buffer mirroring PositionalEncoding.__init__."""
    position = jnp.arange(0, max_len, dtype=jnp.float32)[:, None]
    div_term = jnp.exp(
        jnp.arange(0, d_model, 2, dtype=jnp.float32) * (-math.log(10000.0) / d_model)
    )
    pe = jnp.zeros((max_len, d_model), dtype=jnp.float32)
    pe = pe.at[:, 0::2].set(jnp.sin(position * div_term))
    pe = pe.at[:, 1::2].set(jnp.cos(position * div_term))
    return pe[None]                                           # (1, max_len, d_model)


# ---------------------------------------------------------------------------
# kernel 1: linear  y = act(x @ w + b), optionally with fused residual-add + LayerNorm epilogue
# ---------------------------------------------------------------------------
def _linear_kernel(x_ref, w_ref, b_ref, o_ref, acc_ref, *, activation):
    @pl.when(pl.program_id(2) == 0)
    def _():
        acc_ref[...] = jnp.zeros_like(acc_ref)

    acc_ref[...] += jnp.dot(x_ref[...], w_ref[...], preferred_element_type=jnp.float32)

    @pl.when(pl.program_id(2) == pl.num_programs(2) - 1)
    def _():
        y = acc_ref[...] + b_ref[...].astype(jnp.float32)
        if activation == "relu":
            y = jnp.maximum(y, 0.0)
        o_ref[...] = y.astype(o_ref.dtype)


def _linear_ln_kernel(x_ref, w_ref, b_ref, r_ref, g_ref, bb_ref, o_ref, acc_ref,
                      *, activation, eps):
    @pl.when(pl.program_id(1) == 0)
    def _():
        acc_ref[...] = jnp.zeros_like(acc_ref)

    acc_ref[...] += jnp.dot(x_ref[...], w_ref[...], preferred_element_type=jnp.float32)

    @pl.when(pl.program_id(1) == pl.num_programs(1) - 1)
    def _():
        y = acc_ref[...] + b_ref[...].astype(jnp.float32)
        if activation == "relu":
            y = jnp.maximum(y, 0.0)
        z = y + r_ref[...].astype(jnp.float32)                 # residual add
        mean = jnp.mean(z, axis=-1, keepdims=True)
        zc = z - mean
        var = jnp.mean(zc * zc, axis=-1, keepdims=True)        # biased variance (torch LayerNorm)
        o_ref[...] = (zc * jax.lax.rsqrt(var + eps) * g_ref[...].astype(jnp.float32)
                      + bb_ref[...].astype(jnp.float32)).astype(o_ref.dtype)


def linear_pallas(x, w, b, *, activation=None, residual=None, gamma=None, beta=None, eps=1e-5):
    """x: (N, K); w: (K, M); b: (M,). Returns act(x @ w + b), or LayerNorm(residual + act(...))
    when `residual`/`gamma`/`beta` are given (requires the full M in one tile)."""
    N, K = x.shape
    K2, M = w.shape
    assert K == K2
    fuse_ln = residual is not None

    tn = _pick_tile(N, 512, 8)
    if N // tn < 2 and N >= 16:
        tn = _pick_tile(N, max(8, N // 2), 8)   # >=2 row tiles so both v7x TensorCores get work
    tk = _pick_tile(K, 512, 128)
    b2 = b.reshape(1, M)

    ce = pl.CostEstimate(
        flops=2 * N * M * K,
        transcendentals=0,
        bytes_accessed=x.nbytes + w.nbytes + b2.nbytes + N * M * x.dtype.itemsize
        + (residual.nbytes if fuse_ln else 0),
    )

    if fuse_ln:
        grid = (N // tn, K // tk)
        return pl.pallas_call(
            functools.partial(_linear_ln_kernel, activation=activation, eps=eps),
            out_shape=jax.ShapeDtypeStruct((N, M), x.dtype),
            grid_spec=pltpu.PrefetchScalarGridSpec(
                num_scalar_prefetch=0,
                grid=grid,
                in_specs=[
                    pl.BlockSpec((tn, tk), lambda i, k: (i, k)),   # x
                    pl.BlockSpec((tk, M), lambda i, k: (k, 0)),    # w (full output width)
                    pl.BlockSpec((1, M), lambda i, k: (0, 0)),     # bias
                    pl.BlockSpec((tn, M), lambda i, k: (i, 0)),    # residual
                    pl.BlockSpec((1, M), lambda i, k: (0, 0)),     # LN gamma
                    pl.BlockSpec((1, M), lambda i, k: (0, 0)),     # LN beta
                ],
                out_specs=pl.BlockSpec((tn, M), lambda i, k: (i, 0)),
                scratch_shapes=[pltpu.VMEM((tn, M), jnp.float32)],
            ),
            compiler_params=pltpu.CompilerParams(
                dimension_semantics=("parallel", "arbitrary"),
                vmem_limit_bytes=_VMEM_LIMIT,
            ),
            cost_estimate=ce,
        )(x, w, b2, residual, gamma.reshape(1, M), beta.reshape(1, M))

    tm = _pick_tile(M, 512, 128)
    grid = (N // tn, M // tm, K // tk)
    return pl.pallas_call(
        functools.partial(_linear_kernel, activation=activation),
        out_shape=jax.ShapeDtypeStruct((N, M), x.dtype),
        grid_spec=pltpu.PrefetchScalarGridSpec(
            num_scalar_prefetch=0,
            grid=grid,
            in_specs=[
                pl.BlockSpec((tn, tk), lambda i, j, k: (i, k)),
                pl.BlockSpec((tk, tm), lambda i, j, k: (k, j)),
                pl.BlockSpec((1, tm), lambda i, j, k: (0, j)),
            ],
            out_specs=pl.BlockSpec((tn, tm), lambda i, j, k: (i, j)),
            scratch_shapes=[pltpu.VMEM((tn, tm), jnp.float32)],
        ),
        compiler_params=pltpu.CompilerParams(
            dimension_semantics=("parallel", "parallel", "arbitrary"),
            vmem_limit_bytes=_VMEM_LIMIT,
        ),
        cost_estimate=ce,
    )(x, w, b2)


# ---------------------------------------------------------------------------
# kernel 2: flash-style multi-head attention core
#   grid = (batch n, K/V tile); all heads handled in-kernel; online softmax in VMEM scratch.
#   q_arr / kv_arr are *views* of the packed projection outputs (no XLA transpose):
#     q_arr : (Lq, N, Pq,  H, hd)   kv_arr : (Lk, N, Pkv, H, hd)
#   with q_idx / k_idx / v_idx selecting the packed slot along the P axis.
# ---------------------------------------------------------------------------
def _flash_attn_kernel(q_ref, k_ref, v_ref, o_ref, m_scr, l_scr, acc_scr, *, scale, num_heads):
    kk = pl.program_id(1)

    @pl.when(kk == 0)
    def _():
        m_scr[...] = jnp.full_like(m_scr, -jnp.inf)
        l_scr[...] = jnp.zeros_like(l_scr)
        acc_scr[...] = jnp.zeros_like(acc_scr)

    # TODO(synk): attn_mask (src_mask / tgt_mask) support not implemented; forward accepts None only.
    for h in range(num_heads):                                  # static unroll over heads
        q = q_ref[:, h, :].astype(jnp.float32) * scale          # (Lq, hd)
        k = k_ref[:, h, :].astype(jnp.float32)                  # (tkv, hd)
        v = v_ref[:, h, :]                                      # (tkv, hd)
        s = jax.lax.dot_general(q, k, (((1,), (1,)), ((), ())),
                                preferred_element_type=jnp.float32)   # (Lq, tkv)
        m_prev = m_scr[h]                                        # (Lq, 1)
        m_new = jnp.maximum(m_prev, jnp.max(s, axis=-1, keepdims=True))
        alpha = jnp.exp(m_prev - m_new)
        p = jnp.exp(s - m_new)
        l_scr[h] = alpha * l_scr[h] + jnp.sum(p, axis=-1, keepdims=True)
        acc_scr[h] = alpha * acc_scr[h] + jax.lax.dot_general(
            p.astype(v.dtype), v, (((1,), (0,)), ((), ())),
            preferred_element_type=jnp.float32)
        m_scr[h] = m_new

    @pl.when(kk == pl.num_programs(1) - 1)
    def _():
        for h in range(num_heads):
            inv = pl.reciprocal(l_scr[h], approx=True)           # EUP slot: frees the VPU
            o_ref[:, h, :] = (acc_scr[h] * inv).astype(o_ref.dtype)


def attention_pallas(q_arr, kv_arr, *, q_idx, k_idx, v_idx, num_heads, scale):
    """Returns (Lq, N, H, hd) = softmax(q k^T * scale) v per (batch n, head h)."""
    Lq, N, _, H, hd = q_arr.shape
    assert H == num_heads
    Lk = kv_arr.shape[0]
    E = H * hd

    # K/V tile length from a ~4 MiB f32 budget for the double-buffered K+V tiles.
    # TODO(synk): Lq is not tiled; tile it too for very long target sequences.
    kv_cap = max(8, (4 * 1024 * 1024) // (16 * E))
    t_kv = _pick_tile(Lk, min(512, kv_cap), 8)
    nkt = Lk // t_kv

    itemsize = q_arr.dtype.itemsize
    ce = pl.CostEstimate(
        flops=4 * N * H * Lq * Lk * hd,
        transcendentals=N * H * Lq * Lk,
        bytes_accessed=(2 * Lq * N * E + 2 * Lk * N * E) * itemsize,
    )

    return pl.pallas_call(
        functools.partial(_flash_attn_kernel, scale=scale, num_heads=H),
        out_shape=jax.ShapeDtypeStruct((Lq, N, H, hd), q_arr.dtype),
        grid_spec=pltpu.PrefetchScalarGridSpec(
            num_scalar_prefetch=0,
            grid=(N, nkt),
            in_specs=[
                pl.BlockSpec((Lq, None, None, H, hd), lambda n, kk: (0, n, q_idx, 0, 0)),
                pl.BlockSpec((t_kv, None, None, H, hd), lambda n, kk: (kk, n, k_idx, 0, 0)),
                pl.BlockSpec((t_kv, None, None, H, hd), lambda n, kk: (kk, n, v_idx, 0, 0)),
            ],
            out_specs=pl.BlockSpec((Lq, None, H, hd), lambda n, kk: (0, n, 0, 0)),
            scratch_shapes=[
                pltpu.VMEM((H, Lq, 1), jnp.float32),    # running max m
                pltpu.VMEM((H, Lq, 1), jnp.float32),    # running denom l
                pltpu.VMEM((H, Lq, hd), jnp.float32),   # running accumulator
            ],
        ),
        compiler_params=pltpu.CompilerParams(
            dimension_semantics=("parallel", "arbitrary"),
            vmem_limit_bytes=_VMEM_LIMIT,
        ),
        cost_estimate=ce,
    )(q_arr, kv_arr, kv_arr)


# ---------------------------------------------------------------------------
# decoder layer / decoder forward (only free reshapes as glue; compute in Pallas)
# ---------------------------------------------------------------------------
def decoder_layer_pallas(x, enc_flat, Lk, lp, num_heads):
    """x: (L, N, E) in torch's seq-first convention; enc_flat: (Lk*N, E). Dropout omitted."""
    L, N, E = x.shape
    hd = E // num_heads
    scale = 1.0 / math.sqrt(hd)
    x_flat = x.reshape(L * N, E)

    # --- self attention: fused QKV matmul -> flash attention -> out-proj + add + LN1 fused ---
    p1 = lp["mha1"]
    qkv = linear_pallas(x_flat, p1["w_qkv"], p1["b_qkv"])            # (L*N, 3E): x read once
    qkv5 = qkv.reshape(L, N, 3, num_heads, hd)                        # free view, no transpose
    a1 = attention_pallas(qkv5, qkv5, q_idx=0, k_idx=1, v_idx=2,
                          num_heads=num_heads, scale=scale)
    a1 = a1.reshape(L * N, E)                                         # heads concat along lanes
    out1 = linear_pallas(a1, p1["wo"], p1["bo"], residual=x_flat,
                         gamma=lp["ln1_g"], beta=lp["ln1_b"])         # LN1 in matmul epilogue

    # --- cross attention: Q proj + fused KV proj -> flash attention -> out-proj + add + LN2 ---
    p2 = lp["mha2"]
    q = linear_pallas(out1, p2["wq"], p2["bq"])                       # (L*N, E)
    kv = linear_pallas(enc_flat, p2["w_kv"], p2["b_kv"])              # (Lk*N, 2E)
    q5 = q.reshape(L, N, 1, num_heads, hd)
    kv5 = kv.reshape(Lk, N, 2, num_heads, hd)
    a2 = attention_pallas(q5, kv5, q_idx=0, k_idx=0, v_idx=1,
                          num_heads=num_heads, scale=scale).reshape(L * N, E)
    out2 = linear_pallas(a2, p2["wo"], p2["bo"], residual=out1,
                         gamma=lp["ln2_g"], beta=lp["ln2_b"])

    # --- FFN: Linear+ReLU -> Linear with residual-add + LN3 fused into the epilogue ---
    h = linear_pallas(out2, lp["w1"], lp["b1"], activation="relu")
    out3 = linear_pallas(h, lp["w2"], lp["b2"], residual=out2,
                         gamma=lp["ln3_g"], beta=lp["ln3_b"])
    return out3.reshape(L, N, E)


def decoder_forward(token_ids, enc_output, params, *, num_heads, src_mask=None, tgt_mask=None):
    """token_ids: (B, S) int32; enc_output: (L_src, N, D) in torch's seq-first convention
    (the demo passes (B, S, D), i.e. L_src == B and N == S, matching the PyTorch module)."""
    assert src_mask is None and tgt_mask is None, "TODO(synk): attn_mask not implemented"
    B, S = token_ids.shape
    D = params["embedding"].shape[1]
    max_len = params["pe"].shape[1]
    if S > max_len:
        raise ValueError(f"sequence length {S} exceeds positional-encoding max_len {max_len}")

    # Embedding row-gather + positional-encoding add: trivially fusible glue left to XLA so the
    # gathered activations are not round-tripped through HBM by a standalone PE-add kernel.
    x = jnp.take(params["embedding"], token_ids, axis=0) + params["pe"][:, :S, :]

    # nn.MultiheadAttention default is seq-first: (B, S, D) is treated as (L=B, N=S, E=D).
    Lk, Nk, _ = enc_output.shape
    enc_flat = enc_output.reshape(Lk * Nk, D)
    for lp in params["layers"]:
        x = decoder_layer_pallas(x, enc_flat, Lk, lp, num_heads)
    return x


# ---------------------------------------------------------------------------
# pure-JAX reference (same math, same packed parameters) for a correctness self-check
# ---------------------------------------------------------------------------
def _layernorm_ref(z, g, b, eps=1e-5):
    mean = jnp.mean(z, axis=-1, keepdims=True)
    var = jnp.mean((z - mean) ** 2, axis=-1, keepdims=True)
    return (z - mean) * jax.lax.rsqrt(var + eps) * g + b


def _attn_ref(q, k, v, num_heads):
    Lq, N, E = q.shape
    Lk = k.shape[0]
    hd = E // num_heads
    q = q.reshape(Lq, N * num_heads, hd).transpose(1, 0, 2)
    k = k.reshape(Lk, N * num_heads, hd).transpose(1, 0, 2)
    v = v.reshape(Lk, N * num_heads, hd).transpose(1, 0, 2)
    s = jnp.einsum("bqd,bkd->bqk", q, k) / math.sqrt(hd)
    a = jax.nn.softmax(s, axis=-1)
    o = jnp.einsum("bqk,bkd->bqd", a, v)
    return o.transpose(1, 0, 2).reshape(Lq, N, E)


def decoder_reference(token_ids, enc_output, params, *, num_heads):
    x = params["embedding"][token_ids]
    S = token_ids.shape[1]
    x = x + params["pe"][:, :S, :]
    L, N, E = x.shape
    Lk = enc_output.shape[0]
    for lp in params["layers"]:
        p1 = lp["mha1"]
        qkv = x.reshape(-1, E) @ p1["w_qkv"] + p1["b_qkv"]
        q1 = qkv[:, :E].reshape(L, N, E)
        k1 = qkv[:, E:2 * E].reshape(L, N, E)
        v1 = qkv[:, 2 * E:].reshape(L, N, E)
        a1 = _attn_ref(q1, k1, v1, num_heads).reshape(-1, E) @ p1["wo"] + p1["bo"]
        out1 = _layernorm_ref(x.reshape(-1, E) + a1, lp["ln1_g"], lp["ln1_b"])

        p2 = lp["mha2"]
        q2 = (out1 @ p2["wq"] + p2["bq"]).reshape(L, N, E)
        kv = enc_output.reshape(-1, E) @ p2["w_kv"] + p2["b_kv"]
        k2 = kv[:, :E].reshape(Lk, N, E)
        v2 = kv[:, E:].reshape(Lk, N, E)
        a2 = _attn_ref(q2, k2, v2, num_heads).reshape(-1, E) @ p2["wo"] + p2["bo"]
        out2 = _layernorm_ref(out1 + a2, lp["ln2_g"], lp["ln2_b"])

        h = jnp.maximum(out2 @ lp["w1"] + lp["b1"], 0.0)
        f = h @ lp["w2"] + lp["b2"]
        x = _layernorm_ref(out2 + f, lp["ln3_g"], lp["ln3_b"]).reshape(L, N, E)
    return x


# ---------------------------------------------------------------------------
# deterministic parameter construction (packed QKV / KV weights)
# ---------------------------------------------------------------------------
def init_decoder_params(key, vocab_size, num_layers, d_model, num_heads, d_ff, max_len=5000):
    def dense(k, fan_in, fan_out):
        kw, kb = jax.random.split(k)
        bound = 1.0 / math.sqrt(fan_in)
        w = jax.random.uniform(kw, (fan_in, fan_out), jnp.float32, -bound, bound)
        b = jax.random.uniform(kb, (fan_out,), jnp.float32, -bound, bound)
        return w, b

    keys = jax.random.split(key, num_layers + 1)
    embedding = jax.random.normal(keys[0], (vocab_size, d_model), jnp.float32)
    layers = []
    for li in range(num_layers):
        lk = jax.random.split(keys[li + 1], 7)
        w_qkv, b_qkv = dense(lk[0], d_model, 3 * d_model)     # packed [q | k | v]
        wo1, bo1 = dense(lk[1], d_model, d_model)
        wq2, bq2 = dense(lk[2], d_model, d_model)
        w_kv2, b_kv2 = dense(lk[3], d_model, 2 * d_model)     # packed [k | v]
        wo2, bo2 = dense(lk[4], d_model, d_model)
        w1, b1 = dense(lk[5], d_model, d_ff)
        w2, b2 = dense(lk[6], d_ff, d_model)
        layers.append(dict(
            mha1=dict(w_qkv=w_qkv, b_qkv=b_qkv, wo=wo1, bo=bo1),
            mha2=dict(wq=wq2, bq=bq2, w_kv=w_kv2, b_kv=b_kv2, wo=wo2, bo=bo2),
            w1=w1, b1=b1, w2=w2, b2=b2,
            ln1_g=jnp.ones((d_model,), jnp.float32), ln1_b=jnp.zeros((d_model,), jnp.float32),
            ln2_g=jnp.ones((d_model,), jnp.float32), ln2_b=jnp.zeros((d_model,), jnp.float32),
            ln3_g=jnp.ones((d_model,), jnp.float32), ln3_b=jnp.zeros((d_model,), jnp.float32),
        ))
    return dict(embedding=embedding,
                pe=make_positional_encoding(d_model, max_len),
                layers=layers)


if __name__ == "__main__":
    VOCAB, NUM_LAYERS, D_MODEL, NUM_HEADS, D_FF = 50, 2, 32, 4, 64
    B, S = 2, 8

    key = jax.random.PRNGKey(0)
    k_tok, k_enc, k_par = jax.random.split(key, 3)
    token_ids = jax.random.randint(k_tok, (B, S), 0, VOCAB, dtype=jnp.int32)
    enc_output = jax.random.normal(k_enc, (B, S, D_MODEL), dtype=jnp.float32)
    params = init_decoder_params(k_par, VOCAB, NUM_LAYERS, D_MODEL, NUM_HEADS, D_FF)

    fwd = jax.jit(decoder_forward, static_argnames=("num_heads",))
    out = fwd(token_ids, enc_output, params, num_heads=NUM_HEADS)
    out = jax.block_until_ready(out)

    ref = decoder_reference(token_ids, enc_output, params, num_heads=NUM_HEADS)
    assert out.shape == (B, S, D_MODEL)
    max_err = float(jnp.max(jnp.abs(out - ref)))
    assert max_err < 2e-2, f"max abs error vs reference: {max_err}"

    print("KERNEL_OK")
</pallas_src>

<mosaic_0001>
module attributes {stable_mosaic.version = 11 : i64} {
  func.func @_linear_kernel(%arg0: i32, %arg1: i32, %arg2: i32, %arg3: memref<8x32xf32, #tpu.memory_space<vmem>>, %arg4: memref<32x96xf32, #tpu.memory_space<vmem>>, %arg5: memref<1x96xf32, #tpu.memory_space<vmem>>, %arg6: memref<8x96xf32, #tpu.memory_space<vmem>>, %arg7: memref<8x96xf32, #tpu.memory_space<vmem>>) attributes {dimension_semantics = [#tpu.dimension_semantics<parallel>, #tpu.dimension_semantics<parallel>, #tpu.dimension_semantics<arbitrary>], iteration_bounds = array<i64: 2, 1, 1>, scalar_prefetch = 0 : i64, scratch_operands = 1 : i64, tpu.core_type = #tpu.core_type<tc>, window_params = [{transform_indices = @transform_0, window_bounds = array<i64: 8, 32>}, {transform_indices = @transform_1, window_bounds = array<i64: 32, 96>}, {transform_indices = @transform_2, window_bounds = array<i64: 1, 96>}, {transform_indices = @transform_3, window_bounds = array<i64: 8, 96>}]} {
    %c0_i32 = arith.constant 0 : i32
    %0 = arith.cmpi eq, %arg2, %c0_i32 : i32
    %1 = arith.extui %0 : i1 to i32
    %c0_i32_0 = arith.constant 0 : i32
    %2 = arith.cmpi ne, %1, %c0_i32_0 : i32
    scf.if %2 {
      %cst_10 = arith.constant 0.000000e+00 : f32
      %12 = vector.broadcast %cst_10 : f32 to vector<8x96xf32>
      %c0_11 = arith.constant 0 : index
      %c0_12 = arith.constant 0 : index
      %13 = vector.load %arg7[%c0_11, %c0_12] : memref<8x96xf32, #tpu.memory_space<vmem>>, vector<8x96xf32>
      tpu.vector_store %arg7[%c0_11, %c0_12], %12 {strides = array<i32>} : memref<8x96xf32, #tpu.memory_space<vmem>>, vector<8x96xf32>,
    } else {
    }
    %c0 = arith.constant 0 : index
    %c0_1 = arith.constant 0 : index
    %3 = vector.load %arg7[%c0, %c0_1] : memref<8x96xf32, #tpu.memory_space<vmem>>, vector<8x96xf32>
    %c0_2 = arith.constant 0 : index
    %c0_3 = arith.constant 0 : index
    %4 = vector.load %arg3[%c0_2, %c0_3] : memref<8x32xf32, #tpu.memory_space<vmem>>, vector<8x32xf32>
    %c0_4 = arith.constant 0 : index
    %c0_5 = arith.constant 0 : index
    %5 = vector.load %arg4[%c0_4, %c0_5] : memref<32x96xf32, #tpu.memory_space<vmem>>, vector<32x96xf32>
    %cst = arith.constant dense<0.000000e+00> : vector<8x96xf32>
    %6 = tpu.matmul %4, %5, %cst {dimension_numbers = #tpu.dot_dimension_numbers<[1], [0], [0], [1], [0, 0, 1, 1], [], []>} : vector<8x32xf32>, vector<32x96xf32>, vector<8x96xf32> -> vector<8x96xf32>
    %7 = arith.addf %3, %6 : vector<8x96xf32>
    %c0_6 = arith.constant 0 : index
    %c0_7 = arith.constant 0 : index
    %8 = vector.load %arg7[%c0_6, %c0_7] : memref<8x96xf32, #tpu.memory_space<vmem>>, vector<8x96xf32>
    tpu.vector_store %arg7[%c0_6, %c0_7], %7 {strides = array<i32>} : memref<8x96xf32, #tpu.memory_space<vmem>>, vector<8x96xf32>,
    %c0_i32_8 = arith.constant 0 : i32
    %9 = arith.cmpi eq, %arg2, %c0_i32_8 : i32
    %10 = arith.extui %9 : i1 to i32
    %c0_i32_9 = arith.constant 0 : i32
    %11 = arith.cmpi ne, %10, %c0_i32_9 : i32
    scf.if %11 {
      %c0_10 = arith.constant 0 : index
      %c0_11 = arith.constant 0 : index
      %12 = vector.load %arg7[%c0_10, %c0_11] : memref<8x96xf32, #tpu.memory_space<vmem>>, vector<8x96xf32>
      %c0_12 = arith.constant 0 : index
      %c0_13 = arith.constant 0 : index
      %13 = vector.load %arg5[%c0_12, %c0_13] : memref<1x96xf32, #tpu.memory_space<vmem>>, vector<1x96xf32>
      %14 = vector.broadcast %13 : vector<1x96xf32> to vector<8x96xf32>
      %15 = arith.addf %12, %14 : vector<8x96xf32>
      %c0_14 = arith.constant 0 : index
      %c0_15 = arith.constant 0 : index
      %16 = vector.load %arg6[%c0_14, %c0_15] : memref<8x96xf32, #tpu.memory_space<vmem>>, vector<8x96xf32>
      tpu.vector_store %arg6[%c0_14, %c0_15], %15 {strides = array<i32>} : memref<8x96xf32, #tpu.memory_space<vmem>>, vector<8x96xf32>,
    } else {
    }
    return
  }
  func.func @transform_0(%arg0: i32, %arg1: i32, %arg2: i32) -> (i32, i32) {
    %c0_i32 = arith.constant 0 : i32
    return %arg0, %arg2 : i32, i32
  }
  func.func @transform_1(%arg0: i32, %arg1: i32, %arg2: i32) -> (i32, i32) {
    %c0_i32 = arith.constant 0 : i32
    return %arg2, %arg1 : i32, i32
  }
  func.func @transform_2(%arg0: i32, %arg1: i32, %arg2: i32) -> (i32, i32) {
    %c0_i32 = arith.constant 0 : i32
    %c0_i32_0 = arith.constant 0 : i32
    return %c0_i32, %arg1 : i32, i32
  }
  func.func @transform_3(%arg0: i32, %arg1: i32, %arg2: i32) -> (i32, i32) {
    %c0_i32 = arith.constant 0 : i32
    return %arg0, %arg1 : i32, i32
  }
}

module attributes {stable_mosaic.version = 11 : i64} {
  func.func @_flash_attn_kernel(%arg0: i32, %arg1: i32, %arg2: memref<2x1x1x4x8xf32, #tpu.memory_space<vmem>>, %arg3: memref<2x1x1x4x8xf32, #tpu.memory_space<vmem>>, %arg4: memref<2x1x1x4x8xf32, #tpu.memory_space<vmem>>, %arg5: memref<2x1x4x8xf32, #tpu.memory_space<vmem>>, %arg6: memref<4x2x1xf32, #tpu.memory_space<vmem>>, %arg7: memref<4x2x1xf32, #tpu.memory_space<vmem>>, %arg8: memref<4x2x8xf32, #tpu.memory_space<vmem>>) attributes {dimension_semantics = [#tpu.dimension_semantics<parallel>, #tpu.dimension_semantics<arbitrary>], iteration_bounds = array<i64: 8, 1>, scalar_prefetch = 0 : i64, scratch_operands = 3 : i64, tpu.core_type = #tpu.core_type<tc>, window_params = [{transform_indices = @transform_0, window_bounds = array<i64: 2, 1, 1, 4, 8>}, {transform_indices = @transform_1, window_bounds = array<i64: 2, 1, 1, 4, 8>}, {transform_indices = @transform_2, window_bounds = array<i64: 2, 1, 1, 4, 8>}, {transform_indices = @transform_3, window_bounds = array<i64: 2, 1, 4, 8>}]} {
    %c0_i32 = arith.constant 0 : i32
    %0 = arith.cmpi eq, %arg1, %c0_i32 : i32
    %1 = arith.extui %0 : i1 to i32
    %c0_i32_0 = arith.constant 0 : i32
    %2 = arith.cmpi ne, %1, %c0_i32_0 : i32
    scf.if %2 {
      %cst_150 = arith.constant 0xFF800000 : f32
      %166 = vector.broadcast %cst_150 : f32 to vector<4x2x1xf32>
      %c0_151 = arith.constant 0 : index
      %c0_152 = arith.constant 0 : index
      %c0_153 = arith.constant 0 : index
      %167 = vector.load %arg6[%c0_151, %c0_152, %c0_153] : memref<4x2x1xf32, #tpu.memory_space<vmem>>, vector<4x2x1xf32>
      tpu.vector_store %arg6[%c0_151, %c0_152, %c0_153], %166 {strides = array<i32>} : memref<4x2x1xf32, #tpu.memory_space<vmem>>, vector<4x2x1xf32>,
      %cst_154 = arith.constant 0.000000e+00 : f32
      %168 = vector.broadcast %cst_154 : f32 to vector<4x2x1xf32>
      %c0_155 = arith.constant 0 : index
      %c0_156 = arith.constant 0 : index
      %c0_157 = arith.constant 0 : index
      %169 = vector.load %arg7[%c0_155, %c0_156, %c0_157] : memref<4x2x1xf32, #tpu.memory_space<vmem>>, vector<4x2x1xf32>
      tpu.vector_store %arg7[%c0_155, %c0_156, %c0_157], %168 {strides = array<i32>} : memref<4x2x1xf32, #tpu.memory_space<vmem>>, vector<4x2x1xf32>,
      %cst_158 = arith.constant 0.000000e+00 : f32
      %170 = vector.broadcast %cst_158 : f32 to vector<4x2x8xf32>
      %c0_159 = arith.constant 0 : index
      %c0_160 = arith.constant 0 : index
      %c0_161 = arith.constant 0 : index
      %171 = vector.load %arg8[%c0_159, %c0_160, %c0_161] : memref<4x2x8xf32, #tpu.memory_space<vmem>>, vector<4x2x8xf32>
      tpu.vector_store %arg8[%c0_159, %c0_160, %c0_161], %170 {strides = array<i32>} : memref<4x2x8xf32, #tpu.memory_space<vmem>>, vector<4x2x8xf32>,
    } else {
    }
    %c0 = arith.constant 0 : index
    %c0_1 = arith.constant 0 : index
    %c0_2 = arith.constant 0 : index
    %c0_3 = arith.constant 0 : index
    %c0_4 = arith.constant 0 : index
    %3 = vector.load %arg2[%c0, %c0_1, %c0_2, %c0_3, %c0_4] : memref<2x1x1x4x8xf32, #tpu.memory_space<vmem>>, vector<2x1x1x1x8xf32>
    %4 = vector.shape_cast %3 : vector<2x1x1x1x8xf32> to vector<2x8xf32>
    %cst = arith.constant 0.353553385 : f32
    %5 = vector.broadcast %cst : f32 to vector<2x8xf32>
    %6 = arith.mulf %4, %5 : vector<2x8xf32>
    %c0_5 = arith.constant 0 : index
    %c0_6 = arith.constant 0 : index
    %c0_7 = arith.constant 0 : index
    %c0_8 = arith.constant 0 : index
    %c0_9 = arith.constant 0 : index
    %7 = vector.load %arg3[%c0_5, %c0_6, %c0_7, %c0_8, %c0_9] : memref<2x1x1x4x8xf32, #tpu.memory_space<vmem>>, vector<2x1x1x1x8xf32>
    %8 = vector.shape_cast %7 : vector<2x1x1x1x8xf32> to vector<2x8xf32>
    %c0_10 = arith.constant 0 : index
    %c0_11 = arith.constant 0 : index
    %c0_12 = arith.constant 0 : index
    %c0_13 = arith.constant 0 : index
    %c0_14 = arith.constant 0 : index
    %9 = vector.load %arg4[%c0_10, %c0_11, %c0_12, %c0_13, %c0_14] : memref<2x1x1x4x8xf32, #tpu.memory_space<vmem>>, vector<2x1x1x1x8xf32>
    %10 = vector.shape_cast %9 : vector<2x1x1x1x8xf32> to vector<2x8xf32>
    %cst_15 = arith.constant dense<0.000000e+00> : vector<2x2xf32>
    %11 = tpu.matmul %6, %8, %cst_15 {dimension_numbers = #tpu.dot_dimension_numbers<[1], [1], [0], [0], [0, 0, 1, 0], [], []>} : vector<2x8xf32>, vector<2x8xf32>, vector<2x2xf32> -> vector<2x2xf32>
    %c0_16 = arith.constant 0 : index
    %c0_17 = arith.constant 0 : index
    %c0_18 = arith.constant 0 : index
    %12 = vector.load %arg6[%c0_16, %c0_17, %c0_18] : memref<4x2x1xf32, #tpu.memory_space<vmem>>, vector<1x2x1xf32>
    %13 = vector.shape_cast %12 : vector<1x2x1xf32> to vector<2x1xf32>
    %cst_19 = arith.constant dense<0xFF800000> : vector<2xf32>
    %14 = vector.multi_reduction <maximumf>, %11, %cst_19 [1] : vector<2x2xf32> to vector<2xf32>
    %15 = vector.shape_cast %14 : vector<2xf32> to vector<2x1xf32>
    %16 = arith.maximumf %13, %15 : vector<2x1xf32>
    %17 = arith.subf %13, %16 : vector<2x1xf32>
    %18 = math.exp %17 : vector<2x1xf32>
    %19 = vector.broadcast %16 : vector<2x1xf32> to vector<2x2xf32>
    %20 = arith.subf %11, %19 : vector<2x2xf32>
    %21 = math.exp %20 : vector<2x2xf32>
    %c0_20 = arith.constant 0 : index
    %c0_21 = arith.constant 0 : index
    %c0_22 = arith.constant 0 : index
    %22 = vector.load %arg7[%c0_20, %c0_21, %c0_22] : memref<4x2x1xf32, #tpu.memory_space<vmem>>, vector<1x2x1xf32>
    %23 = vector.shape_cast %22 : vector<1x2x1xf32> to vector<2x1xf32>
    %24 = arith.mulf %18, %23 : vector<2x1xf32>
    %cst_23 = arith.constant dense<0.000000e+00> : vector<2xf32>
    %25 = vector.multi_reduction <add>, %21, %cst_23 [1] : vector<2x2xf32> to vector<2xf32>
    %26 = vector.shape_cast %25 : vector<2xf32> to vector<2x1xf32>
    %27 = arith.addf %24, %26 : vector<2x1xf32>
    %c0_24 = arith.constant 0 : index
    %c0_25 = arith.constant 0 : index
    %c0_26 = arith.constant 0 : index
    %28 = vector.load %arg7[%c0_24, %c0_25, %c0_26] : memref<4x2x1xf32, #tpu.memory_space<vmem>>, vector<1x2x1xf32>
    %29 = vector.shape_cast %28 : vector<1x2x1xf32> to vector<2x1xf32>
    %30 = vector.shape_cast %27 : vector<2x1xf32> to vector<1x2x1xf32>
    tpu.vector_store %arg7[%c0_24, %c0_25, %c0_26], %30 {strides = array<i32>} : memref<4x2x1xf32, #tpu.memory_space<vmem>>, vector<1x2x1xf32>,
    %c0_27 = arith.constant 0 : index
    %c0_28 = arith.constant 0 : index
    %c0_29 = arith.constant 0 : index
    %31 = vector.load %arg8[%c0_27, %c0_28, %c0_29] : memref<4x2x8xf32, #tpu.memory_space<vmem>>, vector<1x2x8xf32>
    %32 = vector.shape_cast %31 : vector<1x2x8xf32> to vector<2x8xf32>
    %33 = vector.broadcast %18 : vector<2x1xf32> to vector<2x8xf32>
    %34 = arith.mulf %33, %32 : vector<2x8xf32>
    %cst_30 = arith.constant dense<0.000000e+00> : vector<2x8xf32>
    %35 = tpu.matmul %21, %10, %cst_30 {dimension_numbers = #tpu.dot_dimension_numbers<[1], [0], [0], [1], [0, 0, 1, 1], [], []>} : vector<2x2xf32>, vector<2x8xf32>, vector<2x8xf32> -> vector<2x8xf32>
    %36 = arith.addf %34, %35 : vector<2x8xf32>
    %c0_31 = arith.constant 0 : index
    %c0_32 = arith.constant 0 : index
    %c0_33 = arith.constant 0 : index
    %37 = vector.load %arg8[%c0_31, %c0_32, %c0_33] : memref<4x2x8xf32, #tpu.memory_space<vmem>>, vector<1x2x8xf32>
    %38 = vector.shape_cast %37 : vector<1x2x8xf32> to vector<2x8xf32>
    %39 = vector.shape_cast %36 : vector<2x8xf32> to vector<1x2x8xf32>
    tpu.vector_store %arg8[%c0_31, %c0_32, %c0_33], %39 {strides = array<i32>} : memref<4x2x8xf32, #tpu.memory_space<vmem>>, vector<1x2x8xf32>,
    %c0_34 = arith.constant 0 : index
    %c0_35 = arith.constant 0 : index
    %c0_36 = arith.constant 0 : index
    %40 = vector.load %arg6[%c0_34, %c0_35, %c0_36] : memref<4x2x1xf32, #tpu.memory_space<vmem>>, vector<1x2x1xf32>
    %41 = vector.shape_cast %40 : vector<1x2x1xf32> to vector<2x1xf32>
    %42 = vector.shape_cast %16 : vector<2x1xf32> to vector<1x2x1xf32>
    tpu.vector_store %arg6[%c0_34, %c0_35, %c0_36], %42 {strides = array<i32>} : memref<4x2x1xf32, #tpu.memory_space<vmem>>, vector<1x2x1xf32>,
    %c0_37 = arith.constant 0 : index
    %c0_38 = arith.constant 0 : index
    %c0_39 = arith.constant 0 : index
    %c1 = arith.constant 1 : index
    %c0_40 = arith.constant 0 : index
    %43 = vector.load %arg2[%c0_37, %c0_38, %c0_39, %c1, %c0_40] : memref<2x1x1x4x8xf32, #tpu.memory_space<vmem>>, vector<2x1x1x1x8xf32>
    %44 = vector.shape_cast %43 : vector<2x1x1x1x8xf32> to vector<2x8xf32>
    %cst_41 = arith.constant 0.353553385 : f32
    %45 = vector.broadcast %cst_41 : f32 to vector<2x8xf32>
    %46 = arith.mulf %44, %45 : vector<2x8xf32>
    %c0_42 = arith.constant 0 : index
    %c0_43 = arith.constant 0 : index
    %c0_44 = arith.constant 0 : index
    %c1_45 = arith.constant 1 : index
    %c0_46 = arith.constant 0 : index
    %47 = vector.load %arg3[%c0_42, %c0_43, %c0_44, %c1_45, %c0_46] : memref<2x1x1x4x8xf32, #tpu.memory_space<vmem>>, vector<2x1x1x1x8xf32>
    %48 = vector.shape_cast %47 : vector<2x1x1x1x8xf32> to vector<2x8xf32>
    %c0_47 = arith.constant 0 : index
    %c0_48 = arith.constant 0 : index
    %c0_49 = arith.constant 0 : index
    %c1_50 = arith.constant 1 : index
    %c0_51 = arith.constant 0 : index
    %49 = vector.load %arg4[%c0_47, %c0_48, %c0_49, %c1_50, %c0_51] : memref<2x1x1x4x8xf32, #tpu.memory_space<vmem>>, vector<2x1x1x1x8xf32>
    %50 = vector.shape_cast %49 : vector<2x1x1x1x8xf32> to vector<2x8xf32>
    %cst_52 = arith.constant dense<0.000000e+00> : vector<2x2xf32>
    %51 = tpu.matmul %46, %48, %cst_52 {dimension_numbers = #tpu.dot_dimension_numbers<[1], [1], [0], [0], [0, 0, 1, 0], [], []>} : vector<2x8xf32>, vector<2x8xf32>, vector<2x2xf32> -> vector<2x2xf32>
    %c1_53 = arith.constant 1 : index
    %c0_54 = arith.constant 0 : index
    %c0_55 = arith.constant 0 : index
    %52 = vector.load %arg6[%c1_53, %c0_54, %c0_55] : memref<4x2x1xf32, #tpu.memory_space<vmem>>, vector<1x2x1xf32>
    %53 = vector.shape_cast %52 : vector<1x2x1xf32> to vector<2x1xf32>
    %cst_56 = arith.constant dense<0xFF800000> : vector<2xf32>
    %54 = vector.multi_reduction <maximumf>, %51, %cst_56 [1] : vector<2x2xf32> to vector<2xf32>
    %55 = vector.shape_cast %54 : vector<2xf32> to vector<2x1xf32>
    %56 = arith.maximumf %53, %55 : vector<2x1xf32>
    %57 = arith.subf %53, %56 : vector<2x1xf32>
    %58 = math.exp %57 : vector<2x1xf32>
    %59 = vector.broadcast %56 : vector<2x1xf32> to vector<2x2xf32>
    %60 = arith.subf %51, %59 : vector<2x2xf32>
    %61 = math.exp %60 : vector<2x2xf32>
    %c1_57 = arith.constant 1 : index
    %c0_58 = arith.constant 0 : index
    %c0_59 = arith.constant 0 : index
    %62 = vector.load %arg7[%c1_57, %c0_58, %c0_59] : memref<4x2x1xf32, #tpu.memory_space<vmem>>, vector<1x2x1xf32>
    %63 = vector.shape_cast %62 : vector<1x2x1xf32> to vector<2x1xf32>
    %64 = arith.mulf %58, %63 : vector<2x1xf32>
    %cst_60 = arith.constant dense<0.000000e+00> : vector<2xf32>
    %65 = vector.multi_reduction <add>, %61, %cst_60 [1] : vector<2x2xf32> to vector<2xf32>
    %66 = vector.shape_cast %65 : vector<2xf32> to vector<2x1xf32>
    %67 = arith.addf %64, %66 : vector<2x1xf32>
    %c1_61 = arith.constant 1 : index
    %c0_62 = arith.constant 0 : index
    %c0_63 = arith.constant 0 : index
    %68 = vector.load %arg7[%c1_61, %c0_62, %c0_63] : memref<4x2x1xf32, #tpu.memory_space<vmem>>, vector<1x2x1xf32>
    %69 = vector.shape_cast %68 : vector<1x2x1xf32> to vector<2x1xf32>
    %70 = vector.shape_cast %67 : vector<2x1xf32> to vector<1x2x1xf32>
    tpu.vector_store %arg7[%c1_61, %c0_62, %c0_63], %70 {strides = array<i32>} : memref<4x2x1xf32, #tpu.memory_space<vmem>>, vector<1x2x1xf32>,
    %c1_64 = arith.constant 1 : index
    %c0_65 = arith.constant 0 : index
    %c0_66 = arith.constant 0 : index
    %71 = vector.load %arg8[%c1_64, %c0_65, %c0_66] : memref<4x2x8xf32, #tpu.memory_space<vmem>>, vector<1x2x8xf32>
    %72 = vector.shape_cast %71 : vector<1x2x8xf32> to vector<2x8xf32>
    %73 = vector.broadcast %58 : vector<2x1xf32> to vector<2x8xf32>
    %74 = arith.mulf %73, %72 : vector<2x8xf32>
    %cst_67 = arith.constant dense<0.000000e+00> : vector<2x8xf32>
    %75 = tpu.matmul %61, %50, %cst_67 {dimension_numbers = #tpu.dot_dimension_numbers<[1], [0], [0], [1], [0, 0, 1, 1], [], []>} : vector<2x2xf32>, vector<2x8xf32>, vector<2x8xf32> -> vector<2x8xf32>
    %76 = arith.addf %74, %75 : vector<2x8xf32>
    %c1_68 = arith.constant 1 : index
    %c0_69 = arith.constant 0 : index
    %c0_70 = arith.constant 0 : index
    %77 = vector.load %arg8[%c1_68, %c0_69, %c0_70] : memref<4x2x8xf32, #tpu.memory_space<vmem>>, vector<1x2x8xf32>
    %78 = vector.shape_cast %77 : vector<1x2x8xf32> to vector<2x8xf32>
    %79 = vector.shape_cast %76 : vector<2x8xf32> to vector<1x2x8xf32>
    tpu.vector_store %arg8[%c1_68, %c0_69, %c0_70], %79 {strides = array<i32>} : memref<4x2x8xf32, #tpu.memory_space<vmem>>, vector<1x2x8xf32>,
    %c1_71 = arith.constant 1 : index
    %c0_72 = arith.constant 0 : index
    %c0_73 = arith.constant 0 : index
    %80 = vector.load %arg6[%c1_71, %c0_72, %c0_73] : memref<4x2x1xf32, #tpu.memory_space<vmem>>, vector<1x2x1xf32>
    %81 = vector.shape_cast %80 : vector<1x2x1xf32> to vector<2x1xf32>
    %82 = vector.shape_cast %56 : vector<2x1xf32> to vector<1x2x1xf32>
    tpu.vector_store %arg6[%c1_71, %c0_72, %c0_73], %82 {strides = array<i32>} : memref<4x2x1xf32, #tpu.memory_space<vmem>>, vector<1x2x1xf32>,
    %c0_74 = arith.constant 0 : index
    %c0_75 = arith.constant 0 : index
    %c0_76 = arith.constant 0 : index
    %c2 = arith.constant 2 : index
    %c0_77 = arith.constant 0 : index
    %83 = vector.load %arg2[%c0_74, %c0_75, %c0_76, %c2, %c0_77] : memref<2x1x1x4x8xf32, #tpu.memory_space<vmem>>, vector<2x1x1x1x8xf32>
    %84 = vector.shape_cast %83 : vector<2x1x1x1x8xf32> to vector<2x8xf32>
    %cst_78 = arith.constant 0.353553385 : f32
    %85 = vector.broadcast %cst_78 : f32 to vector<2x8xf32>
    %86 = arith.mulf %84, %85 : vector<2x8xf32>
    %c0_79 = arith.constant 0 : index
    %c0_80 = arith.constant 0 : index
    %c0_81 = arith.constant 0 : index
    %c2_82 = arith.constant 2 : index
    %c0_83 = arith.constant 0 : index
    %87 = vector.load %arg3[%c0_79, %c0_80, %c0_81, %c2_82, %c0_83] : memref<2x1x1x4x8xf32, #tpu.memory_space<vmem>>, vector<2x1x1x1x8xf32>
    %88 = vector.shape_cast %87 : vector<2x1x1x1x8xf32> to vector<2x8xf32>
    %c0_84 = arith.constant 0 : index
    %c0_85 = arith.constant 0 : index
    %c0_86 = arith.constant 0 : index
    %c2_87 = arith.constant 2 : index
    %c0_88 = arith.constant 0 : index
    %89 = vector.load %arg4[%c0_84, %c0_85, %c0_86, %c2_87, %c0_88] : memref<2x1x1x4x8xf32, #tpu.memory_space<vmem>>, vector<2x1x1x1x8xf32>
    %90 = vector.shape_cast %89 : vector<2x1x1x1x8xf32> to vector<2x8xf32>
    %cst_89 = arith.constant dense<0.000000e+00> : vector<2x2xf32>
    %91 = tpu.matmul %86, %88, %cst_89 {dimension_numbers = #tpu.dot_dimension_numbers<[1], [1], [0], [0], [0, 0, 1, 0], [], []>} : vector<2x8xf32>, vector<2x8xf32>, vector<2x2xf32> -> vector<2x2xf32>
    %c2_90 = arith.constant 2 : index
    %c0_91 = arith.constant 0 : index
    %c0_92 = arith.constant 0 : index
    %92 = vector.load %arg6[%c2_90, %c0_91, %c0_92] : memref<4x2x1xf32, #tpu.memory_space<vmem>>, vector<1x2x1xf32>
    %93 = vector.shape_cast %92 : vector<1x2x1xf32> to vector<2x1xf32>
    %cst_93 = arith.constant dense<0xFF800000> : vector<2xf32>
    %94 = vector.multi_reduction <maximumf>, %91, %cst_93 [1] : vector<2x2xf32> to vector<2xf32>
    %95 = vector.shape_cast %94 : vector<2xf32> to vector<2x1xf32>
    %96 = arith.maximumf %93, %95 : vector<2x1xf32>
    %97 = arith.subf %93, %96 : vector<2x1xf32>
    %98 = math.exp %97 : vector<2x1xf32>
    %99 = vector.broadcast %96 : vector<2x1xf32> to vector<2x2xf32>
    %100 = arith.subf %91, %99 : vector<2x2xf32>
    %101 = math.exp %100 : vector<2x2xf32>
    %c2_94 = arith.constant 2 : index
    %c0_95 = arith.constant 0 : index
    %c0_96 = arith.constant 0 : index
    %102 = vector.load %arg7[%c2_94, %c0_95, %c0_96] : memref<4x2x1xf32, #tpu.memory_space<vmem>>, vector<1x2x1xf32>
    %103 = vector.shape_cast %102 : vector<1x2x1xf32> to vector<2x1xf32>
    %104 = arith.mulf %98, %103 : vector<2x1xf32>
    %cst_97 = arith.constant dense<0.000000e+00> : vector<2xf32>
    %105 = vector.multi_reduction <add>, %101, %cst_97 [1] : vector<2x2xf32> to vector<2xf32>
    %106 = vector.shape_cast %105 : vector<2xf32> to vector<2x1xf32>
    %107 = arith.addf %104, %106 : vector<2x1xf32>
    %c2_98 = arith.constant 2 : index
    %c0_99 = arith.constant 0 : index
    %c0_100 = arith.constant 0 : index
    %108 = vector.load %arg7[%c2_98, %c0_99, %c0_100] : memref<4x2x1xf32, #tpu.memory_space<vmem>>, vector<1x2x1xf32>
    %109 = vector.shape_cast %108 : vector<1x2x1xf32> to vector<2x1xf32>
    %110 = vector.shape_cast %107 : vector<2x1xf32> to vector<1x2x1xf32>
    tpu.vector_store %arg7[%c2_98, %c0_99, %c0_100], %110 {strides = array<i32>} : memref<4x2x1xf32, #tpu.memory_space<vmem>>, vector<1x2x1xf32>,
    %c2_101 = arith.constant 2 : index
    %c0_102 = arith.constant 0 : index
    %c0_103 = arith.constant 0 : index
    %111 = vector.load %arg8[%c2_101, %c0_102, %c0_103] : memref<4x2x8xf32, #tpu.memory_space<vmem>>, vector<1x2x8xf32>
    %112 = vector.shape_cast %111 : vector<1x2x8xf32> to vector<2x8xf32>
    %113 = vector.broadcast %98 : vector<2x1xf32> to vector<2x8xf32>
    %114 = arith.mulf %113, %112 : vector<2x8xf32>
    %cst_104 = arith.constant dense<0.000000e+00> : vector<2x8xf32>
    %115 = tpu.matmul %101, %90, %cst_104 {dimension_numbers = #tpu.dot_dimension_numbers<[1], [0], [0], [1], [0, 0, 1, 1], [], []>} : vector<2x2xf32>, vector<2x8xf32>, vector<2x8xf32> -> vector<2x8xf32>
    %116 = arith.addf %114, %115 : vector<2x8xf32>
    %c2_105 = arith.constant 2 : index
    %c0_106 = arith.constant 0 : index
    %c0_107 = arith.constant 0 : index
    %117 = vector.load %arg8[%c2_105, %c0_106, %c0_107] : memref<4x2x8xf32, #tpu.memory_space<vmem>>, vector<1x2x8xf32>
    %118 = vector.shape_cast %117 : vector<1x2x8xf32> to vector<2x8xf32>
    %119 = vector.shape_cast %116 : vector<2x8xf32> to vector<1x2x8xf32>
    tpu.vector_store %arg8[%c2_105, %c0_106, %c0_107], %119 {strides = array<i32>} : memref<4x2x8xf32, #tpu.memory_space<vmem>>, vector<1x2x8xf32>,
    %c2_108 = arith.constant 2 : index
    %c0_109 = arith.constant 0 : index
    %c0_110 = arith.constant 0 : index
    %120 = vector.load %arg6[%c2_108, %c0_109, %c0_110] : memref<4x2x1xf32, #tpu.memory_space<vmem>>, vector<1x2x1xf32>
    %121 = vector.shape_cast %120 : vector<1x2x1xf32> to vector<2x1xf32>
    %122 = vector.shape_cast %96 : vector<2x1xf32> to vector<1x2x1xf32>
    tpu.vector_store %arg6[%c2_108, %c0_109, %c0_110], %122 {strides = array<i32>} : memref<4x2x1xf32, #tpu.memory_space<vmem>>, vector<1x2x1xf32>,
    %c0_111 = arith.constant 0 : index
    %c0_112 = arith.constant 0 : index
    %c0_113 = arith.constant 0 : index
    %c3 = arith.constant 3 : index
    %c0_114 = arith.constant 0 : index
    %123 = vector.load %arg2[%c0_111, %c0_112, %c0_113, %c3, %c0_114] : memref<2x1x1x4x8xf32, #tpu.memory_space<vmem>>, vector<2x1x1x1x8xf32>
    %124 = vector.shape_cast %123 : vector<2x1x1x1x8xf32> to vector<2x8xf32>
    %cst_115 = arith.constant 0.353553385 : f32
    %125 = vector.broadcast %cst_115 : f32 to vector<2x8xf32>
    %126 = arith.mulf %124, %125 : vector<2x8xf32>
    %c0_116 = arith.constant 0 : index
    %c0_117 = arith.constant 0 : index
    %c0_118 = arith.constant 0 : index
    %c3_119 = arith.constant 3 : index
    %c0_120 = arith.constant 0 : index
    %127 = vector.load %arg3[%c0_116, %c0_117, %c0_118, %c3_119, %c0_120] : memref<2x1x1x4x8xf32, #tpu.memory_space<vmem>>, vector<2x1x1x1x8xf32>
    %128 = vector.shape_cast %127 : vector<2x1x1x1x8xf32> to vector<2x8xf32>
    %c0_121 = arith.constant 0 : index
    %c0_122 = arith.constant 0 : index
    %c0_123 = arith.constant 0 : index
    %c3_124 = arith.constant 3 : index
    %c0_125 = arith.constant 0 : index
    %129 = vector.load %arg4[%c0_121, %c0_122, %c0_123, %c3_124, %c0_125] : memref<2x1x1x4x8xf32, #tpu.memory_space<vmem>>, vector<2x1x1x1x8xf32>
    %130 = vector.shape_cast %129 : vector<2x1x1x1x8xf32> to vector<2x8xf32>
    %cst_126 = arith.constant dense<0.000000e+00> : vector<2x2xf32>
    %131 = tpu.matmul %126, %128, %cst_126 {dimension_numbers = #tpu.dot_dimension_numbers<[1], [1], [0], [0], [0, 0, 1, 0], [], []>} : vector<2x8xf32>, vector<2x8xf32>, vector<2x2xf32> -> vector<2x2xf32>
    %c3_127 = arith.constant 3 : index
    %c0_128 = arith.constant 0 : index
    %c0_129 = arith.constant 0 : index
    %132 = vector.load %arg6[%c3_127, %c0_128, %c0_129] : memref<4x2x1xf32, #tpu.memory_space<vmem>>, vector<1x2x1xf32>
    %133 = vector.shape_cast %132 : vector<1x2x1xf32> to vector<2x1xf32>
    %cst_130 = arith.constant dense<0xFF800000> : vector<2xf32>
    %134 = vector.multi_reduction <maximumf>, %131, %cst_130 [1] : vector<2x2xf32> to vector<2xf32>
    %135 = vector.shape_cast %134 : vector<2xf32> to vector<2x1xf32>
    %136 = arith.maximumf %133, %135 : vector<2x1xf32>
    %137 = arith.subf %133, %136 : vector<2x1xf32>
    %138 = math.exp %137 : vector<2x1xf32>
    %139 = vector.broadcast %136 : vector<2x1xf32> to vector<2x2xf32>
    %140 = arith.subf %131, %139 : vector<2x2xf32>
    %141 = math.exp %140 : vector<2x2xf32>
    %c3_131 = arith.constant 3 : index
    %c0_132 = arith.constant 0 : index
    %c0_133 = arith.constant 0 : index
    %142 = vector.load %arg7[%c3_131, %c0_132, %c0_133] : memref<4x2x1xf32, #tpu.memory_space<vmem>>, vector<1x2x1xf32>
    %143 = vector.shape_cast %142 : vector<1x2x1xf32> to vector<2x1xf32>
    %144 = arith.mulf %138, %143 : vector<2x1xf32>
    %cst_134 = arith.constant dense<0.000000e+00> : vector<2xf32>
    %145 = vector.multi_reduction <add>, %141, %cst_134 [1] : vector<2x2xf32> to vector<2xf32>
    %146 = vector.shape_cast %145 : vector<2xf32> to vector<2x1xf32>
    %147 = arith.addf %144, %146 : vector<2x1xf32>
    %c3_135 = arith.constant 3 : index
    %c0_136 = arith.constant 0 : index
    %c0_137 = arith.constant 0 : index
    %148 = vector.load %arg7[%c3_135, %c0_136, %c0_137] : memref<4x2x1xf32, #tpu.memory_space<vmem>>, vector<1x2x1xf32>
    %149 = vector.shape_cast %148 : vector<1x2x1xf32> to vector<2x1xf32>
    %150 = vector.shape_cast %147 : vector<2x1xf32> to vector<1x2x1xf32>
    tpu.vector_store %arg7[%c3_135, %c0_136, %c0_137], %150 {strides = array<i32>} : memref<4x2x1xf32, #tpu.memory_space<vmem>>, vector<1x2x1xf32>,
    %c3_138 = arith.constant 3 : index
    %c0_139 = arith.constant 0 : index
    %c0_140 = arith.constant 0 : index
    %151 = vector.load %arg8[%c3_138, %c0_139, %c0_140] : memref<4x2x8xf32, #tpu.memory_space<vmem>>, vector<1x2x8xf32>
    %152 = vector.shape_cast %151 : vector<1x2x8xf32> to vector<2x8xf32>
    %153 = vector.broadcast %138 : vector<2x1xf32> to vector<2x8xf32>
    %154 = arith.mulf %153, %152 : vector<2x8xf32>
    %cst_141 = arith.constant dense<0.000000e+00> : vector<2x8xf32>
    %155 = tpu.matmul %141, %130, %cst_141 {dimension_numbers = #tpu.dot_dimension_numbers<[1], [0], [0], [1], [0, 0, 1, 1], [], []>} : vector<2x2xf32>, vector<2x8xf32>, vector<2x8xf32> -> vector<2x8xf32>
    %156 = arith.addf %154, %155 : vector<2x8xf32>
    %c3_142 = arith.constant 3 : index
    %c0_143 = arith.constant 0 : index
    %c0_144 = arith.constant 0 : index
    %157 = vector.load %arg8[%c3_142, %c0_143, %c0_144] : memref<4x2x8xf32, #tpu.memory_space<vmem>>, vector<1x2x8xf32>
    %158 = vector.shape_cast %157 : vector<1x2x8xf32> to vector<2x8xf32>
    %159 = vector.shape_cast %156 : vector<2x8xf32> to vector<1x2x8xf32>
    tpu.vector_store %arg8[%c3_142, %c0_143, %c0_144], %159 {strides = array<i32>} : memref<4x2x8xf32, #tpu.memory_space<vmem>>, vector<1x2x8xf32>,
    %c3_145 = arith.constant 3 : index
    %c0_146 = arith.constant 0 : index
    %c0_147 = arith.constant 0 : index
    %160 = vector.load %arg6[%c3_145, %c0_146, %c0_147] : memref<4x2x1xf32, #tpu.memory_space<vmem>>, vector<1x2x1xf32>
    %161 = vector.shape_cast %160 : vector<1x2x1xf32> to vector<2x1xf32>
    %162 = vector.shape_cast %136 : vector<2x1xf32> to vector<1x2x1xf32>
    tpu.vector_store %arg6[%c3_145, %c0_146, %c0_147], %162 {strides = array<i32>} : memref<4x2x1xf32, #tpu.memory_space<vmem>>, vector<1x2x1xf32>,
    %c0_i32_148 = arith.constant 0 : i32
    %163 = arith.cmpi eq, %arg1, %c0_i32_148 : i32
    %164 = arith.extui %163 : i1 to i32
    %c0_i32_149 = arith.constant 0 : i32
    %165 = arith.cmpi ne, %164, %c0_i32_149 : i32
    scf.if %165 {
      %c0_150 = arith.constant 0 : index
      %c0_151 = arith.constant 0 : index
      %c0_152 = arith.constant 0 : index
      %166 = vector.load %arg7[%c0_150, %c0_151, %c0_152] : memref<4x2x1xf32, #tpu.memory_space<vmem>>, vector<1x2x1xf32>
      %167 = vector.shape_cast %166 : vector<1x2x1xf32> to vector<2x1xf32>
      %168 = tpu.reciprocal %167 {approx = true} : vector<2x1xf32> -> vector<2x1xf32>
      %c0_153 = arith.constant 0 : index
      %c0_154 = arith.constant 0 : index
      %c0_155 = arith.constant 0 : index
      %169 = vector.load %arg8[%c0_153, %c0_154, %c0_155] : memref<4x2x8xf32, #tpu.memory_space<vmem>>, vector<1x2x8xf32>
      %170 = vector.shape_cast %169 : vector<1x2x8xf32> to vector<2x8xf32>
      %171 = vector.broadcast %168 : vector<2x1xf32> to vector<2x8xf32>
      %172 = arith.mulf %170, %171 : vector<2x8xf32>
      %c0_156 = arith.constant 0 : index
      %c0_157 = arith.constant 0 : index
      %c0_158 = arith.constant 0 : index
      %c0_159 = arith.constant 0 : index
      %173 = vector.load %arg5[%c0_156, %c0_157, %c0_158, %c0_159] : memref<2x1x4x8xf32, #tpu.memory_space<vmem>>, vector<2x1x1x8xf32>
      %174 = vector.shape_cast %173 : vector<2x1x1x8xf32> to vector<2x8xf32>
      %175 = vector.shape_cast %172 : vector<2x8xf32> to vector<2x1x1x8xf32>
      tpu.vector_store %arg5[%c0_156, %c0_157, %c0_158, %c0_159], %175 {strides = array<i32>} : memref<2x1x4x8xf32, #tpu.memory_space<vmem>>, vector<2x1x1x8xf32>,
      %c1_160 = arith.constant 1 : index
      %c0_161 = arith.constant 0 : index
      %c0_162 = arith.constant 0 : index
      %176 = vector.load %arg7[%c1_160, %c0_161, %c0_162] : memref<4x2x1xf32, #tpu.memory_space<vmem>>, vector<1x2x1xf32>
      %177 = vector.shape_cast %176 : vector<1x2x1xf32> to vector<2x1xf32>
      %178 = tpu.reciprocal %177 {approx = true} : vector<2x1xf32> -> vector<2x1xf32>
      %c1_163 = arith.constant 1 : index
      %c0_164 = arith.constant 0 : index
      %c0_165 = arith.constant 0 : index
      %179 = vector.load %arg8[%c1_163, %c0_164, %c0_165] : memref<4x2x8xf32, #tpu.memory_space<vmem>>, vector<1x2x8xf32>
      %180 = vector.shape_cast %179 : vector<1x2x8xf32> to vector<2x8xf32>
      %181 = vector.broadcast %178 : vector<2x1xf32> to vector<2x8xf32>
      %182 = arith.mulf %180, %181 : vector<2x8xf32>
      %c0_166 = arith.constant 0 : index
      %c0_167 = arith.constant 0 : index
      %c1_168 = arith.constant 1 : index
      %c0_169 = arith.constant 0 : index
      %183 = vector.load %arg5[%c0_166, %c0_167, %c1_168, %c0_169] : memref<2x1x4x8xf32, #tpu.memory_space<vmem>>, vector<2x1x1x8xf32>
      %184 = vector.shape_cast %183 : vector<2x1x1x8xf32> to vector<2x8xf32>
      %185 = vector.shape_cast %182 : vector<2x8xf32> to vector<2x1x1x8xf32>
      tpu.vector_store %arg5[%c0_166, %c0_167, %c1_168, %c0_169], %185 {strides = array<i32>} : memref<2x1x4x8xf32, #tpu.memory_space<vmem>>, vector<2x1x1x8xf32>,
      %c2_170 = arith.constant 2 : index
      %c0_171 = arith.constant 0 : index
      %c0_172 = arith.constant 0 : index
      %186 = vector.load %arg7[%c2_170, %c0_171, %c0_172] : memref<4x2x1xf32, #tpu.memory_space<vmem>>, vector<1x2x1xf32>
      %187 = vector.shape_cast %186 : vector<1x2x1xf32> to vector<2x1xf32>
      %188 = tpu.reciprocal %187 {approx = true} : vector<2x1xf32> -> vector<2x1xf32>
      %c2_173 = arith.constant 2 : index
      %c0_174 = arith.constant 0 : index
      %c0_175 = arith.constant 0 : index
      %189 = vector.load %arg8[%c2_173, %c0_174, %c0_175] : memref<4x2x8xf32, #tpu.memory_space<vmem>>, vector<1x2x8xf32>
      %190 = vector.shape_cast %189 : vector<1x2x8xf32> to vector<2x8xf32>
      %191 = vector.broadcast %188 : vector<2x1xf32> to vector<2x8xf32>
      %192 = arith.mulf %190, %191 : vector<2x8xf32>
      %c0_176 = arith.constant 0 : index
      %c0_177 = arith.constant 0 : index
      %c2_178 = arith.constant 2 : index
      %c0_179 = arith.constant 0 : index
      %193 = vector.load %arg5[%c0_176, %c0_177, %c2_178, %c0_179] : memref<2x1x4x8xf32, #tpu.memory_space<vmem>>, vector<2x1x1x8xf32>
      %194 = vector.shape_cast %193 : vector<2x1x1x8xf32> to vector<2x8xf32>
      %195 = vector.shape_cast %192 : vector<2x8xf32> to vector<2x1x1x8xf32>
      tpu.vector_store %arg5[%c0_176, %c0_177, %c2_178, %c0_179], %195 {strides = array<i32>} : memref<2x1x4x8xf32, #tpu.memory_space<vmem>>, vector<2x1x1x8xf32>,
      %c3_180 = arith.constant 3 : index
      %c0_181 = arith.constant 0 : index
      %c0_182 = arith.constant 0 : index
      %196 = vector.load %arg7[%c3_180, %c0_181, %c0_182] : memref<4x2x1xf32, #tpu.memory_space<vmem>>, vector<1x2x1xf32>
      %197 = vector.shape_cast %196 : vector<1x2x1xf32> to vector<2x1xf32>
      %198 = tpu.reciprocal %197 {approx = true} : vector<2x1xf32> -> vector<2x1xf32>
      %c3_183 = arith.constant 3 : index
      %c0_184 = arith.constant 0 : index
      %c0_185 = arith.constant 0 : index
      %199 = vector.load %arg8[%c3_183, %c0_184, %c0_185] : memref<4x2x8xf32, #tpu.memory_space<vmem>>, vector<1x2x8xf32>
      %200 = vector.shape_cast %199 : vector<1x2x8xf32> to vector<2x8xf32>
      %201 = vector.broadcast %198 : vector<2x1xf32> to vector<2x8xf32>
      %202 = arith.mulf %200, %201 : vector<2x8xf32>
      %c0_186 = arith.constant 0 : index
      %c0_187 = arith.constant 0 : index
      %c3_188 = arith.constant 3 : index
      %c0_189 = arith.constant 0 : index
      %203 = vector.load %arg5[%c0_186, %c0_187, %c3_188, %c0_189] : memref<2x1x4x8xf32, #tpu.memory_space<vmem>>, vector<2x1x1x8xf32>
      %204 = vector.shape_cast %203 : vector<2x1x1x8xf32> to vector<2x8xf32>
      %205 = vector.shape_cast %202 : vector<2x8xf32> to vector<2x1x1x8xf32>
      tpu.vector_store %arg5[%c0_186, %c0_187, %c3_188, %c0_189], %205 {strides = array<i32>} : memref<2x1x4x8xf32, #tpu.memory_space<vmem>>, vector<2x1x1x8xf32>,
    } else {
    }
    return
  }
  func.func @transform_0(%arg0: i32, %arg1: i32) -> (i32, i32, i32, i32, i32) {
    %c0_i32 = arith.constant 0 : i32
    %c0_i32_0 = arith.constant 0 : i32
    %c0_i32_1 = arith.constant 0 : i32
    %c0_i32_2 = arith.constant 0 : i32
    %c0_i32_3 = arith.constant 0 : i32
    return %c0_i32, %arg0, %c0_i32_0, %c0_i32_1, %c0_i32_2 : i32, i32, i32, i32, i32
  }
  func.func @transform_1(%arg0: i32, %arg1: i32) -> (i32, i32, i32, i32, i32) {
    %c1_i32 = arith.constant 1 : i32
    %c0_i32 = arith.constant 0 : i32
    %c0_i32_0 = arith.constant 0 : i32
    %c0_i32_1 = arith.constant 0 : i32
    return %arg1, %arg0, %c1_i32, %c0_i32, %c0_i32_0 : i32, i32, i32, i32, i32
  }
  func.func @transform_2(%arg0: i32, %arg1: i32) -> (i32, i32, i32, i32, i32) {
    %c2_i32 = arith.constant 2 : i32
    %c0_i32 = arith.constant 0 : i32
    %c0_i32_0 = arith.constant 0 : i32
    %c0_i32_1 = arith.constant 0 : i32
    return %arg1, %arg0, %c2_i32, %c0_i32, %c0_i32_0 : i32, i32, i32, i32, i32
  }
  func.func @transform_3(%arg0: i32, %arg1: i32) -> (i32, i32, i32, i32) {
    %c0_i32 = arith.constant 0 : i32
    %c0_i32_0 = arith.constant 0 : i32
    %c0_i32_1 = arith.constant 0 : i32
    %c0_i32_2 = arith.constant 0 : i32
    return %c0_i32, %arg0, %c0_i32_0, %c0_i32_1 : i32, i32, i32, i32
  }
}

module attributes {stable_mosaic.version = 11 : i64} {
  func.func @_linear_kernel(%arg0: i32, %arg1: i32, %arg2: i32, %arg3: memref<8x32xf32, #tpu.memory_space<vmem>>, %arg4: memref<32x32xf32, #tpu.memory_space<vmem>>, %arg5: memref<1x32xf32, #tpu.memory_space<vmem>>, %arg6: memref<8x32xf32, #tpu.memory_space<vmem>>, %arg7: memref<8x32xf32, #tpu.memory_space<vmem>>) attributes {dimension_semantics = [#tpu.dimension_semantics<parallel>, #tpu.dimension_semantics<parallel>, #tpu.dimension_semantics<arbitrary>], iteration_bounds = array<i64: 2, 1, 1>, scalar_prefetch = 0 : i64, scratch_operands = 1 : i64, tpu.core_type = #tpu.core_type<tc>, window_params = [{transform_indices = @transform_0, window_bounds = array<i64: 8, 32>}, {transform_indices = @transform_1, window_bounds = array<i64: 32, 32>}, {transform_indices = @transform_2, window_bounds = array<i64: 1, 32>}, {transform_indices = @transform_3, window_bounds = array<i64: 8, 32>}]} {
    %c0_i32 = arith.constant 0 : i32
    %0 = arith.cmpi eq, %arg2, %c0_i32 : i32
    %1 = arith.extui %0 : i1 to i32
    %c0_i32_0 = arith.constant 0 : i32
    %2 = arith.cmpi ne, %1, %c0_i32_0 : i32
    scf.if %2 {
      %cst_10 = arith.constant 0.000000e+00 : f32
      %12 = vector.broadcast %cst_10 : f32 to vector<8x32xf32>
      %c0_11 = arith.constant 0 : index
      %c0_12 = arith.constant 0 : index
      %13 = vector.load %arg7[%c0_11, %c0_12] : memref<8x32xf32, #tpu.memory_space<vmem>>, vector<8x32xf32>
      tpu.vector_store %arg7[%c0_11, %c0_12], %12 {strides = array<i32>} : memref<8x32xf32, #tpu.memory_space<vmem>>, vector<8x32xf32>,
    } else {
    }
    %c0 = arith.constant 0 : index
    %c0_1 = arith.constant 0 : index
    %3 = vector.load %arg7[%c0, %c0_1] : memref<8x32xf32, #tpu.memory_space<vmem>>, vector<8x32xf32>
    %c0_2 = arith.constant 0 : index
    %c0_3 = arith.constant 0 : index
    %4 = vector.load %arg3[%c0_2, %c0_3] : memref<8x32xf32, #tpu.memory_space<vmem>>, vector<8x32xf32>
    %c0_4 = arith.constant 0 : index
    %c0_5 = arith.constant 0 : index
    %5 = vector.load %arg4[%c0_4, %c0_5] : memref<32x32xf32, #tpu.memory_space<vmem>>, vector<32x32xf32>
    %cst = arith.constant dense<0.000000e+00> : vector<8x32xf32>
    %6 = tpu.matmul %4, %5, %cst {dimension_numbers = #tpu.dot_dimension_numbers<[1], [0], [0], [1], [0, 0, 1, 1], [], []>} : vector<8x32xf32>, vector<32x32xf32>, vector<8x32xf32> -> vector<8x32xf32>
    %7 = arith.addf %3, %6 : vector<8x32xf32>
    %c0_6 = arith.constant 0 : index
    %c0_7 = arith.constant 0 : index
    %8 = vector.load %arg7[%c0_6, %c0_7] : memref<8x32xf32, #tpu.memory_space<vmem>>, vector<8x32xf32>
    tpu.vector_store %arg7[%c0_6, %c0_7], %7 {strides = array<i32>} : memref<8x32xf32, #tpu.memory_space<vmem>>, vector<8x32xf32>,
    %c0_i32_8 = arith.constant 0 : i32
    %9 = arith.cmpi eq, %arg2, %c0_i32_8 : i32
    %10 = arith.extui %9 : i1 to i32
    %c0_i32_9 = arith.constant 0 : i32
    %11 = arith.cmpi ne, %10, %c0_i32_9 : i32
    scf.if %11 {
      %c0_10 = arith.constant 0 : index
      %c0_11 = arith.constant 0 : index
      %12 = vector.load %arg7[%c0_10, %c0_11] : memref<8x32xf32, #tpu.memory_space<vmem>>, vector<8x32xf32>
      %c0_12 = arith.constant 0 : index
      %c0_13 = arith.constant 0 : index
      %13 = vector.load %arg5[%c0_12, %c0_13] : memref<1x32xf32, #tpu.memory_space<vmem>>, vector<1x32xf32>
      %14 = vector.broadcast %13 : vector<1x32xf32> to vector<8x32xf32>
      %15 = arith.addf %12, %14 : vector<8x32xf32>
      %c0_14 = arith.constant 0 : index
      %c0_15 = arith.constant 0 : index
      %16 = vector.load %arg6[%c0_14, %c0_15] : memref<8x32xf32, #tpu.memory_space<vmem>>, vector<8x32xf32>
      tpu.vector_store %arg6[%c0_14, %c0_15], %15 {strides = array<i32>} : memref<8x32xf32, #tpu.memory_space<vmem>>, vector<8x32xf32>,
    } else {
    }
    return
  }
  func.func @transform_0(%arg0: i32, %arg1: i32, %arg2: i32) -> (i32, i32) {
    %c0_i32 = arith.constant 0 : i32
    return %arg0, %arg2 : i32, i32
  }
  func.func @transform_1(%arg0: i32, %arg1: i32, %arg2: i32) -> (i32, i32) {
    %c0_i32 = arith.constant 0 : i32
    return %arg2, %arg1 : i32, i32
  }
  func.func @transform_2(%arg0: i32, %arg1: i32, %arg2: i32) -> (i32, i32) {
    %c0_i32 = arith.constant 0 : i32
    %c0_i32_0 = arith.constant 0 : i32
    return %c0_i32, %arg1 : i32, i32
  }
  func.func @transform_3(%arg0: i32, %arg1: i32, %arg2: i32) -> (i32, i32) {
    %c0_i32 = arith.constant 0 : i32
    return %arg0, %arg1 : i32, i32
  }
}

module attributes {stable_mosaic.version = 11 : i64} {
  func.func @_linear_ln_kernel(%arg0: i32, %arg1: i32, %arg2: memref<8x32xf32, #tpu.memory_space<vmem>>, %arg3: memref<32x32xf32, #tpu.memory_space<vmem>>, %arg4: memref<1x32xf32, #tpu.memory_space<vmem>>, %arg5: memref<8x32xf32, #tpu.memory_space<vmem>>, %arg6: memref<1x32xf32, #tpu.memory_space<vmem>>, %arg7: memref<1x32xf32, #tpu.memory_space<vmem>>, %arg8: memref<8x32xf32, #tpu.memory_space<vmem>>, %arg9: memref<8x32xf32, #tpu.memory_space<vmem>>) attributes {dimension_semantics = [#tpu.dimension_semantics<parallel>, #tpu.dimension_semantics<arbitrary>], iteration_bounds = array<i64: 2, 1>, scalar_prefetch = 0 : i64, scratch_operands = 1 : i64, tpu.core_type = #tpu.core_type<tc>, window_params = [{transform_indices = @transform_0, window_bounds = array<i64: 8, 32>}, {transform_indices = @transform_1, window_bounds = array<i64: 32, 32>}, {pipeline_mode = #tpu.pipeline_mode<synchronous>, transform_indices = @transform_2, window_bounds = array<i64: 1, 32>}, {transform_indices = @transform_3, window_bounds = array<i64: 8, 32>}, {pipeline_mode = #tpu.pipeline_mode<synchronous>, transform_indices = @transform_4, window_bounds = array<i64: 1, 32>}, {pipeline_mode = #tpu.pipeline_mode<synchronous>, transform_indices = @transform_5, window_bounds = array<i64: 1, 32>}, {transform_indices = @transform_6, window_bounds = array<i64: 8, 32>}]} {
    %c0_i32 = arith.constant 0 : i32
    %0 = arith.cmpi eq, %arg1, %c0_i32 : i32
    %1 = arith.extui %0 : i1 to i32
    %c0_i32_0 = arith.constant 0 : i32
    %2 = arith.cmpi ne, %1, %c0_i32_0 : i32
    scf.if %2 {
      %cst_10 = arith.constant 0.000000e+00 : f32
      %12 = vector.broadcast %cst_10 : f32 to vector<8x32xf32>
      %c0_11 = arith.constant 0 : index
      %c0_12 = arith.constant 0 : index
      %13 = vector.load %arg9[%c0_11, %c0_12] : memref<8x32xf32, #tpu.memory_space<vmem>>, vector<8x32xf32>
      tpu.vector_store %arg9[%c0_11, %c0_12], %12 {strides = array<i32>} : memref<8x32xf32, #tpu.memory_space<vmem>>, vector<8x32xf32>,
    } else {
    }
    %c0 = arith.constant 0 : index
    %c0_1 = arith.constant 0 : index
    %3 = vector.load %arg9[%c0, %c0_1] : memref<8x32xf32, #tpu.memory_space<vmem>>, vector<8x32xf32>
    %c0_2 = arith.constant 0 : index
    %c0_3 = arith.constant 0 : index
    %4 = vector.load %arg2[%c0_2, %c0_3] : memref<8x32xf32, #tpu.memory_space<vmem>>, vector<8x32xf32>
    %c0_4 = arith.constant 0 : index
    %c0_5 = arith.constant 0 : index
    %5 = vector.load %arg3[%c0_4, %c0_5] : memref<32x32xf32, #tpu.memory_space<vmem>>, vector<32x32xf32>
    %cst = arith.constant dense<0.000000e+00> : vector<8x32xf32>
    %6 = tpu.matmul %4, %5, %cst {dimension_numbers = #tpu.dot_dimension_numbers<[1], [0], [0], [1], [0, 0, 1, 1], [], []>} : vector<8x32xf32>, vector<32x32xf32>, vector<8x32xf32> -> vector<8x32xf32>
    %7 = arith.addf %3, %6 : vector<8x32xf32>
    %c0_6 = arith.constant 0 : index
    %c0_7 = arith.constant 0 : index
    %8 = vector.load %arg9[%c0_6, %c0_7] : memref<8x32xf32, #tpu.memory_space<vmem>>, vector<8x32xf32>
    tpu.vector_store %arg9[%c0_6, %c0_7], %7 {strides = array<i32>} : memref<8x32xf32, #tpu.memory_space<vmem>>, vector<8x32xf32>,
    %c0_i32_8 = arith.constant 0 : i32
    %9 = arith.cmpi eq, %arg1, %c0_i32_8 : i32
    %10 = arith.extui %9 : i1 to i32
    %c0_i32_9 = arith.constant 0 : i32
    %11 = arith.cmpi ne, %10, %c0_i32_9 : i32
    scf.if %11 {
      %c0_10 = arith.constant 0 : index
      %c0_11 = arith.constant 0 : index
      %12 = vector.load %arg9[%c0_10, %c0_11] : memref<8x32xf32, #tpu.memory_space<vmem>>, vector<8x32xf32>
      %c0_12 = arith.constant 0 : index
      %c0_13 = arith.constant 0 : index
      %13 = vector.load %arg4[%c0_12, %c0_13] : memref<1x32xf32, #tpu.memory_space<vmem>>, vector<1x32xf32>
      %14 = vector.broadcast %13 : vector<1x32xf32> to vector<8x32xf32>
      %15 = arith.addf %12, %14 : vector<8x32xf32>
      %c0_14 = arith.constant 0 : index
      %c0_15 = arith.constant 0 : index
      %16 = vector.load %arg5[%c0_14, %c0_15] : memref<8x32xf32, #tpu.memory_space<vmem>>, vector<8x32xf32>
      %17 = arith.addf %15, %16 : vector<8x32xf32>
      %cst_16 = arith.constant dense<0.000000e+00> : vector<8xf32>
      %18 = vector.multi_reduction <add>, %17, %cst_16 [1] : vector<8x32xf32> to vector<8xf32>
      %19 = vector.shape_cast %18 : vector<8xf32> to vector<8x1xf32>
      %cst_17 = arith.constant 3.200000e+01 : f32
      %20 = vector.broadcast %cst_17 : f32 to vector<8x1xf32>
      %21 = arith.divf %19, %20 : vector<8x1xf32>
      %22 = vector.broadcast %21 : vector<8x1xf32> to vector<8x32xf32>
      %23 = arith.subf %17, %22 : vector<8x32xf32>
      %24 = arith.mulf %23, %23 : vector<8x32xf32>
      %cst_18 = arith.constant dense<0.000000e+00> : vector<8xf32>
      %25 = vector.multi_reduction <add>, %24, %cst_18 [1] : vector<8x32xf32> to vector<8xf32>
      %26 = vector.shape_cast %25 : vector<8xf32> to vector<8x1xf32>
      %cst_19 = arith.constant 3.200000e+01 : f32
      %27 = vector.broadcast %cst_19 : f32 to vector<8x1xf32>
      %28 = arith.divf %26, %27 : vector<8x1xf32>
      %cst_20 = arith.constant 9.99999974E-6 : f32
      %29 = vector.broadcast %cst_20 : f32 to vector<8x1xf32>
      %30 = arith.addf %28, %29 : vector<8x1xf32>
      %31 = math.rsqrt %30 : vector<8x1xf32>
      %32 = vector.broadcast %31 : vector<8x1xf32> to vector<8x32xf32>
      %33 = arith.mulf %23, %32 : vector<8x32xf32>
      %c0_21 = arith.constant 0 : index
      %c0_22 = arith.constant 0 : index
      %34 = vector.load %arg6[%c0_21, %c0_22] : memref<1x32xf32, #tpu.memory_space<vmem>>, vector<1x32xf32>
      %35 = vector.broadcast %34 : vector<1x32xf32> to vector<8x32xf32>
      %36 = arith.mulf %33, %35 : vector<8x32xf32>
      %c0_23 = arith.constant 0 : index
      %c0_24 = arith.constant 0 : index
      %37 = vector.load %arg7[%c0_23, %c0_24] : memref<1x32xf32, #tpu.memory_space<vmem>>, vector<1x32xf32>
      %38 = vector.broadcast %37 : vector<1x32xf32> to vector<8x32xf32>
      %39 = arith.addf %36, %38 : vector<8x32xf32>
      %c0_25 = arith.constant 0 : index
      %c0_26 = arith.constant 0 : index
      %40 = vector.load %arg8[%c0_25, %c0_26] : memref<8x32xf32, #tpu.memory_space<vmem>>, vector<8x32xf32>
      tpu.vector_store %arg8[%c0_25, %c0_26], %39 {strides = array<i32>} : memref<8x32xf32, #tpu.memory_space<vmem>>, vector<8x32xf32>,
    } else {
    }
    return
  }
  func.func @transform_0(%arg0: i32, %arg1: i32) -> (i32, i32) {
    %c0_i32 = arith.constant 0 : i32
    return %arg0, %arg1 : i32, i32
  }
  func.func @transform_1(%arg0: i32, %arg1: i32) -> (i32, i32) {
    %c0_i32 = arith.constant 0 : i32
    %c0_i32_0 = arith.constant 0 : i32
    return %arg1, %c0_i32 : i32, i32
  }
  func.func @transform_2(%arg0: i32, %arg1: i32) -> (i32, i32) {
    %c0_i32 = arith.constant 0 : i32
    %c0_i32_0 = arith.constant 0 : i32
    %c0_i32_1 = arith.constant 0 : i32
    return %c0_i32, %c0_i32_0 : i32, i32
  }
  func.func @transform_3(%arg0: i32, %arg1: i32) -> (i32, i32) {
    %c0_i32 = arith.constant 0 : i32
    %c0_i32_0 = arith.constant 0 : i32
    return %arg0, %c0_i32 : i32, i32
  }
  func.func @transform_4(%arg0: i32, %arg1: i32) -> (i32, i32) {
    %c0_i32 = arith.constant 0 : i32
    %c0_i32_0 = arith.constant 0 : i32
    %c0_i32_1 = arith.constant 0 : i32
    return %c0_i32, %c0_i32_0 : i32, i32
  }
  func.func @transform_5(%arg0: i32, %arg1: i32) -> (i32, i32) {
    %c0_i32 = arith.constant 0 : i32
    %c0_i32_0 = arith.constant 0 : i32
    %c0_i32_1 = arith.constant 0 : i32
    return %c0_i32, %c0_i32_0 : i32, i32
  }
  func.func @transform_6(%arg0: i32, %arg1: i32) -> (i32, i32) {
    %c0_i32 = arith.constant 0 : i32
    %c0_i32_0 = arith.constant 0 : i32
    return %arg0, %c0_i32 : i32, i32
  }
}

module attributes {stable_mosaic.version = 11 : i64} {
  func.func @_linear_kernel(%arg0: i32, %arg1: i32, %arg2: i32, %arg3: memref<8x32xf32, #tpu.memory_space<vmem>>, %arg4: memref<32x64xf32, #tpu.memory_space<vmem>>, %arg5: memref<1x64xf32, #tpu.memory_space<vmem>>, %arg6: memref<8x64xf32, #tpu.memory_space<vmem>>, %arg7: memref<8x64xf32, #tpu.memory_space<vmem>>) attributes {dimension_semantics = [#tpu.dimension_semantics<parallel>, #tpu.dimension_semantics<parallel>, #tpu.dimension_semantics<arbitrary>], iteration_bounds = array<i64: 2, 1, 1>, scalar_prefetch = 0 : i64, scratch_operands = 1 : i64, tpu.core_type = #tpu.core_type<tc>, window_params = [{transform_indices = @transform_0, window_bounds = array<i64: 8, 32>}, {transform_indices = @transform_1, window_bounds = array<i64: 32, 64>}, {transform_indices = @transform_2, window_bounds = array<i64: 1, 64>}, {transform_indices = @transform_3, window_bounds = array<i64: 8, 64>}]} {
    %c0_i32 = arith.constant 0 : i32
    %0 = arith.cmpi eq, %arg2, %c0_i32 : i32
    %1 = arith.extui %0 : i1 to i32
    %c0_i32_0 = arith.constant 0 : i32
    %2 = arith.cmpi ne, %1, %c0_i32_0 : i32
    scf.if %2 {
      %cst_10 = arith.constant 0.000000e+00 : f32
      %12 = vector.broadcast %cst_10 : f32 to vector<8x64xf32>
      %c0_11 = arith.constant 0 : index
      %c0_12 = arith.constant 0 : index
      %13 = vector.load %arg7[%c0_11, %c0_12] : memref<8x64xf32, #tpu.memory_space<vmem>>, vector<8x64xf32>
      tpu.vector_store %arg7[%c0_11, %c0_12], %12 {strides = array<i32>} : memref<8x64xf32, #tpu.memory_space<vmem>>, vector<8x64xf32>,
    } else {
    }
    %c0 = arith.constant 0 : index
    %c0_1 = arith.constant 0 : index
    %3 = vector.load %arg7[%c0, %c0_1] : memref<8x64xf32, #tpu.memory_space<vmem>>, vector<8x64xf32>
    %c0_2 = arith.constant 0 : index
    %c0_3 = arith.constant 0 : index
    %4 = vector.load %arg3[%c0_2, %c0_3] : memref<8x32xf32, #tpu.memory_space<vmem>>, vector<8x32xf32>
    %c0_4 = arith.constant 0 : index
    %c0_5 = arith.constant 0 : index
    %5 = vector.load %arg4[%c0_4, %c0_5] : memref<32x64xf32, #tpu.memory_space<vmem>>, vector<32x64xf32>
    %cst = arith.constant dense<0.000000e+00> : vector<8x64xf32>
    %6 = tpu.matmul %4, %5, %cst {dimension_numbers = #tpu.dot_dimension_numbers<[1], [0], [0], [1], [0, 0, 1, 1], [], []>} : vector<8x32xf32>, vector<32x64xf32>, vector<8x64xf32> -> vector<8x64xf32>
    %7 = arith.addf %3, %6 : vector<8x64xf32>
    %c0_6 = arith.constant 0 : index
    %c0_7 = arith.constant 0 : index
    %8 = vector.load %arg7[%c0_6, %c0_7] : memref<8x64xf32, #tpu.memory_space<vmem>>, vector<8x64xf32>
    tpu.vector_store %arg7[%c0_6, %c0_7], %7 {strides = array<i32>} : memref<8x64xf32, #tpu.memory_space<vmem>>, vector<8x64xf32>,
    %c0_i32_8 = arith.constant 0 : i32
    %9 = arith.cmpi eq, %arg2, %c0_i32_8 : i32
    %10 = arith.extui %9 : i1 to i32
    %c0_i32_9 = arith.constant 0 : i32
    %11 = arith.cmpi ne, %10, %c0_i32_9 : i32
    scf.if %11 {
      %c0_10 = arith.constant 0 : index
      %c0_11 = arith.constant 0 : index
      %12 = vector.load %arg7[%c0_10, %c0_11] : memref<8x64xf32, #tpu.memory_space<vmem>>, vector<8x64xf32>
      %c0_12 = arith.constant 0 : index
      %c0_13 = arith.constant 0 : index
      %13 = vector.load %arg5[%c0_12, %c0_13] : memref<1x64xf32, #tpu.memory_space<vmem>>, vector<1x64xf32>
      %14 = vector.broadcast %13 : vector<1x64xf32> to vector<8x64xf32>
      %15 = arith.addf %12, %14 : vector<8x64xf32>
      %c0_14 = arith.constant 0 : index
      %c0_15 = arith.constant 0 : index
      %16 = vector.load %arg6[%c0_14, %c0_15] : memref<8x64xf32, #tpu.memory_space<vmem>>, vector<8x64xf32>
      tpu.vector_store %arg6[%c0_14, %c0_15], %15 {strides = array<i32>} : memref<8x64xf32, #tpu.memory_space<vmem>>, vector<8x64xf32>,
    } else {
    }
    return
  }
  func.func @transform_0(%arg0: i32, %arg1: i32, %arg2: i32) -> (i32, i32) {
    %c0_i32 = arith.constant 0 : i32
    return %arg0, %arg2 : i32, i32
  }
  func.func @transform_1(%arg0: i32, %arg1: i32, %arg2: i32) -> (i32, i32) {
    %c0_i32 = arith.constant 0 : i32
    return %arg2, %arg1 : i32, i32
  }
  func.func @transform_2(%arg0: i32, %arg1: i32, %arg2: i32) -> (i32, i32) {
    %c0_i32 = arith.constant 0 : i32
    %c0_i32_0 = arith.constant 0 : i32
    return %c0_i32, %arg1 : i32, i32
  }
  func.func @transform_3(%arg0: i32, %arg1: i32, %arg2: i32) -> (i32, i32) {
    %c0_i32 = arith.constant 0 : i32
    return %arg0, %arg1 : i32, i32
  }
}

module attributes {stable_mosaic.version = 11 : i64} {
  func.func @_flash_attn_kernel(%arg0: i32, %arg1: i32, %arg2: memref<2x1x1x4x8xf32, #tpu.memory_space<vmem>>, %arg3: memref<2x1x1x4x8xf32, #tpu.memory_space<vmem>>, %arg4: memref<2x1x1x4x8xf32, #tpu.memory_space<vmem>>, %arg5: memref<2x1x4x8xf32, #tpu.memory_space<vmem>>, %arg6: memref<4x2x1xf32, #tpu.memory_space<vmem>>, %arg7: memref<4x2x1xf32, #tpu.memory_space<vmem>>, %arg8: memref<4x2x8xf32, #tpu.memory_space<vmem>>) attributes {dimension_semantics = [#tpu.dimension_semantics<parallel>, #tpu.dimension_semantics<arbitrary>], iteration_bounds = array<i64: 8, 1>, scalar_prefetch = 0 : i64, scratch_operands = 3 : i64, tpu.core_type = #tpu.core_type<tc>, window_params = [{transform_indices = @transform_0, window_bounds = array<i64: 2, 1, 1, 4, 8>}, {transform_indices = @transform_1, window_bounds = array<i64: 2, 1, 1, 4, 8>}, {transform_indices = @transform_2, window_bounds = array<i64: 2, 1, 1, 4, 8>}, {transform_indices = @transform_3, window_bounds = array<i64: 2, 1, 4, 8>}]} {
    %c0_i32 = arith.constant 0 : i32
    %0 = arith.cmpi eq, %arg1, %c0_i32 : i32
    %1 = arith.extui %0 : i1 to i32
    %c0_i32_0 = arith.constant 0 : i32
    %2 = arith.cmpi ne, %1, %c0_i32_0 : i32
    scf.if %2 {
      %cst_150 = arith.constant 0xFF800000 : f32
      %166 = vector.broadcast %cst_150 : f32 to vector<4x2x1xf32>
      %c0_151 = arith.constant 0 : index
      %c0_152 = arith.constant 0 : index
      %c0_153 = arith.constant 0 : index
      %167 = vector.load %arg6[%c0_151, %c0_152, %c0_153] : memref<4x2x1xf32, #tpu.memory_space<vmem>>, vector<4x2x1xf32>
      tpu.vector_store %arg6[%c0_151, %c0_152, %c0_153], %166 {strides = array<i32>} : memref<4x2x1xf32, #tpu.memory_space<vmem>>, vector<4x2x1xf32>,
      %cst_154 = arith.constant 0.000000e+00 : f32
      %168 = vector.broadcast %cst_154 : f32 to vector<4x2x1xf32>
      %c0_155 = arith.constant 0 : index
      %c0_156 = arith.constant 0 : index
      %c0_157 = arith.constant 0 : index
      %169 = vector.load %arg7[%c0_155, %c0_156, %c0_157] : memref<4x2x1xf32, #tpu.memory_space<vmem>>, vector<4x2x1xf32>
      tpu.vector_store %arg7[%c0_155, %c0_156, %c0_157], %168 {strides = array<i32>} : memref<4x2x1xf32, #tpu.memory_space<vmem>>, vector<4x2x1xf32>,
      %cst_158 = arith.constant 0.000000e+00 : f32
      %170 = vector.broadcast %cst_158 : f32 to vector<4x2x8xf32>
      %c0_159 = arith.constant 0 : index
      %c0_160 = arith.constant 0 : index
      %c0_161 = arith.constant 0 : index
      %171 = vector.load %arg8[%c0_159, %c0_160, %c0_161] : memref<4x2x8xf32, #tpu.memory_space<vmem>>, vector<4x2x8xf32>
      tpu.vector_store %arg8[%c0_159, %c0_160, %c0_161], %170 {strides = array<i32>} : memref<4x2x8xf32, #tpu.memory_space<vmem>>, vector<4x2x8xf32>,
    } else {
    }
    %c0 = arith.constant 0 : index
    %c0_1 = arith.constant 0 : index
    %c0_2 = arith.constant 0 : index
    %c0_3 = arith.constant 0 : index
    %c0_4 = arith.constant 0 : index
    %3 = vector.load %arg2[%c0, %c0_1, %c0_2, %c0_3, %c0_4] : memref<2x1x1x4x8xf32, #tpu.memory_space<vmem>>, vector<2x1x1x1x8xf32>
    %4 = vector.shape_cast %3 : vector<2x1x1x1x8xf32> to vector<2x8xf32>
    %cst = arith.constant 0.353553385 : f32
    %5 = vector.broadcast %cst : f32 to vector<2x8xf32>
    %6 = arith.mulf %4, %5 : vector<2x8xf32>
    %c0_5 = arith.constant 0 : index
    %c0_6 = arith.constant 0 : index
    %c0_7 = arith.constant 0 : index
    %c0_8 = arith.constant 0 : index
    %c0_9 = arith.constant 0 : index
    %7 = vector.load %arg3[%c0_5, %c0_6, %c0_7, %c0_8, %c0_9] : memref<2x1x1x4x8xf32, #tpu.memory_space<vmem>>, vector<2x1x1x1x8xf32>
    %8 = vector.shape_cast %7 : vector<2x1x1x1x8xf32> to vector<2x8xf32>
    %c0_10 = arith.constant 0 : index
    %c0_11 = arith.constant 0 : index
    %c0_12 = arith.constant 0 : index
    %c0_13 = arith.constant 0 : index
    %c0_14 = arith.constant 0 : index
    %9 = vector.load %arg4[%c0_10, %c0_11, %c0_12, %c0_13, %c0_14] : memref<2x1x1x4x8xf32, #tpu.memory_space<vmem>>, vector<2x1x1x1x8xf32>
    %10 = vector.shape_cast %9 : vector<2x1x1x1x8xf32> to vector<2x8xf32>
    %cst_15 = arith.constant dense<0.000000e+00> : vector<2x2xf32>
    %11 = tpu.matmul %6, %8, %cst_15 {dimension_numbers = #tpu.dot_dimension_numbers<[1], [1], [0], [0], [0, 0, 1, 0], [], []>} : vector<2x8xf32>, vector<2x8xf32>, vector<2x2xf32> -> vector<2x2xf32>
    %c0_16 = arith.constant 0 : index
    %c0_17 = arith.constant 0 : index
    %c0_18 = arith.constant 0 : index
    %12 = vector.load %arg6[%c0_16, %c0_17, %c0_18] : memref<4x2x1xf32, #tpu.memory_space<vmem>>, vector<1x2x1xf32>
    %13 = vector.shape_cast %12 : vector<1x2x1xf32> to vector<2x1xf32>
    %cst_19 = arith.constant dense<0xFF800000> : vector<2xf32>
    %14 = vector.multi_reduction <maximumf>, %11, %cst_19 [1] : vector<2x2xf32> to vector<2xf32>
    %15 = vector.shape_cast %14 : vector<2xf32> to vector<2x1xf32>
    %16 = arith.maximumf %13, %15 : vector<2x1xf32>
    %17 = arith.subf %13, %16 : vector<2x1xf32>
    %18 = math.exp %17 : vector<2x1xf32>
    %19 = vector.broadcast %16 : vector<2x1xf32> to vector<2x2xf32>
    %20 = arith.subf %11, %19 : vector<2x2xf32>
    %21 = math.exp %20 : vector<2x2xf32>
    %c0_20 = arith.constant 0 : index
    %c0_21 = arith.constant 0 : index
    %c0_22 = arith.constant 0 : index
    %22 = vector.load %arg7[%c0_20, %c0_21, %c0_22] : memref<4x2x1xf32, #tpu.memory_space<vmem>>, vector<1x2x1xf32>
    %23 = vector.shape_cast %22 : vector<1x2x1xf32> to vector<2x1xf32>
    %24 = arith.mulf %18, %23 : vector<2x1xf32>
    %cst_23 = arith.constant dense<0.000000e+00> : vector<2xf32>
    %25 = vector.multi_reduction <add>, %21, %cst_23 [1] : vector<2x2xf32> to vector<2xf32>
    %26 = vector.shape_cast %25 : vector<2xf32> to vector<2x1xf32>
    %27 = arith.addf %24, %26 : vector<2x1xf32>
    %c0_24 = arith.constant 0 : index
    %c0_25 = arith.constant 0 : index
    %c0_26 = arith.constant 0 : index
    %28 = vector.load %arg7[%c0_24, %c0_25, %c0_26] : memref<4x2x1xf32, #tpu.memory_space<vmem>>, vector<1x2x1xf32>
    %29 = vector.shape_cast %28 : vector<1x2x1xf32> to vector<2x1xf32>
    %30 = vector.shape_cast %27 : vector<2x1xf32> to vector<1x2x1xf32>
    tpu.vector_store %arg7[%c0_24, %c0_25, %c0_26], %30 {strides = array<i32>} : memref<4x2x1xf32, #tpu.memory_space<vmem>>, vector<1x2x1xf32>,
    %c0_27 = arith.constant 0 : index
    %c0_28 = arith.constant 0 : index
    %c0_29 = arith.constant 0 : index
    %31 = vector.load %arg8[%c0_27, %c0_28, %c0_29] : memref<4x2x8xf32, #tpu.memory_space<vmem>>, vector<1x2x8xf32>
    %32 = vector.shape_cast %31 : vector<1x2x8xf32> to vector<2x8xf32>
    %33 = vector.broadcast %18 : vector<2x1xf32> to vector<2x8xf32>
    %34 = arith.mulf %33, %32 : vector<2x8xf32>
    %cst_30 = arith.constant dense<0.000000e+00> : vector<2x8xf32>
    %35 = tpu.matmul %21, %10, %cst_30 {dimension_numbers = #tpu.dot_dimension_numbers<[1], [0], [0], [1], [0, 0, 1, 1], [], []>} : vector<2x2xf32>, vector<2x8xf32>, vector<2x8xf32> -> vector<2x8xf32>
    %36 = arith.addf %34, %35 : vector<2x8xf32>
    %c0_31 = arith.constant 0 : index
    %c0_32 = arith.constant 0 : index
    %c0_33 = arith.constant 0 : index
    %37 = vector.load %arg8[%c0_31, %c0_32, %c0_33] : memref<4x2x8xf32, #tpu.memory_space<vmem>>, vector<1x2x8xf32>
    %38 = vector.shape_cast %37 : vector<1x2x8xf32> to vector<2x8xf32>
    %39 = vector.shape_cast %36 : vector<2x8xf32> to vector<1x2x8xf32>
    tpu.vector_store %arg8[%c0_31, %c0_32, %c0_33], %39 {strides = array<i32>} : memref<4x2x8xf32, #tpu.memory_space<vmem>>, vector<1x2x8xf32>,
    %c0_34 = arith.constant 0 : index
    %c0_35 = arith.constant 0 : index
    %c0_36 = arith.constant 0 : index
    %40 = vector.load %arg6[%c0_34, %c0_35, %c0_36] : memref<4x2x1xf32, #tpu.memory_space<vmem>>, vector<1x2x1xf32>
    %41 = vector.shape_cast %40 : vector<1x2x1xf32> to vector<2x1xf32>
    %42 = vector.shape_cast %16 : vector<2x1xf32> to vector<1x2x1xf32>
    tpu.vector_store %arg6[%c0_34, %c0_35, %c0_36], %42 {strides = array<i32>} : memref<4x2x1xf32, #tpu.memory_space<vmem>>, vector<1x2x1xf32>,
    %c0_37 = arith.constant 0 : index
    %c0_38 = arith.constant 0 : index
    %c0_39 = arith.constant 0 : index
    %c1 = arith.constant 1 : index
    %c0_40 = arith.constant 0 : index
    %43 = vector.load %arg2[%c0_37, %c0_38, %c0_39, %c1, %c0_40] : memref<2x1x1x4x8xf32, #tpu.memory_space<vmem>>, vector<2x1x1x1x8xf32>
    %44 = vector.shape_cast %43 : vector<2x1x1x1x8xf32> to vector<2x8xf32>
    %cst_41 = arith.constant 0.353553385 : f32
    %45 = vector.broadcast %cst_41 : f32 to vector<2x8xf32>
    %46 = arith.mulf %44, %45 : vector<2x8xf32>
    %c0_42 = arith.constant 0 : index
    %c0_43 = arith.constant 0 : index
    %c0_44 = arith.constant 0 : index
    %c1_45 = arith.constant 1 : index
    %c0_46 = arith.constant 0 : index
    %47 = vector.load %arg3[%c0_42, %c0_43, %c0_44, %c1_45, %c0_46] : memref<2x1x1x4x8xf32, #tpu.memory_space<vmem>>, vector<2x1x1x1x8xf32>
    %48 = vector.shape_cast %47 : vector<2x1x1x1x8xf32> to vector<2x8xf32>
    %c0_47 = arith.constant 0 : index
    %c0_48 = arith.constant 0 : index
    %c0_49 = arith.constant 0 : index
    %c1_50 = arith.constant 1 : index
    %c0_51 = arith.constant 0 : index
    %49 = vector.load %arg4[%c0_47, %c0_48, %c0_49, %c1_50, %c0_51] : memref<2x1x1x4x8xf32, #tpu.memory_space<vmem>>, vector<2x1x1x1x8xf32>
    %50 = vector.shape_cast %49 : vector<2x1x1x1x8xf32> to vector<2x8xf32>
    %cst_52 = arith.constant dense<0.000000e+00> : vector<2x2xf32>
    %51 = tpu.matmul %46, %48, %cst_52 {dimension_numbers = #tpu.dot_dimension_numbers<[1], [1], [0], [0], [0, 0, 1, 0], [], []>} : vector<2x8xf32>, vector<2x8xf32>, vector<2x2xf32> -> vector<2x2xf32>
    %c1_53 = arith.constant 1 : index
    %c0_54 = arith.constant 0 : index
    %c0_55 = arith.constant 0 : index
    %52 = vector.load %arg6[%c1_53, %c0_54, %c0_55] : memref<4x2x1xf32, #tpu.memory_space<vmem>>, vector<1x2x1xf32>
    %53 = vector.shape_cast %52 : vector<1x2x1xf32> to vector<2x1xf32>
    %cst_56 = arith.constant dense<0xFF800000> : vector<2xf32>
    %54 = vector.multi_reduction <maximumf>, %51, %cst_56 [1] : vector<2x2xf32> to vector<2xf32>
    %55 = vector.shape_cast %54 : vector<2xf32> to vector<2x1xf32>
    %56 = arith.maximumf %53, %55 : vector<2x1xf32>
    %57 = arith.subf %53, %56 : vector<2x1xf32>
    %58 = math.exp %57 : vector<2x1xf32>
    %59 = vector.broadcast %56 : vector<2x1xf32> to vector<2x2xf32>
    %60 = arith.subf %51, %59 : vector<2x2xf32>
    %61 = math.exp %60 : vector<2x2xf32>
    %c1_57 = arith.constant 1 : index
    %c0_58 = arith.constant 0 : index
    %c0_59 = arith.constant 0 : index
    %62 = vector.load %arg7[%c1_57, %c0_58, %c0_59] : memref<4x2x1xf32, #tpu.memory_space<vmem>>, vector<1x2x1xf32>
    %63 = vector.shape_cast %62 : vector<1x2x1xf32> to vector<2x1xf32>
    %64 = arith.mulf %58, %63 : vector<2x1xf32>
    %cst_60 = arith.constant dense<0.000000e+00> : vector<2xf32>
    %65 = vector.multi_reduction <add>, %61, %cst_60 [1] : vector<2x2xf32> to vector<2xf32>
    %66 = vector.shape_cast %65 : vector<2xf32> to vector<2x1xf32>
    %67 = arith.addf %64, %66 : vector<2x1xf32>
    %c1_61 = arith.constant 1 : index
    %c0_62 = arith.constant 0 : index
    %c0_63 = arith.constant 0 : index
    %68 = vector.load %arg7[%c1_61, %c0_62, %c0_63] : memref<4x2x1xf32, #tpu.memory_space<vmem>>, vector<1x2x1xf32>
    %69 = vector.shape_cast %68 : vector<1x2x1xf32> to vector<2x1xf32>
    %70 = vector.shape_cast %67 : vector<2x1xf32> to vector<1x2x1xf32>
    tpu.vector_store %arg7[%c1_61, %c0_62, %c0_63], %70 {strides = array<i32>} : memref<4x2x1xf32, #tpu.memory_space<vmem>>, vector<1x2x1xf32>,
    %c1_64 = arith.constant 1 : index
    %c0_65 = arith.constant 0 : index
    %c0_66 = arith.constant 0 : index
    %71 = vector.load %arg8[%c1_64, %c0_65, %c0_66] : memref<4x2x8xf32, #tpu.memory_space<vmem>>, vector<1x2x8xf32>
    %72 = vector.shape_cast %71 : vector<1x2x8xf32> to vector<2x8xf32>
    %73 = vector.broadcast %58 : vector<2x1xf32> to vector<2x8xf32>
    %74 = arith.mulf %73, %72 : vector<2x8xf32>
    %cst_67 = arith.constant dense<0.000000e+00> : vector<2x8xf32>
    %75 = tpu.matmul %61, %50, %cst_67 {dimension_numbers = #tpu.dot_dimension_numbers<[1], [0], [0], [1], [0, 0, 1, 1], [], []>} : vector<2x2xf32>, vector<2x8xf32>, vector<2x8xf32> -> vector<2x8xf32>
    %76 = arith.addf %74, %75 : vector<2x8xf32>
    %c1_68 = arith.constant 1 : index
    %c0_69 = arith.constant 0 : index
    %c0_70 = arith.constant 0 : index
    %77 = vector.load %arg8[%c1_68, %c0_69, %c0_70] : memref<4x2x8xf32, #tpu.memory_space<vmem>>, vector<1x2x8xf32>
    %78 = vector.shape_cast %77 : vector<1x2x8xf32> to vector<2x8xf32>
    %79 = vector.shape_cast %76 : vector<2x8xf32> to vector<1x2x8xf32>
    tpu.vector_store %arg8[%c1_68, %c0_69, %c0_70], %79 {strides = array<i32>} : memref<4x2x8xf32, #tpu.memory_space<vmem>>, vector<1x2x8xf32>,
    %c1_71 = arith.constant 1 : index
    %c0_72 = arith.constant 0 : index
    %c0_73 = arith.constant 0 : index
    %80 = vector.load %arg6[%c1_71, %c0_72, %c0_73] : memref<4x2x1xf32, #tpu.memory_space<vmem>>, vector<1x2x1xf32>
    %81 = vector.shape_cast %80 : vector<1x2x1xf32> to vector<2x1xf32>
    %82 = vector.shape_cast %56 : vector<2x1xf32> to vector<1x2x1xf32>
    tpu.vector_store %arg6[%c1_71, %c0_72, %c0_73], %82 {strides = array<i32>} : memref<4x2x1xf32, #tpu.memory_space<vmem>>, vector<1x2x1xf32>,
    %c0_74 = arith.constant 0 : index
    %c0_75 = arith.constant 0 : index
    %c0_76 = arith.constant 0 : index
    %c2 = arith.constant 2 : index
    %c0_77 = arith.constant 0 : index
    %83 = vector.load %arg2[%c0_74, %c0_75, %c0_76, %c2, %c0_77] : memref<2x1x1x4x8xf32, #tpu.memory_space<vmem>>, vector<2x1x1x1x8xf32>
    %84 = vector.shape_cast %83 : vector<2x1x1x1x8xf32> to vector<2x8xf32>
    %cst_78 = arith.constant 0.353553385 : f32
    %85 = vector.broadcast %cst_78 : f32 to vector<2x8xf32>
    %86 = arith.mulf %84, %85 : vector<2x8xf32>
    %c0_79 = arith.constant 0 : index
    %c0_80 = arith.constant 0 : index
    %c0_81 = arith.constant 0 : index
    %c2_82 = arith.constant 2 : index
    %c0_83 = arith.constant 0 : index
    %87 = vector.load %arg3[%c0_79, %c0_80, %c0_81, %c2_82, %c0_83] : memref<2x1x1x4x8xf32, #tpu.memory_space<vmem>>, vector<2x1x1x1x8xf32>
    %88 = vector.shape_cast %87 : vector<2x1x1x1x8xf32> to vector<2x8xf32>
    %c0_84 = arith.constant 0 : index
    %c0_85 = arith.constant 0 : index
    %c0_86 = arith.constant 0 : index
    %c2_87 = arith.constant 2 : index
    %c0_88 = arith.constant 0 : index
    %89 = vector.load %arg4[%c0_84, %c0_85, %c0_86, %c2_87, %c0_88] : memref<2x1x1x4x8xf32, #tpu.memory_space<vmem>>, vector<2x1x1x1x8xf32>
    %90 = vector.shape_cast %89 : vector<2x1x1x1x8xf32> to vector<2x8xf32>
    %cst_89 = arith.constant dense<0.000000e+00> : vector<2x2xf32>
    %91 = tpu.matmul %86, %88, %cst_89 {dimension_numbers = #tpu.dot_dimension_numbers<[1], [1], [0], [0], [0, 0, 1, 0], [], []>} : vector<2x8xf32>, vector<2x8xf32>, vector<2x2xf32> -> vector<2x2xf32>
    %c2_90 = arith.constant 2 : index
    %c0_91 = arith.constant 0 : index
    %c0_92 = arith.constant 0 : index
    %92 = vector.load %arg6[%c2_90, %c0_91, %c0_92] : memref<4x2x1xf32, #tpu.memory_space<vmem>>, vector<1x2x1xf32>
    %93 = vector.shape_cast %92 : vector<1x2x1xf32> to vector<2x1xf32>
    %cst_93 = arith.constant dense<0xFF800000> : vector<2xf32>
    %94 = vector.multi_reduction <maximumf>, %91, %cst_93 [1] : vector<2x2xf32> to vector<2xf32>
    %95 = vector.shape_cast %94 : vector<2xf32> to vector<2x1xf32>
    %96 = arith.maximumf %93, %95 : vector<2x1xf32>
    %97 = arith.subf %93, %96 : vector<2x1xf32>
    %98 = math.exp %97 : vector<2x1xf32>
    %99 = vector.broadcast %96 : vector<2x1xf32> to vector<2x2xf32>
    %100 = arith.subf %91, %99 : vector<2x2xf32>
    %101 = math.exp %100 : vector<2x2xf32>
    %c2_94 = arith.constant 2 : index
    %c0_95 = arith.constant 0 : index
    %c0_96 = arith.constant 0 : index
    %102 = vector.load %arg7[%c2_94, %c0_95, %c0_96] : memref<4x2x1xf32, #tpu.memory_space<vmem>>, vector<1x2x1xf32>
    %103 = vector.shape_cast %102 : vector<1x2x1xf32> to vector<2x1xf32>
    %104 = arith.mulf %98, %103 : vector<2x1xf32>
    %cst_97 = arith.constant dense<0.000000e+00> : vector<2xf32>
    %105 = vector.multi_reduction <add>, %101, %cst_97 [1] : vector<2x2xf32> to vector<2xf32>
    %106 = vector.shape_cast %105 : vector<2xf32> to vector<2x1xf32>
    %107 = arith.addf %104, %106 : vector<2x1xf32>
    %c2_98 = arith.constant 2 : index
    %c0_99 = arith.constant 0 : index
    %c0_100 = arith.constant 0 : index
    %108 = vector.load %arg7[%c2_98, %c0_99, %c0_100] : memref<4x2x1xf32, #tpu.memory_space<vmem>>, vector<1x2x1xf32>
    %109 = vector.shape_cast %108 : vector<1x2x1xf32> to vector<2x1xf32>
    %110 = vector.shape_cast %107 : vector<2x1xf32> to vector<1x2x1xf32>
    tpu.vector_store %arg7[%c2_98, %c0_99, %c0_100], %110 {strides = array<i32>} : memref<4x2x1xf32, #tpu.memory_space<vmem>>, vector<1x2x1xf32>,
    %c2_101 = arith.constant 2 : index
    %c0_102 = arith.constant 0 : index
    %c0_103 = arith.constant 0 : index
    %111 = vector.load %arg8[%c2_101, %c0_102, %c0_103] : memref<4x2x8xf32, #tpu.memory_space<vmem>>, vector<1x2x8xf32>
    %112 = vector.shape_cast %111 : vector<1x2x8xf32> to vector<2x8xf32>
    %113 = vector.broadcast %98 : vector<2x1xf32> to vector<2x8xf32>
    %114 = arith.mulf %113, %112 : vector<2x8xf32>
    %cst_104 = arith.constant dense<0.000000e+00> : vector<2x8xf32>
    %115 = tpu.matmul %101, %90, %cst_104 {dimension_numbers = #tpu.dot_dimension_numbers<[1], [0], [0], [1], [0, 0, 1, 1], [], []>} : vector<2x2xf32>, vector<2x8xf32>, vector<2x8xf32> -> vector<2x8xf32>
    %116 = arith.addf %114, %115 : vector<2x8xf32>
    %c2_105 = arith.constant 2 : index
    %c0_106 = arith.constant 0 : index
    %c0_107 = arith.constant 0 : index
    %117 = vector.load %arg8[%c2_105, %c0_106, %c0_107] : memref<4x2x8xf32, #tpu.memory_space<vmem>>, vector<1x2x8xf32>
    %118 = vector.shape_cast %117 : vector<1x2x8xf32> to vector<2x8xf32>
    %119 = vector.shape_cast %116 : vector<2x8xf32> to vector<1x2x8xf32>
    tpu.vector_store %arg8[%c2_105, %c0_106, %c0_107], %119 {strides = array<i32>} : memref<4x2x8xf32, #tpu.memory_space<vmem>>, vector<1x2x8xf32>,
    %c2_108 = arith.constant 2 : index
    %c0_109 = arith.constant 0 : index
    %c0_110 = arith.constant 0 : index
    %120 = vector.load %arg6[%c2_108, %c0_109, %c0_110] : memref<4x2x1xf32, #tpu.memory_space<vmem>>, vector<1x2x1xf32>
    %121 = vector.shape_cast %120 : vector<1x2x1xf32> to vector<2x1xf32>
    %122 = vector.shape_cast %96 : vector<2x1xf32> to vector<1x2x1xf32>
    tpu.vector_store %arg6[%c2_108, %c0_109, %c0_110], %122 {strides = array<i32>} : memref<4x2x1xf32, #tpu.memory_space<vmem>>, vector<1x2x1xf32>,
    %c0_111 = arith.constant 0 : index
    %c0_112 = arith.constant 0 : index
    %c0_113 = arith.constant 0 : index
    %c3 = arith.constant 3 : index
    %c0_114 = arith.constant 0 : index
    %123 = vector.load %arg2[%c0_111, %c0_112, %c0_113, %c3, %c0_114] : memref<2x1x1x4x8xf32, #tpu.memory_space<vmem>>, vector<2x1x1x1x8xf32>
    %124 = vector.shape_cast %123 : vector<2x1x1x1x8xf32> to vector<2x8xf32>
    %cst_115 = arith.constant 0.353553385 : f32
    %125 = vector.broadcast %cst_115 : f32 to vector<2x8xf32>
    %126 = arith.mulf %124, %125 : vector<2x8xf32>
    %c0_116 = arith.constant 0 : index
    %c0_117 = arith.constant 0 : index
    %c0_118 = arith.constant 0 : index
    %c3_119 = arith.constant 3 : index
    %c0_120 = arith.constant 0 : index
    %127 = vector.load %arg3[%c0_116, %c0_117, %c0_118, %c3_119, %c0_120] : memref<2x1x1x4x8xf32, #tpu.memory_space<vmem>>, vector<2x1x1x1x8xf32>
    %128 = vector.shape_cast %127 : vector<2x1x1x1x8xf32> to vector<2x8xf32>
    %c0_121 = arith.constant 0 : index
    %c0_122 = arith.constant 0 : index
    %c0_123 = arith.constant 0 : index
    %c3_124 = arith.constant 3 : index
    %c0_125 = arith.constant 0 : index
    %129 = vector.load %arg4[%c0_121, %c0_122, %c0_123, %c3_124, %c0_125] : memref<2x1x1x4x8xf32, #tpu.memory_space<vmem>>, vector<2x1x1x1x8xf32>
    %130 = vector.shape_cast %129 : vector<2x1x1x1x8xf32> to vector<2x8xf32>
    %cst_126 = arith.constant dense<0.000000e+00> : vector<2x2xf32>
    %131 = tpu.matmul %126, %128, %cst_126 {dimension_numbers = #tpu.dot_dimension_numbers<[1], [1], [0], [0], [0, 0, 1, 0], [], []>} : vector<2x8xf32>, vector<2x8xf32>, vector<2x2xf32> -> vector<2x2xf32>
    %c3_127 = arith.constant 3 : index
    %c0_128 = arith.constant 0 : index
    %c0_129 = arith.constant 0 : index
    %132 = vector.load %arg6[%c3_127, %c0_128, %c0_129] : memref<4x2x1xf32, #tpu.memory_space<vmem>>, vector<1x2x1xf32>
    %133 = vector.shape_cast %132 : vector<1x2x1xf32> to vector<2x1xf32>
    %cst_130 = arith.constant dense<0xFF800000> : vector<2xf32>
    %134 = vector.multi_reduction <maximumf>, %131, %cst_130 [1] : vector<2x2xf32> to vector<2xf32>
    %135 = vector.shape_cast %134 : vector<2xf32> to vector<2x1xf32>
    %136 = arith.maximumf %133, %135 : vector<2x1xf32>
    %137 = arith.subf %133, %136 : vector<2x1xf32>
    %138 = math.exp %137 : vector<2x1xf32>
    %139 = vector.broadcast %136 : vector<2x1xf32> to vector<2x2xf32>
    %140 = arith.subf %131, %139 : vector<2x2xf32>
    %141 = math.exp %140 : vector<2x2xf32>
    %c3_131 = arith.constant 3 : index
    %c0_132 = arith.constant 0 : index
    %c0_133 = arith.constant 0 : index
    %142 = vector.load %arg7[%c3_131, %c0_132, %c0_133] : memref<4x2x1xf32, #tpu.memory_space<vmem>>, vector<1x2x1xf32>
    %143 = vector.shape_cast %142 : vector<1x2x1xf32> to vector<2x1xf32>
    %144 = arith.mulf %138, %143 : vector<2x1xf32>
    %cst_134 = arith.constant dense<0.000000e+00> : vector<2xf32>
    %145 = vector.multi_reduction <add>, %141, %cst_134 [1] : vector<2x2xf32> to vector<2xf32>
    %146 = vector.shape_cast %145 : vector<2xf32> to vector<2x1xf32>
    %147 = arith.addf %144, %146 : vector<2x1xf32>
    %c3_135 = arith.constant 3 : index
    %c0_136 = arith.constant 0 : index
    %c0_137 = arith.constant 0 : index
    %148 = vector.load %arg7[%c3_135, %c0_136, %c0_137] : memref<4x2x1xf32, #tpu.memory_space<vmem>>, vector<1x2x1xf32>
    %149 = vector.shape_cast %148 : vector<1x2x1xf32> to vector<2x1xf32>
    %150 = vector.shape_cast %147 : vector<2x1xf32> to vector<1x2x1xf32>
    tpu.vector_store %arg7[%c3_135, %c0_136, %c0_137], %150 {strides = array<i32>} : memref<4x2x1xf32, #tpu.memory_space<vmem>>, vector<1x2x1xf32>,
    %c3_138 = arith.constant 3 : index
    %c0_139 = arith.constant 0 : index
    %c0_140 = arith.constant 0 : index
    %151 = vector.load %arg8[%c3_138, %c0_139, %c0_140] : memref<4x2x8xf32, #tpu.memory_space<vmem>>, vector<1x2x8xf32>
    %152 = vector.shape_cast %151 : vector<1x2x8xf32> to vector<2x8xf32>
    %153 = vector.broadcast %138 : vector<2x1xf32> to vector<2x8xf32>
    %154 = arith.mulf %153, %152 : vector<2x8xf32>
    %cst_141 = arith.constant dense<0.000000e+00> : vector<2x8xf32>
    %155 = tpu.matmul %141, %130, %cst_141 {dimension_numbers = #tpu.dot_dimension_numbers<[1], [0], [0], [1], [0, 0, 1, 1], [], []>} : vector<2x2xf32>, vector<2x8xf32>, vector<2x8xf32> -> vector<2x8xf32>
    %156 = arith.addf %154, %155 : vector<2x8xf32>
    %c3_142 = arith.constant 3 : index
    %c0_143 = arith.constant 0 : index
    %c0_144 = arith.constant 0 : index
    %157 = vector.load %arg8[%c3_142, %c0_143, %c0_144] : memref<4x2x8xf32, #tpu.memory_space<vmem>>, vector<1x2x8xf32>
    %158 = vector.shape_cast %157 : vector<1x2x8xf32> to vector<2x8xf32>
    %159 = vector.shape_cast %156 : vector<2x8xf32> to vector<1x2x8xf32>
    tpu.vector_store %arg8[%c3_142, %c0_143, %c0_144], %159 {strides = array<i32>} : memref<4x2x8xf32, #tpu.memory_space<vmem>>, vector<1x2x8xf32>,
    %c3_145 = arith.constant 3 : index
    %c0_146 = arith.constant 0 : index
    %c0_147 = arith.constant 0 : index
    %160 = vector.load %arg6[%c3_145, %c0_146, %c0_147] : memref<4x2x1xf32, #tpu.memory_space<vmem>>, vector<1x2x1xf32>
    %161 = vector.shape_cast %160 : vector<1x2x1xf32> to vector<2x1xf32>
    %162 = vector.shape_cast %136 : vector<2x1xf32> to vector<1x2x1xf32>
    tpu.vector_store %arg6[%c3_145, %c0_146, %c0_147], %162 {strides = array<i32>} : memref<4x2x1xf32, #tpu.memory_space<vmem>>, vector<1x2x1xf32>,
    %c0_i32_148 = arith.constant 0 : i32
    %163 = arith.cmpi eq, %arg1, %c0_i32_148 : i32
    %164 = arith.extui %163 : i1 to i32
    %c0_i32_149 = arith.constant 0 : i32
    %165 = arith.cmpi ne, %164, %c0_i32_149 : i32
    scf.if %165 {
      %c0_150 = arith.constant 0 : index
      %c0_151 = arith.constant 0 : index
      %c0_152 = arith.constant 0 : index
      %166 = vector.load %arg7[%c0_150, %c0_151, %c0_152] : memref<4x2x1xf32, #tpu.memory_space<vmem>>, vector<1x2x1xf32>
      %167 = vector.shape_cast %166 : vector<1x2x1xf32> to vector<2x1xf32>
      %168 = tpu.reciprocal %167 {approx = true} : vector<2x1xf32> -> vector<2x1xf32>
      %c0_153 = arith.constant 0 : index
      %c0_154 = arith.constant 0 : index
      %c0_155 = arith.constant 0 : index
      %169 = vector.load %arg8[%c0_153, %c0_154, %c0_155] : memref<4x2x8xf32, #tpu.memory_space<vmem>>, vector<1x2x8xf32>
      %170 = vector.shape_cast %169 : vector<1x2x8xf32> to vector<2x8xf32>
      %171 = vector.broadcast %168 : vector<2x1xf32> to vector<2x8xf32>
      %172 = arith.mulf %170, %171 : vector<2x8xf32>
      %c0_156 = arith.constant 0 : index
      %c0_157 = arith.constant 0 : index
      %c0_158 = arith.constant 0 : index
      %c0_159 = arith.constant 0 : index
      %173 = vector.load %arg5[%c0_156, %c0_157, %c0_158, %c0_159] : memref<2x1x4x8xf32, #tpu.memory_space<vmem>>, vector<2x1x1x8xf32>
      %174 = vector.shape_cast %173 : vector<2x1x1x8xf32> to vector<2x8xf32>
      %175 = vector.shape_cast %172 : vector<2x8xf32> to vector<2x1x1x8xf32>
      tpu.vector_store %arg5[%c0_156, %c0_157, %c0_158, %c0_159], %175 {strides = array<i32>} : memref<2x1x4x8xf32, #tpu.memory_space<vmem>>, vector<2x1x1x8xf32>,
      %c1_160 = arith.constant 1 : index
      %c0_161 = arith.constant 0 : index
      %c0_162 = arith.constant 0 : index
      %176 = vector.load %arg7[%c1_160, %c0_161, %c0_162] : memref<4x2x1xf32, #tpu.memory_space<vmem>>, vector<1x2x1xf32>
      %177 = vector.shape_cast %176 : vector<1x2x1xf32> to vector<2x1xf32>
      %178 = tpu.reciprocal %177 {approx = true} : vector<2x1xf32> -> vector<2x1xf32>
      %c1_163 = arith.constant 1 : index
      %c0_164 = arith.constant 0 : index
      %c0_165 = arith.constant 0 : index
      %179 = vector.load %arg8[%c1_163, %c0_164, %c0_165] : memref<4x2x8xf32, #tpu.memory_space<vmem>>, vector<1x2x8xf32>
      %180 = vector.shape_cast %179 : vector<1x2x8xf32> to vector<2x8xf32>
      %181 = vector.broadcast %178 : vector<2x1xf32> to vector<2x8xf32>
      %182 = arith.mulf %180, %181 : vector<2x8xf32>
      %c0_166 = arith.constant 0 : index
      %c0_167 = arith.constant 0 : index
      %c1_168 = arith.constant 1 : index
      %c0_169 = arith.constant 0 : index
      %183 = vector.load %arg5[%c0_166, %c0_167, %c1_168, %c0_169] : memref<2x1x4x8xf32, #tpu.memory_space<vmem>>, vector<2x1x1x8xf32>
      %184 = vector.shape_cast %183 : vector<2x1x1x8xf32> to vector<2x8xf32>
      %185 = vector.shape_cast %182 : vector<2x8xf32> to vector<2x1x1x8xf32>
      tpu.vector_store %arg5[%c0_166, %c0_167, %c1_168, %c0_169], %185 {strides = array<i32>} : memref<2x1x4x8xf32, #tpu.memory_space<vmem>>, vector<2x1x1x8xf32>,
      %c2_170 = arith.constant 2 : index
      %c0_171 = arith.constant 0 : index
      %c0_172 = arith.constant 0 : index
      %186 = vector.load %arg7[%c2_170, %c0_171, %c0_172] : memref<4x2x1xf32, #tpu.memory_space<vmem>>, vector<1x2x1xf32>
      %187 = vector.shape_cast %186 : vector<1x2x1xf32> to vector<2x1xf32>
      %188 = tpu.reciprocal %187 {approx = true} : vector<2x1xf32> -> vector<2x1xf32>
      %c2_173 = arith.constant 2 : index
      %c0_174 = arith.constant 0 : index
      %c0_175 = arith.constant 0 : index
      %189 = vector.load %arg8[%c2_173, %c0_174, %c0_175] : memref<4x2x8xf32, #tpu.memory_space<vmem>>, vector<1x2x8xf32>
      %190 = vector.shape_cast %189 : vector<1x2x8xf32> to vector<2x8xf32>
      %191 = vector.broadcast %188 : vector<2x1xf32> to vector<2x8xf32>
      %192 = arith.mulf %190, %191 : vector<2x8xf32>
      %c0_176 = arith.constant 0 : index
      %c0_177 = arith.constant 0 : index
      %c2_178 = arith.constant 2 : index
      %c0_179 = arith.constant 0 : index
      %193 = vector.load %arg5[%c0_176, %c0_177, %c2_178, %c0_179] : memref<2x1x4x8xf32, #tpu.memory_space<vmem>>, vector<2x1x1x8xf32>
      %194 = vector.shape_cast %193 : vector<2x1x1x8xf32> to vector<2x8xf32>
      %195 = vector.shape_cast %192 : vector<2x8xf32> to vector<2x1x1x8xf32>
      tpu.vector_store %arg5[%c0_176, %c0_177, %c2_178, %c0_179], %195 {strides = array<i32>} : memref<2x1x4x8xf32, #tpu.memory_space<vmem>>, vector<2x1x1x8xf32>,
      %c3_180 = arith.constant 3 : index
      %c0_181 = arith.constant 0 : index
      %c0_182 = arith.constant 0 : index
      %196 = vector.load %arg7[%c3_180, %c0_181, %c0_182] : memref<4x2x1xf32, #tpu.memory_space<vmem>>, vector<1x2x1xf32>
      %197 = vector.shape_cast %196 : vector<1x2x1xf32> to vector<2x1xf32>
      %198 = tpu.reciprocal %197 {approx = true} : vector<2x1xf32> -> vector<2x1xf32>
      %c3_183 = arith.constant 3 : index
      %c0_184 = arith.constant 0 : index
      %c0_185 = arith.constant 0 : index
      %199 = vector.load %arg8[%c3_183, %c0_184, %c0_185] : memref<4x2x8xf32, #tpu.memory_space<vmem>>, vector<1x2x8xf32>
      %200 = vector.shape_cast %199 : vector<1x2x8xf32> to vector<2x8xf32>
      %201 = vector.broadcast %198 : vector<2x1xf32> to vector<2x8xf32>
      %202 = arith.mulf %200, %201 : vector<2x8xf32>
      %c0_186 = arith.constant 0 : index
      %c0_187 = arith.constant 0 : index
      %c3_188 = arith.constant 3 : index
      %c0_189 = arith.constant 0 : index
      %203 = vector.load %arg5[%c0_186, %c0_187, %c3_188, %c0_189] : memref<2x1x4x8xf32, #tpu.memory_space<vmem>>, vector<2x1x1x8xf32>
      %204 = vector.shape_cast %203 : vector<2x1x1x8xf32> to vector<2x8xf32>
      %205 = vector.shape_cast %202 : vector<2x8xf32> to vector<2x1x1x8xf32>
      tpu.vector_store %arg5[%c0_186, %c0_187, %c3_188, %c0_189], %205 {strides = array<i32>} : memref<2x1x4x8xf32, #tpu.memory_space<vmem>>, vector<2x1x1x8xf32>,
    } else {
    }
    return
  }
  func.func @transform_0(%arg0: i32, %arg1: i32) -> (i32, i32, i32, i32, i32) {
    %c0_i32 = arith.constant 0 : i32
    %c0_i32_0 = arith.constant 0 : i32
    %c0_i32_1 = arith.constant 0 : i32
    %c0_i32_2 = arith.constant 0 : i32
    %c0_i32_3 = arith.constant 0 : i32
    return %c0_i32, %arg0, %c0_i32_0, %c0_i32_1, %c0_i32_2 : i32, i32, i32, i32, i32
  }
  func.func @transform_1(%arg0: i32, %arg1: i32) -> (i32, i32, i32, i32, i32) {
    %c0_i32 = arith.constant 0 : i32
    %c0_i32_0 = arith.constant 0 : i32
    %c0_i32_1 = arith.constant 0 : i32
    %c0_i32_2 = arith.constant 0 : i32
    return %arg1, %arg0, %c0_i32, %c0_i32_0, %c0_i32_1 : i32, i32, i32, i32, i32
  }
  func.func @transform_2(%arg0: i32, %arg1: i32) -> (i32, i32, i32, i32, i32) {
    %c1_i32 = arith.constant 1 : i32
    %c0_i32 = arith.constant 0 : i32
    %c0_i32_0 = arith.constant 0 : i32
    %c0_i32_1 = arith.constant 0 : i32
    return %arg1, %arg0, %c1_i32, %c0_i32, %c0_i32_0 : i32, i32, i32, i32, i32
  }
  func.func @transform_3(%arg0: i32, %arg1: i32) -> (i32, i32, i32, i32) {
    %c0_i32 = arith.constant 0 : i32
    %c0_i32_0 = arith.constant 0 : i32
    %c0_i32_1 = arith.constant 0 : i32
    %c0_i32_2 = arith.constant 0 : i32
    return %c0_i32, %arg0, %c0_i32_0, %c0_i32_1 : i32, i32, i32, i32
  }
}

module attributes {stable_mosaic.version = 11 : i64} {
  func.func @_linear_kernel(%arg0: i32, %arg1: i32, %arg2: i32, %arg3: memref<8x32xf32, #tpu.memory_space<vmem>>, %arg4: memref<32x64xf32, #tpu.memory_space<vmem>>, %arg5: memref<1x64xf32, #tpu.memory_space<vmem>>, %arg6: memref<8x64xf32, #tpu.memory_space<vmem>>, %arg7: memref<8x64xf32, #tpu.memory_space<vmem>>) attributes {dimension_semantics = [#tpu.dimension_semantics<parallel>, #tpu.dimension_semantics<parallel>, #tpu.dimension_semantics<arbitrary>], iteration_bounds = array<i64: 2, 1, 1>, scalar_prefetch = 0 : i64, scratch_operands = 1 : i64, tpu.core_type = #tpu.core_type<tc>, window_params = [{transform_indices = @transform_0, window_bounds = array<i64: 8, 32>}, {transform_indices = @transform_1, window_bounds = array<i64: 32, 64>}, {transform_indices = @transform_2, window_bounds = array<i64: 1, 64>}, {transform_indices = @transform_3, window_bounds = array<i64: 8, 64>}]} {
    %c0_i32 = arith.constant 0 : i32
    %0 = arith.cmpi eq, %arg2, %c0_i32 : i32
    %1 = arith.extui %0 : i1 to i32
    %c0_i32_0 = arith.constant 0 : i32
    %2 = arith.cmpi ne, %1, %c0_i32_0 : i32
    scf.if %2 {
      %cst_10 = arith.constant 0.000000e+00 : f32
      %12 = vector.broadcast %cst_10 : f32 to vector<8x64xf32>
      %c0_11 = arith.constant 0 : index
      %c0_12 = arith.constant 0 : index
      %13 = vector.load %arg7[%c0_11, %c0_12] : memref<8x64xf32, #tpu.memory_space<vmem>>, vector<8x64xf32>
      tpu.vector_store %arg7[%c0_11, %c0_12], %12 {strides = array<i32>} : memref<8x64xf32, #tpu.memory_space<vmem>>, vector<8x64xf32>,
    } else {
    }
    %c0 = arith.constant 0 : index
    %c0_1 = arith.constant 0 : index
    %3 = vector.load %arg7[%c0, %c0_1] : memref<8x64xf32, #tpu.memory_space<vmem>>, vector<8x64xf32>
    %c0_2 = arith.constant 0 : index
    %c0_3 = arith.constant 0 : index
    %4 = vector.load %arg3[%c0_2, %c0_3] : memref<8x32xf32, #tpu.memory_space<vmem>>, vector<8x32xf32>
    %c0_4 = arith.constant 0 : index
    %c0_5 = arith.constant 0 : index
    %5 = vector.load %arg4[%c0_4, %c0_5] : memref<32x64xf32, #tpu.memory_space<vmem>>, vector<32x64xf32>
    %cst = arith.constant dense<0.000000e+00> : vector<8x64xf32>
    %6 = tpu.matmul %4, %5, %cst {dimension_numbers = #tpu.dot_dimension_numbers<[1], [0], [0], [1], [0, 0, 1, 1], [], []>} : vector<8x32xf32>, vector<32x64xf32>, vector<8x64xf32> -> vector<8x64xf32>
    %7 = arith.addf %3, %6 : vector<8x64xf32>
    %c0_6 = arith.constant 0 : index
    %c0_7 = arith.constant 0 : index
    %8 = vector.load %arg7[%c0_6, %c0_7] : memref<8x64xf32, #tpu.memory_space<vmem>>, vector<8x64xf32>
    tpu.vector_store %arg7[%c0_6, %c0_7], %7 {strides = array<i32>} : memref<8x64xf32, #tpu.memory_space<vmem>>, vector<8x64xf32>,
    %c0_i32_8 = arith.constant 0 : i32
    %9 = arith.cmpi eq, %arg2, %c0_i32_8 : i32
    %10 = arith.extui %9 : i1 to i32
    %c0_i32_9 = arith.constant 0 : i32
    %11 = arith.cmpi ne, %10, %c0_i32_9 : i32
    scf.if %11 {
      %c0_10 = arith.constant 0 : index
      %c0_11 = arith.constant 0 : index
      %12 = vector.load %arg7[%c0_10, %c0_11] : memref<8x64xf32, #tpu.memory_space<vmem>>, vector<8x64xf32>
      %c0_12 = arith.constant 0 : index
      %c0_13 = arith.constant 0 : index
      %13 = vector.load %arg5[%c0_12, %c0_13] : memref<1x64xf32, #tpu.memory_space<vmem>>, vector<1x64xf32>
      %14 = vector.broadcast %13 : vector<1x64xf32> to vector<8x64xf32>
      %15 = arith.addf %12, %14 : vector<8x64xf32>
      %cst_14 = arith.constant 0.000000e+00 : f32
      %16 = vector.broadcast %cst_14 : f32 to vector<8x64xf32>
      %17 = arith.maximumf %15, %16 : vector<8x64xf32>
      %c0_15 = arith.constant 0 : index
      %c0_16 = arith.constant 0 : index
      %18 = vector.load %arg6[%c0_15, %c0_16] : memref<8x64xf32, #tpu.memory_space<vmem>>, vector<8x64xf32>
      tpu.vector_store %arg6[%c0_15, %c0_16], %17 {strides = array<i32>} : memref<8x64xf32, #tpu.memory_space<vmem>>, vector<8x64xf32>,
    } else {
    }
    return
  }
  func.func @transform_0(%arg0: i32, %arg1: i32, %arg2: i32) -> (i32, i32) {
    %c0_i32 = arith.constant 0 : i32
    return %arg0, %arg2 : i32, i32
  }
  func.func @transform_1(%arg0: i32, %arg1: i32, %arg2: i32) -> (i32, i32) {
    %c0_i32 = arith.constant 0 : i32
    return %arg2, %arg1 : i32, i32
  }
  func.func @transform_2(%arg0: i32, %arg1: i32, %arg2: i32) -> (i32, i32) {
    %c0_i32 = arith.constant 0 : i32
    %c0_i32_0 = arith.constant 0 : i32
    return %c0_i32, %arg1 : i32, i32
  }
  func.func @transform_3(%arg0: i32, %arg1: i32, %arg2: i32) -> (i32, i32) {
    %c0_i32 = arith.constant 0 : i32
    return %arg0, %arg1 : i32, i32
  }
}

module attributes {stable_mosaic.version = 11 : i64} {
  func.func @_linear_ln_kernel(%arg0: i32, %arg1: i32, %arg2: memref<8x64xf32, #tpu.memory_space<vmem>>, %arg3: memref<64x32xf32, #tpu.memory_space<vmem>>, %arg4: memref<1x32xf32, #tpu.memory_space<vmem>>, %arg5: memref<8x32xf32, #tpu.memory_space<vmem>>, %arg6: memref<1x32xf32, #tpu.memory_space<vmem>>, %arg7: memref<1x32xf32, #tpu.memory_space<vmem>>, %arg8: memref<8x32xf32, #tpu.memory_space<vmem>>, %arg9: memref<8x32xf32, #tpu.memory_space<vmem>>) attributes {dimension_semantics = [#tpu.dimension_semantics<parallel>, #tpu.dimension_semantics<arbitrary>], iteration_bounds = array<i64: 2, 1>, scalar_prefetch = 0 : i64, scratch_operands = 1 : i64, tpu.core_type = #tpu.core_type<tc>, window_params = [{transform_indices = @transform_0, window_bounds = array<i64: 8, 64>}, {transform_indices = @transform_1, window_bounds = array<i64: 64, 32>}, {pipeline_mode = #tpu.pipeline_mode<synchronous>, transform_indices = @transform_2, window_bounds = array<i64: 1, 32>}, {transform_indices = @transform_3, window_bounds = array<i64: 8, 32>}, {pipeline_mode = #tpu.pipeline_mode<synchronous>, transform_indices = @transform_4, window_bounds = array<i64: 1, 32>}, {pipeline_mode = #tpu.pipeline_mode<synchronous>, transform_indices = @transform_5, window_bounds = array<i64: 1, 32>}, {transform_indices = @transform_6, window_bounds = array<i64: 8, 32>}]} {
    %c0_i32 = arith.constant 0 : i32
    %0 = arith.cmpi eq, %arg1, %c0_i32 : i32
    %1 = arith.extui %0 : i1 to i32
    %c0_i32_0 = arith.constant 0 : i32
    %2 = arith.cmpi ne, %1, %c0_i32_0 : i32
    scf.if %2 {
      %cst_10 = arith.constant 0.000000e+00 : f32
      %12 = vector.broadcast %cst_10 : f32 to vector<8x32xf32>
      %c0_11 = arith.constant 0 : index
      %c0_12 = arith.constant 0 : index
      %13 = vector.load %arg9[%c0_11, %c0_12] : memref<8x32xf32, #tpu.memory_space<vmem>>, vector<8x32xf32>
      tpu.vector_store %arg9[%c0_11, %c0_12], %12 {strides = array<i32>} : memref<8x32xf32, #tpu.memory_space<vmem>>, vector<8x32xf32>,
    } else {
    }
    %c0 = arith.constant 0 : index
    %c0_1 = arith.constant 0 : index
    %3 = vector.load %arg9[%c0, %c0_1] : memref<8x32xf32, #tpu.memory_space<vmem>>, vector<8x32xf32>
    %c0_2 = arith.constant 0 : index
    %c0_3 = arith.constant 0 : index
    %4 = vector.load %arg2[%c0_2, %c0_3] : memref<8x64xf32, #tpu.memory_space<vmem>>, vector<8x64xf32>
    %c0_4 = arith.constant 0 : index
    %c0_5 = arith.constant 0 : index
    %5 = vector.load %arg3[%c0_4, %c0_5] : memref<64x32xf32, #tpu.memory_space<vmem>>, vector<64x32xf32>
    %cst = arith.constant dense<0.000000e+00> : vector<8x32xf32>
    %6 = tpu.matmul %4, %5, %cst {dimension_numbers = #tpu.dot_dimension_numbers<[1], [0], [0], [1], [0, 0, 1, 1], [], []>} : vector<8x64xf32>, vector<64x32xf32>, vector<8x32xf32> -> vector<8x32xf32>
    %7 = arith.addf %3, %6 : vector<8x32xf32>
    %c0_6 = arith.constant 0 : index
    %c0_7 = arith.constant 0 : index
    %8 = vector.load %arg9[%c0_6, %c0_7] : memref<8x32xf32, #tpu.memory_space<vmem>>, vector<8x32xf32>
    tpu.vector_store %arg9[%c0_6, %c0_7], %7 {strides = array<i32>} : memref<8x32xf32, #tpu.memory_space<vmem>>, vector<8x32xf32>,
    %c0_i32_8 = arith.constant 0 : i32
    %9 = arith.cmpi eq, %arg1, %c0_i32_8 : i32
    %10 = arith.extui %9 : i1 to i32
    %c0_i32_9 = arith.constant 0 : i32
    %11 = arith.cmpi ne, %10, %c0_i32_9 : i32
    scf.if %11 {
      %c0_10 = arith.constant 0 : index
      %c0_11 = arith.constant 0 : index
      %12 = vector.load %arg9[%c0_10, %c0_11] : memref<8x32xf32, #tpu.memory_space<vmem>>, vector<8x32xf32>
      %c0_12 = arith.constant 0 : index
      %c0_13 = arith.constant 0 : index
      %13 = vector.load %arg4[%c0_12, %c0_13] : memref<1x32xf32, #tpu.memory_space<vmem>>, vector<1x32xf32>
      %14 = vector.broadcast %13 : vector<1x32xf32> to vector<8x32xf32>
      %15 = arith.addf %12, %14 : vector<8x32xf32>
      %c0_14 = arith.constant 0 : index
      %c0_15 = arith.constant 0 : index
      %16 = vector.load %arg5[%c0_14, %c0_15] : memref<8x32xf32, #tpu.memory_space<vmem>>, vector<8x32xf32>
      %17 = arith.addf %15, %16 : vector<8x32xf32>
      %cst_16 = arith.constant dense<0.000000e+00> : vector<8xf32>
      %18 = vector.multi_reduction <add>, %17, %cst_16 [1] : vector<8x32xf32> to vector<8xf32>
      %19 = vector.shape_cast %18 : vector<8xf32> to vector<8x1xf32>
      %cst_17 = arith.constant 3.200000e+01 : f32
      %20 = vector.broadcast %cst_17 : f32 to vector<8x1xf32>
      %21 = arith.divf %19, %20 : vector<8x1xf32>
      %22 = vector.broadcast %21 : vector<8x1xf32> to vector<8x32xf32>
      %23 = arith.subf %17, %22 : vector<8x32xf32>
      %24 = arith.mulf %23, %23 : vector<8x32xf32>
      %cst_18 = arith.constant dense<0.000000e+00> : vector<8xf32>
      %25 = vector.multi_reduction <add>, %24, %cst_18 [1] : vector<8x32xf32> to vector<8xf32>
      %26 = vector.shape_cast %25 : vector<8xf32> to vector<8x1xf32>
      %cst_19 = arith.constant 3.200000e+01 : f32
      %27 = vector.broadcast %cst_19 : f32 to vector<8x1xf32>
      %28 = arith.divf %26, %27 : vector<8x1xf32>
      %cst_20 = arith.constant 9.99999974E-6 : f32
      %29 = vector.broadcast %cst_20 : f32 to vector<8x1xf32>
      %30 = arith.addf %28, %29 : vector<8x1xf32>
      %31 = math.rsqrt %30 : vector<8x1xf32>
      %32 = vector.broadcast %31 : vector<8x1xf32> to vector<8x32xf32>
      %33 = arith.mulf %23, %32 : vector<8x32xf32>
      %c0_21 = arith.constant 0 : index
      %c0_22 = arith.constant 0 : index
      %34 = vector.load %arg6[%c0_21, %c0_22] : memref<1x32xf32, #tpu.memory_space<vmem>>, vector<1x32xf32>
      %35 = vector.broadcast %34 : vector<1x32xf32> to vector<8x32xf32>
      %36 = arith.mulf %33, %35 : vector<8x32xf32>
      %c0_23 = arith.constant 0 : index
      %c0_24 = arith.constant 0 : index
      %37 = vector.load %arg7[%c0_23, %c0_24] : memref<1x32xf32, #tpu.memory_space<vmem>>, vector<1x32xf32>
      %38 = vector.broadcast %37 : vector<1x32xf32> to vector<8x32xf32>
      %39 = arith.addf %36, %38 : vector<8x32xf32>
      %c0_25 = arith.constant 0 : index
      %c0_26 = arith.constant 0 : index
      %40 = vector.load %arg8[%c0_25, %c0_26] : memref<8x32xf32, #tpu.memory_space<vmem>>, vector<8x32xf32>
      tpu.vector_store %arg8[%c0_25, %c0_26], %39 {strides = array<i32>} : memref<8x32xf32, #tpu.memory_space<vmem>>, vector<8x32xf32>,
    } else {
    }
    return
  }
  func.func @transform_0(%arg0: i32, %arg1: i32) -> (i32, i32) {
    %c0_i32 = arith.constant 0 : i32
    return %arg0, %arg1 : i32, i32
  }
  func.func @transform_1(%arg0: i32, %arg1: i32) -> (i32, i32) {
    %c0_i32 = arith.constant 0 : i32
    %c0_i32_0 = arith.constant 0 : i32
    return %arg1, %c0_i32 : i32, i32
  }
  func.func @transform_2(%arg0: i32, %arg1: i32) -> (i32, i32) {
    %c0_i32 = arith.constant 0 : i32
    %c0_i32_0 = arith.constant 0 : i32
    %c0_i32_1 = arith.constant 0 : i32
    return %c0_i32, %c0_i32_0 : i32, i32
  }
  func.func @transform_3(%arg0: i32, %arg1: i32) -> (i32, i32) {
    %c0_i32 = arith.constant 0 : i32
    %c0_i32_0 = arith.constant 0 : i32
    return %arg0, %c0_i32 : i32, i32
  }
  func.func @transform_4(%arg0: i32, %arg1: i32) -> (i32, i32) {
    %c0_i32 = arith.constant 0 : i32
    %c0_i32_0 = arith.constant 0 : i32
    %c0_i32_1 = arith.constant 0 : i32
    return %c0_i32, %c0_i32_0 : i32, i32
  }
  func.func @transform_5(%arg0: i32, %arg1: i32) -> (i32, i32) {
    %c0_i32 = arith.constant 0 : i32
    %c0_i32_0 = arith.constant 0 : i32
    %c0_i32_1 = arith.constant 0 : i32
    return %c0_i32, %c0_i32_0 : i32, i32
  }
  func.func @transform_6(%arg0: i32, %arg1: i32) -> (i32, i32) {
    %c0_i32 = arith.constant 0 : i32
    %c0_i32_0 = arith.constant 0 : i32
    return %arg0, %c0_i32 : i32, i32
  }
}

module attributes {stable_mosaic.version = 11 : i64} {
  func.func @_linear_ln_kernel(%arg0: i32, %arg1: i32, %arg2: memref<8x64xf32, #tpu.memory_space<vmem>>, %arg3: memref<64x32xf32, #tpu.memory_space<vmem>>, %arg4: memref<1x32xf32, #tpu.memory_space<vmem>>, %arg5: memref<8x32xf32, #tpu.memory_space<vmem>>, %arg6: memref<1x32xf32, #tpu.memory_space<vmem>>, %arg7: memref<1x32xf32, #tpu.memory_space<vmem>>, %arg8: memref<8x32xf32, #tpu.memory_space<vmem>>, %arg9: memref<8x32xf32, #tpu.memory_space<vmem>>) attributes {dimension_semantics = [#tpu.dimension_semantics<parallel>, #tpu.dimension_semantics<arbitrary>], iteration_bounds = array<i64: 2, 1>, scalar_prefetch = 0 : i64, scratch_operands = 1 : i64, tpu.core_type = #tpu.core_type<tc>, window_params = [{transform_indices = @transform_0, window_bounds = array<i64: 8, 64>}, {transform_indices = @transform_1, window_bounds = array<i64: 64, 32>}, {pipeline_mode = #tpu.pipeline_mode<synchronous>, transform_indices = @transform_2, window_bounds = array<i64: 1, 32>}, {transform_indices = @transform_3, window_bounds = array<i64: 8, 32>}, {pipeline_mode = #tpu.pipeline_mode<synchronous>, transform_indices = @transform_4, window_bounds = array<i64: 1, 32>}, {pipeline_mode = #tpu.pipeline_mode<synchronous>, transform_indices = @transform_5, window_bounds = array<i64: 1, 32>}, {transform_indices = @transform_6, window_bounds = array<i64: 8, 32>}]} {
    %c0_i32 = arith.constant 0 : i32
    %0 = arith.cmpi eq, %arg1, %c0_i32 : i32
    %1 = arith.extui %0 : i1 to i32
    %c0_i32_0 = arith.constant 0 : i32
    %2 = arith.cmpi ne, %1, %c0_i32_0 : i32
    scf.if %2 {
      %cst_10 = arith.constant 0.000000e+00 : f32
      %12 = vector.broadcast %cst_10 : f32 to vector<8x32xf32>
      %c0_11 = arith.constant 0 : index
      %c0_12 = arith.constant 0 : index
      %13 = vector.load %arg9[%c0_11, %c0_12] : memref<8x32xf32, #tpu.memory_space<vmem>>, vector<8x32xf32>
      tpu.vector_store %arg9[%c0_11, %c0_12], %12 {strides = array<i32>} : memref<8x32xf32, #tpu.memory_space<vmem>>, vector<8x32xf32>,
    } else {
    }
    %c0 = arith.constant 0 : index
    %c0_1 = arith.constant 0 : index
    %3 = vector.load %arg9[%c0, %c0_1] : memref<8x32xf32, #tpu.memory_space<vmem>>, vector<8x32xf32>
    %c0_2 = arith.constant 0 : index
    %c0_3 = arith.constant 0 : index
    %4 = vector.load %arg2[%c0_2, %c0_3] : memref<8x64xf32, #tpu.memory_space<vmem>>, vector<8x64xf32>
    %c0_4 = arith.constant 0 : index
    %c0_5 = arith.constant 0 : index
    %5 = vector.load %arg3[%c0_4, %c0_5] : memref<64x32xf32, #tpu.memory_space<vmem>>, vector<64x32xf32>
    %cst = arith.constant dense<0.000000e+00> : vector<8x32xf32>
    %6 = tpu.matmul %4, %5, %cst {dimension_numbers = #tpu.dot_dimension_numbers<[1], [0], [0], [1], [0, 0, 1, 1], [], []>} : vector<8x64xf32>, vector<64x32xf32>, vector<8x32xf32> -> vector<8x32xf32>
    %7 = arith.addf %3, %6 : vector<8x32xf32>
    %c0_6 = arith.constant 0 : index
    %c0_7 = arith.constant 0 : index
    %8 = vector.load %arg9[%c0_6, %c0_7] : memref<8x32xf32, #tpu.memory_space<vmem>>, vector<8x32xf32>
    tpu.vector_store %arg9[%c0_6, %c0_7], %7 {strides = array<i32>} : memref<8x32xf32, #tpu.memory_space<vmem>>, vector<8x32xf32>,
    %c0_i32_8 = arith.constant 0 : i32
    %9 = arith.cmpi eq, %arg1, %c0_i32_8 : i32
    %10 = arith.extui %9 : i1 to i32
    %c0_i32_9 = arith.constant 0 : i32
    %11 = arith.cmpi ne, %10, %c0_i32_9 : i32
    scf.if %11 {
      %c0_10 = arith.constant 0 : index
      %c0_11 = arith.constant 0 : index
      %12 = vector.load %arg9[%c0_10, %c0_11] : memref<8x32xf32, #tpu.memory_space<vmem>>, vector<8x32xf32>
      %c0_12 = arith.constant 0 : index
      %c0_13 = arith.constant 0 : index
      %13 = vector.load %arg4[%c0_12, %c0_13] : memref<1x32xf32, #tpu.memory_space<vmem>>, vector<1x32xf32>
      %14 = vector.broadcast %13 : vector<1x32xf32> to vector<8x32xf32>
      %15 = arith.addf %12, %14 : vector<8x32xf32>
      %c0_14 = arith.constant 0 : index
      %c0_15 = arith.constant 0 : index
      %16 = vector.load %arg5[%c0_14, %c0_15] : memref<8x32xf32, #tpu.memory_space<vmem>>, vector<8x32xf32>
      %17 = arith.addf %15, %16 : vector<8x32xf32>
      %cst_16 = arith.constant dense<0.000000e+00> : vector<8xf32>
      %18 = vector.multi_reduction <add>, %17, %cst_16 [1] : vector<8x32xf32> to vector<8xf32>
      %19 = vector.shape_cast %18 : vector<8xf32> to vector<8x1xf32>
      %cst_17 = arith.constant 3.200000e+01 : f32
      %20 = vector.broadcast %cst_17 : f32 to vector<8x1xf32>
      %21 = arith.divf %19, %20 : vector<8x1xf32>
      %22 = vector.broadcast %21 : vector<8x1xf32> to vector<8x32xf32>
      %23 = arith.subf %17, %22 : vector<8x32xf32>
      %24 = arith.mulf %23, %23 : vector<8x32xf32>
      %cst_18 = arith.constant dense<0.000000e+00> : vector<8xf32>
      %25 = vector.multi_reduction <add>, %24, %cst_18 [1] : vector<8x32xf32> to vector<8xf32>
      %26 = vector.shape_cast %25 : vector<8xf32> to vector<8x1xf32>
      %cst_19 = arith.constant 3.200000e+01 : f32
      %27 = vector.broadcast %cst_19 : f32 to vector<8x1xf32>
      %28 = arith.divf %26, %27 : vector<8x1xf32>
      %cst_20 = arith.constant 9.99999974E-6 : f32
      %29 = vector.broadcast %cst_20 : f32 to vector<8x1xf32>
      %30 = arith.addf %28, %29 : vector<8x1xf32>
      %31 = math.rsqrt %30 : vector<8x1xf32>
      %32 = vector.broadcast %31 : vector<8x1xf32> to vector<8x32xf32>
      %33 = arith.mulf %23, %32 : vector<8x32xf32>
      %c0_21 = arith.constant 0 : index
      %c0_22 = arith.constant 0 : index
      %34 = vector.load %arg6[%c0_21, %c0_22] : memref<1x32xf32, #tpu.memory_space<vmem>>, vector<1x32xf32>
      %35 = vector.broadcast %34 : vector<1x32xf32> to vector<8x32xf32>
      %36 = arith.mulf %33, %35 : vector<8x32xf32>
      %c0_23 = arith.constant 0 : index
      %c0_24 = arith.constant 0 : index
      %37 = vector.load %arg7[%c0_23, %c0_24] : memref<1x32xf32, #tpu.memory_space<vmem>>, vector<1x32xf32>
      %38 = vector.broadcast %37 : vector<1x32xf32> to vector<8x32xf32>
      %39 = arith.addf %36, %38 : vector<8x32xf32>
      %c0_25 = arith.constant 0 : index
      %c0_26 = arith.constant 0 : index
      %40 = vector.load %arg8[%c0_25, %c0_26] : memref<8x32xf32, #tpu.memory_space<vmem>>, vector<8x32xf32>
      tpu.vector_store %arg8[%c0_25, %c0_26], %39 {strides = array<i32>} : memref<8x32xf32, #tpu.memory_space<vmem>>, vector<8x32xf32>,
    } else {
    }
    return
  }
  func.func @transform_0(%arg0: i32, %arg1: i32) -> (i32, i32) {
    %c0_i32 = arith.constant 0 : i32
    return %arg0, %arg1 : i32, i32
  }
  func.func @transform_1(%arg0: i32, %arg1: i32) -> (i32, i32) {
    %c0_i32 = arith.constant 0 : i32
    %c0_i32_0 = arith.constant 0 : i32
    return %arg1, %c0_i32 : i32, i32
  }
  func.func @transform_2(%arg0: i32, %arg1: i32) -> (i32, i32) {
    %c0_i32 = arith.constant 0 : i32
    %c0_i32_0 = arith.constant 0 : i32
    %c0_i32_1 = arith.constant 0 : i32
    return %c0_i32, %c0_i32_0 : i32, i32
  }
  func.func @transform_3(%arg0: i32, %arg1: i32) -> (i32, i32) {
    %c0_i32 = arith.constant 0 : i32
    %c0_i32_0 = arith.constant 0 : i32
    return %arg0, %c0_i32 : i32, i32
  }
  func.func @transform_4(%arg0: i32, %arg1: i32) -> (i32, i32) {
    %c0_i32 = arith.constant 0 : i32
    %c0_i32_0 = arith.constant 0 : i32
    %c0_i32_1 = arith.constant 0 : i32
    return %c0_i32, %c0_i32_0 : i32, i32
  }
  func.func @transform_5(%arg0: i32, %arg1: i32) -> (i32, i32) {
    %c0_i32 = arith.constant 0 : i32
    %c0_i32_0 = arith.constant 0 : i32
    %c0_i32_1 = arith.constant 0 : i32
    return %c0_i32, %c0_i32_0 : i32, i32
  }
  func.func @transform_6(%arg0: i32, %arg1: i32) -> (i32, i32) {
    %c0_i32 = arith.constant 0 : i32
    %c0_i32_0 = arith.constant 0 : i32
    return %arg0, %c0_i32 : i32, i32
  }
}

</mosaic_0001>

<llo_original>
// kernel: decoder_forward.18
$region0: #{decoder_forward.18}
  #allocation0 [shape = 'u32[]', space=smem, size = 0x4, offset = 0x4, fixed_abs, tag = 'smem constant byte address 0x4 - core index']
  #allocation1 [shape = 'u32[72,128]{1,0:T(1,128)}', space=vmem, size = 0x9000, scoped, tag = 'internal scratch']
  #allocation2 [shape = 'f32[8,96]{1,0:T(8,128)}', space=vmem, size = 0x1000, scoped, tag = 'scratch operand']
  %s0 = inlined_call_operand.vmem [shape: f32[16,32], index: 0, kind: input, shape index: {}]
  %s1 = inlined_call_operand.vmem [shape: f32[32,96], index: 1, kind: input, shape index: {}]
  %s2 = inlined_call_operand.vmem [shape: f32[1,96], index: 2, kind: input, shape index: {}]
  %s3 = inlined_call_operand.vmem [shape: f32[16,96], index: 3, kind: output, shape index: {}]
  %s4 = sld [smem:[#allocation0]]
  $region53: #{decoder_forward.18} parent=0
    _
  %s6 = ssub.s32 1, %s4
  %s7 = scalar_select 0, %s6, %s4
  loop: start=0, step=1, limit=4
  $region2: #{decoder_forward.18} parent=0 // loop_pre_header
    _
  $region3: #{decoder_forward.18} parent=0 // loop_header
    %s9 = sphi 0, %s13
    %p10 = scmp.ge.s32.totalorder %s9, 4
    %s16 = sphi 0, %s35
    %s17 = sphi 0, %s31
    %s18 = sphi 0, %s27
    %s19 = sphi 0, %s16
    %s20 = sphi 0, %s17
    %s21 = sphi 0, %s18
    %s22 = sphi 0, %s19
    %s23 = sphi 0, %s20
    %s24 = sphi 0, %s21
    %s40 = sphi 0, %s42
    %s43 = sphi 0, %s40
    %s44 = sphi 0, %s43
    %s60 = sphi 0, %s44
    %s68 = sphi 0, %s70
    %s71 = sphi 0, %s68
    %s72 = sphi 0, %s71
    %s88 = sphi 0, %s72
    %s94 = sphi 0, %s96
    %s97 = sphi 0, %s94
    %s98 = sphi 0, %s97
    %s114 = sphi 0, %s98
    %s122 = sphi 0, %s124
    %s125 = sphi 0, %s122
    %s126 = sphi 0, %s125
    %s142 = sphi 0, %s126
  $region4: #{decoder_forward.18} parent=0 // loop_header_branch
    %12 = sbr.rel (%p10) target = $region8
  $region5: #{decoder_forward.18} parent=0 // loop_body
    %s14 = ssub.s32 %s9, 1
    %s15 = ssub.s32 %s9, 2
    %s25 = sadd.s32 1, %s18
    %p26 = scmp.ge.s32.totalorder %s25, 1
    %s27 = scalar_select %p26, 0, %s25
    %s28 = sadd.s32 1, %s17
    %s29 = scalar_select %p26, %s28, %s17
    %p30 = scmp.ge.s32.totalorder %s29, 1
    %s31 = scalar_select %p30, 0, %s29
    %s32 = sadd.s32 1, %s16
    %s33 = scalar_select %p30, %s32, %s16
    %p34 = scmp.ge.s32.totalorder %s33, 2
    %s35 = scalar_select %p34, 0, %s33
    %s36 = ssub.s32 %s16, %s35
    %s37 = ssub.s32 %s18, %s27
    %s38 = sor.u32 %s36, %s37
    %p39 = scmp.eq.s32.totalorder %s38, 0
    %s41 = sadd.s32 %s40, 1
    %s42 = scalar_select %p39, %s40, %s41
    %p45 = pneg %p39
    %p46 = scmp.eq.s32.totalorder %s9, 1
    %p47 = por %p45, %p46
    %p48 = scmp.ne.s32.totalorder %s40, %s43
    %p49 = scmp.eq.s32.totalorder %s9, 0
    %p50 = por %p48, %p49
    %p51 = scmp.ne.s32.totalorder %s40, %s43
    %p52 = scmp.eq.s32.totalorder %s14, 1
    %p53 = por %p51, %p52
    %p54 = scmp.ne.s32.totalorder %s43, %s44
    %p55 = scmp.eq.s32.totalorder %s14, 0
    %p56 = por %p54, %p55
    %p57 = scmp.ne.s32.totalorder %s43, %s44
    %p58 = scmp.eq.s32.totalorder %s15, 1
    %p59 = por %p57, %p58
    %p61 = scmp.ne.s32.totalorder %s44, %s60
    %p62 = scmp.eq.s32.totalorder %s15, 0
    %p63 = por %p61, %p62
    %s64 = ssub.s32 %s18, %s27
    %s65 = ssub.s32 %s17, %s31
    %s66 = sor.u32 %s64, %s65
    %p67 = scmp.eq.s32.totalorder %s66, 0
    %s69 = sadd.s32 %s68, 1
    %s70 = scalar_select %p67, %s68, %s69
    %p73 = pneg %p67
    %p74 = scmp.eq.s32.totalorder %s9, 1
    %p75 = por %p73, %p74
    %p76 = scmp.ne.s32.totalorder %s68, %s71
    %p77 = scmp.eq.s32.totalorder %s9, 0
    %p78 = por %p76, %p77
    %p79 = scmp.ne.s32.totalorder %s68, %s71
    %p80 = scmp.eq.s32.totalorder %s14, 1
    %p81 = por %p79, %p80
    %p82 = scmp.ne.s32.totalorder %s71, %s72
    %p83 = scmp.eq.s32.totalorder %s14, 0
    %p84 = por %p82, %p83
    %p85 = scmp.ne.s32.totalorder %s71, %s72
    %p86 = scmp.eq.s32.totalorder %s15, 1
    %p87 = por %p85, %p86
    %p89 = scmp.ne.s32.totalorder %s72, %s88
    %p90 = scmp.eq.s32.totalorder %s15, 0
    %p91 = por %p89, %p90
    %s92 = ssub.s32 %s17, %s31
    %p93 = scmp.eq.s32.totalorder %s92, 0
    %s95 = sadd.s32 %s94, 1
    %s96 = scalar_select %p93, %s94, %s95
    %p99 = pneg %p93
    %p100 = scmp.eq.s32.totalorder %s9, 1
    %p101 = por %p99, %p100
    %p102 = scmp.ne.s32.totalorder %s94, %s97
    %p103 = scmp.eq.s32.totalorder %s9, 0
    %p104 = por %p102, %p103
    %p105 = scmp.ne.s32.totalorder %s94, %s97
    %p106 = scmp.eq.s32.totalorder %s14, 1
    %p107 = por %p105, %p106
    %p108 = scmp.ne.s32.totalorder %s97, %s98
    %p109 = scmp.eq.s32.totalorder %s14, 0
    %p110 = por %p108, %p109
    %p111 = scmp.ne.s32.totalorder %s97, %s98
    %p112 = scmp.eq.s32.totalorder %s15, 1
    %p113 = por %p111, %p112
    %p115 = scmp.ne.s32.totalorder %s98, %s114
    %p116 = scmp.eq.s32.totalorder %s15, 0
    %p117 = por %p115, %p116
    %s118 = ssub.s32 %s16, %s35
    %s119 = ssub.s32 %s17, %s31
    %s120 = sor.u32 %s118, %s119
    %p121 = scmp.eq.s32.totalorder %s120, 0
    %s123 = sadd.s32 %s122, 1
    %s124 = scalar_select %p121, %s122, %s123
    %p127 = pneg %p121
    %p128 = scmp.eq.s32.totalorder %s9, 1
    %p129 = por %p127, %p128
    %p130 = scmp.ne.s32.totalorder %s122, %s125
    %p131 = scmp.eq.s32.totalorder %s9, 0
    %p132 = por %p130, %p131
    %p133 = scmp.ne.s32.totalorder %s122, %s125
    %p134 = scmp.eq.s32.totalorder %s14, 1
    %p135 = por %p133, %p134
    %p136 = scmp.ne.s32.totalorder %s125, %s126
    %p137 = scmp.eq.s32.totalorder %s14, 0
    %p138 = por %p136, %p137
    %p139 = scmp.ne.s32.totalorder %s125, %s126
    %p140 = scmp.eq.s32.totalorder %s15, 1
    %p141 = por %p139, %p140
    %p143 = scmp.ne.s32.totalorder %s126, %s142
    %p144 = scmp.eq.s32.totalorder %s15, 0
    %p145 = por %p143, %p144
    %p146 = scmp.le.s32.totalorder 1, %s9
    %p147 = scmp.lt.s32.totalorder %s9, 3
    %p148 = pnand %p146, %p147
    %p149 = pneg %p148
    // Predicated region
    $region9: #{decoder_forward.18} parent=5 // pred_check
      _
    $region10: #{decoder_forward.18} parent=5 // pred_check_branch
      %151 = sbr.rel (%p148) target = $region12
    $region11: #{decoder_forward.18} parent=5 // pred_region
      %s152 = ssub.s32 %s9, 1
      // Predicated region
      $region13: #{decoder_forward.18} parent=11 // pred_check
        %p153 = pneg %p84
      $region14: #{decoder_forward.18} parent=11 // pred_check_branch
        %155 = sbr.rel (%p153) target = $region16
      $region15: #{decoder_forward.18} parent=11 // pred_region
        %s156 = smul.u32 4, %s21
        %p157 = scmp.lt.s32.totalorder %s156, 3
        %s158 = scalar_select %p157, %s156, 3
        %p159 = scmp.lt.s32.totalorder %s20, 0
        %s160 = scalar_select %p159, %s20, 0
        %s161 = sadd.s32 %s160, %s158
        %s162 = smul.addr %s161, 8
        %s163 = scalar_lea.vmem %s1, %s162
        %s164 = smul.u32 4, %s21
      $region16: #{decoder_forward.18} parent=11 // pred_fallthru
        _
      // Predicated region
      $region17: #{decoder_forward.18} parent=11 // pred_check
        %p165 = pneg %p110
      $region18: #{decoder_forward.18} parent=11 // pred_check_branch
        %167 = sbr.rel (%p165) target = $region20
      $region19: #{decoder_forward.18} parent=11 // pred_region
        %p168 = scmp.lt.s32.totalorder %s20, 0
        %s169 = scalar_select %p168, %s20, 0
        %s170 = scalar_lea.vmem %s2, %s169
      $region20: #{decoder_forward.18} parent=11 // pred_fallthru
        _
    $region12: #{decoder_forward.18} parent=5 // pred_fallthru
      _
    %p171 = scmp.lt.s32.totalorder %s9, 2
    // Predicated region
    $region21: #{decoder_forward.18} parent=5 // pred_check
      %p172 = pneg %p171
    $region22: #{decoder_forward.18} parent=5 // pred_check_branch
      %174 = sbr.rel (%p172) target = $region24
    $region23: #{decoder_forward.18} parent=5 // pred_region
      // Predicated region
      $region25: #{decoder_forward.18} parent=23 // pred_check
        %p175 = pneg %p50
      $region26: #{decoder_forward.18} parent=23 // pred_check_branch
        %177 = sbr.rel (%p175) target = $region28
      $region27: #{decoder_forward.18} parent=23 // pred_region
        %p178 = scmp.lt.s32.totalorder %s16, 1
        %s179 = scalar_select %p178, %s16, 1
        %p180 = scmp.lt.s32.totalorder %s18, 0
        %s181 = scalar_select %p180, %s18, 0
        %s182 = sadd.s32 %s181, %s179
        %s183 = smul.addr %s182, 8
        %s184 = scalar_lea.vmem %s0, %s183
      $region28: #{decoder_forward.18} parent=23 // pred_fallthru
        _
    $region24: #{decoder_forward.18} parent=5 // pred_fallthru
      _
    %p185 = scmp.le.s32.totalorder 1, %s9
    %p186 = scmp.lt.s32.totalorder %s9, 3
    %p187 = pnand %p185, %p186
    %p188 = pneg %p187
    // Predicated region
    $region29: #{decoder_forward.18} parent=5 // pred_check
      _
    $region30: #{decoder_forward.18} parent=5 // pred_check_branch
      %190 = sbr.rel (%p187) target = $region32
    $region31: #{decoder_forward.18} parent=5 // pred_region
      %s191 = ssub.s32 %s9, 1
      %p192 = scmp.lt.s32.totalorder %s19, 1
      %s193 = scalar_select %p192, %s19, 1
      %p194 = scmp.lt.s32.totalorder %s21, 0
      %s195 = scalar_select %p194, %s21, 0
      %s196 = sadd.s32 %s195, %s193
      %s197 = smul.addr %s196, 8
      %s198 = scalar_lea.vmem %s0, %s197
      %p199 = pneg %p56
      %p200 = pneg %p53
      %s201 = smul.u32 4, %s21
      %p202 = scmp.lt.s32.totalorder %s201, 3
      %s203 = scalar_select %p202, %s201, 3
      %p204 = scmp.lt.s32.totalorder %s20, 0
      %s205 = scalar_select %p204, %s20, 0
      %s206 = sadd.s32 %s205, %s203
      %s207 = smul.addr %s206, 8
      %s208 = scalar_lea.vmem %s1, %s207
      %p209 = pneg %p84
      %p210 = pneg %p81
      %p211 = scmp.lt.s32.totalorder %s20, 0
      %s212 = scalar_select %p211, %s20, 0
      %s213 = scalar_lea.vmem %s2, %s212
      %p214 = pneg %p110
      %p215 = pneg %p107
      %p216 = pneg %p138
      %p217 = pneg %p135
      %p218 = scmp.lt.s32.totalorder %s19, 1
      %s219 = scalar_select %p218, %s19, 1
      %p220 = scmp.lt.s32.totalorder %s20, 0
      %s221 = scalar_select %p220, %s20, 0
      %s222 = sadd.s32 %s221, %s219
      %s223 = smul.addr %s222, 8
      %s224 = scalar_lea.vmem %s3, %s223
      %p225 = scmp.lt.s32.totalorder %s19, 1
      %s226 = scalar_select %p225, %s19, 1
      %p227 = scmp.lt.s32.totalorder %s21, 0
      %s228 = scalar_select %p227, %s21, 0
      %s229 = sadd.s32 %s228, %s226
      %s230 = smul.addr %s229, 8
      %s231 = scalar_lea.vmem %s0, %s230
      %s232 = smul.u32 4, %s21
      %p233 = scmp.lt.s32.totalorder %s232, 3
      %s234 = scalar_select %p233, %s232, 3
      %p235 = scmp.lt.s32.totalorder %s20, 0
      %s236 = scalar_select %p235, %s20, 0
      %s237 = sadd.s32 %s236, %s234
      %s238 = smul.addr %s237, 8
      %s239 = scalar_lea.vmem %s1, %s238
      %s240 = smul.u32 4, %s21
      %p241 = scmp.lt.s32.totalorder %s20, 0
      %s242 = scalar_select %p241, %s20, 0
      %s243 = scalar_lea.vmem %s2, %s242
      %p244 = scmp.lt.s32.totalorder %s19, 1
      %s245 = scalar_select %p244, %s19, 1
      %p246 = scmp.lt.s32.totalorder %s20, 0
      %s247 = scalar_select %p246, %s20, 0
      %s248 = sadd.s32 %s247, %s245
      %s249 = smul.addr %s248, 8
      %s250 = scalar_lea.vmem %s3, %s249
      %p251 = scmp.eq.s32.totalorder %s21, 0
      // Predicated region
      $region33: #{decoder_forward.18} parent=31 // pred_check
        %p252 = pneg %p251
      $region34: #{decoder_forward.18} parent=31 // pred_check_branch
        %254 = sbr.rel (%p252) target = $region36
      $region35: #{decoder_forward.18} parent=31 // pred_region
        %vm255 = vcmask 785408
        %256 = vst.msk [vmem:[#allocation2] sm:$0xff] %vm255, 0.0
      $region36: #{decoder_forward.18} parent=31 // pred_fallthru
        _
      %v257 = vld [vmem:[#allocation2] sm:$0xff]
      %v258 = vld [vmem:[%s231] sm:$0xff]
      %v259 = vld [vmem:[%s239] sm:$0xff]
      %v260 = vld [vmem:[%s239 + $0x8] sm:$0xff]
      %v261 = vld [vmem:[%s239 + $0x10] sm:$0xff]
      %v262 = vld [vmem:[%s239 + $0x18] sm:$0xff]
      %vm263 = vcmask 261120
      %v265 = vsel %vm263, %v258, 0
      %267 = vmatpush.msra.mxu0 0.0
      %268 = vmatpush.msra.mxu0 0.0
      %269 = vmatpush.msra.mxu0 0.0
      %270 = vmatpush.msra.mxu0 0.0
      %271 = vmatpush.msra.mxu0 0.0
      %272 = vmatpush.msra.mxu0 0.0
      %273 = vmatpush.msra.mxu0 0.0
      %274 = vmatpush.msra.mxu0 0.0
      %275 = vmatpush.msra.mxu0 0.0
      %276 = vmatpush.msra.mxu0 0.0
      %277 = vmatpush.msra.mxu0 0.0
      %278 = vmatpush.msra.mxu0 0.0
      %279 = vmatpush.msra.mxu0 %v262
      %280 = vmatpush.msra.mxu0 %v261
      %281 = vmatpush.msra.mxu0 %v260
      %282 = vmatpush.msra.mxu0 %v259
      %283 = vmatmul.f32.gmra.mxu0 %v265
      %v284 = vpop.f32.mrf.mxu0
      %v285 = vadd.f32 0.0, %v284
      %286 = vdwg.mxu0
      %v287 = vadd.f32 %v257, %v285
      %vm288 = vcmask 785408
      %289 = vst.msk [vmem:[#allocation2] sm:$0xff] %vm288, %v287
      // Predicated region
      $region37: #{decoder_forward.18} parent=31 // pred_check
        %p290 = pneg %p251
      $region38: #{decoder_forward.18} parent=31 // pred_check_branch
        %292 = sbr.rel (%p290) target = $region40
      $region39: #{decoder_forward.18} parent=31 // pred_region
        %v293 = vld [vmem:[#allocation2] sm:$0xff]
        %v294 = vld [vmem:[%s243] sm:$0x1]
        %v296 = vperm.slane %v294, 0
        %v298 = vadd.f32 %v293, %v296
        %299 = vst.msk [vmem:[%s250] sm:$0xff] %vm288, %v298
      $region40: #{decoder_forward.18} parent=31 // pred_fallthru
        _
      %p300 = scmp.lt.s32.totalorder %s19, 1
      %s301 = scalar_select %p300, %s19, 1
      %p302 = scmp.lt.s32.totalorder %s20, 0
      %s303 = scalar_select %p302, %s20, 0
      %s304 = sadd.s32 %s303, %s301
      %s305 = smul.addr %s304, 8
      %s306 = scalar_lea.vmem %s3, %s305
      // Predicated region
      $region41: #{decoder_forward.18} parent=31 // pred_check
        %p307 = pneg %p135
      $region42: #{decoder_forward.18} parent=31 // pred_check_branch
        %309 = sbr.rel (%p307) target = $region44
      $region43: #{decoder_forward.18} parent=31 // pred_region
        _
      $region44: #{decoder_forward.18} parent=31 // pred_fallthru
        _
    $region32: #{decoder_forward.18} parent=5 // pred_fallthru
      _
    %p310 = scmp.le.s32.totalorder 2, %s9
    // Predicated region
    $region45: #{decoder_forward.18} parent=5 // pred_check
      %p311 = pneg %p310
    $region46: #{decoder_forward.18} parent=5 // pred_check_branch
      %313 = sbr.rel (%p311) target = $region48
    $region47: #{decoder_forward.18} parent=5 // pred_region
      %s314 = ssub.s32 %s9, 2
      // Predicated region
      $region49: #{decoder_forward.18} parent=47 // pred_check
        %p315 = pneg %p141
      $region50: #{decoder_forward.18} parent=47 // pred_check_branch
        %317 = sbr.rel (%p315) target = $region52
      $region51: #{decoder_forward.18} parent=47 // pred_region
        %p318 = scmp.lt.s32.totalorder %s22, 1
        %s319 = scalar_select %p318, %s22, 1
        %p320 = scmp.lt.s32.totalorder %s23, 0
        %s321 = scalar_select %p320, %s23, 0
        %s322 = sadd.s32 %s321, %s319
        %s323 = smul.addr %s322, 8
        %s324 = scalar_lea.vmem %s3, %s323
      $region52: #{decoder_forward.18} parent=47 // pred_fallthru
        _
    $region48: #{decoder_forward.18} parent=5 // pred_fallthru
      _
  $region6: #{decoder_forward.18} parent=0 // loop_footer
    %s13 = sadd.s32 1, %s9
  $region7: #{decoder_forward.18} parent=0 // loop_footer_branch
    %8 = sbr.rel target = $region3
  $region8: #{decoder_forward.18} parent=0 // loop_exit
    _

// kernel: decoder_forward.20
$region0: #{decoder_forward.20}
  #allocation0 [shape = 'u32[]', space=smem, size = 0x4, offset = 0x4, fixed_abs, tag = 'smem constant byte address 0x4 - core index']
  #allocation1 [shape = 'u32[72,128]{1,0:T(1,128)}', space=vmem, size = 0x9000, scoped, tag = 'internal scratch']
  #allocation2 [shape = 'f32[8,32]{1,0:T(8,128)}', space=vmem, size = 0x1000, scoped, tag = 'scratch operand']
  %s0 = inlined_call_operand.vmem [shape: f32[16,32], index: 0, kind: input, shape index: {}]
  %s1 = inlined_call_operand.vmem [shape: f32[32,32], index: 1, kind: input, shape index: {}]
  %s2 = inlined_call_operand.vmem [shape: f32[1,32], index: 2, kind: input, shape index: {}]
  %s3 = inlined_call_operand.vmem [shape: f32[16,32], index: 3, kind: input, shape index: {}]
  %s4 = inlined_call_operand.vmem [shape: f32[1,32], index: 4, kind: input, shape index: {}]
  %s5 = inlined_call_operand.vmem [shape: f32[1,32], index: 5, kind: input, shape index: {}]
  %s6 = inlined_call_operand.vmem [shape: f32[16,32], index: 6, kind: output, shape index: {}]
  %s7 = sld [smem:[#allocation0]]
  $region65: #{decoder_forward.20} parent=0
    _
  %s9 = ssub.s32 1, %s7
  %s10 = scalar_select 0, %s9, %s7
  loop: start=0, step=1, limit=4
  $region2: #{decoder_forward.20} parent=0 // loop_pre_header
    _
  $region3: #{decoder_forward.20} parent=0 // loop_header
    %s12 = sphi 0, %s16
    %p13 = scmp.ge.s32.totalorder %s12, 4
    %s19 = sphi 0, %s31
    %s20 = sphi 0, %s27
    %s21 = sphi 0, %s19
    %s22 = sphi 0, %s20
    %s23 = sphi 0, %s21
    %s24 = sphi 0, %s22
    %s36 = sphi 0, %s38
    %s39 = sphi 0, %s36
    %s40 = sphi 0, %s39
    %s56 = sphi 0, %s40
    %s62 = sphi 0, %s64
    %s65 = sphi 0, %s62
    %s66 = sphi 0, %s65
    %s82 = sphi 0, %s66
    %s86 = sphi 0, %s86
    %s88 = sphi 0, %s86
    %s89 = sphi 0, %s88
    %s103 = sphi 0, %s89
    %s109 = sphi 0, %s111
    %s112 = sphi 0, %s109
    %s113 = sphi 0, %s112
    %s129 = sphi 0, %s113
    %s133 = sphi 0, %s133
    %s135 = sphi 0, %s133
    %s136 = sphi 0, %s135
    %s150 = sphi 0, %s136
    %s154 = sphi 0, %s154
    %s156 = sphi 0, %s154
    %s157 = sphi 0, %s156
    %s171 = sphi 0, %s157
    %s177 = sphi 0, %s179
    %s180 = sphi 0, %s177
    %s181 = sphi 0, %s180
    %s197 = sphi 0, %s181
  $region4: #{decoder_forward.20} parent=0 // loop_header_branch
    %15 = sbr.rel (%p13) target = $region8
  $region5: #{decoder_forward.20} parent=0 // loop_body
    %s17 = ssub.s32 %s12, 1
    %s18 = ssub.s32 %s12, 2
    %s25 = sadd.s32 1, %s20
    %p26 = scmp.ge.s32.totalorder %s25, 1
    %s27 = scalar_select %p26, 0, %s25
    %s28 = sadd.s32 1, %s19
    %s29 = scalar_select %p26, %s28, %s19
    %p30 = scmp.ge.s32.totalorder %s29, 2
    %s31 = scalar_select %p30, 0, %s29
    %s32 = ssub.s32 %s19, %s31
    %s33 = ssub.s32 %s20, %s27
    %s34 = sor.u32 %s32, %s33
    %p35 = scmp.eq.s32.totalorder %s34, 0
    %s37 = sadd.s32 %s36, 1
    %s38 = scalar_select %p35, %s36, %s37
    %p41 = pneg %p35
    %p42 = scmp.eq.s32.totalorder %s12, 1
    %p43 = por %p41, %p42
    %p44 = scmp.ne.s32.totalorder %s36, %s39
    %p45 = scmp.eq.s32.totalorder %s12, 0
    %p46 = por %p44, %p45
    %p47 = scmp.ne.s32.totalorder %s36, %s39
    %p48 = scmp.eq.s32.totalorder %s17, 1
    %p49 = por %p47, %p48
    %p50 = scmp.ne.s32.totalorder %s39, %s40
    %p51 = scmp.eq.s32.totalorder %s17, 0
    %p52 = por %p50, %p51
    %p53 = scmp.ne.s32.totalorder %s39, %s40
    %p54 = scmp.eq.s32.totalorder %s18, 1
    %p55 = por %p53, %p54
    %p57 = scmp.ne.s32.totalorder %s40, %s56
    %p58 = scmp.eq.s32.totalorder %s18, 0
    %p59 = por %p57, %p58
    %s60 = ssub.s32 %s20, %s27
    %p61 = scmp.eq.s32.totalorder %s60, 0
    %s63 = sadd.s32 %s62, 1
    %s64 = scalar_select %p61, %s62, %s63
    %p67 = pneg %p61
    %p68 = scmp.eq.s32.totalorder %s12, 1
    %p69 = por %p67, %p68
    %p70 = scmp.ne.s32.totalorder %s62, %s65
    %p71 = scmp.eq.s32.totalorder %s12, 0
    %p72 = por %p70, %p71
    %p73 = scmp.ne.s32.totalorder %s62, %s65
    %p74 = scmp.eq.s32.totalorder %s17, 1
    %p75 = por %p73, %p74
    %p76 = scmp.ne.s32.totalorder %s65, %s66
    %p77 = scmp.eq.s32.totalorder %s17, 0
    %p78 = por %p76, %p77
    %p79 = scmp.ne.s32.totalorder %s65, %s66
    %p80 = scmp.eq.s32.totalorder %s18, 1
    %p81 = por %p79, %p80
    %p83 = scmp.ne.s32.totalorder %s66, %s82
    %p84 = scmp.eq.s32.totalorder %s18, 0
    %p85 = por %p83, %p84
    %s87 = sadd.s32 %s86, 1
    %p90 = scmp.eq.s32.totalorder %s12, 1
    %p91 = scmp.ne.s32.totalorder %s86, %s88
    %p92 = scmp.eq.s32.totalorder %s12, 0
    %p93 = por %p91, %p92
    %p94 = scmp.ne.s32.totalorder %s86, %s88
    %p95 = scmp.eq.s32.totalorder %s17, 1
    %p96 = por %p94, %p95
    %p97 = scmp.ne.s32.totalorder %s88, %s89
    %p98 = scmp.eq.s32.totalorder %s17, 0
    %p99 = por %p97, %p98
    %p100 = scmp.ne.s32.totalorder %s88, %s89
    %p101 = scmp.eq.s32.totalorder %s18, 1
    %p102 = por %p100, %p101
    %p104 = scmp.ne.s32.totalorder %s89, %s103
    %p105 = scmp.eq.s32.totalorder %s18, 0
    %p106 = por %p104, %p105
    %s107 = ssub.s32 %s19, %s31
    %p108 = scmp.eq.s32.totalorder %s107, 0
    %s110 = sadd.s32 %s109, 1
    %s111 = scalar_select %p108, %s109, %s110
    %p114 = pneg %p108
    %p115 = scmp.eq.s32.totalorder %s12, 1
    %p116 = por %p114, %p115
    %p117 = scmp.ne.s32.totalorder %s109, %s112
    %p118 = scmp.eq.s32.totalorder %s12, 0
    %p119 = por %p117, %p118
    %p120 = scmp.ne.s32.totalorder %s109, %s112
    %p121 = scmp.eq.s32.totalorder %s17, 1
    %p122 = por %p120, %p121
    %p123 = scmp.ne.s32.totalorder %s112, %s113
    %p124 = scmp.eq.s32.totalorder %s17, 0
    %p125 = por %p123, %p124
    %p126 = scmp.ne.s32.totalorder %s112, %s113
    %p127 = scmp.eq.s32.totalorder %s18, 1
    %p128 = por %p126, %p127
    %p130 = scmp.ne.s32.totalorder %s113, %s129
    %p131 = scmp.eq.s32.totalorder %s18, 0
    %p132 = por %p130, %p131
    %s134 = sadd.s32 %s133, 1
    %p137 = scmp.eq.s32.totalorder %s12, 1
    %p138 = scmp.ne.s32.totalorder %s133, %s135
    %p139 = scmp.eq.s32.totalorder %s12, 0
    %p140 = por %p138, %p139
    %p141 = scmp.ne.s32.totalorder %s133, %s135
    %p142 = scmp.eq.s32.totalorder %s17, 1
    %p143 = por %p141, %p142
    %p144 = scmp.ne.s32.totalorder %s135, %s136
    %p145 = scmp.eq.s32.totalorder %s17, 0
    %p146 = por %p144, %p145
    %p147 = scmp.ne.s32.totalorder %s135, %s136
    %p148 = scmp.eq.s32.totalorder %s18, 1
    %p149 = por %p147, %p148
    %p151 = scmp.ne.s32.totalorder %s136, %s150
    %p152 = scmp.eq.s32.totalorder %s18, 0
    %p153 = por %p151, %p152
    %s155 = sadd.s32 %s154, 1
    %p158 = scmp.eq.s32.totalorder %s12, 1
    %p159 = scmp.ne.s32.totalorder %s154, %s156
    %p160 = scmp.eq.s32.totalorder %s12, 0
    %p161 = por %p159, %p160
    %p162 = scmp.ne.s32.totalorder %s154, %s156
    %p163 = scmp.eq.s32.totalorder %s17, 1
    %p164 = por %p162, %p163
    %p165 = scmp.ne.s32.totalorder %s156, %s157
    %p166 = scmp.eq.s32.totalorder %s17, 0
    %p167 = por %p165, %p166
    %p168 = scmp.ne.s32.totalorder %s156, %s157
    %p169 = scmp.eq.s32.totalorder %s18, 1
    %p170 = por %p168, %p169
    %p172 = scmp.ne.s32.totalorder %s157, %s171
    %p173 = scmp.eq.s32.totalorder %s18, 0
    %p174 = por %p172, %p173
    %s175 = ssub.s32 %s19, %s31
    %p176 = scmp.eq.s32.totalorder %s175, 0
    %s178 = sadd.s32 %s177, 1
    %s179 = scalar_select %p176, %s177, %s178
    %p182 = pneg %p176
    %p183 = scmp.eq.s32.totalorder %s12, 1
    %p184 = por %p182, %p183
    %p185 = scmp.ne.s32.totalorder %s177, %s180
    %p186 = scmp.eq.s32.totalorder %s12, 0
    %p187 = por %p185, %p186
    %p188 = scmp.ne.s32.totalorder %s177, %s180
    %p189 = scmp.eq.s32.totalorder %s17, 1
    %p190 = por %p188, %p189
    %p191 = scmp.ne.s32.totalorder %s180, %s181
    %p192 = scmp.eq.s32.totalorder %s17, 0
    %p193 = por %p191, %p192
    %p194 = scmp.ne.s32.totalorder %s180, %s181
    %p195 = scmp.eq.s32.totalorder %s18, 1
    %p196 = por %p194, %p195
    %p198 = scmp.ne.s32.totalorder %s181, %s197
    %p199 = scmp.eq.s32.totalorder %s18, 0
    %p200 = por %p198, %p199
    %p201 = scmp.le.s32.totalorder 1, %s12
    %p202 = scmp.lt.s32.totalorder %s12, 3
    %p203 = pnand %p201, %p202
    %p204 = pneg %p203
    // Predicated region
    $region9: #{decoder_forward.20} parent=5 // pred_check
      _
    $region10: #{decoder_forward.20} parent=5 // pred_check_branch
      %206 = sbr.rel (%p203) target = $region12
    $region11: #{decoder_forward.20} parent=5 // pred_region
      %s207 = ssub.s32 %s12, 1
      // Predicated region
      $region13: #{decoder_forward.20} parent=11 // pred_check
        %p208 = pneg %p78
      $region14: #{decoder_forward.20} parent=11 // pred_check_branch
        %210 = sbr.rel (%p208) target = $region16
      $region15: #{decoder_forward.20} parent=11 // pred_region
        %s211 = smul.u32 4, %s22
        %p212 = scmp.lt.s32.totalorder %s211, 3
        %s213 = scalar_select %p212, %s211, 3
        %s214 = smul.addr %s213, 8
        %s215 = scalar_lea.vmem %s1, %s214
        %s216 = smul.u32 4, %s22
      $region16: #{decoder_forward.20} parent=11 // pred_fallthru
        _
      // Predicated region
      $region17: #{decoder_forward.20} parent=11 // pred_check
        %p217 = pneg %p99
      $region18: #{decoder_forward.20} parent=11 // pred_check_branch
        %219 = sbr.rel (%p217) target = $region20
      $region19: #{decoder_forward.20} parent=11 // pred_region
        _
      $region20: #{decoder_forward.20} parent=11 // pred_fallthru
        _
      // Predicated region
      $region21: #{decoder_forward.20} parent=11 // pred_check
        %p220 = pneg %p146
      $region22: #{decoder_forward.20} parent=11 // pred_check_branch
        %222 = sbr.rel (%p220) target = $region24
      $region23: #{decoder_forward.20} parent=11 // pred_region
        _
      $region24: #{decoder_forward.20} parent=11 // pred_fallthru
        _
      // Predicated region
      $region25: #{decoder_forward.20} parent=11 // pred_check
        %p223 = pneg %p167
      $region26: #{decoder_forward.20} parent=11 // pred_check_branch
        %225 = sbr.rel (%p223) target = $region28
      $region27: #{decoder_forward.20} parent=11 // pred_region
        _
      $region28: #{decoder_forward.20} parent=11 // pred_fallthru
        _
    $region12: #{decoder_forward.20} parent=5 // pred_fallthru
      _
    %p226 = scmp.lt.s32.totalorder %s12, 2
    // Predicated region
    $region29: #{decoder_forward.20} parent=5 // pred_check
      %p227 = pneg %p226
    $region30: #{decoder_forward.20} parent=5 // pred_check_branch
      %229 = sbr.rel (%p227) target = $region32
    $region31: #{decoder_forward.20} parent=5 // pred_region
      // Predicated region
      $region33: #{decoder_forward.20} parent=31 // pred_check
        %p230 = pneg %p46
      $region34: #{decoder_forward.20} parent=31 // pred_check_branch
        %232 = sbr.rel (%p230) target = $region36
      $region35: #{decoder_forward.20} parent=31 // pred_region
        %p233 = scmp.lt.s32.totalorder %s19, 1
        %s234 = scalar_select %p233, %s19, 1
        %p235 = scmp.lt.s32.totalorder %s20, 0
        %s236 = scalar_select %p235, %s20, 0
        %s237 = sadd.s32 %s236, %s234
        %s238 = smul.addr %s237, 8
        %s239 = scalar_lea.vmem %s0, %s238
      $region36: #{decoder_forward.20} parent=31 // pred_fallthru
        _
      // Predicated region
      $region37: #{decoder_forward.20} parent=31 // pred_check
        %p240 = pneg %p119
      $region38: #{decoder_forward.20} parent=31 // pred_check_branch
        %242 = sbr.rel (%p240) target = $region40
      $region39: #{decoder_forward.20} parent=31 // pred_region
        %p243 = scmp.lt.s32.totalorder %s19, 1
        %s244 = scalar_select %p243, %s19, 1
        %s245 = smul.addr %s244, 8
        %s246 = scalar_lea.vmem %s3, %s245
      $region40: #{decoder_forward.20} parent=31 // pred_fallthru
        _
    $region32: #{decoder_forward.20} parent=5 // pred_fallthru
      _
    %p247 = scmp.le.s32.totalorder 1, %s12
    %p248 = scmp.lt.s32.totalorder %s12, 3
    %p249 = pnand %p247, %p248
    %p250 = pneg %p249
    // Predicated region
    $region41: #{decoder_forward.20} parent=5 // pred_check
      _
    $region42: #{decoder_forward.20} parent=5 // pred_check_branch
      %252 = sbr.rel (%p249) target = $region44
    $region43: #{decoder_forward.20} parent=5 // pred_region
      %s253 = ssub.s32 %s12, 1
      %p254 = scmp.lt.s32.totalorder %s21, 1
      %s255 = scalar_select %p254, %s21, 1
      %p256 = scmp.lt.s32.totalorder %s22, 0
      %s257 = scalar_select %p256, %s22, 0
      %s258 = sadd.s32 %s257, %s255
      %s259 = smul.addr %s258, 8
      %s260 = scalar_lea.vmem %s0, %s259
      %p261 = pneg %p52
      %p262 = pneg %p49
      %s263 = smul.u32 4, %s22
      %p264 = scmp.lt.s32.totalorder %s263, 3
      %s265 = scalar_select %p264, %s263, 3
      %s266 = smul.addr %s265, 8
      %s267 = scalar_lea.vmem %s1, %s266
      %p268 = pneg %p78
      %p269 = pneg %p75
      %p270 = pneg %p99
      %p271 = pneg %p96
      %p272 = scmp.lt.s32.totalorder %s21, 1
      %s273 = scalar_select %p272, %s21, 1
      %s274 = smul.addr %s273, 8
      %s275 = scalar_lea.vmem %s3, %s274
      %p276 = pneg %p125
      %p277 = pneg %p122
      %p278 = pneg %p146
      %p279 = pneg %p143
      %p280 = pneg %p167
      %p281 = pneg %p164
      %p282 = pneg %p193
      %p283 = pneg %p190
      %p284 = scmp.lt.s32.totalorder %s21, 1
      %s285 = scalar_select %p284, %s21, 1
      %s286 = smul.addr %s285, 8
      %s287 = scalar_lea.vmem %s6, %s286
      %p288 = scmp.lt.s32.totalorder %s21, 1
      %s289 = scalar_select %p288, %s21, 1
      %p290 = scmp.lt.s32.totalorder %s22, 0
      %s291 = scalar_select %p290, %s22, 0
      %s292 = sadd.s32 %s291, %s289
      %s293 = smul.addr %s292, 8
      %s294 = scalar_lea.vmem %s0, %s293
      %s295 = smul.u32 4, %s22
      %p296 = scmp.lt.s32.totalorder %s295, 3
      %s297 = scalar_select %p296, %s295, 3
      %s298 = smul.addr %s297, 8
      %s299 = scalar_lea.vmem %s1, %s298
      %s300 = smul.u32 4, %s22
      %p301 = scmp.lt.s32.totalorder %s21, 1
      %s302 = scalar_select %p301, %s21, 1
      %s303 = smul.addr %s302, 8
      %s304 = scalar_lea.vmem %s3, %s303
      %p305 = scmp.lt.s32.totalorder %s21, 1
      %s306 = scalar_select %p305, %s21, 1
      %s307 = smul.addr %s306, 8
      %s308 = scalar_lea.vmem %s6, %s307
      %p309 = scmp.eq.s32.totalorder %s22, 0
      // Predicated region
      $region45: #{decoder_forward.20} parent=43 // pred_check
        %p310 = pneg %p309
      $region46: #{decoder_forward.20} parent=43 // pred_check_branch
        %312 = sbr.rel (%p310) target = $region48
      $region47: #{decoder_forward.20} parent=43 // pred_region
        %vm313 = vcmask 261120
        %314 = vst.msk [vmem:[#allocation2] sm:$0xff] %vm313, 0.0
      $region48: #{decoder_forward.20} parent=43 // pred_fallthru
        _
      %v315 = vld [vmem:[#allocation2] sm:$0xff]
      %v316 = vld [vmem:[%s294] sm:$0xff]
      %v317 = vld [vmem:[%s299] sm:$0xff]
      %v318 = vld [vmem:[%s299 + $0x8] sm:$0xff]
      %v319 = vld [vmem:[%s299 + $0x10] sm:$0xff]
      %v320 = vld [vmem:[%s299 + $0x18] sm:$0xff]
      %vm321 = vcmask 261120
      %v323 = vsel %vm321, %v316, 0
      %325 = vmatpush.msra.mxu0 0.0
      %326 = vmatpush.msra.mxu0 0.0
      %327 = vmatpush.msra.mxu0 0.0
      %328 = vmatpush.msra.mxu0 0.0
      %329 = vmatpush.msra.mxu0 0.0
      %330 = vmatpush.msra.mxu0 0.0
      %331 = vmatpush.msra.mxu0 0.0
      %332 = vmatpush.msra.mxu0 0.0
      %333 = vmatpush.msra.mxu0 0.0
      %334 = vmatpush.msra.mxu0 0.0
      %335 = vmatpush.msra.mxu0 0.0
      %336 = vmatpush.msra.mxu0 0.0
      %337 = vmatpush.msra.mxu0 %v320
      %338 = vmatpush.msra.mxu0 %v319
      %339 = vmatpush.msra.mxu0 %v318
      %340 = vmatpush.msra.mxu0 %v317
      %341 = vmatmul.f32.gmra.mxu0 %v323
      %v342 = vpop.f32.mrf.mxu0
      %v343 = vadd.f32 0.0, %v342
      %344 = vdwg.mxu0
      %v345 = vadd.f32 %v315, %v343
      %346 = vst.msk [vmem:[#allocation2] sm:$0xff] %vm321, %v345
      // Predicated region
      $region49: #{decoder_forward.20} parent=43 // pred_check
        %p347 = pneg %p309
      $region50: #{decoder_forward.20} parent=43 // pred_check_branch
        %349 = sbr.rel (%p347) target = $region52
      $region51: #{decoder_forward.20} parent=43 // pred_region
        %v350 = vld [vmem:[#allocation2] sm:$0xff]
        %v351 = vld [vmem:[%s2] sm:$0x1]
        %v353 = vperm.slane %v351, 0
        %v355 = vadd.f32 %v350, %v353
        %v356 = vld [vmem:[%s304] sm:$0xff]
        %v357 = vadd.f32 %v355, %v356
        %v358 = vsel %vm321, %v357, 0.0
        %359 = vadd.xlane.f32.xlu0 %v358
        %v360 = vpop.xlane.xlu0 %359
        %v361 = vrcp.pop 32.0
        %v362 = vmul.f32 32.0, %v361
        %v363 = vsub.f32 1.0, %v362
        %v364 = vmul.f32 %v361, %v363
        %v365 = vadd.f32 %v361, %v364
        %vm366 = vweird.f32 %v361
        %v367 = vsel %vm366, %v361, %v365
        %v368 = vmul.f32 %v360, %v367
        %v369 = vsub.f32 %v357, %v368
        %v370 = vmul.f32 %v369, %v369
        %v371 = vsel %vm321, %v370, 0.0
        %372 = vadd.xlane.f32.xlu0 %v371
        %v373 = vpop.xlane.xlu0 %372
        %v374 = vmul.f32 %v373, %v367
        %v375 = vadd.f32 %v374, 1e-05
        %v376 = vrsqrt.pop %v375
        %v377 = vmul.f32 %v376, %v375
        %v378 = vmul.f32 %v377, %v376
        %v379 = vmul.f32 0.5, %v378
        %v380 = vsub.f32 1.5, %v379
        %v381 = vmul.f32 %v376, %v380
        %vm382 = vweird.f32 %v375
        %vm383 = vweird.f32 %v376
        %vm384 = vmor %vm382, %vm383
        %v385 = vsel %vm384, %v376, %v381
        %v386 = vmul.f32 %v369, %v385
        %v387 = vld [vmem:[%s4] sm:$0x1]
        %v389 = vperm.slane %v387, 0
        %v391 = vmul.f32 %v386, %v389
        %v392 = vld [vmem:[%s5] sm:$0x1]
        %v394 = vperm.slane %v392, 0
        %v396 = vadd.f32 %v391, %v394
        %397 = vst.msk [vmem:[%s308] sm:$0xff] %vm321, %v396
      $region52: #{decoder_forward.20} parent=43 // pred_fallthru
        _
      %p398 = scmp.lt.s32.totalorder %s21, 1
      %s399 = scalar_select %p398, %s21, 1
      %s400 = smul.addr %s399, 8
      %s401 = scalar_lea.vmem %s6, %s400
      // Predicated region
      $region53: #{decoder_forward.20} parent=43 // pred_check
        %p402 = pneg %p190
      $region54: #{decoder_forward.20} parent=43 // pred_check_branch
        %404 = sbr.rel (%p402) target = $region56
      $region55: #{decoder_forward.20} parent=43 // pred_region
        _
      $region56: #{decoder_forward.20} parent=43 // pred_fallthru
        _
    $region44: #{decoder_forward.20} parent=5 // pred_fallthru
      _
    %p405 = scmp.le.s32.totalorder 2, %s12
    // Predicated region
    $region57: #{decoder_forward.20} parent=5 // pred_check
      %p406 = pneg %p405
    $region58: #{decoder_forward.20} parent=5 // pred_check_branch
      %408 = sbr.rel (%p406) target = $region60
    $region59: #{decoder_forward.20} parent=5 // pred_region
      %s409 = ssub.s32 %s12, 2
      // Predicated region
      $region61: #{decoder_forward.20} parent=59 // pred_check
        %p410 = pneg %p196
      $region62: #{decoder_forward.20} parent=59 // pred_check_branch
        %412 = sbr.rel (%p410) target = $region64
      $region63: #{decoder_forward.20} parent=59 // pred_region
        %p413 = scmp.lt.s32.totalorder %s23, 1
        %s414 = scalar_select %p413, %s23, 1
        %s415 = smul.addr %s414, 8
        %s416 = scalar_lea.vmem %s6, %s415
      $region64: #{decoder_forward.20} parent=59 // pred_fallthru
        _
    $region60: #{decoder_forward.20} parent=5 // pred_fallthru
      _
  $region6: #{decoder_forward.20} parent=0 // loop_footer
    %s16 = sadd.s32 1, %s12
  $region7: #{decoder_forward.20} parent=0 // loop_footer_branch
    %11 = sbr.rel target = $region3
  $region8: #{decoder_forward.20} parent=0 // loop_exit
    _

// kernel: decoder_forward.21
$region0: #{decoder_forward.21}
  #allocation0 [shape = 'u32[]', space=smem, size = 0x4, offset = 0x4, fixed_abs, tag = 'smem constant byte address 0x4 - core index']
  #allocation1 [shape = 'u32[72,128]{1,0:T(1,128)}', space=vmem, size = 0x9000, scoped, tag = 'internal scratch']
  #allocation2 [shape = 'f32[8,32]{1,0:T(8,128)}', space=vmem, size = 0x1000, scoped, tag = 'scratch operand']
  %s0 = inlined_call_operand.vmem [shape: f32[16,32], index: 0, kind: input, shape index: {}]
  %s1 = inlined_call_operand.vmem [shape: f32[32,32], index: 1, kind: input, shape index: {}]
  %s2 = inlined_call_operand.vmem [shape: f32[1,32], index: 2, kind: input, shape index: {}]
  %s3 = inlined_call_operand.vmem [shape: f32[16,32], index: 3, kind: output, shape index: {}]
  %s4 = sld [smem:[#allocation0]]
  $region53: #{decoder_forward.21} parent=0
    _
  %s6 = ssub.s32 1, %s4
  %s7 = scalar_select 0, %s6, %s4
  loop: start=0, step=1, limit=4
  $region2: #{decoder_forward.21} parent=0 // loop_pre_header
    _
  $region3: #{decoder_forward.21} parent=0 // loop_header
    %s9 = sphi 0, %s13
    %p10 = scmp.ge.s32.totalorder %s9, 4
    %s16 = sphi 0, %s35
    %s17 = sphi 0, %s31
    %s18 = sphi 0, %s27
    %s19 = sphi 0, %s16
    %s20 = sphi 0, %s17
    %s21 = sphi 0, %s18
    %s22 = sphi 0, %s19
    %s23 = sphi 0, %s20
    %s24 = sphi 0, %s21
    %s40 = sphi 0, %s42
    %s43 = sphi 0, %s40
    %s44 = sphi 0, %s43
    %s60 = sphi 0, %s44
    %s68 = sphi 0, %s70
    %s71 = sphi 0, %s68
    %s72 = sphi 0, %s71
    %s88 = sphi 0, %s72
    %s94 = sphi 0, %s96
    %s97 = sphi 0, %s94
    %s98 = sphi 0, %s97
    %s114 = sphi 0, %s98
    %s122 = sphi 0, %s124
    %s125 = sphi 0, %s122
    %s126 = sphi 0, %s125
    %s142 = sphi 0, %s126
  $region4: #{decoder_forward.21} parent=0 // loop_header_branch
    %12 = sbr.rel (%p10) target = $region8
  $region5: #{decoder_forward.21} parent=0 // loop_body
    %s14 = ssub.s32 %s9, 1
    %s15 = ssub.s32 %s9, 2
    %s25 = sadd.s32 1, %s18
    %p26 = scmp.ge.s32.totalorder %s25, 1
    %s27 = scalar_select %p26, 0, %s25
    %s28 = sadd.s32 1, %s17
    %s29 = scalar_select %p26, %s28, %s17
    %p30 = scmp.ge.s32.totalorder %s29, 1
    %s31 = scalar_select %p30, 0, %s29
    %s32 = sadd.s32 1, %s16
    %s33 = scalar_select %p30, %s32, %s16
    %p34 = scmp.ge.s32.totalorder %s33, 2
    %s35 = scalar_select %p34, 0, %s33
    %s36 = ssub.s32 %s16, %s35
    %s37 = ssub.s32 %s18, %s27
    %s38 = sor.u32 %s36, %s37
    %p39 = scmp.eq.s32.totalorder %s38, 0
    %s41 = sadd.s32 %s40, 1
    %s42 = scalar_select %p39, %s40, %s41
    %p45 = pneg %p39
    %p46 = scmp.eq.s32.totalorder %s9, 1
    %p47 = por %p45, %p46
    %p48 = scmp.ne.s32.totalorder %s40, %s43
    %p49 = scmp.eq.s32.totalorder %s9, 0
    %p50 = por %p48, %p49
    %p51 = scmp.ne.s32.totalorder %s40, %s43
    %p52 = scmp.eq.s32.totalorder %s14, 1
    %p53 = por %p51, %p52
    %p54 = scmp.ne.s32.totalorder %s43, %s44
    %p55 = scmp.eq.s32.totalorder %s14, 0
    %p56 = por %p54, %p55
    %p57 = scmp.ne.s32.totalorder %s43, %s44
    %p58 = scmp.eq.s32.totalorder %s15, 1
    %p59 = por %p57, %p58
    %p61 = scmp.ne.s32.totalorder %s44, %s60
    %p62 = scmp.eq.s32.totalorder %s15, 0
    %p63 = por %p61, %p62
    %s64 = ssub.s32 %s18, %s27
    %s65 = ssub.s32 %s17, %s31
    %s66 = sor.u32 %s64, %s65
    %p67 = scmp.eq.s32.totalorder %s66, 0
    %s69 = sadd.s32 %s68, 1
    %s70 = scalar_select %p67, %s68, %s69
    %p73 = pneg %p67
    %p74 = scmp.eq.s32.totalorder %s9, 1
    %p75 = por %p73, %p74
    %p76 = scmp.ne.s32.totalorder %s68, %s71
    %p77 = scmp.eq.s32.totalorder %s9, 0
    %p78 = por %p76, %p77
    %p79 = scmp.ne.s32.totalorder %s68, %s71
    %p80 = scmp.eq.s32.totalorder %s14, 1
    %p81 = por %p79, %p80
    %p82 = scmp.ne.s32.totalorder %s71, %s72
    %p83 = scmp.eq.s32.totalorder %s14, 0
    %p84 = por %p82, %p83
    %p85 = scmp.ne.s32.totalorder %s71, %s72
    %p86 = scmp.eq.s32.totalorder %s15, 1
    %p87 = por %p85, %p86
    %p89 = scmp.ne.s32.totalorder %s72, %s88
    %p90 = scmp.eq.s32.totalorder %s15, 0
    %p91 = por %p89, %p90
    %s92 = ssub.s32 %s17, %s31
    %p93 = scmp.eq.s32.totalorder %s92, 0
    %s95 = sadd.s32 %s94, 1
    %s96 = scalar_select %p93, %s94, %s95
    %p99 = pneg %p93
    %p100 = scmp.eq.s32.totalorder %s9, 1
    %p101 = por %p99, %p100
    %p102 = scmp.ne.s32.totalorder %s94, %s97
    %p103 = scmp.eq.s32.totalorder %s9, 0
    %p104 = por %p102, %p103
    %p105 = scmp.ne.s32.totalorder %s94, %s97
    %p106 = scmp.eq.s32.totalorder %s14, 1
    %p107 = por %p105, %p106
    %p108 = scmp.ne.s32.totalorder %s97, %s98
    %p109 = scmp.eq.s32.totalorder %s14, 0
    %p110 = por %p108, %p109
    %p111 = scmp.ne.s32.totalorder %s97, %s98
    %p112 = scmp.eq.s32.totalorder %s15, 1
    %p113 = por %p111, %p112
    %p115 = scmp.ne.s32.totalorder %s98, %s114
    %p116 = scmp.eq.s32.totalorder %s15, 0
    %p117 = por %p115, %p116
    %s118 = ssub.s32 %s16, %s35
    %s119 = ssub.s32 %s17, %s31
    %s120 = sor.u32 %s118, %s119
    %p121 = scmp.eq.s32.totalorder %s120, 0
    %s123 = sadd.s32 %s122, 1
    %s124 = scalar_select %p121, %s122, %s123
    %p127 = pneg %p121
    %p128 = scmp.eq.s32.totalorder %s9, 1
    %p129 = por %p127, %p128
    %p130 = scmp.ne.s32.totalorder %s122, %s125
    %p131 = scmp.eq.s32.totalorder %s9, 0
    %p132 = por %p130, %p131
    %p133 = scmp.ne.s32.totalorder %s122, %s125
    %p134 = scmp.eq.s32.totalorder %s14, 1
    %p135 = por %p133, %p134
    %p136 = scmp.ne.s32.totalorder %s125, %s126
    %p137 = scmp.eq.s32.totalorder %s14, 0
    %p138 = por %p136, %p137
    %p139 = scmp.ne.s32.totalorder %s125, %s126
    %p140 = scmp.eq.s32.totalorder %s15, 1
    %p141 = por %p139, %p140
    %p143 = scmp.ne.s32.totalorder %s126, %s142
    %p144 = scmp.eq.s32.totalorder %s15, 0
    %p145 = por %p143, %p144
    %p146 = scmp.le.s32.totalorder 1, %s9
    %p147 = scmp.lt.s32.totalorder %s9, 3
    %p148 = pnand %p146, %p147
    %p149 = pneg %p148
    // Predicated region
    $region9: #{decoder_forward.21} parent=5 // pred_check
      _
    $region10: #{decoder_forward.21} parent=5 // pred_check_branch
      %151 = sbr.rel (%p148) target = $region12
    $region11: #{decoder_forward.21} parent=5 // pred_region
      %s152 = ssub.s32 %s9, 1
      // Predicated region
      $region13: #{decoder_forward.21} parent=11 // pred_check
        %p153 = pneg %p84
      $region14: #{decoder_forward.21} parent=11 // pred_check_branch
        %155 = sbr.rel (%p153) target = $region16
      $region15: #{decoder_forward.21} parent=11 // pred_region
        %s156 = smul.u32 4, %s21
        %p157 = scmp.lt.s32.totalorder %s156, 3
        %s158 = scalar_select %p157, %s156, 3
        %p159 = scmp.lt.s32.totalorder %s20, 0
        %s160 = scalar_select %p159, %s20, 0
        %s161 = sadd.s32 %s160, %s158
        %s162 = smul.addr %s161, 8
        %s163 = scalar_lea.vmem %s1, %s162
        %s164 = smul.u32 4, %s21
      $region16: #{decoder_forward.21} parent=11 // pred_fallthru
        _
      // Predicated region
      $region17: #{decoder_forward.21} parent=11 // pred_check
        %p165 = pneg %p110
      $region18: #{decoder_forward.21} parent=11 // pred_check_branch
        %167 = sbr.rel (%p165) target = $region20
      $region19: #{decoder_forward.21} parent=11 // pred_region
        %p168 = scmp.lt.s32.totalorder %s20, 0
        %s169 = scalar_select %p168, %s20, 0
        %s170 = scalar_lea.vmem %s2, %s169
      $region20: #{decoder_forward.21} parent=11 // pred_fallthru
        _
    $region12: #{decoder_forward.21} parent=5 // pred_fallthru
      _
    %p171 = scmp.lt.s32.totalorder %s9, 2
    // Predicated region
    $region21: #{decoder_forward.21} parent=5 // pred_check
      %p172 = pneg %p171
    $region22: #{decoder_forward.21} parent=5 // pred_check_branch
      %174 = sbr.rel (%p172) target = $region24
    $region23: #{decoder_forward.21} parent=5 // pred_region
      // Predicated region
      $region25: #{decoder_forward.21} parent=23 // pred_check
        %p175 = pneg %p50
      $region26: #{decoder_forward.21} parent=23 // pred_check_branch
        %177 = sbr.rel (%p175) target = $region28
      $region27: #{decoder_forward.21} parent=23 // pred_region
        %p178 = scmp.lt.s32.totalorder %s16, 1
        %s179 = scalar_select %p178, %s16, 1
        %p180 = scmp.lt.s32.totalorder %s18, 0
        %s181 = scalar_select %p180, %s18, 0
        %s182 = sadd.s32 %s181, %s179
        %s183 = smul.addr %s182, 8
        %s184 = scalar_lea.vmem %s0, %s183
      $region28: #{decoder_forward.21} parent=23 // pred_fallthru
        _
    $region24: #{decoder_forward.21} parent=5 // pred_fallthru
      _
    %p185 = scmp.le.s32.totalorder 1, %s9
    %p186 = scmp.lt.s32.totalorder %s9, 3
    %p187 = pnand %p185, %p186
    %p188 = pneg %p187
    // Predicated region
    $region29: #{decoder_forward.21} parent=5 // pred_check
      _
    $region30: #{decoder_forward.21} parent=5 // pred_check_branch
      %190 = sbr.rel (%p187) target = $region32
    $region31: #{decoder_forward.21} parent=5 // pred_region
      %s191 = ssub.s32 %s9, 1
      %p192 = scmp.lt.s32.totalorder %s19, 1
      %s193 = scalar_select %p192, %s19, 1
      %p194 = scmp.lt.s32.totalorder %s21, 0
      %s195 = scalar_select %p194, %s21, 0
      %s196 = sadd.s32 %s195, %s193
      %s197 = smul.addr %s196, 8
      %s198 = scalar_lea.vmem %s0, %s197
      %p199 = pneg %p56
      %p200 = pneg %p53
      %s201 = smul.u32 4, %s21
      %p202 = scmp.lt.s32.totalorder %s201, 3
      %s203 = scalar_select %p202, %s201, 3
      %p204 = scmp.lt.s32.totalorder %s20, 0
      %s205 = scalar_select %p204, %s20, 0
      %s206 = sadd.s32 %s205, %s203
      %s207 = smul.addr %s206, 8
      %s208 = scalar_lea.vmem %s1, %s207
      %p209 = pneg %p84
      %p210 = pneg %p81
      %p211 = scmp.lt.s32.totalorder %s20, 0
      %s212 = scalar_select %p211, %s20, 0
      %s213 = scalar_lea.vmem %s2, %s212
      %p214 = pneg %p110
      %p215 = pneg %p107
      %p216 = pneg %p138
      %p217 = pneg %p135
      %p218 = scmp.lt.s32.totalorder %s19, 1
      %s219 = scalar_select %p218, %s19, 1
      %p220 = scmp.lt.s32.totalorder %s20, 0
      %s221 = scalar_select %p220, %s20, 0
      %s222 = sadd.s32 %s221, %s219
      %s223 = smul.addr %s222, 8
      %s224 = scalar_lea.vmem %s3, %s223
      %p225 = scmp.lt.s32.totalorder %s19, 1
      %s226 = scalar_select %p225, %s19, 1
      %p227 = scmp.lt.s32.totalorder %s21, 0
      %s228 = scalar_select %p227, %s21, 0
      %s229 = sadd.s32 %s228, %s226
      %s230 = smul.addr %s229, 8
      %s231 = scalar_lea.vmem %s0, %s230
      %s232 = smul.u32 4, %s21
      %p233 = scmp.lt.s32.totalorder %s232, 3
      %s234 = scalar_select %p233, %s232, 3
      %p235 = scmp.lt.s32.totalorder %s20, 0
      %s236 = scalar_select %p235, %s20, 0
      %s237 = sadd.s32 %s236, %s234
      %s238 = smul.addr %s237, 8
      %s239 = scalar_lea.vmem %s1, %s238
      %s240 = smul.u32 4, %s21
      %p241 = scmp.lt.s32.totalorder %s20, 0
      %s242 = scalar_select %p241, %s20, 0
      %s243 = scalar_lea.vmem %s2, %s242
      %p244 = scmp.lt.s32.totalorder %s19, 1
      %s245 = scalar_select %p244, %s19, 1
      %p246 = scmp.lt.s32.totalorder %s20, 0
      %s247 = scalar_select %p246, %s20, 0
      %s248 = sadd.s32 %s247, %s245
      %s249 = smul.addr %s248, 8
      %s250 = scalar_lea.vmem %s3, %s249
      %p251 = scmp.eq.s32.totalorder %s21, 0
      // Predicated region
      $region33: #{decoder_forward.21} parent=31 // pred_check
        %p252 = pneg %p251
      $region34: #{decoder_forward.21} parent=31 // pred_check_branch
        %254 = sbr.rel (%p252) target = $region36
      $region35: #{decoder_forward.21} parent=31 // pred_region
        %vm255 = vcmask 261120
        %256 = vst.msk [vmem:[#allocation2] sm:$0xff] %vm255, 0.0
      $region36: #{decoder_forward.21} parent=31 // pred_fallthru
        _
      %v257 = vld [vmem:[#allocation2] sm:$0xff]
      %v258 = vld [vmem:[%s231] sm:$0xff]
      %v259 = vld [vmem:[%s239] sm:$0xff]
      %v260 = vld [vmem:[%s239 + $0x8] sm:$0xff]
      %v261 = vld [vmem:[%s239 + $0x10] sm:$0xff]
      %v262 = vld [vmem:[%s239 + $0x18] sm:$0xff]
      %vm263 = vcmask 261120
      %v265 = vsel %vm263, %v258, 0
      %267 = vmatpush.msra.mxu0 0.0
      %268 = vmatpush.msra.mxu0 0.0
      %269 = vmatpush.msra.mxu0 0.0
      %270 = vmatpush.msra.mxu0 0.0
      %271 = vmatpush.msra.mxu0 0.0
      %272 = vmatpush.msra.mxu0 0.0
      %273 = vmatpush.msra.mxu0 0.0
      %274 = vmatpush.msra.mxu0 0.0
      %275 = vmatpush.msra.mxu0 0.0
      %276 = vmatpush.msra.mxu0 0.0
      %277 = vmatpush.msra.mxu0 0.0
      %278 = vmatpush.msra.mxu0 0.0
      %279 = vmatpush.msra.mxu0 %v262
      %280 = vmatpush.msra.mxu0 %v261
      %281 = vmatpush.msra.mxu0 %v260
      %282 = vmatpush.msra.mxu0 %v259
      %283 = vmatmul.f32.gmra.mxu0 %v265
      %v284 = vpop.f32.mrf.mxu0
      %v285 = vadd.f32 0.0, %v284
      %286 = vdwg.mxu0
      %v287 = vadd.f32 %v257, %v285
      %288 = vst.msk [vmem:[#allocation2] sm:$0xff] %vm263, %v287
      // Predicated region
      $region37: #{decoder_forward.21} parent=31 // pred_check
        %p289 = pneg %p251
      $region38: #{decoder_forward.21} parent=31 // pred_check_branch
        %291 = sbr.rel (%p289) target = $region40
      $region39: #{decoder_forward.21} parent=31 // pred_region
        %v292 = vld [vmem:[#allocation2] sm:$0xff]
        %v293 = vld [vmem:[%s243] sm:$0x1]
        %v295 = vperm.slane %v293, 0
        %v297 = vadd.f32 %v292, %v295
        %298 = vst.msk [vmem:[%s250] sm:$0xff] %vm263, %v297
      $region40: #{decoder_forward.21} parent=31 // pred_fallthru
        _
      %p299 = scmp.lt.s32.totalorder %s19, 1
      %s300 = scalar_select %p299, %s19, 1
      %p301 = scmp.lt.s32.totalorder %s20, 0
      %s302 = scalar_select %p301, %s20, 0
      %s303 = sadd.s32 %s302, %s300
      %s304 = smul.addr %s303, 8
      %s305 = scalar_lea.vmem %s3, %s304
      // Predicated region
      $region41: #{decoder_forward.21} parent=31 // pred_check
        %p306 = pneg %p135
      $region42: #{decoder_forward.21} parent=31 // pred_check_branch
        %308 = sbr.rel (%p306) target = $region44
      $region43: #{decoder_forward.21} parent=31 // pred_region
        _
      $region44: #{decoder_forward.21} parent=31 // pred_fallthru
        _
    $region32: #{decoder_forward.21} parent=5 // pred_fallthru
      _
    %p309 = scmp.le.s32.totalorder 2, %s9
    // Predicated region
    $region45: #{decoder_forward.21} parent=5 // pred_check
      %p310 = pneg %p309
    $region46: #{decoder_forward.21} parent=5 // pred_check_branch
      %312 = sbr.rel (%p310) target = $region48
    $region47: #{decoder_forward.21} parent=5 // pred_region
      %s313 = ssub.s32 %s9, 2
      // Predicated region
      $region49: #{decoder_forward.21} parent=47 // pred_check
        %p314 = pneg %p141
      $region50: #{decoder_forward.21} parent=47 // pred_check_branch
        %316 = sbr.rel (%p314) target = $region52
      $region51: #{decoder_forward.21} parent=47 // pred_region
        %p317 = scmp.lt.s32.totalorder %s22, 1
        %s318 = scalar_select %p317, %s22, 1
        %p319 = scmp.lt.s32.totalorder %s23, 0
        %s320 = scalar_select %p319, %s23, 0
        %s321 = sadd.s32 %s320, %s318
        %s322 = smul.addr %s321, 8
        %s323 = scalar_lea.vmem %s3, %s322
      $region52: #{decoder_forward.21} parent=47 // pred_fallthru
        _
    $region48: #{decoder_forward.21} parent=5 // pred_fallthru
      _
  $region6: #{decoder_forward.21} parent=0 // loop_footer
    %s13 = sadd.s32 1, %s9
  $region7: #{decoder_forward.21} parent=0 // loop_footer_branch
    %8 = sbr.rel target = $region3
  $region8: #{decoder_forward.21} parent=0 // loop_exit
    _

// kernel: decoder_forward.19
$region0: #{decoder_forward.19}
  #allocation0 [shape = 'u32[]', space=smem, size = 0x4, offset = 0x4, fixed_abs, tag = 'smem constant byte address 0x4 - core index']
  #allocation1 [shape = 'u32[72,128]{1,0:T(1,128)}', space=vmem, size = 0x9000, scoped, tag = 'internal scratch']
  #allocation2 [shape = 'f32[4,2,1]{2,1,0:T(2,128)}', space=vmem, size = 0x1000, scoped, tag = 'scratch operand']
  #allocation3 [shape = 'f32[4,2,1]{2,1,0:T(2,128)}', space=vmem, size = 0x1000, scoped, tag = 'scratch operand']
  #allocation4 [shape = 'f32[4,2,8]{2,1,0:T(2,128)}', space=vmem, size = 0x1000, scoped, tag = 'scratch operand']
  %s0 = inlined_call_operand.vmem [shape: f32[2,8,3,4,8], index: 0, kind: input, shape index: {}, may-alias: {0,1,2}]
  %s1 = inlined_call_operand.vmem [shape: f32[2,8,3,4,8], index: 1, kind: input, shape index: {}, may-alias: {0,1,2}]
  %s2 = inlined_call_operand.vmem [shape: f32[2,8,3,4,8], index: 2, kind: input, shape index: {}, may-alias: {0,1,2}]
  %s3 = inlined_call_operand.vmem [shape: f32[2,8,4,8], index: 3, kind: output, shape index: {}]
  %s4 = sld [smem:[#allocation0]]
  $region213: #{decoder_forward.19} parent=0
    _
  %s6 = ssub.s32 1, %s4
  %s7 = scalar_select 0, %s6, %s4
  $region1: #{decoder_forward.19} parent=0
    #allocation5 [shape = 'u8[8192]{0}', space=vmem, size = 0x2000, scoped, tag = 'input window, operand 0']
    #allocation6 [shape = 'u8[8192]{0}', space=vmem, size = 0x2000, scoped, tag = 'input window, operand 1']
    #allocation7 [shape = 'u8[8192]{0}', space=vmem, size = 0x2000, scoped, tag = 'input window, operand 2']
    #allocation8 [shape = 'u8[8192]{0}', space=vmem, size = 0x2000, scoped, tag = 'output window, operand 0']
    loop: start=0, step=1, limit=10
    $region2: #{decoder_forward.19} parent=1 // loop_pre_header
      _
    $region3: #{decoder_forward.19} parent=1 // loop_header
      %s9 = sphi 0, %s13
      %p10 = scmp.ge.s32.totalorder %s9, 10
      %s16 = sphi 0, %s28
      %s17 = sphi 0, %s24
      %s18 = sphi 0, %s16
      %s19 = sphi 0, %s17
      %s20 = sphi 0, %s18
      %s21 = sphi 0, %s19
      %s31 = sphi 0, %s33
      %s34 = sphi 0, %s31
      %s35 = sphi 0, %s34
      %s51 = sphi 0, %s35
      %s59 = sphi 0, %s61
      %s62 = sphi 0, %s59
      %s63 = sphi 0, %s62
      %s79 = sphi 0, %s63
      %s87 = sphi 0, %s89
      %s90 = sphi 0, %s87
      %s91 = sphi 0, %s90
      %s107 = sphi 0, %s91
      %s113 = sphi 0, %s115
      %s116 = sphi 0, %s113
      %s117 = sphi 0, %s116
      %s133 = sphi 0, %s117
    $region4: #{decoder_forward.19} parent=1 // loop_header_branch
      %12 = sbr.rel (%p10) target = $region8
    $region5: #{decoder_forward.19} parent=1 // loop_body
      %s14 = ssub.s32 %s9, 1
      %s15 = ssub.s32 %s9, 2
      %s22 = sadd.s32 1, %s17
      %p23 = scmp.ge.s32.totalorder %s22, 1
      %s24 = scalar_select %p23, 0, %s22
      %s25 = sadd.s32 1, %s16
      %s26 = scalar_select %p23, %s25, %s16
      %p27 = scmp.ge.s32.totalorder %s26, 8
      %s28 = scalar_select %p27, 0, %s26
      %s29 = ssub.s32 %s16, %s28
      %p30 = scmp.eq.s32.totalorder %s29, 0
      %s32 = sadd.s32 %s31, 1
      %s33 = scalar_select %p30, %s31, %s32
      %p36 = pneg %p30
      %p37 = scmp.eq.s32.totalorder %s9, 7
      %p38 = por %p36, %p37
      %p39 = scmp.ne.s32.totalorder %s31, %s34
      %p40 = scmp.eq.s32.totalorder %s9, 0
      %p41 = por %p39, %p40
      %p42 = scmp.ne.s32.totalorder %s31, %s34
      %p43 = scmp.eq.s32.totalorder %s14, 7
      %p44 = por %p42, %p43
      %p45 = scmp.ne.s32.totalorder %s34, %s35
      %p46 = scmp.eq.s32.totalorder %s14, 0
      %p47 = por %p45, %p46
      %p48 = scmp.ne.s32.totalorder %s34, %s35
      %p49 = scmp.eq.s32.totalorder %s15, 7
      %p50 = por %p48, %p49
      %p52 = scmp.ne.s32.totalorder %s35, %s51
      %p53 = scmp.eq.s32.totalorder %s15, 0
      %p54 = por %p52, %p53
      %s55 = ssub.s32 %s17, %s24
      %s56 = ssub.s32 %s16, %s28
      %s57 = sor.u32 %s55, %s56
      %p58 = scmp.eq.s32.totalorder %s57, 0
      %s60 = sadd.s32 %s59, 1
      %s61 = scalar_select %p58, %s59, %s60
      %p64 = pneg %p58
      %p65 = scmp.eq.s32.totalorder %s9, 7
      %p66 = por %p64, %p65
      %p67 = scmp.ne.s32.totalorder %s59, %s62
      %p68 = scmp.eq.s32.totalorder %s9, 0
      %p69 = por %p67, %p68
      %p70 = scmp.ne.s32.totalorder %s59, %s62
      %p71 = scmp.eq.s32.totalorder %s14, 7
      %p72 = por %p70, %p71
      %p73 = scmp.ne.s32.totalorder %s62, %s63
      %p74 = scmp.eq.s32.totalorder %s14, 0
      %p75 = por %p73, %p74
      %p76 = scmp.ne.s32.totalorder %s62, %s63
      %p77 = scmp.eq.s32.totalorder %s15, 7
      %p78 = por %p76, %p77
      %p80 = scmp.ne.s32.totalorder %s63, %s79
      %p81 = scmp.eq.s32.totalorder %s15, 0
      %p82 = por %p80, %p81
      %s83 = ssub.s32 %s17, %s24
      %s84 = ssub.s32 %s16, %s28
      %s85 = sor.u32 %s83, %s84
      %p86 = scmp.eq.s32.totalorder %s85, 0
      %s88 = sadd.s32 %s87, 1
      %s89 = scalar_select %p86, %s87, %s88
      %p92 = pneg %p86
      %p93 = scmp.eq.s32.totalorder %s9, 7
      %p94 = por %p92, %p93
      %p95 = scmp.ne.s32.totalorder %s87, %s90
      %p96 = scmp.eq.s32.totalorder %s9, 0
      %p97 = por %p95, %p96
      %p98 = scmp.ne.s32.totalorder %s87, %s90
      %p99 = scmp.eq.s32.totalorder %s14, 7
      %p100 = por %p98, %p99
      %p101 = scmp.ne.s32.totalorder %s90, %s91
      %p102 = scmp.eq.s32.totalorder %s14, 0
      %p103 = por %p101, %p102
      %p104 = scmp.ne.s32.totalorder %s90, %s91
      %p105 = scmp.eq.s32.totalorder %s15, 7
      %p106 = por %p104, %p105
      %p108 = scmp.ne.s32.totalorder %s91, %s107
      %p109 = scmp.eq.s32.totalorder %s15, 0
      %p110 = por %p108, %p109
      %s111 = ssub.s32 %s16, %s28
      %p112 = scmp.eq.s32.totalorder %s111, 0
      %s114 = sadd.s32 %s113, 1
      %s115 = scalar_select %p112, %s113, %s114
      %p118 = pneg %p112
      %p119 = scmp.eq.s32.totalorder %s9, 7
      %p120 = por %p118, %p119
      %p121 = scmp.ne.s32.totalorder %s113, %s116
      %p122 = scmp.eq.s32.totalorder %s9, 0
      %p123 = por %p121, %p122
      %p124 = scmp.ne.s32.totalorder %s113, %s116
      %p125 = scmp.eq.s32.totalorder %s14, 7
      %p126 = por %p124, %p125
      %p127 = scmp.ne.s32.totalorder %s116, %s117
      %p128 = scmp.eq.s32.totalorder %s14, 0
      %p129 = por %p127, %p128
      %p130 = scmp.ne.s32.totalorder %s116, %s117
      %p131 = scmp.eq.s32.totalorder %s15, 7
      %p132 = por %p130, %p131
      %p134 = scmp.ne.s32.totalorder %s117, %s133
      %p135 = scmp.eq.s32.totalorder %s15, 0
      %p136 = por %p134, %p135
      %p137 = scmp.le.s32.totalorder 1, %s9
      %p138 = scmp.lt.s32.totalorder %s9, 9
      %p139 = pnand %p137, %p138
      %p140 = pneg %p139
      // Predicated region
      $region9: #{decoder_forward.19} parent=5 // pred_check
        _
      $region10: #{decoder_forward.19} parent=5 // pred_check_branch
        %142 = sbr.rel (%p139) target = $region12
      $region11: #{decoder_forward.19} parent=5 // pred_region
        %s143 = ssub.s32 %s9, 1
      $region12: #{decoder_forward.19} parent=5 // pred_fallthru
        _
      %p144 = scmp.lt.s32.totalorder %s9, 8
      // Predicated region
      $region13: #{decoder_forward.19} parent=5 // pred_check
        %p145 = pneg %p144
      $region14: #{decoder_forward.19} parent=5 // pred_check_branch
        %147 = sbr.rel (%p145) target = $region16
      $region15: #{decoder_forward.19} parent=5 // pred_region
        // Predicated region
        $region17: #{decoder_forward.19} parent=15 // pred_check
          %p148 = pneg %p41
        $region18: #{decoder_forward.19} parent=15 // pred_check_branch
          %150 = sbr.rel (%p148) target = $region20
        $region19: #{decoder_forward.19} parent=15 // pred_region
          %s151 = sand.u32 %s31, 1
          %s152 = sand.u32 %s31, 1
          %s153 = smul.addr %s152, 8
          %s154 = scalar_lea.vmem [#allocation5], %s153
          %s155 = smul.addr %s16, 3
          %s156 = smul.addr %s155, 4
          %s157 = scalar_lea.vmem %s0, %s156
          // Predicated region
          $region21: #{decoder_forward.19} parent=19 // pred_check
            _
          $region22: #{decoder_forward.19} parent=19 // pred_check_branch
            %159 = sbr.rel (0) target = $region24
          $region23: #{decoder_forward.19} parent=19 // pred_region
            // Predicated region
            $region25: #{decoder_forward.19} parent=23 // pred_check
              _
            $region26: #{decoder_forward.19} parent=23 // pred_check_branch
              %161 = sbr.rel target = $region28
            $region27: #{decoder_forward.19} parent=23 // pred_region
              // Predicated region
              $region40: #{decoder_forward.19} parent=27 // pred_check
                _
              $region41: #{decoder_forward.19} parent=27 // pred_check_branch
                %179 = sbr.rel (0) target = $region43
              $region42: #{decoder_forward.19} parent=27 // pred_region
                loop: start=0, step=1, limit=1
                $region44: #{decoder_forward.19} parent=42 // loop_pre_header
                  _
                $region45: #{decoder_forward.19} parent=42 // loop_header
                  %s181 = sphi 0, %s185
                  %p182 = scmp.ge.s32.totalorder %s181, 1
                  %s186 = sphi %s157, %s157
                  %s187 = sphi %s154, %s154
                $region46: #{decoder_forward.19} parent=42 // loop_header_branch
                  %184 = sbr.rel (%p182) target = $region50
                $region47: #{decoder_forward.19} parent=42 // loop_body
                  _
                $region48: #{decoder_forward.19} parent=42 // loop_footer
                  %s185 = sadd.s32 1, %s181
                $region49: #{decoder_forward.19} parent=42 // loop_footer_branch
                  %180 = sbr.rel target = $region45
                $region50: #{decoder_forward.19} parent=42 // loop_exit
                  _
                %s189 = ssub.s32 16, 1
                loop: start=0, step=1, limit=1
                $region51: #{decoder_forward.19} parent=42 // loop_pre_header
                  _
                $region52: #{decoder_forward.19} parent=42 // loop_header
                  %s191 = sphi 0, %s195
                  %p192 = scmp.ge.s32.totalorder %s191, 1
                  %s196 = sphi %s157, %s157
                  %s197 = sphi %s154, %s154
                $region53: #{decoder_forward.19} parent=42 // loop_header_branch
                  %194 = sbr.rel (%p192) target = $region57
                $region54: #{decoder_forward.19} parent=42 // loop_body
                  %v198 = vld [vmem:[%s196] sm:%s189]
                  %199 = vst [vmem:[%s197] sm:%s189] %v198
                  %v200 = vld [vmem:[%s196 + $0x60] sm:%s189]
                  %201 = vst [vmem:[%s197 + $0x4] sm:%s189] %v200
                $region55: #{decoder_forward.19} parent=42 // loop_footer
                  %s195 = sadd.s32 1, %s191
                $region56: #{decoder_forward.19} parent=42 // loop_footer_branch
                  %190 = sbr.rel target = $region52
                $region57: #{decoder_forward.19} parent=42 // loop_exit
                  _
              $region43: #{decoder_forward.19} parent=27 // pred_fallthru
                _
            $region28: #{decoder_forward.19} parent=23 // pred_fallthru
              _
            // Predicated region
            $region29: #{decoder_forward.19} parent=23 // pred_check
              _
            $region30: #{decoder_forward.19} parent=23 // pred_check_branch
              %163 = sbr.rel (0) target = $region32
            $region31: #{decoder_forward.19} parent=23 // pred_region
              %s165 = ssub.s32 16, 1
              loop: start=0, step=1, limit=1
              $region33: #{decoder_forward.19} parent=31 // loop_pre_header
                _
              $region34: #{decoder_forward.19} parent=31 // loop_header
                %s167 = sphi 0, %s171
                %p168 = scmp.ge.s32.totalorder %s167, 1
                %s172 = sphi %s157, %s157
                %s173 = sphi %s154, %s154
              $region35: #{decoder_forward.19} parent=31 // loop_header_branch
                %170 = sbr.rel (%p168) target = $region39
              $region36: #{decoder_forward.19} parent=31 // loop_body
                %v174 = vld [vmem:[%s172] sm:%s165]
                %175 = vst [vmem:[%s173] sm:%s165] %v174
                %v176 = vld [vmem:[%s172 + $0x60] sm:%s165]
                %177 = vst [vmem:[%s173 + $0x4] sm:%s165] %v176
              $region37: #{decoder_forward.19} parent=31 // loop_footer
                %s171 = sadd.s32 1, %s167
              $region38: #{decoder_forward.19} parent=31 // loop_footer_branch
                %166 = sbr.rel target = $region34
              $region39: #{decoder_forward.19} parent=31 // loop_exit
                _
            $region32: #{decoder_forward.19} parent=23 // pred_fallthru
              _
          $region24: #{decoder_forward.19} parent=19 // pred_fallthru
            _
          %202 = vnop
        $region20: #{decoder_forward.19} parent=15 // pred_fallthru
          _
        // Predicated region
        $region58: #{decoder_forward.19} parent=15 // pred_check
          %p203 = pneg %p69
        $region59: #{decoder_forward.19} parent=15 // pred_check_branch
          %205 = sbr.rel (%p203) target = $region61
        $region60: #{decoder_forward.19} parent=15 // pred_region
          %s206 = sand.u32 %s59, 1
          %s207 = sand.u32 %s59, 1
          %s208 = smul.addr %s207, 8
          %s209 = scalar_lea.vmem [#allocation6], %s208
          %s210 = smul.u32 2, %s17
          %s211 = smul.addr %s16, 3
          %s212 = sadd.s32 1, %s211
          %s213 = smul.addr %s210, 24
          %s214 = sadd.s32 %s212, %s213
          %s215 = smul.addr %s214, 4
          %s216 = scalar_lea.vmem %s1, %s215
          // Predicated region
          $region62: #{decoder_forward.19} parent=60 // pred_check
            _
          $region63: #{decoder_forward.19} parent=60 // pred_check_branch
            %218 = sbr.rel (0) target = $region65
          $region64: #{decoder_forward.19} parent=60 // pred_region
            // Predicated region
            $region66: #{decoder_forward.19} parent=64 // pred_check
              _
            $region67: #{decoder_forward.19} parent=64 // pred_check_branch
              %220 = sbr.rel target = $region69
            $region68: #{decoder_forward.19} parent=64 // pred_region
              // Predicated region
              $region81: #{decoder_forward.19} parent=68 // pred_check
                _
              $region82: #{decoder_forward.19} parent=68 // pred_check_branch
                %238 = sbr.rel (0) target = $region84
              $region83: #{decoder_forward.19} parent=68 // pred_region
                loop: start=0, step=1, limit=1
                $region85: #{decoder_forward.19} parent=83 // loop_pre_header
                  _
                $region86: #{decoder_forward.19} parent=83 // loop_header
                  %s240 = sphi 0, %s244
                  %p241 = scmp.ge.s32.totalorder %s240, 1
                  %s245 = sphi %s216, %s216
                  %s246 = sphi %s209, %s209
                $region87: #{decoder_forward.19} parent=83 // loop_header_branch
                  %243 = sbr.rel (%p241) target = $region91
                $region88: #{decoder_forward.19} parent=83 // loop_body
                  _
                $region89: #{decoder_forward.19} parent=83 // loop_footer
                  %s244 = sadd.s32 1, %s240
                $region90: #{decoder_forward.19} parent=83 // loop_footer_branch
                  %239 = sbr.rel target = $region86
                $region91: #{decoder_forward.19} parent=83 // loop_exit
                  _
                %s248 = ssub.s32 16, 1
                loop: start=0, step=1, limit=1
                $region92: #{decoder_forward.19} parent=83 // loop_pre_header
                  _
                $region93: #{decoder_forward.19} parent=83 // loop_header
                  %s250 = sphi 0, %s254
                  %p251 = scmp.ge.s32.totalorder %s250, 1
                  %s255 = sphi %s216, %s216
                  %s256 = sphi %s209, %s209
                $region94: #{decoder_forward.19} parent=83 // loop_header_branch
                  %253 = sbr.rel (%p251) target = $region98
                $region95: #{decoder_forward.19} parent=83 // loop_body
                  %v257 = vld [vmem:[%s255] sm:%s248]
                  %258 = vst [vmem:[%s256] sm:%s248] %v257
                  %v259 = vld [vmem:[%s255 + $0x60] sm:%s248]
                  %260 = vst [vmem:[%s256 + $0x4] sm:%s248] %v259
                $region96: #{decoder_forward.19} parent=83 // loop_footer
                  %s254 = sadd.s32 1, %s250
                $region97: #{decoder_forward.19} parent=83 // loop_footer_branch
                  %249 = sbr.rel target = $region93
                $region98: #{decoder_forward.19} parent=83 // loop_exit
                  _
              $region84: #{decoder_forward.19} parent=68 // pred_fallthru
                _
            $region69: #{decoder_forward.19} parent=64 // pred_fallthru
              _
            // Predicated region
            $region70: #{decoder_forward.19} parent=64 // pred_check
              _
            $region71: #{decoder_forward.19} parent=64 // pred_check_branch
              %222 = sbr.rel (0) target = $region73
            $region72: #{decoder_forward.19} parent=64 // pred_region
              %s224 = ssub.s32 16, 1
              loop: start=0, step=1, limit=1
              $region74: #{decoder_forward.19} parent=72 // loop_pre_header
                _
              $region75: #{decoder_forward.19} parent=72 // loop_header
                %s226 = sphi 0, %s230
                %p227 = scmp.ge.s32.totalorder %s226, 1
                %s231 = sphi %s216, %s216
                %s232 = sphi %s209, %s209
              $region76: #{decoder_forward.19} parent=72 // loop_header_branch
                %229 = sbr.rel (%p227) target = $region80
              $region77: #{decoder_forward.19} parent=72 // loop_body
                %v233 = vld [vmem:[%s231] sm:%s224]
                %234 = vst [vmem:[%s232] sm:%s224] %v233
                %v235 = vld [vmem:[%s231 + $0x60] sm:%s224]
                %236 = vst [vmem:[%s232 + $0x4] sm:%s224] %v235
              $region78: #{decoder_forward.19} parent=72 // loop_footer
                %s230 = sadd.s32 1, %s226
              $region79: #{decoder_forward.19} parent=72 // loop_footer_branch
                %225 = sbr.rel target = $region75
              $region80: #{decoder_forward.19} parent=72 // loop_exit
                _
            $region73: #{decoder_forward.19} parent=64 // pred_fallthru
              _
          $region65: #{decoder_forward.19} parent=60 // pred_fallthru
            _
          %261 = vnop
        $region61: #{decoder_forward.19} parent=15 // pred_fallthru
          _
        // Predicated region
        $region99: #{decoder_forward.19} parent=15 // pred_check
          %p262 = pneg %p97
        $region100: #{decoder_forward.19} parent=15 // pred_check_branch
          %264 = sbr.rel (%p262) target = $region102
        $region101: #{decoder_forward.19} parent=15 // pred_region
          %s265 = sand.u32 %s87, 1
          %s266 = sand.u32 %s87, 1
          %s267 = smul.addr %s266, 8
          %s268 = scalar_lea.vmem [#allocation7], %s267
          %s269 = smul.u32 2, %s17
          %s270 = smul.addr %s16, 3
          %s271 = sadd.s32 2, %s270
          %s272 = smul.addr %s269, 24
          %s273 = sadd.s32 %s271, %s272
          %s274 = smul.addr %s273, 4
          %s275 = scalar_lea.vmem %s2, %s274
          // Predicated region
          $region103: #{decoder_forward.19} parent=101 // pred_check
            _
          $region104: #{decoder_forward.19} parent=101 // pred_check_branch
            %277 = sbr.rel (0) target = $region106
          $region105: #{decoder_forward.19} parent=101 // pred_region
            // Predicated region
            $region107: #{decoder_forward.19} parent=105 // pred_check
              _
            $region108: #{decoder_forward.19} parent=105 // pred_check_branch
              %279 = sbr.rel target = $region110
            $region109: #{decoder_forward.19} parent=105 // pred_region
              // Predicated region
              $region122: #{decoder_forward.19} parent=109 // pred_check
                _
              $region123: #{decoder_forward.19} parent=109 // pred_check_branch
                %297 = sbr.rel (0) target = $region125
              $region124: #{decoder_forward.19} parent=109 // pred_region
                loop: start=0, step=1, limit=1
                $region126: #{decoder_forward.19} parent=124 // loop_pre_header
                  _
                $region127: #{decoder_forward.19} parent=124 // loop_header
                  %s299 = sphi 0, %s303
                  %p300 = scmp.ge.s32.totalorder %s299, 1
                  %s304 = sphi %s275, %s275
                  %s305 = sphi %s268, %s268
                $region128: #{decoder_forward.19} parent=124 // loop_header_branch
                  %302 = sbr.rel (%p300) target = $region132
                $region129: #{decoder_forward.19} parent=124 // loop_body
                  _
                $region130: #{decoder_forward.19} parent=124 // loop_footer
                  %s303 = sadd.s32 1, %s299
                $region131: #{decoder_forward.19} parent=124 // loop_footer_branch
                  %298 = sbr.rel target = $region127
                $region132: #{decoder_forward.19} parent=124 // loop_exit
                  _
                %s307 = ssub.s32 16, 1
                loop: start=0, step=1, limit=1
                $region133: #{decoder_forward.19} parent=124 // loop_pre_header
                  _
                $region134: #{decoder_forward.19} parent=124 // loop_header
                  %s309 = sphi 0, %s313
                  %p310 = scmp.ge.s32.totalorder %s309, 1
                  %s314 = sphi %s275, %s275
                  %s315 = sphi %s268, %s268
                $region135: #{decoder_forward.19} parent=124 // loop_header_branch
                  %312 = sbr.rel (%p310) target = $region139
                $region136: #{decoder_forward.19} parent=124 // loop_body
                  %v316 = vld [vmem:[%s314] sm:%s307]
                  %317 = vst [vmem:[%s315] sm:%s307] %v316
                  %v318 = vld [vmem:[%s314 + $0x60] sm:%s307]
                  %319 = vst [vmem:[%s315 + $0x4] sm:%s307] %v318
                $region137: #{decoder_forward.19} parent=124 // loop_footer
                  %s313 = sadd.s32 1, %s309
                $region138: #{decoder_forward.19} parent=124 // loop_footer_branch
                  %308 = sbr.rel target = $region134
                $region139: #{decoder_forward.19} parent=124 // loop_exit
                  _
              $region125: #{decoder_forward.19} parent=109 // pred_fallthru
                _
            $region110: #{decoder_forward.19} parent=105 // pred_fallthru
              _
            // Predicated region
            $region111: #{decoder_forward.19} parent=105 // pred_check
              _
            $region112: #{decoder_forward.19} parent=105 // pred_check_branch
              %281 = sbr.rel (0) target = $region114
            $region113: #{decoder_forward.19} parent=105 // pred_region
              %s283 = ssub.s32 16, 1
              loop: start=0, step=1, limit=1
              $region115: #{decoder_forward.19} parent=113 // loop_pre_header
                _
              $region116: #{decoder_forward.19} parent=113 // loop_header
                %s285 = sphi 0, %s289
                %p286 = scmp.ge.s32.totalorder %s285, 1
                %s290 = sphi %s275, %s275
                %s291 = sphi %s268, %s268
              $region117: #{decoder_forward.19} parent=113 // loop_header_branch
                %288 = sbr.rel (%p286) target = $region121
              $region118: #{decoder_forward.19} parent=113 // loop_body
                %v292 = vld [vmem:[%s290] sm:%s283]
                %293 = vst [vmem:[%s291] sm:%s283] %v292
                %v294 = vld [vmem:[%s290 + $0x60] sm:%s283]
                %295 = vst [vmem:[%s291 + $0x4] sm:%s283] %v294
              $region119: #{decoder_forward.19} parent=113 // loop_footer
                %s289 = sadd.s32 1, %s285
              $region120: #{decoder_forward.19} parent=113 // loop_footer_branch
                %284 = sbr.rel target = $region116
              $region121: #{decoder_forward.19} parent=113 // loop_exit
                _
            $region114: #{decoder_forward.19} parent=105 // pred_fallthru
              _
          $region106: #{decoder_forward.19} parent=101 // pred_fallthru
            _
          %320 = vnop
        $region102: #{decoder_forward.19} parent=15 // pred_fallthru
          _
      $region16: #{decoder_forward.19} parent=5 // pred_fallthru
        _
      %p321 = scmp.le.s32.totalorder 1, %s9
      %p322 = scmp.lt.s32.totalorder %s9, 9
      %p323 = pnand %p321, %p322
      %p324 = pneg %p323
      // Predicated region
      $region140: #{decoder_forward.19} parent=5 // pred_check
        _
      $region141: #{decoder_forward.19} parent=5 // pred_check_branch
        %326 = sbr.rel (%p323) target = $region143
      $region142: #{decoder_forward.19} parent=5 // pred_region
        %s327 = ssub.s32 %s9, 1
        %s328 = sand.u32 %s34, 1
        %s329 = sand.u32 %s34, 1
        %s330 = smul.addr %s329, 8
        %s331 = scalar_lea.vmem [#allocation5], %s330
        // Predicated region
        $region144: #{decoder_forward.19} parent=142 // pred_check
          %p332 = pneg %p47
        $region145: #{decoder_forward.19} parent=142 // pred_check_branch
          %334 = sbr.rel (%p332) target = $region147
        $region146: #{decoder_forward.19} parent=142 // pred_region
          _
        $region147: #{decoder_forward.19} parent=142 // pred_fallthru
          _
        %s335 = sand.u32 %s62, 1
        %s336 = sand.u32 %s62, 1
        %s337 = smul.addr %s336, 8
        %s338 = scalar_lea.vmem [#allocation6], %s337
        // Predicated region
        $region148: #{decoder_forward.19} parent=142 // pred_check
          %p339 = pneg %p75
        $region149: #{decoder_forward.19} parent=142 // pred_check_branch
          %341 = sbr.rel (%p339) target = $region151
        $region150: #{decoder_forward.19} parent=142 // pred_region
          _
        $region151: #{decoder_forward.19} parent=142 // pred_fallthru
          _
        %s342 = sand.u32 %s90, 1
        %s343 = sand.u32 %s90, 1
        %s344 = smul.addr %s343, 8
        %s345 = scalar_lea.vmem [#allocation7], %s344
        // Predicated region
        $region152: #{decoder_forward.19} parent=142 // pred_check
          %p346 = pneg %p103
        $region153: #{decoder_forward.19} parent=142 // pred_check_branch
          %348 = sbr.rel (%p346) target = $region155
        $region154: #{decoder_forward.19} parent=142 // pred_region
          _
        $region155: #{decoder_forward.19} parent=142 // pred_fallthru
          _
        %s349 = sand.u32 %s34, 1
        %s350 = sand.u32 %s34, 1
        %s351 = smul.addr %s350, 8
        %s352 = scalar_lea.vmem [#allocation5], %s351
        %p353 = pneg %p47
        %p354 = pneg %p44
        %s355 = sand.u32 %s62, 1
        %s356 = sand.u32 %s62, 1
        %s357 = smul.addr %s356, 8
        %s358 = scalar_lea.vmem [#allocation6], %s357
        %p359 = pneg %p75
        %p360 = pneg %p72
        %s361 = sand.u32 %s90, 1
        %s362 = sand.u32 %s90, 1
        %s363 = smul.addr %s362, 8
        %s364 = scalar_lea.vmem [#allocation7], %s363
        %p365 = pneg %p103
        %p366 = pneg %p100
        %p367 = pneg %p129
        %p368 = pneg %p126
        %s369 = sand.u32 %s116, 1
        %s370 = sand.u32 %s116, 1
        %s371 = smul.addr %s370, 8
        %s372 = scalar_lea.vmem [#allocation8], %s371
        %s373 = smul.u32 2, %s19
        %s374 = smul.u32 2, %s19
        %p375 = scmp.eq.s32.totalorder %s19, 0
        // Predicated region
        $region156: #{decoder_forward.19} parent=142 // pred_check
          %p376 = pneg %p375
        $region157: #{decoder_forward.19} parent=142 // pred_check_branch
          %378 = sbr.rel (%p376) target = $region159
        $region158: #{decoder_forward.19} parent=142 // pred_region
          %vm379 = vcmask 1024
          %380 = vst.msk [vmem:[#allocation2] sm:$0x3] %vm379, -inf
          %381 = vst.msk [vmem:[#allocation2 + $0x2] sm:$0x3] %vm379, -inf
          %382 = vst.msk [vmem:[#allocation2 + $0x4] sm:$0x3] %vm379, -inf
          %383 = vst.msk [vmem:[#allocation2 + $0x6] sm:$0x3] %vm379, -inf
          %384 = vst.msk [vmem:[#allocation3] sm:$0x3] %vm379, 0.0
          %385 = vst.msk [vmem:[#allocation3 + $0x2] sm:$0x3] %vm379, 0.0
          %386 = vst.msk [vmem:[#allocation3 + $0x4] sm:$0x3] %vm379, 0.0
          %387 = vst.msk [vmem:[#allocation3 + $0x6] sm:$0x3] %vm379, 0.0
          %vm388 = vcmask 58368
          %389 = vst.msk [vmem:[#allocation4] sm:$0x3] %vm388, 0.0
          %390 = vst.msk [vmem:[#allocation4 + $0x2] sm:$0x3] %vm388, 0.0
          %391 = vst.msk [vmem:[#allocation4 + $0x4] sm:$0x3] %vm388, 0.0
          %392 = vst.msk [vmem:[#allocation4 + $0x6] sm:$0x3] %vm388, 0.0
        $region159: #{decoder_forward.19} parent=142 // pred_fallthru
          _
        %v393 = vld [vmem:[%s331] sm:$0x1]
        %v394 = vld [vmem:[%s331 + $0x4] sm:$0x1]
        %v395 = vmul.f32 %v393, 0.35355338
        %v396 = vmul.f32 %v394, 0.35355338
        %v397 = vld [vmem:[%s338] sm:$0x1]
        %v398 = vld [vmem:[%s338 + $0x4] sm:$0x1]
        %v399 = vld [vmem:[%s345] sm:$0x1]
        %v400 = vld [vmem:[%s345 + $0x4] sm:$0x1]
        %v403 = vrot.slane %v396, 7
        %vm404 = vcmask 1041409
        %v405 = vsel %vm404, %v403, %v395
        %v408 = vrot.slane %v398, 7
        %v409 = vsel %vm404, %v408, %v397
        %vm410 = vcmask 64512
        %v411 = vsel %vm410, %v405, 0
        %v413 = vsel %vm410, %v409, 0
        %415 = vmatpush.xpose.msra.mxu0 0.0
        %416 = vmatpush.xpose.msra.mxu0 0.0
        %417 = vmatpush.xpose.msra.mxu0 0.0
        %418 = vmatpush.xpose.msra.mxu0 0.0
        %419 = vmatpush.xpose.msra.mxu0 0.0
        %420 = vmatpush.xpose.msra.mxu0 0.0
        %421 = vmatpush.xpose.msra.mxu0 0.0
        %422 = vmatpush.xpose.msra.mxu0 0.0
        %423 = vmatpush.xpose.msra.mxu0 0.0
        %424 = vmatpush.xpose.msra.mxu0 0.0
        %425 = vmatpush.xpose.msra.mxu0 0.0
        %426 = vmatpush.xpose.msra.mxu0 0.0
        %427 = vmatpush.xpose.msra.mxu0 0.0
        %428 = vmatpush.xpose.msra.mxu0 0.0
        %429 = vmatpush.xpose.msra.mxu0 0.0
        %430 = vmatpush.xpose.msra.mxu0 %v413
        %431 = vmatmul.f32.gmra.mxu0 %v411
        %v432 = vpop.f32.mrf.mxu0
        %v433 = vadd.f32 0.0, %v432
        %434 = vdwg.mxu0
        %v435 = vld [vmem:[#allocation2] sm:$0x3]
        %vm436 = vcmask 9216
        %v437 = vsel %vm436, %v433, -inf
        %438 = vmax.xlane.f32.xlu0 %v437
        %v439 = vpop.xlane.xlu0 %438
        %v440 = vmax.f32 %v435, %v439
        %v441 = vsub.f32 %v435, %v440
        %v442 = vmul.f32 %v441, 1.442695
        %v443 = vpow.pop %v442
        %445 = vset.pattern.permute.xlu0 0
        %446 = vperm.xlu0 %445, %v440
        %v447 = vpop.permute.xlu0 %446
        %v449 = vsub.f32 %v433, %v447
        %v450 = vmul.f32 %v449, 1.442695
        %v451 = vpow.pop %v450
        %v452 = vld [vmem:[#allocation3] sm:$0x3]
        %v453 = vmul.f32 %v443, %v452
        %v454 = vsel %vm436, %v451, 0.0
        %455 = vadd.xlane.f32.xlu0 %v454
        %v456 = vpop.xlane.xlu0 %455
        %v457 = vadd.f32 %v453, %v456
        %vm458 = vcmask 1024
        %459 = vst.msk [vmem:[#allocation3] sm:$0x3] %vm458, %v457
        %v460 = vld [vmem:[#allocation4] sm:$0x3]
        %462 = vset.pattern.permute.xlu0 0
        %463 = vperm.xlu0 %462, %v443
        %v464 = vpop.permute.xlu0 %463
        %v466 = vmul.f32 %v464, %v460
        %v469 = vrot.slane %v400, 7
        %v470 = vsel %vm404, %v469, %v399
        %vm471 = vcmask 15360
        %v473 = vsel %vm471, %v451, 0
        %vm475 = vcmask 1041408
        %v476 = vsel %vm475, %v470, 0
        %478 = vmatpush.msra.mxu0 0.0
        %479 = vmatpush.msra.mxu0 0.0
        %480 = vmatpush.msra.mxu0 0.0
        %481 = vmatpush.msra.mxu0 0.0
        %482 = vmatpush.msra.mxu0 0.0
        %483 = vmatpush.msra.mxu0 0.0
        %484 = vmatpush.msra.mxu0 0.0
        %485 = vmatpush.msra.mxu0 0.0
        %486 = vmatpush.msra.mxu0 0.0
        %487 = vmatpush.msra.mxu0 0.0
        %488 = vmatpush.msra.mxu0 0.0
        %489 = vmatpush.msra.mxu0 0.0
        %490 = vmatpush.msra.mxu0 0.0
        %491 = vmatpush.msra.mxu0 0.0
        %492 = vmatpush.msra.mxu0 0.0
        %493 = vmatpush.msra.mxu0 %v476
        %494 = vmatmul.f32.gmra.mxu0 %v473
        %v495 = vpop.f32.mrf.mxu0
        %v496 = vadd.f32 0.0, %v495
        %497 = vdwg.mxu0
        %v498 = vadd.f32 %v466, %v496
        %vm499 = vcmask 58368
        %500 = vst.msk [vmem:[#allocation4] sm:$0x3] %vm499, %v498
        %501 = vst.msk [vmem:[#allocation2] sm:$0x3] %vm458, %v440
        %v502 = vld [vmem:[%s331 + $0x1] sm:$0x1]
        %v503 = vld [vmem:[%s331 + $0x5] sm:$0x1]
        %v504 = vmul.f32 %v502, 0.35355338
        %v505 = vmul.f32 %v503, 0.35355338
        %v506 = vld [vmem:[%s338 + $0x1] sm:$0x1]
        %v507 = vld [vmem:[%s338 + $0x5] sm:$0x1]
        %v508 = vld [vmem:[%s345 + $0x1] sm:$0x1]
        %v509 = vld [vmem:[%s345 + $0x5] sm:$0x1]
        %v512 = vrot.slane %v505, 7
        %v513 = vsel %vm404, %v512, %v504
        %v516 = vrot.slane %v507, 7
        %v517 = vsel %vm404, %v516, %v506
        %v518 = vsel %vm410, %v513, 0
        %v520 = vsel %vm410, %v517, 0
        %522 = vmatpush.xpose.msra.mxu0 0.0
        %523 = vmatpush.xpose.msra.mxu0 0.0
        %524 = vmatpush.xpose.msra.mxu0 0.0
        %525 = vmatpush.xpose.msra.mxu0 0.0
        %526 = vmatpush.xpose.msra.mxu0 0.0
        %527 = vmatpush.xpose.msra.mxu0 0.0
        %528 = vmatpush.xpose.msra.mxu0 0.0
        %529 = vmatpush.xpose.msra.mxu0 0.0
        %530 = vmatpush.xpose.msra.mxu0 0.0
        %531 = vmatpush.xpose.msra.mxu0 0.0
        %532 = vmatpush.xpose.msra.mxu0 0.0
        %533 = vmatpush.xpose.msra.mxu0 0.0
        %534 = vmatpush.xpose.msra.mxu0 0.0
        %535 = vmatpush.xpose.msra.mxu0 0.0
        %536 = vmatpush.xpose.msra.mxu0 0.0
        %537 = vmatpush.xpose.msra.mxu0 %v520
        %538 = vmatmul.f32.gmra.mxu0 %v518
        %v539 = vpop.f32.mrf.mxu0
        %v540 = vadd.f32 0.0, %v539
        %541 = vdwg.mxu0
        %s542 = scalar_lea.vmem [#allocation2], 2
        %v543 = vld [vmem:[%s542] sm:$0x3]
        %v544 = vsel %vm436, %v540, -inf
        %545 = vmax.xlane.f32.xlu0 %v544
        %v546 = vpop.xlane.xlu0 %545
        %v547 = vmax.f32 %v543, %v546
        %v548 = vsub.f32 %v543, %v547
        %v549 = vmul.f32 %v548, 1.442695
        %v550 = vpow.pop %v549
        %552 = vset.pattern.permute.xlu0 0
        %553 = vperm.xlu0 %552, %v547
        %v554 = vpop.permute.xlu0 %553
        %v556 = vsub.f32 %v540, %v554
        %v557 = vmul.f32 %v556, 1.442695
        %v558 = vpow.pop %v557
        %s559 = scalar_lea.vmem [#allocation3], 2
        %v560 = vld [vmem:[%s559] sm:$0x3]
        %v561 = vmul.f32 %v550, %v560
        %v562 = vsel %vm436, %v558, 0.0
        %563 = vadd.xlane.f32.xlu0 %v562
        %v564 = vpop.xlane.xlu0 %563
        %v565 = vadd.f32 %v561, %v564
        %566 = vst.msk [vmem:[%s559] sm:$0x3] %vm458, %v565
        %s567 = scalar_lea.vmem [#allocation4], 2
        %v568 = vld [vmem:[%s567] sm:$0x3]
        %570 = vset.pattern.permute.xlu0 0
        %571 = vperm.xlu0 %570, %v550
        %v572 = vpop.permute.xlu0 %571
        %v574 = vmul.f32 %v572, %v568
        %v577 = vrot.slane %v509, 7
        %v578 = vsel %vm404, %v577, %v508
        %v580 = vsel %vm471, %v558, 0
        %v582 = vsel %vm475, %v578, 0
        %584 = vmatpush.msra.mxu0 0.0
        %585 = vmatpush.msra.mxu0 0.0
        %586 = vmatpush.msra.mxu0 0.0
        %587 = vmatpush.msra.mxu0 0.0
        %588 = vmatpush.msra.mxu0 0.0
        %589 = vmatpush.msra.mxu0 0.0
        %590 = vmatpush.msra.mxu0 0.0
        %591 = vmatpush.msra.mxu0 0.0
        %592 = vmatpush.msra.mxu0 0.0
        %593 = vmatpush.msra.mxu0 0.0
        %594 = vmatpush.msra.mxu0 0.0
        %595 = vmatpush.msra.mxu0 0.0
        %596 = vmatpush.msra.mxu0 0.0
        %597 = vmatpush.msra.mxu0 0.0
        %598 = vmatpush.msra.mxu0 0.0
        %599 = vmatpush.msra.mxu0 %v582
        %600 = vmatmul.f32.gmra.mxu0 %v580
        %v601 = vpop.f32.mrf.mxu0
        %v602 = vadd.f32 0.0, %v601
        %603 = vdwg.mxu0
        %v604 = vadd.f32 %v574, %v602
        %605 = vst.msk [vmem:[%s567] sm:$0x3] %vm499, %v604
        %606 = vst.msk [vmem:[%s542] sm:$0x3] %vm458, %v547
        %v607 = vld [vmem:[%s331 + $0x2] sm:$0x1]
        %v608 = vld [vmem:[%s331 + $0x6] sm:$0x1]
        %v609 = vmul.f32 %v607, 0.35355338
        %v610 = vmul.f32 %v608, 0.35355338
        %v611 = vld [vmem:[%s338 + $0x2] sm:$0x1]
        %v612 = vld [vmem:[%s338 + $0x6] sm:$0x1]
        %v613 = vld [vmem:[%s345 + $0x2] sm:$0x1]
        %v614 = vld [vmem:[%s345 + $0x6] sm:$0x1]
        %v617 = vrot.slane %v610, 7
        %v618 = vsel %vm404, %v617, %v609
        %v621 = vrot.slane %v612, 7
        %v622 = vsel %vm404, %v621, %v611
        %v623 = vsel %vm410, %v618, 0
        %v625 = vsel %vm410, %v622, 0
        %627 = vmatpush.xpose.msra.mxu0 0.0
        %628 = vmatpush.xpose.msra.mxu0 0.0
        %629 = vmatpush.xpose.msra.mxu0 0.0
        %630 = vmatpush.xpose.msra.mxu0 0.0
        %631 = vmatpush.xpose.msra.mxu0 0.0
        %632 = vmatpush.xpose.msra.mxu0 0.0
        %633 = vmatpush.xpose.msra.mxu0 0.0
        %634 = vmatpush.xpose.msra.mxu0 0.0
        %635 = vmatpush.xpose.msra.mxu0 0.0
        %636 = vmatpush.xpose.msra.mxu0 0.0
        %637 = vmatpush.xpose.msra.mxu0 0.0
        %638 = vmatpush.xpose.msra.mxu0 0.0
        %639 = vmatpush.xpose.msra.mxu0 0.0
        %640 = vmatpush.xpose.msra.mxu0 0.0
        %641 = vmatpush.xpose.msra.mxu0 0.0
        %642 = vmatpush.xpose.msra.mxu0 %v625
        %643 = vmatmul.f32.gmra.mxu0 %v623
        %v644 = vpop.f32.mrf.mxu0
        %v645 = vadd.f32 0.0, %v644
        %646 = vdwg.mxu0
        %s647 = scalar_lea.vmem [#allocation2], 4
        %v648 = vld [vmem:[%s647] sm:$0x3]
        %v649 = vsel %vm436, %v645, -inf
        %650 = vmax.xlane.f32.xlu0 %v649
        %v651 = vpop.xlane.xlu0 %650
        %v652 = vmax.f32 %v648, %v651
        %v653 = vsub.f32 %v648, %v652
        %v654 = vmul.f32 %v653, 1.442695
        %v655 = vpow.pop %v654
        %657 = vset.pattern.permute.xlu0 0
        %658 = vperm.xlu0 %657, %v652
        %v659 = vpop.permute.xlu0 %658
        %v661 = vsub.f32 %v645, %v659
        %v662 = vmul.f32 %v661, 1.442695
        %v663 = vpow.pop %v662
        %s664 = scalar_lea.vmem [#allocation3], 4
        %v665 = vld [vmem:[%s664] sm:$0x3]
        %v666 = vmul.f32 %v655, %v665
        %v667 = vsel %vm436, %v663, 0.0
        %668 = vadd.xlane.f32.xlu0 %v667
        %v669 = vpop.xlane.xlu0 %668
        %v670 = vadd.f32 %v666, %v669
        %671 = vst.msk [vmem:[%s664] sm:$0x3] %vm458, %v670
        %s672 = scalar_lea.vmem [#allocation4], 4
        %v673 = vld [vmem:[%s672] sm:$0x3]
        %675 = vset.pattern.permute.xlu0 0
        %676 = vperm.xlu0 %675, %v655
        %v677 = vpop.permute.xlu0 %676
        %v679 = vmul.f32 %v677, %v673
        %v682 = vrot.slane %v614, 7
        %v683 = vsel %vm404, %v682, %v613
        %v685 = vsel %vm471, %v663, 0
        %v687 = vsel %vm475, %v683, 0
        %689 = vmatpush.msra.mxu0 0.0
        %690 = vmatpush.msra.mxu0 0.0
        %691 = vmatpush.msra.mxu0 0.0
        %692 = vmatpush.msra.mxu0 0.0
        %693 = vmatpush.msra.mxu0 0.0
        %694 = vmatpush.msra.mxu0 0.0
        %695 = vmatpush.msra.mxu0 0.0
        %696 = vmatpush.msra.mxu0 0.0
        %697 = vmatpush.msra.mxu0 0.0
        %698 = vmatpush.msra.mxu0 0.0
        %699 = vmatpush.msra.mxu0 0.0
        %700 = vmatpush.msra.mxu0 0.0
        %701 = vmatpush.msra.mxu0 0.0
        %702 = vmatpush.msra.mxu0 0.0
        %703 = vmatpush.msra.mxu0 0.0
        %704 = vmatpush.msra.mxu0 %v687
        %705 = vmatmul.f32.gmra.mxu0 %v685
        %v706 = vpop.f32.mrf.mxu0
        %v707 = vadd.f32 0.0, %v706
        %708 = vdwg.mxu0
        %v709 = vadd.f32 %v679, %v707
        %710 = vst.msk [vmem:[%s672] sm:$0x3] %vm499, %v709
        %711 = vst.msk [vmem:[%s647] sm:$0x3] %vm458, %v652
        %v712 = vld [vmem:[%s331 + $0x3] sm:$0x1]
        %v713 = vld [vmem:[%s331 + $0x7] sm:$0x1]
        %v714 = vmul.f32 %v712, 0.35355338
        %v715 = vmul.f32 %v713, 0.35355338
        %v716 = vld [vmem:[%s338 + $0x3] sm:$0x1]
        %v717 = vld [vmem:[%s338 + $0x7] sm:$0x1]
        %v718 = vld [vmem:[%s345 + $0x3] sm:$0x1]
        %v719 = vld [vmem:[%s345 + $0x7] sm:$0x1]
        %v722 = vrot.slane %v715, 7
        %v723 = vsel %vm404, %v722, %v714
        %v726 = vrot.slane %v717, 7
        %v727 = vsel %vm404, %v726, %v716
        %v728 = vsel %vm410, %v723, 0
        %v730 = vsel %vm410, %v727, 0
        %732 = vmatpush.xpose.msra.mxu0 0.0
        %733 = vmatpush.xpose.msra.mxu0 0.0
        %734 = vmatpush.xpose.msra.mxu0 0.0
        %735 = vmatpush.xpose.msra.mxu0 0.0
        %736 = vmatpush.xpose.msra.mxu0 0.0
        %737 = vmatpush.xpose.msra.mxu0 0.0
        %738 = vmatpush.xpose.msra.mxu0 0.0
        %739 = vmatpush.xpose.msra.mxu0 0.0
        %740 = vmatpush.xpose.msra.mxu0 0.0
        %741 = vmatpush.xpose.msra.mxu0 0.0
        %742 = vmatpush.xpose.msra.mxu0 0.0
        %743 = vmatpush.xpose.msra.mxu0 0.0
        %744 = vmatpush.xpose.msra.mxu0 0.0
        %745 = vmatpush.xpose.msra.mxu0 0.0
        %746 = vmatpush.xpose.msra.mxu0 0.0
        %747 = vmatpush.xpose.msra.mxu0 %v730
        %748 = vmatmul.f32.gmra.mxu0 %v728
        %v749 = vpop.f32.mrf.mxu0
        %v750 = vadd.f32 0.0, %v749
        %751 = vdwg.mxu0
        %s752 = scalar_lea.vmem [#allocation2], 6
        %v753 = vld [vmem:[%s752] sm:$0x3]
        %v754 = vsel %vm436, %v750, -inf
        %755 = vmax.xlane.f32.xlu0 %v754
        %v756 = vpop.xlane.xlu0 %755
        %v757 = vmax.f32 %v753, %v756
        %v758 = vsub.f32 %v753, %v757
        %v759 = vmul.f32 %v758, 1.442695
        %v760 = vpow.pop %v759
        %762 = vset.pattern.permute.xlu0 0
        %763 = vperm.xlu0 %762, %v757
        %v764 = vpop.permute.xlu0 %763
        %v766 = vsub.f32 %v750, %v764
        %v767 = vmul.f32 %v766, 1.442695
        %v768 = vpow.pop %v767
        %s769 = scalar_lea.vmem [#allocation3], 6
        %v770 = vld [vmem:[%s769] sm:$0x3]
        %v771 = vmul.f32 %v760, %v770
        %v772 = vsel %vm436, %v768, 0.0
        %773 = vadd.xlane.f32.xlu0 %v772
        %v774 = vpop.xlane.xlu0 %773
        %v775 = vadd.f32 %v771, %v774
        %776 = vst.msk [vmem:[%s769] sm:$0x3] %vm458, %v775
        %s777 = scalar_lea.vmem [#allocation4], 6
        %v778 = vld [vmem:[%s777] sm:$0x3]
        %780 = vset.pattern.permute.xlu0 0
        %781 = vperm.xlu0 %780, %v760
        %v782 = vpop.permute.xlu0 %781
        %v784 = vmul.f32 %v782, %v778
        %v787 = vrot.slane %v719, 7
        %v788 = vsel %vm404, %v787, %v718
        %v790 = vsel %vm471, %v768, 0
        %v792 = vsel %vm475, %v788, 0
        %794 = vmatpush.msra.mxu0 0.0
        %795 = vmatpush.msra.mxu0 0.0
        %796 = vmatpush.msra.mxu0 0.0
        %797 = vmatpush.msra.mxu0 0.0
        %798 = vmatpush.msra.mxu0 0.0
        %799 = vmatpush.msra.mxu0 0.0
        %800 = vmatpush.msra.mxu0 0.0
        %801 = vmatpush.msra.mxu0 0.0
        %802 = vmatpush.msra.mxu0 0.0
        %803 = vmatpush.msra.mxu0 0.0
        %804 = vmatpush.msra.mxu0 0.0
        %805 = vmatpush.msra.mxu0 0.0
        %806 = vmatpush.msra.mxu0 0.0
        %807 = vmatpush.msra.mxu0 0.0
        %808 = vmatpush.msra.mxu0 0.0
        %809 = vmatpush.msra.mxu0 %v792
        %810 = vmatmul.f32.gmra.mxu0 %v790
        %v811 = vpop.f32.mrf.mxu0
        %v812 = vadd.f32 0.0, %v811
        %813 = vdwg.mxu0
        %v814 = vadd.f32 %v784, %v812
        %815 = vst.msk [vmem:[%s777] sm:$0x3] %vm499, %v814
        %816 = vst.msk [vmem:[%s752] sm:$0x3] %vm458, %v757
        // Predicated region
        $region160: #{decoder_forward.19} parent=142 // pred_check
          %p817 = pneg %p375
        $region161: #{decoder_forward.19} parent=142 // pred_check_branch
          %819 = sbr.rel (%p817) target = $region163
        $region162: #{decoder_forward.19} parent=142 // pred_region
          %v820 = vld [vmem:[#allocation3] sm:$0x3]
          %v821 = vrcp.pop %v820
          %v822 = vld [vmem:[#allocation4] sm:$0x3]
          %824 = vset.pattern.permute.xlu0 0
          %825 = vperm.xlu0 %824, %v821
          %v826 = vpop.permute.xlu0 %825
          %v828 = vmul.f32 %v822, %v826
          %v830 = vrot.slane %v828, 1
          %vm832 = vcmask 57344
          %833 = vst.msk [vmem:[%s372] sm:$0x1] %vm832, %v828
          %834 = vst.msk [vmem:[%s372 + $0x4] sm:$0x1] %vm832, %v830
          %v835 = vld [vmem:[%s559] sm:$0x3]
          %v836 = vrcp.pop %v835
          %v837 = vld [vmem:[%s567] sm:$0x3]
          %839 = vset.pattern.permute.xlu0 0
          %840 = vperm.xlu0 %839, %v836
          %v841 = vpop.permute.xlu0 %840
          %v843 = vmul.f32 %v837, %v841
          %v845 = vrot.slane %v843, 1
          %847 = vst.msk [vmem:[%s372 + $0x1] sm:$0x1] %vm832, %v843
          %848 = vst.msk [vmem:[%s372 + $0x5] sm:$0x1] %vm832, %v845
          %v849 = vld [vmem:[%s664] sm:$0x3]
          %v850 = vrcp.pop %v849
          %v851 = vld [vmem:[%s672] sm:$0x3]
          %853 = vset.pattern.permute.xlu0 0
          %854 = vperm.xlu0 %853, %v850
          %v855 = vpop.permute.xlu0 %854
          %v857 = vmul.f32 %v851, %v855
          %v859 = vrot.slane %v857, 1
          %861 = vst.msk [vmem:[%s372 + $0x2] sm:$0x1] %vm832, %v857
          %862 = vst.msk [vmem:[%s372 + $0x6] sm:$0x1] %vm832, %v859
          %v863 = vld [vmem:[%s769] sm:$0x3]
          %v864 = vrcp.pop %v863
          %v865 = vld [vmem:[%s777] sm:$0x3]
          %867 = vset.pattern.permute.xlu0 0
          %868 = vperm.xlu0 %867, %v864
          %v869 = vpop.permute.xlu0 %868
          %v871 = vmul.f32 %v865, %v869
          %v873 = vrot.slane %v871, 1
          %875 = vst.msk [vmem:[%s372 + $0x3] sm:$0x1] %vm832, %v871
          %876 = vst.msk [vmem:[%s372 + $0x7] sm:$0x1] %vm832, %v873
        $region163: #{decoder_forward.19} parent=142 // pred_fallthru
          _
        %s877 = sand.u32 %s116, 1
        %s878 = sand.u32 %s116, 1
        %s879 = smul.addr %s878, 8
        %s880 = scalar_lea.vmem [#allocation8], %s879
        // Predicated region
        $region164: #{decoder_forward.19} parent=142 // pred_check
          %p881 = pneg %p126
        $region165: #{decoder_forward.19} parent=142 // pred_check_branch
          %883 = sbr.rel (%p881) target = $region167
        $region166: #{decoder_forward.19} parent=142 // pred_region
          %s884 = smul.addr %s18, 4
          %s885 = scalar_lea.vmem %s3, %s884
          // Predicated region
          $region168: #{decoder_forward.19} parent=166 // pred_check
            _
          $region169: #{decoder_forward.19} parent=166 // pred_check_branch
            %887 = sbr.rel (0) target = $region171
          $region170: #{decoder_forward.19} parent=166 // pred_region
            // Predicated region
            $region172: #{decoder_forward.19} parent=170 // pred_check
              _
            $region173: #{decoder_forward.19} parent=170 // pred_check_branch
              %889 = sbr.rel target = $region175
            $region174: #{decoder_forward.19} parent=170 // pred_region
              // Predicated region
              $region187: #{decoder_forward.19} parent=174 // pred_check
                _
              $region188: #{decoder_forward.19} parent=174 // pred_check_branch
                %907 = sbr.rel (0) target = $region190
              $region189: #{decoder_forward.19} parent=174 // pred_region
                loop: start=0, step=1, limit=1
                $region191: #{decoder_forward.19} parent=189 // loop_pre_header
                  _
                $region192: #{decoder_forward.19} parent=189 // loop_header
                  %s909 = sphi 0, %s913
                  %p910 = scmp.ge.s32.totalorder %s909, 1
                  %s914 = sphi %s880, %s880
                  %s915 = sphi %s885, %s885
                $region193: #{decoder_forward.19} parent=189 // loop_header_branch
                  %912 = sbr.rel (%p910) target = $region197
                $region194: #{decoder_forward.19} parent=189 // loop_body
                  _
                $region195: #{decoder_forward.19} parent=189 // loop_footer
                  %s913 = sadd.s32 1, %s909
                $region196: #{decoder_forward.19} parent=189 // loop_footer_branch
                  %908 = sbr.rel target = $region192
                $region197: #{decoder_forward.19} parent=189 // loop_exit
                  _
                %s917 = ssub.s32 16, 1
                loop: start=0, step=1, limit=1
                $region198: #{decoder_forward.19} parent=189 // loop_pre_header
                  _
                $region199: #{decoder_forward.19} parent=189 // loop_header
                  %s919 = sphi 0, %s923
                  %p920 = scmp.ge.s32.totalorder %s919, 1
                  %s924 = sphi %s880, %s880
                  %s925 = sphi %s885, %s885
                $region200: #{decoder_forward.19} parent=189 // loop_header_branch
                  %922 = sbr.rel (%p920) target = $region204
                $region201: #{decoder_forward.19} parent=189 // loop_body
                  %v926 = vld [vmem:[%s924] sm:%s917]
                  %927 = vst [vmem:[%s925] sm:%s917] %v926
                  %v928 = vld [vmem:[%s924 + $0x4] sm:%s917]
                  %929 = vst [vmem:[%s925 + $0x20] sm:%s917] %v928
                $region202: #{decoder_forward.19} parent=189 // loop_footer
                  %s923 = sadd.s32 1, %s919
                $region203: #{decoder_forward.19} parent=189 // loop_footer_branch
                  %918 = sbr.rel target = $region199
                $region204: #{decoder_forward.19} parent=189 // loop_exit
                  _
              $region190: #{decoder_forward.19} parent=174 // pred_fallthru
                _
            $region175: #{decoder_forward.19} parent=170 // pred_fallthru
              _
            // Predicated region
            $region176: #{decoder_forward.19} parent=170 // pred_check
              _
            $region177: #{decoder_forward.19} parent=170 // pred_check_branch
              %891 = sbr.rel (0) target = $region179
            $region178: #{decoder_forward.19} parent=170 // pred_region
              %s893 = ssub.s32 16, 1
              loop: start=0, step=1, limit=1
              $region180: #{decoder_forward.19} parent=178 // loop_pre_header
                _
              $region181: #{decoder_forward.19} parent=178 // loop_header
                %s895 = sphi 0, %s899
                %p896 = scmp.ge.s32.totalorder %s895, 1
                %s900 = sphi %s880, %s880
                %s901 = sphi %s885, %s885
              $region182: #{decoder_forward.19} parent=178 // loop_header_branch
                %898 = sbr.rel (%p896) target = $region186
              $region183: #{decoder_forward.19} parent=178 // loop_body
                %v902 = vld [vmem:[%s900] sm:%s893]
                %903 = vst [vmem:[%s901] sm:%s893] %v902
                %v904 = vld [vmem:[%s900 + $0x4] sm:%s893]
                %905 = vst [vmem:[%s901 + $0x20] sm:%s893] %v904
              $region184: #{decoder_forward.19} parent=178 // loop_footer
                %s899 = sadd.s32 1, %s895
              $region185: #{decoder_forward.19} parent=178 // loop_footer_branch
                %894 = sbr.rel target = $region181
              $region186: #{decoder_forward.19} parent=178 // loop_exit
                _
            $region179: #{decoder_forward.19} parent=170 // pred_fallthru
              _
          $region171: #{decoder_forward.19} parent=166 // pred_fallthru
            _
          %930 = vnop
        $region167: #{decoder_forward.19} parent=142 // pred_fallthru
          _
      $region143: #{decoder_forward.19} parent=5 // pred_fallthru
        _
      %p931 = scmp.le.s32.totalorder 2, %s9
      // Predicated region
      $region205: #{decoder_forward.19} parent=5 // pred_check
        %p932 = pneg %p931
      $region206: #{decoder_forward.19} parent=5 // pred_check_branch
        %934 = sbr.rel (%p932) target = $region208
      $region207: #{decoder_forward.19} parent=5 // pred_region
        %s935 = ssub.s32 %s9, 2
        // Predicated region
        $region209: #{decoder_forward.19} parent=207 // pred_check
          %p936 = pneg %p132
        $region210: #{decoder_forward.19} parent=207 // pred_check_branch
          %938 = sbr.rel (%p936) target = $region212
        $region211: #{decoder_forward.19} parent=207 // pred_region
          %s939 = sand.u32 %s117, 1
          %s940 = sand.u32 %s117, 1
          %s941 = smul.addr %s940, 8
          %s942 = scalar_lea.vmem [#allocation8], %s941
        $region212: #{decoder_forward.19} parent=207 // pred_fallthru
          _
      $region208: #{decoder_forward.19} parent=5 // pred_fallthru
        _
    $region6: #{decoder_forward.19} parent=1 // loop_footer
      %s13 = sadd.s32 1, %s9
    $region7: #{decoder_forward.19} parent=1 // loop_footer_branch
      %8 = sbr.rel target = $region3
    $region8: #{decoder_forward.19} parent=1 // loop_exit
      _

// kernel: decoder_forward.22
$region0: #{decoder_forward.22}
  #allocation0 [shape = 'u32[]', space=smem, size = 0x4, offset = 0x4, fixed_abs, tag = 'smem constant byte address 0x4 - core index']
  #allocation1 [shape = 'u32[72,128]{1,0:T(1,128)}', space=vmem, size = 0x9000, scoped, tag = 'internal scratch']
  #allocation2 [shape = 'f32[8,64]{1,0:T(8,128)}', space=vmem, size = 0x1000, scoped, tag = 'scratch operand']
  %s0 = inlined_call_operand.vmem [shape: f32[16,32], index: 0, kind: input, shape index: {}]
  %s1 = inlined_call_operand.vmem [shape: f32[32,64], index: 1, kind: input, shape index: {}]
  %s2 = inlined_call_operand.vmem [shape: f32[1,64], index: 2, kind: input, shape index: {}]
  %s3 = inlined_call_operand.vmem [shape: f32[16,64], index: 3, kind: output, shape index: {}]
  %s4 = sld [smem:[#allocation0]]
  $region53: #{decoder_forward.22} parent=0
    _
  %s6 = ssub.s32 1, %s4
  %s7 = scalar_select 0, %s6, %s4
  loop: start=0, step=1, limit=4
  $region2: #{decoder_forward.22} parent=0 // loop_pre_header
    _
  $region3: #{decoder_forward.22} parent=0 // loop_header
    %s9 = sphi 0, %s13
    %p10 = scmp.ge.s32.totalorder %s9, 4
    %s16 = sphi 0, %s35
    %s17 = sphi 0, %s31
    %s18 = sphi 0, %s27
    %s19 = sphi 0, %s16
    %s20 = sphi 0, %s17
    %s21 = sphi 0, %s18
    %s22 = sphi 0, %s19
    %s23 = sphi 0, %s20
    %s24 = sphi 0, %s21
    %s40 = sphi 0, %s42
    %s43 = sphi 0, %s40
    %s44 = sphi 0, %s43
    %s60 = sphi 0, %s44
    %s68 = sphi 0, %s70
    %s71 = sphi 0, %s68
    %s72 = sphi 0, %s71
    %s88 = sphi 0, %s72
    %s94 = sphi 0, %s96
    %s97 = sphi 0, %s94
    %s98 = sphi 0, %s97
    %s114 = sphi 0, %s98
    %s122 = sphi 0, %s124
    %s125 = sphi 0, %s122
    %s126 = sphi 0, %s125
    %s142 = sphi 0, %s126
  $region4: #{decoder_forward.22} parent=0 // loop_header_branch
    %12 = sbr.rel (%p10) target = $region8
  $region5: #{decoder_forward.22} parent=0 // loop_body
    %s14 = ssub.s32 %s9, 1
    %s15 = ssub.s32 %s9, 2
    %s25 = sadd.s32 1, %s18
    %p26 = scmp.ge.s32.totalorder %s25, 1
    %s27 = scalar_select %p26, 0, %s25
    %s28 = sadd.s32 1, %s17
    %s29 = scalar_select %p26, %s28, %s17
    %p30 = scmp.ge.s32.totalorder %s29, 1
    %s31 = scalar_select %p30, 0, %s29
    %s32 = sadd.s32 1, %s16
    %s33 = scalar_select %p30, %s32, %s16
    %p34 = scmp.ge.s32.totalorder %s33, 2
    %s35 = scalar_select %p34, 0, %s33
    %s36 = ssub.s32 %s16, %s35
    %s37 = ssub.s32 %s18, %s27
    %s38 = sor.u32 %s36, %s37
    %p39 = scmp.eq.s32.totalorder %s38, 0
    %s41 = sadd.s32 %s40, 1
    %s42 = scalar_select %p39, %s40, %s41
    %p45 = pneg %p39
    %p46 = scmp.eq.s32.totalorder %s9, 1
    %p47 = por %p45, %p46
    %p48 = scmp.ne.s32.totalorder %s40, %s43
    %p49 = scmp.eq.s32.totalorder %s9, 0
    %p50 = por %p48, %p49
    %p51 = scmp.ne.s32.totalorder %s40, %s43
    %p52 = scmp.eq.s32.totalorder %s14, 1
    %p53 = por %p51, %p52
    %p54 = scmp.ne.s32.totalorder %s43, %s44
    %p55 = scmp.eq.s32.totalorder %s14, 0
    %p56 = por %p54, %p55
    %p57 = scmp.ne.s32.totalorder %s43, %s44
    %p58 = scmp.eq.s32.totalorder %s15, 1
    %p59 = por %p57, %p58
    %p61 = scmp.ne.s32.totalorder %s44, %s60
    %p62 = scmp.eq.s32.totalorder %s15, 0
    %p63 = por %p61, %p62
    %s64 = ssub.s32 %s18, %s27
    %s65 = ssub.s32 %s17, %s31
    %s66 = sor.u32 %s64, %s65
    %p67 = scmp.eq.s32.totalorder %s66, 0
    %s69 = sadd.s32 %s68, 1
    %s70 = scalar_select %p67, %s68, %s69
    %p73 = pneg %p67
    %p74 = scmp.eq.s32.totalorder %s9, 1
    %p75 = por %p73, %p74
    %p76 = scmp.ne.s32.totalorder %s68, %s71
    %p77 = scmp.eq.s32.totalorder %s9, 0
    %p78 = por %p76, %p77
    %p79 = scmp.ne.s32.totalorder %s68, %s71
    %p80 = scmp.eq.s32.totalorder %s14, 1
    %p81 = por %p79, %p80
    %p82 = scmp.ne.s32.totalorder %s71, %s72
    %p83 = scmp.eq.s32.totalorder %s14, 0
    %p84 = por %p82, %p83
    %p85 = scmp.ne.s32.totalorder %s71, %s72
    %p86 = scmp.eq.s32.totalorder %s15, 1
    %p87 = por %p85, %p86
    %p89 = scmp.ne.s32.totalorder %s72, %s88
    %p90 = scmp.eq.s32.totalorder %s15, 0
    %p91 = por %p89, %p90
    %s92 = ssub.s32 %s17, %s31
    %p93 = scmp.eq.s32.totalorder %s92, 0
    %s95 = sadd.s32 %s94, 1
    %s96 = scalar_select %p93, %s94, %s95
    %p99 = pneg %p93
    %p100 = scmp.eq.s32.totalorder %s9, 1
    %p101 = por %p99, %p100
    %p102 = scmp.ne.s32.totalorder %s94, %s97
    %p103 = scmp.eq.s32.totalorder %s9, 0
    %p104 = por %p102, %p103
    %p105 = scmp.ne.s32.totalorder %s94, %s97
    %p106 = scmp.eq.s32.totalorder %s14, 1
    %p107 = por %p105, %p106
    %p108 = scmp.ne.s32.totalorder %s97, %s98
    %p109 = scmp.eq.s32.totalorder %s14, 0
    %p110 = por %p108, %p109
    %p111 = scmp.ne.s32.totalorder %s97, %s98
    %p112 = scmp.eq.s32.totalorder %s15, 1
    %p113 = por %p111, %p112
    %p115 = scmp.ne.s32.totalorder %s98, %s114
    %p116 = scmp.eq.s32.totalorder %s15, 0
    %p117 = por %p115, %p116
    %s118 = ssub.s32 %s16, %s35
    %s119 = ssub.s32 %s17, %s31
    %s120 = sor.u32 %s118, %s119
    %p121 = scmp.eq.s32.totalorder %s120, 0
    %s123 = sadd.s32 %s122, 1
    %s124 = scalar_select %p121, %s122, %s123
    %p127 = pneg %p121
    %p128 = scmp.eq.s32.totalorder %s9, 1
    %p129 = por %p127, %p128
    %p130 = scmp.ne.s32.totalorder %s122, %s125
    %p131 = scmp.eq.s32.totalorder %s9, 0
    %p132 = por %p130, %p131
    %p133 = scmp.ne.s32.totalorder %s122, %s125
    %p134 = scmp.eq.s32.totalorder %s14, 1
    %p135 = por %p133, %p134
    %p136 = scmp.ne.s32.totalorder %s125, %s126
    %p137 = scmp.eq.s32.totalorder %s14, 0
    %p138 = por %p136, %p137
    %p139 = scmp.ne.s32.totalorder %s125, %s126
    %p140 = scmp.eq.s32.totalorder %s15, 1
    %p141 = por %p139, %p140
    %p143 = scmp.ne.s32.totalorder %s126, %s142
    %p144 = scmp.eq.s32.totalorder %s15, 0
    %p145 = por %p143, %p144
    %p146 = scmp.le.s32.totalorder 1, %s9
    %p147 = scmp.lt.s32.totalorder %s9, 3
    %p148 = pnand %p146, %p147
    %p149 = pneg %p148
    // Predicated region
    $region9: #{decoder_forward.22} parent=5 // pred_check
      _
    $region10: #{decoder_forward.22} parent=5 // pred_check_branch
      %151 = sbr.rel (%p148) target = $region12
    $region11: #{decoder_forward.22} parent=5 // pred_region
      %s152 = ssub.s32 %s9, 1
      // Predicated region
      $region13: #{decoder_forward.22} parent=11 // pred_check
        %p153 = pneg %p84
      $region14: #{decoder_forward.22} parent=11 // pred_check_branch
        %155 = sbr.rel (%p153) target = $region16
      $region15: #{decoder_forward.22} parent=11 // pred_region
        %s156 = smul.u32 4, %s21
        %p157 = scmp.lt.s32.totalorder %s156, 3
        %s158 = scalar_select %p157, %s156, 3
        %p159 = scmp.lt.s32.totalorder %s20, 0
        %s160 = scalar_select %p159, %s20, 0
        %s161 = sadd.s32 %s160, %s158
        %s162 = smul.addr %s161, 8
        %s163 = scalar_lea.vmem %s1, %s162
        %s164 = smul.u32 4, %s21
      $region16: #{decoder_forward.22} parent=11 // pred_fallthru
        _
      // Predicated region
      $region17: #{decoder_forward.22} parent=11 // pred_check
        %p165 = pneg %p110
      $region18: #{decoder_forward.22} parent=11 // pred_check_branch
        %167 = sbr.rel (%p165) target = $region20
      $region19: #{decoder_forward.22} parent=11 // pred_region
        %p168 = scmp.lt.s32.totalorder %s20, 0
        %s169 = scalar_select %p168, %s20, 0
        %s170 = scalar_lea.vmem %s2, %s169
      $region20: #{decoder_forward.22} parent=11 // pred_fallthru
        _
    $region12: #{decoder_forward.22} parent=5 // pred_fallthru
      _
    %p171 = scmp.lt.s32.totalorder %s9, 2
    // Predicated region
    $region21: #{decoder_forward.22} parent=5 // pred_check
      %p172 = pneg %p171
    $region22: #{decoder_forward.22} parent=5 // pred_check_branch
      %174 = sbr.rel (%p172) target = $region24
    $region23: #{decoder_forward.22} parent=5 // pred_region
      // Predicated region
      $region25: #{decoder_forward.22} parent=23 // pred_check
        %p175 = pneg %p50
      $region26: #{decoder_forward.22} parent=23 // pred_check_branch
        %177 = sbr.rel (%p175) target = $region28
      $region27: #{decoder_forward.22} parent=23 // pred_region
        %p178 = scmp.lt.s32.totalorder %s16, 1
        %s179 = scalar_select %p178, %s16, 1
        %p180 = scmp.lt.s32.totalorder %s18, 0
        %s181 = scalar_select %p180, %s18, 0
        %s182 = sadd.s32 %s181, %s179
        %s183 = smul.addr %s182, 8
        %s184 = scalar_lea.vmem %s0, %s183
      $region28: #{decoder_forward.22} parent=23 // pred_fallthru
        _
    $region24: #{decoder_forward.22} parent=5 // pred_fallthru
      _
    %p185 = scmp.le.s32.totalorder 1, %s9
    %p186 = scmp.lt.s32.totalorder %s9, 3
    %p187 = pnand %p185, %p186
    %p188 = pneg %p187
    // Predicated region
    $region29: #{decoder_forward.22} parent=5 // pred_check
      _
    $region30: #{decoder_forward.22} parent=5 // pred_check_branch
      %190 = sbr.rel (%p187) target = $region32
    $region31: #{decoder_forward.22} parent=5 // pred_region
      %s191 = ssub.s32 %s9, 1
      %p192 = scmp.lt.s32.totalorder %s19, 1
      %s193 = scalar_select %p192, %s19, 1
      %p194 = scmp.lt.s32.totalorder %s21, 0
      %s195 = scalar_select %p194, %s21, 0
      %s196 = sadd.s32 %s195, %s193
      %s197 = smul.addr %s196, 8
      %s198 = scalar_lea.vmem %s0, %s197
      %p199 = pneg %p56
      %p200 = pneg %p53
      %s201 = smul.u32 4, %s21
      %p202 = scmp.lt.s32.totalorder %s201, 3
      %s203 = scalar_select %p202, %s201, 3
      %p204 = scmp.lt.s32.totalorder %s20, 0
      %s205 = scalar_select %p204, %s20, 0
      %s206 = sadd.s32 %s205, %s203
      %s207 = smul.addr %s206, 8
      %s208 = scalar_lea.vmem %s1, %s207
      %p209 = pneg %p84
      %p210 = pneg %p81
      %p211 = scmp.lt.s32.totalorder %s20, 0
      %s212 = scalar_select %p211, %s20, 0
      %s213 = scalar_lea.vmem %s2, %s212
      %p214 = pneg %p110
      %p215 = pneg %p107
      %p216 = pneg %p138
      %p217 = pneg %p135
      %p218 = scmp.lt.s32.totalorder %s19, 1
      %s219 = scalar_select %p218, %s19, 1
      %p220 = scmp.lt.s32.totalorder %s20, 0
      %s221 = scalar_select %p220, %s20, 0
      %s222 = sadd.s32 %s221, %s219
      %s223 = smul.addr %s222, 8
      %s224 = scalar_lea.vmem %s3, %s223
      %p225 = scmp.lt.s32.totalorder %s19, 1
      %s226 = scalar_select %p225, %s19, 1
      %p227 = scmp.lt.s32.totalorder %s21, 0
      %s228 = scalar_select %p227, %s21, 0
      %s229 = sadd.s32 %s228, %s226
      %s230 = smul.addr %s229, 8
      %s231 = scalar_lea.vmem %s0, %s230
      %s232 = smul.u32 4, %s21
      %p233 = scmp.lt.s32.totalorder %s232, 3
      %s234 = scalar_select %p233, %s232, 3
      %p235 = scmp.lt.s32.totalorder %s20, 0
      %s236 = scalar_select %p235, %s20, 0
      %s237 = sadd.s32 %s236, %s234
      %s238 = smul.addr %s237, 8
      %s239 = scalar_lea.vmem %s1, %s238
      %s240 = smul.u32 4, %s21
      %p241 = scmp.lt.s32.totalorder %s20, 0
      %s242 = scalar_select %p241, %s20, 0
      %s243 = scalar_lea.vmem %s2, %s242
      %p244 = scmp.lt.s32.totalorder %s19, 1
      %s245 = scalar_select %p244, %s19, 1
      %p246 = scmp.lt.s32.totalorder %s20, 0
      %s247 = scalar_select %p246, %s20, 0
      %s248 = sadd.s32 %s247, %s245
      %s249 = smul.addr %s248, 8
      %s250 = scalar_lea.vmem %s3, %s249
      %p251 = scmp.eq.s32.totalorder %s21, 0
      // Predicated region
      $region33: #{decoder_forward.22} parent=31 // pred_check
        %p252 = pneg %p251
      $region34: #{decoder_forward.22} parent=31 // pred_check_branch
        %254 = sbr.rel (%p252) target = $region36
      $region35: #{decoder_forward.22} parent=31 // pred_region
        %vm255 = vcmask 523264
        %256 = vst.msk [vmem:[#allocation2] sm:$0xff] %vm255, 0.0
      $region36: #{decoder_forward.22} parent=31 // pred_fallthru
        _
      %v257 = vld [vmem:[#allocation2] sm:$0xff]
      %v258 = vld [vmem:[%s231] sm:$0xff]
      %v259 = vld [vmem:[%s239] sm:$0xff]
      %v260 = vld [vmem:[%s239 + $0x8] sm:$0xff]
      %v261 = vld [vmem:[%s239 + $0x10] sm:$0xff]
      %v262 = vld [vmem:[%s239 + $0x18] sm:$0xff]
      %vm263 = vcmask 261120
      %v265 = vsel %vm263, %v258, 0
      %267 = vmatpush.msra.mxu0 0.0
      %268 = vmatpush.msra.mxu0 0.0
      %269 = vmatpush.msra.mxu0 0.0
      %270 = vmatpush.msra.mxu0 0.0
      %271 = vmatpush.msra.mxu0 0.0
      %272 = vmatpush.msra.mxu0 0.0
      %273 = vmatpush.msra.mxu0 0.0
      %274 = vmatpush.msra.mxu0 0.0
      %275 = vmatpush.msra.mxu0 0.0
      %276 = vmatpush.msra.mxu0 0.0
      %277 = vmatpush.msra.mxu0 0.0
      %278 = vmatpush.msra.mxu0 0.0
      %279 = vmatpush.msra.mxu0 %v262
      %280 = vmatpush.msra.mxu0 %v261
      %281 = vmatpush.msra.mxu0 %v260
      %282 = vmatpush.msra.mxu0 %v259
      %283 = vmatmul.f32.gmra.mxu0 %v265
      %v284 = vpop.f32.mrf.mxu0
      %v285 = vadd.f32 0.0, %v284
      %286 = vdwg.mxu0
      %v287 = vadd.f32 %v257, %v285
      %vm288 = vcmask 523264
      %289 = vst.msk [vmem:[#allocation2] sm:$0xff] %vm288, %v287
      // Predicated region
      $region37: #{decoder_forward.22} parent=31 // pred_check
        %p290 = pneg %p251
      $region38: #{decoder_forward.22} parent=31 // pred_check_branch
        %292 = sbr.rel (%p290) target = $region40
      $region39: #{decoder_forward.22} parent=31 // pred_region
        %v293 = vld [vmem:[#allocation2] sm:$0xff]
        %v294 = vld [vmem:[%s243] sm:$0x1]
        %v296 = vperm.slane %v294, 0
        %v298 = vadd.f32 %v293, %v296
        %299 = vst.msk [vmem:[%s250] sm:$0xff] %vm288, %v298
      $region40: #{decoder_forward.22} parent=31 // pred_fallthru
        _
      %p300 = scmp.lt.s32.totalorder %s19, 1
      %s301 = scalar_select %p300, %s19, 1
      %p302 = scmp.lt.s32.totalorder %s20, 0
      %s303 = scalar_select %p302, %s20, 0
      %s304 = sadd.s32 %s303, %s301
      %s305 = smul.addr %s304, 8
      %s306 = scalar_lea.vmem %s3, %s305
      // Predicated region
      $region41: #{decoder_forward.22} parent=31 // pred_check
        %p307 = pneg %p135
      $region42: #{decoder_forward.22} parent=31 // pred_check_branch
        %309 = sbr.rel (%p307) target = $region44
      $region43: #{decoder_forward.22} parent=31 // pred_region
        _
      $region44: #{decoder_forward.22} parent=31 // pred_fallthru
        _
    $region32: #{decoder_forward.22} parent=5 // pred_fallthru
      _
    %p310 = scmp.le.s32.totalorder 2, %s9
    // Predicated region
    $region45: #{decoder_forward.22} parent=5 // pred_check
      %p311 = pneg %p310
    $region46: #{decoder_forward.22} parent=5 // pred_check_branch
      %313 = sbr.rel (%p311) target = $region48
    $region47: #{decoder_forward.22} parent=5 // pred_region
      %s314 = ssub.s32 %s9, 2
      // Predicated region
      $region49: #{decoder_forward.22} parent=47 // pred_check
        %p315 = pneg %p141
      $region50: #{decoder_forward.22} parent=47 // pred_check_branch
        %317 = sbr.rel (%p315) target = $region52
      $region51: #{decoder_forward.22} parent=47 // pred_region
        %p318 = scmp.lt.s32.totalorder %s22, 1
        %s319 = scalar_select %p318, %s22, 1
        %p320 = scmp.lt.s32.totalorder %s23, 0
        %s321 = scalar_select %p320, %s23, 0
        %s322 = sadd.s32 %s321, %s319
        %s323 = smul.addr %s322, 8
        %s324 = scalar_lea.vmem %s3, %s323
      $region52: #{decoder_forward.22} parent=47 // pred_fallthru
        _
    $region48: #{decoder_forward.22} parent=5 // pred_fallthru
      _
  $region6: #{decoder_forward.22} parent=0 // loop_footer
    %s13 = sadd.s32 1, %s9
  $region7: #{decoder_forward.22} parent=0 // loop_footer_branch
    %8 = sbr.rel target = $region3
  $region8: #{decoder_forward.22} parent=0 // loop_exit
    _

// kernel: decoder_forward.25
$region0: #{decoder_forward.25}
  #allocation0 [shape = 'u32[]', space=smem, size = 0x4, offset = 0x4, fixed_abs, tag = 'smem constant byte address 0x4 - core index']
  #allocation1 [shape = 'u32[72,128]{1,0:T(1,128)}', space=vmem, size = 0x9000, scoped, tag = 'internal scratch']
  #allocation2 [shape = 'f32[8,64]{1,0:T(8,128)}', space=vmem, size = 0x1000, scoped, tag = 'scratch operand']
  %s0 = inlined_call_operand.vmem [shape: f32[16,32], index: 0, kind: input, shape index: {}]
  %s1 = inlined_call_operand.vmem [shape: f32[32,64], index: 1, kind: input, shape index: {}]
  %s2 = inlined_call_operand.vmem [shape: f32[1,64], index: 2, kind: input, shape index: {}]
  %s3 = inlined_call_operand.vmem [shape: f32[16,64], index: 3, kind: output, shape index: {}]
  %s4 = sld [smem:[#allocation0]]
  $region53: #{decoder_forward.25} parent=0
    _
  %s6 = ssub.s32 1, %s4
  %s7 = scalar_select 0, %s6, %s4
  loop: start=0, step=1, limit=4
  $region2: #{decoder_forward.25} parent=0 // loop_pre_header
    _
  $region3: #{decoder_forward.25} parent=0 // loop_header
    %s9 = sphi 0, %s13
    %p10 = scmp.ge.s32.totalorder %s9, 4
    %s16 = sphi 0, %s35
    %s17 = sphi 0, %s31
    %s18 = sphi 0, %s27
    %s19 = sphi 0, %s16
    %s20 = sphi 0, %s17
    %s21 = sphi 0, %s18
    %s22 = sphi 0, %s19
    %s23 = sphi 0, %s20
    %s24 = sphi 0, %s21
    %s40 = sphi 0, %s42
    %s43 = sphi 0, %s40
    %s44 = sphi 0, %s43
    %s60 = sphi 0, %s44
    %s68 = sphi 0, %s70
    %s71 = sphi 0, %s68
    %s72 = sphi 0, %s71
    %s88 = sphi 0, %s72
    %s94 = sphi 0, %s96
    %s97 = sphi 0, %s94
    %s98 = sphi 0, %s97
    %s114 = sphi 0, %s98
    %s122 = sphi 0, %s124
    %s125 = sphi 0, %s122
    %s126 = sphi 0, %s125
    %s142 = sphi 0, %s126
  $region4: #{decoder_forward.25} parent=0 // loop_header_branch
    %12 = sbr.rel (%p10) target = $region8
  $region5: #{decoder_forward.25} parent=0 // loop_body
    %s14 = ssub.s32 %s9, 1
    %s15 = ssub.s32 %s9, 2
    %s25 = sadd.s32 1, %s18
    %p26 = scmp.ge.s32.totalorder %s25, 1
    %s27 = scalar_select %p26, 0, %s25
    %s28 = sadd.s32 1, %s17
    %s29 = scalar_select %p26, %s28, %s17
    %p30 = scmp.ge.s32.totalorder %s29, 1
    %s31 = scalar_select %p30, 0, %s29
    %s32 = sadd.s32 1, %s16
    %s33 = scalar_select %p30, %s32, %s16
    %p34 = scmp.ge.s32.totalorder %s33, 2
    %s35 = scalar_select %p34, 0, %s33
    %s36 = ssub.s32 %s16, %s35
    %s37 = ssub.s32 %s18, %s27
    %s38 = sor.u32 %s36, %s37
    %p39 = scmp.eq.s32.totalorder %s38, 0
    %s41 = sadd.s32 %s40, 1
    %s42 = scalar_select %p39, %s40, %s41
    %p45 = pneg %p39
    %p46 = scmp.eq.s32.totalorder %s9, 1
    %p47 = por %p45, %p46
    %p48 = scmp.ne.s32.totalorder %s40, %s43
    %p49 = scmp.eq.s32.totalorder %s9, 0
    %p50 = por %p48, %p49
    %p51 = scmp.ne.s32.totalorder %s40, %s43
    %p52 = scmp.eq.s32.totalorder %s14, 1
    %p53 = por %p51, %p52
    %p54 = scmp.ne.s32.totalorder %s43, %s44
    %p55 = scmp.eq.s32.totalorder %s14, 0
    %p56 = por %p54, %p55
    %p57 = scmp.ne.s32.totalorder %s43, %s44
    %p58 = scmp.eq.s32.totalorder %s15, 1
    %p59 = por %p57, %p58
    %p61 = scmp.ne.s32.totalorder %s44, %s60
    %p62 = scmp.eq.s32.totalorder %s15, 0
    %p63 = por %p61, %p62
    %s64 = ssub.s32 %s18, %s27
    %s65 = ssub.s32 %s17, %s31
    %s66 = sor.u32 %s64, %s65
    %p67 = scmp.eq.s32.totalorder %s66, 0
    %s69 = sadd.s32 %s68, 1
    %s70 = scalar_select %p67, %s68, %s69
    %p73 = pneg %p67
    %p74 = scmp.eq.s32.totalorder %s9, 1
    %p75 = por %p73, %p74
    %p76 = scmp.ne.s32.totalorder %s68, %s71
    %p77 = scmp.eq.s32.totalorder %s9, 0
    %p78 = por %p76, %p77
    %p79 = scmp.ne.s32.totalorder %s68, %s71
    %p80 = scmp.eq.s32.totalorder %s14, 1
    %p81 = por %p79, %p80
    %p82 = scmp.ne.s32.totalorder %s71, %s72
    %p83 = scmp.eq.s32.totalorder %s14, 0
    %p84 = por %p82, %p83
    %p85 = scmp.ne.s32.totalorder %s71, %s72
    %p86 = scmp.eq.s32.totalorder %s15, 1
    %p87 = por %p85, %p86
    %p89 = scmp.ne.s32.totalorder %s72, %s88
    %p90 = scmp.eq.s32.totalorder %s15, 0
    %p91 = por %p89, %p90
    %s92 = ssub.s32 %s17, %s31
    %p93 = scmp.eq.s32.totalorder %s92, 0
    %s95 = sadd.s32 %s94, 1
    %s96 = scalar_select %p93, %s94, %s95
    %p99 = pneg %p93
    %p100 = scmp.eq.s32.totalorder %s9, 1
    %p101 = por %p99, %p100
    %p102 = scmp.ne.s32.totalorder %s94, %s97
    %p103 = scmp.eq.s32.totalorder %s9, 0
    %p104 = por %p102, %p103
    %p105 = scmp.ne.s32.totalorder %s94, %s97
    %p106 = scmp.eq.s32.totalorder %s14, 1
    %p107 = por %p105, %p106
    %p108 = scmp.ne.s32.totalorder %s97, %s98
    %p109 = scmp.eq.s32.totalorder %s14, 0
    %p110 = por %p108, %p109
    %p111 = scmp.ne.s32.totalorder %s97, %s98
    %p112 = scmp.eq.s32.totalorder %s15, 1
    %p113 = por %p111, %p112
    %p115 = scmp.ne.s32.totalorder %s98, %s114
    %p116 = scmp.eq.s32.totalorder %s15, 0
    %p117 = por %p115, %p116
    %s118 = ssub.s32 %s16, %s35
    %s119 = ssub.s32 %s17, %s31
    %s120 = sor.u32 %s118, %s119
    %p121 = scmp.eq.s32.totalorder %s120, 0
    %s123 = sadd.s32 %s122, 1
    %s124 = scalar_select %p121, %s122, %s123
    %p127 = pneg %p121
    %p128 = scmp.eq.s32.totalorder %s9, 1
    %p129 = por %p127, %p128
    %p130 = scmp.ne.s32.totalorder %s122, %s125
    %p131 = scmp.eq.s32.totalorder %s9, 0
    %p132 = por %p130, %p131
    %p133 = scmp.ne.s32.totalorder %s122, %s125
    %p134 = scmp.eq.s32.totalorder %s14, 1
    %p135 = por %p133, %p134
    %p136 = scmp.ne.s32.totalorder %s125, %s126
    %p137 = scmp.eq.s32.totalorder %s14, 0
    %p138 = por %p136, %p137
    %p139 = scmp.ne.s32.totalorder %s125, %s126
    %p140 = scmp.eq.s32.totalorder %s15, 1
    %p141 = por %p139, %p140
    %p143 = scmp.ne.s32.totalorder %s126, %s142
    %p144 = scmp.eq.s32.totalorder %s15, 0
    %p145 = por %p143, %p144
    %p146 = scmp.le.s32.totalorder 1, %s9
    %p147 = scmp.lt.s32.totalorder %s9, 3
    %p148 = pnand %p146, %p147
    %p149 = pneg %p148
    // Predicated region
    $region9: #{decoder_forward.25} parent=5 // pred_check
      _
    $region10: #{decoder_forward.25} parent=5 // pred_check_branch
      %151 = sbr.rel (%p148) target = $region12
    $region11: #{decoder_forward.25} parent=5 // pred_region
      %s152 = ssub.s32 %s9, 1
      // Predicated region
      $region13: #{decoder_forward.25} parent=11 // pred_check
        %p153 = pneg %p84
      $region14: #{decoder_forward.25} parent=11 // pred_check_branch
        %155 = sbr.rel (%p153) target = $region16
      $region15: #{decoder_forward.25} parent=11 // pred_region
        %s156 = smul.u32 4, %s21
        %p157 = scmp.lt.s32.totalorder %s156, 3
        %s158 = scalar_select %p157, %s156, 3
        %p159 = scmp.lt.s32.totalorder %s20, 0
        %s160 = scalar_select %p159, %s20, 0
        %s161 = sadd.s32 %s160, %s158
        %s162 = smul.addr %s161, 8
        %s163 = scalar_lea.vmem %s1, %s162
        %s164 = smul.u32 4, %s21
      $region16: #{decoder_forward.25} parent=11 // pred_fallthru
        _
      // Predicated region
      $region17: #{decoder_forward.25} parent=11 // pred_check
        %p165 = pneg %p110
      $region18: #{decoder_forward.25} parent=11 // pred_check_branch
        %167 = sbr.rel (%p165) target = $region20
      $region19: #{decoder_forward.25} parent=11 // pred_region
        %p168 = scmp.lt.s32.totalorder %s20, 0
        %s169 = scalar_select %p168, %s20, 0
        %s170 = scalar_lea.vmem %s2, %s169
      $region20: #{decoder_forward.25} parent=11 // pred_fallthru
        _
    $region12: #{decoder_forward.25} parent=5 // pred_fallthru
      _
    %p171 = scmp.lt.s32.totalorder %s9, 2
    // Predicated region
    $region21: #{decoder_forward.25} parent=5 // pred_check
      %p172 = pneg %p171
    $region22: #{decoder_forward.25} parent=5 // pred_check_branch
      %174 = sbr.rel (%p172) target = $region24
    $region23: #{decoder_forward.25} parent=5 // pred_region
      // Predicated region
      $region25: #{decoder_forward.25} parent=23 // pred_check
        %p175 = pneg %p50
      $region26: #{decoder_forward.25} parent=23 // pred_check_branch
        %177 = sbr.rel (%p175) target = $region28
      $region27: #{decoder_forward.25} parent=23 // pred_region
        %p178 = scmp.lt.s32.totalorder %s16, 1
        %s179 = scalar_select %p178, %s16, 1
        %p180 = scmp.lt.s32.totalorder %s18, 0
        %s181 = scalar_select %p180, %s18, 0
        %s182 = sadd.s32 %s181, %s179
        %s183 = smul.addr %s182, 8
        %s184 = scalar_lea.vmem %s0, %s183
      $region28: #{decoder_forward.25} parent=23 // pred_fallthru
        _
    $region24: #{decoder_forward.25} parent=5 // pred_fallthru
      _
    %p185 = scmp.le.s32.totalorder 1, %s9
    %p186 = scmp.lt.s32.totalorder %s9, 3
    %p187 = pnand %p185, %p186
    %p188 = pneg %p187
    // Predicated region
    $region29: #{decoder_forward.25} parent=5 // pred_check
      _
    $region30: #{decoder_forward.25} parent=5 // pred_check_branch
      %190 = sbr.rel (%p187) target = $region32
    $region31: #{decoder_forward.25} parent=5 // pred_region
      %s191 = ssub.s32 %s9, 1
      %p192 = scmp.lt.s32.totalorder %s19, 1
      %s193 = scalar_select %p192, %s19, 1
      %p194 = scmp.lt.s32.totalorder %s21, 0
      %s195 = scalar_select %p194, %s21, 0
      %s196 = sadd.s32 %s195, %s193
      %s197 = smul.addr %s196, 8
      %s198 = scalar_lea.vmem %s0, %s197
      %p199 = pneg %p56
      %p200 = pneg %p53
      %s201 = smul.u32 4, %s21
      %p202 = scmp.lt.s32.totalorder %s201, 3
      %s203 = scalar_select %p202, %s201, 3
      %p204 = scmp.lt.s32.totalorder %s20, 0
      %s205 = scalar_select %p204, %s20, 0
      %s206 = sadd.s32 %s205, %s203
      %s207 = smul.addr %s206, 8
      %s208 = scalar_lea.vmem %s1, %s207
      %p209 = pneg %p84
      %p210 = pneg %p81
      %p211 = scmp.lt.s32.totalorder %s20, 0
      %s212 = scalar_select %p211, %s20, 0
      %s213 = scalar_lea.vmem %s2, %s212
      %p214 = pneg %p110
      %p215 = pneg %p107
      %p216 = pneg %p138
      %p217 = pneg %p135
      %p218 = scmp.lt.s32.totalorder %s19, 1
      %s219 = scalar_select %p218, %s19, 1
      %p220 = scmp.lt.s32.totalorder %s20, 0
      %s221 = scalar_select %p220, %s20, 0
      %s222 = sadd.s32 %s221, %s219
      %s223 = smul.addr %s222, 8
      %s224 = scalar_lea.vmem %s3, %s223
      %p225 = scmp.lt.s32.totalorder %s19, 1
      %s226 = scalar_select %p225, %s19, 1
      %p227 = scmp.lt.s32.totalorder %s21, 0
      %s228 = scalar_select %p227, %s21, 0
      %s229 = sadd.s32 %s228, %s226
      %s230 = smul.addr %s229, 8
      %s231 = scalar_lea.vmem %s0, %s230
      %s232 = smul.u32 4, %s21
      %p233 = scmp.lt.s32.totalorder %s232, 3
      %s234 = scalar_select %p233, %s232, 3
      %p235 = scmp.lt.s32.totalorder %s20, 0
      %s236 = scalar_select %p235, %s20, 0
      %s237 = sadd.s32 %s236, %s234
      %s238 = smul.addr %s237, 8
      %s239 = scalar_lea.vmem %s1, %s238
      %s240 = smul.u32 4, %s21
      %p241 = scmp.lt.s32.totalorder %s20, 0
      %s242 = scalar_select %p241, %s20, 0
      %s243 = scalar_lea.vmem %s2, %s242
      %p244 = scmp.lt.s32.totalorder %s19, 1
      %s245 = scalar_select %p244, %s19, 1
      %p246 = scmp.lt.s32.totalorder %s20, 0
      %s247 = scalar_select %p246, %s20, 0
      %s248 = sadd.s32 %s247, %s245
      %s249 = smul.addr %s248, 8
      %s250 = scalar_lea.vmem %s3, %s249
      %p251 = scmp.eq.s32.totalorder %s21, 0
      // Predicated region
      $region33: #{decoder_forward.25} parent=31 // pred_check
        %p252 = pneg %p251
      $region34: #{decoder_forward.25} parent=31 // pred_check_branch
        %254 = sbr.rel (%p252) target = $region36
      $region35: #{decoder_forward.25} parent=31 // pred_region
        %vm255 = vcmask 523264
        %256 = vst.msk [vmem:[#allocation2] sm:$0xff] %vm255, 0.0
      $region36: #{decoder_forward.25} parent=31 // pred_fallthru
        _
      %v257 = vld [vmem:[#allocation2] sm:$0xff]
      %v258 = vld [vmem:[%s231] sm:$0xff]
      %v259 = vld [vmem:[%s239] sm:$0xff]
      %v260 = vld [vmem:[%s239 + $0x8] sm:$0xff]
      %v261 = vld [vmem:[%s239 + $0x10] sm:$0xff]
      %v262 = vld [vmem:[%s239 + $0x18] sm:$0xff]
      %vm263 = vcmask 261120
      %v265 = vsel %vm263, %v258, 0
      %267 = vmatpush.msra.mxu0 0.0
      %268 = vmatpush.msra.mxu0 0.0
      %269 = vmatpush.msra.mxu0 0.0
      %270 = vmatpush.msra.mxu0 0.0
      %271 = vmatpush.msra.mxu0 0.0
      %272 = vmatpush.msra.mxu0 0.0
      %273 = vmatpush.msra.mxu0 0.0
      %274 = vmatpush.msra.mxu0 0.0
      %275 = vmatpush.msra.mxu0 0.0
      %276 = vmatpush.msra.mxu0 0.0
      %277 = vmatpush.msra.mxu0 0.0
      %278 = vmatpush.msra.mxu0 0.0
      %279 = vmatpush.msra.mxu0 %v262
      %280 = vmatpush.msra.mxu0 %v261
      %281 = vmatpush.msra.mxu0 %v260
      %282 = vmatpush.msra.mxu0 %v259
      %283 = vmatmul.f32.gmra.mxu0 %v265
      %v284 = vpop.f32.mrf.mxu0
      %v285 = vadd.f32 0.0, %v284
      %286 = vdwg.mxu0
      %v287 = vadd.f32 %v257, %v285
      %vm288 = vcmask 523264
      %289 = vst.msk [vmem:[#allocation2] sm:$0xff] %vm288, %v287
      // Predicated region
      $region37: #{decoder_forward.25} parent=31 // pred_check
        %p290 = pneg %p251
      $region38: #{decoder_forward.25} parent=31 // pred_check_branch
        %292 = sbr.rel (%p290) target = $region40
      $region39: #{decoder_forward.25} parent=31 // pred_region
        %v293 = vld [vmem:[#allocation2] sm:$0xff]
        %v294 = vld [vmem:[%s243] sm:$0x1]
        %v296 = vperm.slane %v294, 0
        %v298 = vadd.f32 %v293, %v296
        %v299 = vmax.f32 %v298, 0.0
        %300 = vst.msk [vmem:[%s250] sm:$0xff] %vm288, %v299
      $region40: #{decoder_forward.25} parent=31 // pred_fallthru
        _
      %p301 = scmp.lt.s32.totalorder %s19, 1
      %s302 = scalar_select %p301, %s19, 1
      %p303 = scmp.lt.s32.totalorder %s20, 0
      %s304 = scalar_select %p303, %s20, 0
      %s305 = sadd.s32 %s304, %s302
      %s306 = smul.addr %s305, 8
      %s307 = scalar_lea.vmem %s3, %s306
      // Predicated region
      $region41: #{decoder_forward.25} parent=31 // pred_check
        %p308 = pneg %p135
      $region42: #{decoder_forward.25} parent=31 // pred_check_branch
        %310 = sbr.rel (%p308) target = $region44
      $region43: #{decoder_forward.25} parent=31 // pred_region
        _
      $region44: #{decoder_forward.25} parent=31 // pred_fallthru
        _
    $region32: #{decoder_forward.25} parent=5 // pred_fallthru
      _
    %p311 = scmp.le.s32.totalorder 2, %s9
    // Predicated region
    $region45: #{decoder_forward.25} parent=5 // pred_check
      %p312 = pneg %p311
    $region46: #{decoder_forward.25} parent=5 // pred_check_branch
      %314 = sbr.rel (%p312) target = $region48
    $region47: #{decoder_forward.25} parent=5 // pred_region
      %s315 = ssub.s32 %s9, 2
      // Predicated region
      $region49: #{decoder_forward.25} parent=47 // pred_check
        %p316 = pneg %p141
      $region50: #{decoder_forward.25} parent=47 // pred_check_branch
        %318 = sbr.rel (%p316) target = $region52
      $region51: #{decoder_forward.25} parent=47 // pred_region
        %p319 = scmp.lt.s32.totalorder %s22, 1
        %s320 = scalar_select %p319, %s22, 1
        %p321 = scmp.lt.s32.totalorder %s23, 0
        %s322 = scalar_select %p321, %s23, 0
        %s323 = sadd.s32 %s322, %s320
        %s324 = smul.addr %s323, 8
        %s325 = scalar_lea.vmem %s3, %s324
      $region52: #{decoder_forward.25} parent=47 // pred_fallthru
        _
    $region48: #{decoder_forward.25} parent=5 // pred_fallthru
      _
  $region6: #{decoder_forward.25} parent=0 // loop_footer
    %s13 = sadd.s32 1, %s9
  $region7: #{decoder_forward.25} parent=0 // loop_footer_branch
    %8 = sbr.rel target = $region3
  $region8: #{decoder_forward.25} parent=0 // loop_exit
    _

// kernel: decoder_forward.26
$region0: #{decoder_forward.26}
  #allocation0 [shape = 'u32[]', space=smem, size = 0x4, offset = 0x4, fixed_abs, tag = 'smem constant byte address 0x4 - core index']
  #allocation1 [shape = 'u32[72,128]{1,0:T(1,128)}', space=vmem, size = 0x9000, scoped, tag = 'internal scratch']
  #allocation2 [shape = 'f32[8,32]{1,0:T(8,128)}', space=vmem, size = 0x1000, scoped, tag = 'scratch operand']
  %s0 = inlined_call_operand.vmem [shape: f32[16,64], index: 0, kind: input, shape index: {}]
  %s1 = inlined_call_operand.vmem [shape: f32[64,32], index: 1, kind: input, shape index: {}]
  %s2 = inlined_call_operand.vmem [shape: f32[1,32], index: 2, kind: input, shape index: {}]
  %s3 = inlined_call_operand.vmem [shape: f32[16,32], index: 3, kind: input, shape index: {}]
  %s4 = inlined_call_operand.vmem [shape: f32[1,32], index: 4, kind: input, shape index: {}]
  %s5 = inlined_call_operand.vmem [shape: f32[1,32], index: 5, kind: input, shape index: {}]
  %s6 = inlined_call_operand.vmem [shape: f32[16,32], index: 6, kind: output, shape index: {}]
  %s7 = sld [smem:[#allocation0]]
  $region65: #{decoder_forward.26} parent=0
    _
  %s9 = ssub.s32 1, %s7
  %s10 = scalar_select 0, %s9, %s7
  loop: start=0, step=1, limit=4
  $region2: #{decoder_forward.26} parent=0 // loop_pre_header
    _
  $region3: #{decoder_forward.26} parent=0 // loop_header
    %s12 = sphi 0, %s16
    %p13 = scmp.ge.s32.totalorder %s12, 4
    %s19 = sphi 0, %s31
    %s20 = sphi 0, %s27
    %s21 = sphi 0, %s19
    %s22 = sphi 0, %s20
    %s23 = sphi 0, %s21
    %s24 = sphi 0, %s22
    %s36 = sphi 0, %s38
    %s39 = sphi 0, %s36
    %s40 = sphi 0, %s39
    %s56 = sphi 0, %s40
    %s62 = sphi 0, %s64
    %s65 = sphi 0, %s62
    %s66 = sphi 0, %s65
    %s82 = sphi 0, %s66
    %s86 = sphi 0, %s86
    %s88 = sphi 0, %s86
    %s89 = sphi 0, %s88
    %s103 = sphi 0, %s89
    %s109 = sphi 0, %s111
    %s112 = sphi 0, %s109
    %s113 = sphi 0, %s112
    %s129 = sphi 0, %s113
    %s133 = sphi 0, %s133
    %s135 = sphi 0, %s133
    %s136 = sphi 0, %s135
    %s150 = sphi 0, %s136
    %s154 = sphi 0, %s154
    %s156 = sphi 0, %s154
    %s157 = sphi 0, %s156
    %s171 = sphi 0, %s157
    %s177 = sphi 0, %s179
    %s180 = sphi 0, %s177
    %s181 = sphi 0, %s180
    %s197 = sphi 0, %s181
  $region4: #{decoder_forward.26} parent=0 // loop_header_branch
    %15 = sbr.rel (%p13) target = $region8
  $region5: #{decoder_forward.26} parent=0 // loop_body
    %s17 = ssub.s32 %s12, 1
    %s18 = ssub.s32 %s12, 2
    %s25 = sadd.s32 1, %s20
    %p26 = scmp.ge.s32.totalorder %s25, 1
    %s27 = scalar_select %p26, 0, %s25
    %s28 = sadd.s32 1, %s19
    %s29 = scalar_select %p26, %s28, %s19
    %p30 = scmp.ge.s32.totalorder %s29, 2
    %s31 = scalar_select %p30, 0, %s29
    %s32 = ssub.s32 %s19, %s31
    %s33 = ssub.s32 %s20, %s27
    %s34 = sor.u32 %s32, %s33
    %p35 = scmp.eq.s32.totalorder %s34, 0
    %s37 = sadd.s32 %s36, 1
    %s38 = scalar_select %p35, %s36, %s37
    %p41 = pneg %p35
    %p42 = scmp.eq.s32.totalorder %s12, 1
    %p43 = por %p41, %p42
    %p44 = scmp.ne.s32.totalorder %s36, %s39
    %p45 = scmp.eq.s32.totalorder %s12, 0
    %p46 = por %p44, %p45
    %p47 = scmp.ne.s32.totalorder %s36, %s39
    %p48 = scmp.eq.s32.totalorder %s17, 1
    %p49 = por %p47, %p48
    %p50 = scmp.ne.s32.totalorder %s39, %s40
    %p51 = scmp.eq.s32.totalorder %s17, 0
    %p52 = por %p50, %p51
    %p53 = scmp.ne.s32.totalorder %s39, %s40
    %p54 = scmp.eq.s32.totalorder %s18, 1
    %p55 = por %p53, %p54
    %p57 = scmp.ne.s32.totalorder %s40, %s56
    %p58 = scmp.eq.s32.totalorder %s18, 0
    %p59 = por %p57, %p58
    %s60 = ssub.s32 %s20, %s27
    %p61 = scmp.eq.s32.totalorder %s60, 0
    %s63 = sadd.s32 %s62, 1
    %s64 = scalar_select %p61, %s62, %s63
    %p67 = pneg %p61
    %p68 = scmp.eq.s32.totalorder %s12, 1
    %p69 = por %p67, %p68
    %p70 = scmp.ne.s32.totalorder %s62, %s65
    %p71 = scmp.eq.s32.totalorder %s12, 0
    %p72 = por %p70, %p71
    %p73 = scmp.ne.s32.totalorder %s62, %s65
    %p74 = scmp.eq.s32.totalorder %s17, 1
    %p75 = por %p73, %p74
    %p76 = scmp.ne.s32.totalorder %s65, %s66
    %p77 = scmp.eq.s32.totalorder %s17, 0
    %p78 = por %p76, %p77
    %p79 = scmp.ne.s32.totalorder %s65, %s66
    %p80 = scmp.eq.s32.totalorder %s18, 1
    %p81 = por %p79, %p80
    %p83 = scmp.ne.s32.totalorder %s66, %s82
    %p84 = scmp.eq.s32.totalorder %s18, 0
    %p85 = por %p83, %p84
    %s87 = sadd.s32 %s86, 1
    %p90 = scmp.eq.s32.totalorder %s12, 1
    %p91 = scmp.ne.s32.totalorder %s86, %s88
    %p92 = scmp.eq.s32.totalorder %s12, 0
    %p93 = por %p91, %p92
    %p94 = scmp.ne.s32.totalorder %s86, %s88
    %p95 = scmp.eq.s32.totalorder %s17, 1
    %p96 = por %p94, %p95
    %p97 = scmp.ne.s32.totalorder %s88, %s89
    %p98 = scmp.eq.s32.totalorder %s17, 0
    %p99 = por %p97, %p98
    %p100 = scmp.ne.s32.totalorder %s88, %s89
    %p101 = scmp.eq.s32.totalorder %s18, 1
    %p102 = por %p100, %p101
    %p104 = scmp.ne.s32.totalorder %s89, %s103
    %p105 = scmp.eq.s32.totalorder %s18, 0
    %p106 = por %p104, %p105
    %s107 = ssub.s32 %s19, %s31
    %p108 = scmp.eq.s32.totalorder %s107, 0
    %s110 = sadd.s32 %s109, 1
    %s111 = scalar_select %p108, %s109, %s110
    %p114 = pneg %p108
    %p115 = scmp.eq.s32.totalorder %s12, 1
    %p116 = por %p114, %p115
    %p117 = scmp.ne.s32.totalorder %s109, %s112
    %p118 = scmp.eq.s32.totalorder %s12, 0
    %p119 = por %p117, %p118
    %p120 = scmp.ne.s32.totalorder %s109, %s112
    %p121 = scmp.eq.s32.totalorder %s17, 1
    %p122 = por %p120, %p121
    %p123 = scmp.ne.s32.totalorder %s112, %s113
    %p124 = scmp.eq.s32.totalorder %s17, 0
    %p125 = por %p123, %p124
    %p126 = scmp.ne.s32.totalorder %s112, %s113
    %p127 = scmp.eq.s32.totalorder %s18, 1
    %p128 = por %p126, %p127
    %p130 = scmp.ne.s32.totalorder %s113, %s129
    %p131 = scmp.eq.s32.totalorder %s18, 0
    %p132 = por %p130, %p131
    %s134 = sadd.s32 %s133, 1
    %p137 = scmp.eq.s32.totalorder %s12, 1
    %p138 = scmp.ne.s32.totalorder %s133, %s135
    %p139 = scmp.eq.s32.totalorder %s12, 0
    %p140 = por %p138, %p139
    %p141 = scmp.ne.s32.totalorder %s133, %s135
    %p142 = scmp.eq.s32.totalorder %s17, 1
    %p143 = por %p141, %p142
    %p144 = scmp.ne.s32.totalorder %s135, %s136
    %p145 = scmp.eq.s32.totalorder %s17, 0
    %p146 = por %p144, %p145
    %p147 = scmp.ne.s32.totalorder %s135, %s136
    %p148 = scmp.eq.s32.totalorder %s18, 1
    %p149 = por %p147, %p148
    %p151 = scmp.ne.s32.totalorder %s136, %s150
    %p152 = scmp.eq.s32.totalorder %s18, 0
    %p153 = por %p151, %p152
    %s155 = sadd.s32 %s154, 1
    %p158 = scmp.eq.s32.totalorder %s12, 1
    %p159 = scmp.ne.s32.totalorder %s154, %s156
    %p160 = scmp.eq.s32.totalorder %s12, 0
    %p161 = por %p159, %p160
    %p162 = scmp.ne.s32.totalorder %s154, %s156
    %p163 = scmp.eq.s32.totalorder %s17, 1
    %p164 = por %p162, %p163
    %p165 = scmp.ne.s32.totalorder %s156, %s157
    %p166 = scmp.eq.s32.totalorder %s17, 0
    %p167 = por %p165, %p166
    %p168 = scmp.ne.s32.totalorder %s156, %s157
    %p169 = scmp.eq.s32.totalorder %s18, 1
    %p170 = por %p168, %p169
    %p172 = scmp.ne.s32.totalorder %s157, %s171
    %p173 = scmp.eq.s32.totalorder %s18, 0
    %p174 = por %p172, %p173
    %s175 = ssub.s32 %s19, %s31
    %p176 = scmp.eq.s32.totalorder %s175, 0
    %s178 = sadd.s32 %s177, 1
    %s179 = scalar_select %p176, %s177, %s178
    %p182 = pneg %p176
    %p183 = scmp.eq.s32.totalorder %s12, 1
    %p184 = por %p182, %p183
    %p185 = scmp.ne.s32.totalorder %s177, %s180
    %p186 = scmp.eq.s32.totalorder %s12, 0
    %p187 = por %p185, %p186
    %p188 = scmp.ne.s32.totalorder %s177, %s180
    %p189 = scmp.eq.s32.totalorder %s17, 1
    %p190 = por %p188, %p189
    %p191 = scmp.ne.s32.totalorder %s180, %s181
    %p192 = scmp.eq.s32.totalorder %s17, 0
    %p193 = por %p191, %p192
    %p194 = scmp.ne.s32.totalorder %s180, %s181
    %p195 = scmp.eq.s32.totalorder %s18, 1
    %p196 = por %p194, %p195
    %p198 = scmp.ne.s32.totalorder %s181, %s197
    %p199 = scmp.eq.s32.totalorder %s18, 0
    %p200 = por %p198, %p199
    %p201 = scmp.le.s32.totalorder 1, %s12
    %p202 = scmp.lt.s32.totalorder %s12, 3
    %p203 = pnand %p201, %p202
    %p204 = pneg %p203
    // Predicated region
    $region9: #{decoder_forward.26} parent=5 // pred_check
      _
    $region10: #{decoder_forward.26} parent=5 // pred_check_branch
      %206 = sbr.rel (%p203) target = $region12
    $region11: #{decoder_forward.26} parent=5 // pred_region
      %s207 = ssub.s32 %s12, 1
      // Predicated region
      $region13: #{decoder_forward.26} parent=11 // pred_check
        %p208 = pneg %p78
      $region14: #{decoder_forward.26} parent=11 // pred_check_branch
        %210 = sbr.rel (%p208) target = $region16
      $region15: #{decoder_forward.26} parent=11 // pred_region
        %s211 = smul.u32 8, %s22
        %p212 = scmp.lt.s32.totalorder %s211, 7
        %s213 = scalar_select %p212, %s211, 7
        %s214 = smul.addr %s213, 8
        %s215 = scalar_lea.vmem %s1, %s214
        %s216 = smul.u32 8, %s22
      $region16: #{decoder_forward.26} parent=11 // pred_fallthru
        _
      // Predicated region
      $region17: #{decoder_forward.26} parent=11 // pred_check
        %p217 = pneg %p99
      $region18: #{decoder_forward.26} parent=11 // pred_check_branch
        %219 = sbr.rel (%p217) target = $region20
      $region19: #{decoder_forward.26} parent=11 // pred_region
        _
      $region20: #{decoder_forward.26} parent=11 // pred_fallthru
        _
      // Predicated region
      $region21: #{decoder_forward.26} parent=11 // pred_check
        %p220 = pneg %p146
      $region22: #{decoder_forward.26} parent=11 // pred_check_branch
        %222 = sbr.rel (%p220) target = $region24
      $region23: #{decoder_forward.26} parent=11 // pred_region
        _
      $region24: #{decoder_forward.26} parent=11 // pred_fallthru
        _
      // Predicated region
      $region25: #{decoder_forward.26} parent=11 // pred_check
        %p223 = pneg %p167
      $region26: #{decoder_forward.26} parent=11 // pred_check_branch
        %225 = sbr.rel (%p223) target = $region28
      $region27: #{decoder_forward.26} parent=11 // pred_region
        _
      $region28: #{decoder_forward.26} parent=11 // pred_fallthru
        _
    $region12: #{decoder_forward.26} parent=5 // pred_fallthru
      _
    %p226 = scmp.lt.s32.totalorder %s12, 2
    // Predicated region
    $region29: #{decoder_forward.26} parent=5 // pred_check
      %p227 = pneg %p226
    $region30: #{decoder_forward.26} parent=5 // pred_check_branch
      %229 = sbr.rel (%p227) target = $region32
    $region31: #{decoder_forward.26} parent=5 // pred_region
      // Predicated region
      $region33: #{decoder_forward.26} parent=31 // pred_check
        %p230 = pneg %p46
      $region34: #{decoder_forward.26} parent=31 // pred_check_branch
        %232 = sbr.rel (%p230) target = $region36
      $region35: #{decoder_forward.26} parent=31 // pred_region
        %p233 = scmp.lt.s32.totalorder %s19, 1
        %s234 = scalar_select %p233, %s19, 1
        %p235 = scmp.lt.s32.totalorder %s20, 0
        %s236 = scalar_select %p235, %s20, 0
        %s237 = sadd.s32 %s236, %s234
        %s238 = smul.addr %s237, 8
        %s239 = scalar_lea.vmem %s0, %s238
      $region36: #{decoder_forward.26} parent=31 // pred_fallthru
        _
      // Predicated region
      $region37: #{decoder_forward.26} parent=31 // pred_check
        %p240 = pneg %p119
      $region38: #{decoder_forward.26} parent=31 // pred_check_branch
        %242 = sbr.rel (%p240) target = $region40
      $region39: #{decoder_forward.26} parent=31 // pred_region
        %p243 = scmp.lt.s32.totalorder %s19, 1
        %s244 = scalar_select %p243, %s19, 1
        %s245 = smul.addr %s244, 8
        %s246 = scalar_lea.vmem %s3, %s245
      $region40: #{decoder_forward.26} parent=31 // pred_fallthru
        _
    $region32: #{decoder_forward.26} parent=5 // pred_fallthru
      _
    %p247 = scmp.le.s32.totalorder 1, %s12
    %p248 = scmp.lt.s32.totalorder %s12, 3
    %p249 = pnand %p247, %p248
    %p250 = pneg %p249
    // Predicated region
    $region41: #{decoder_forward.26} parent=5 // pred_check
      _
    $region42: #{decoder_forward.26} parent=5 // pred_check_branch
      %252 = sbr.rel (%p249) target = $region44
    $region43: #{decoder_forward.26} parent=5 // pred_region
      %s253 = ssub.s32 %s12, 1
      %p254 = scmp.lt.s32.totalorder %s21, 1
      %s255 = scalar_select %p254, %s21, 1
      %p256 = scmp.lt.s32.totalorder %s22, 0
      %s257 = scalar_select %p256, %s22, 0
      %s258 = sadd.s32 %s257, %s255
      %s259 = smul.addr %s258, 8
      %s260 = scalar_lea.vmem %s0, %s259
      %p261 = pneg %p52
      %p262 = pneg %p49
      %s263 = smul.u32 8, %s22
      %p264 = scmp.lt.s32.totalorder %s263, 7
      %s265 = scalar_select %p264, %s263, 7
      %s266 = smul.addr %s265, 8
      %s267 = scalar_lea.vmem %s1, %s266
      %p268 = pneg %p78
      %p269 = pneg %p75
      %p270 = pneg %p99
      %p271 = pneg %p96
      %p272 = scmp.lt.s32.totalorder %s21, 1
      %s273 = scalar_select %p272, %s21, 1
      %s274 = smul.addr %s273, 8
      %s275 = scalar_lea.vmem %s3, %s274
      %p276 = pneg %p125
      %p277 = pneg %p122
      %p278 = pneg %p146
      %p279 = pneg %p143
      %p280 = pneg %p167
      %p281 = pneg %p164
      %p282 = pneg %p193
      %p283 = pneg %p190
      %p284 = scmp.lt.s32.totalorder %s21, 1
      %s285 = scalar_select %p284, %s21, 1
      %s286 = smul.addr %s285, 8
      %s287 = scalar_lea.vmem %s6, %s286
      %p288 = scmp.lt.s32.totalorder %s21, 1
      %s289 = scalar_select %p288, %s21, 1
      %p290 = scmp.lt.s32.totalorder %s22, 0
      %s291 = scalar_select %p290, %s22, 0
      %s292 = sadd.s32 %s291, %s289
      %s293 = smul.addr %s292, 8
      %s294 = scalar_lea.vmem %s0, %s293
      %s295 = smul.u32 8, %s22
      %p296 = scmp.lt.s32.totalorder %s295, 7
      %s297 = scalar_select %p296, %s295, 7
      %s298 = smul.addr %s297, 8
      %s299 = scalar_lea.vmem %s1, %s298
      %s300 = smul.u32 8, %s22
      %p301 = scmp.lt.s32.totalorder %s21, 1
      %s302 = scalar_select %p301, %s21, 1
      %s303 = smul.addr %s302, 8
      %s304 = scalar_lea.vmem %s3, %s303
      %p305 = scmp.lt.s32.totalorder %s21, 1
      %s306 = scalar_select %p305, %s21, 1
      %s307 = smul.addr %s306, 8
      %s308 = scalar_lea.vmem %s6, %s307
      %p309 = scmp.eq.s32.totalorder %s22, 0
      // Predicated region
      $region45: #{decoder_forward.26} parent=43 // pred_check
        %p310 = pneg %p309
      $region46: #{decoder_forward.26} parent=43 // pred_check_branch
        %312 = sbr.rel (%p310) target = $region48
      $region47: #{decoder_forward.26} parent=43 // pred_region
        %vm313 = vcmask 261120
        %314 = vst.msk [vmem:[#allocation2] sm:$0xff] %vm313, 0.0
      $region48: #{decoder_forward.26} parent=43 // pred_fallthru
        _
      %v315 = vld [vmem:[#allocation2] sm:$0xff]
      %v316 = vld [vmem:[%s294] sm:$0xff]
      %v317 = vld [vmem:[%s299] sm:$0xff]
      %v318 = vld [vmem:[%s299 + $0x8] sm:$0xff]
      %v319 = vld [vmem:[%s299 + $0x10] sm:$0xff]
      %v320 = vld [vmem:[%s299 + $0x18] sm:$0xff]
      %v321 = vld [vmem:[%s299 + $0x20] sm:$0xff]
      %v322 = vld [vmem:[%s299 + $0x28] sm:$0xff]
      %v323 = vld [vmem:[%s299 + $0x30] sm:$0xff]
      %v324 = vld [vmem:[%s299 + $0x38] sm:$0xff]
      %vm325 = vcmask 523264
      %v327 = vsel %vm325, %v316, 0
      %329 = vmatpush.msra.mxu0 0.0
      %330 = vmatpush.msra.mxu0 0.0
      %331 = vmatpush.msra.mxu0 0.0
      %332 = vmatpush.msra.mxu0 0.0
      %333 = vmatpush.msra.mxu0 0.0
      %334 = vmatpush.msra.mxu0 0.0
      %335 = vmatpush.msra.mxu0 0.0
      %336 = vmatpush.msra.mxu0 0.0
      %337 = vmatpush.msra.mxu0 %v324
      %338 = vmatpush.msra.mxu0 %v323
      %339 = vmatpush.msra.mxu0 %v322
      %340 = vmatpush.msra.mxu0 %v321
      %341 = vmatpush.msra.mxu0 %v320
      %342 = vmatpush.msra.mxu0 %v319
      %343 = vmatpush.msra.mxu0 %v318
      %344 = vmatpush.msra.mxu0 %v317
      %345 = vmatmul.f32.gmra.mxu0 %v327
      %v346 = vpop.f32.mrf.mxu0
      %v347 = vadd.f32 0.0, %v346
      %348 = vdwg.mxu0
      %v349 = vadd.f32 %v315, %v347
      %vm350 = vcmask 261120
      %351 = vst.msk [vmem:[#allocation2] sm:$0xff] %vm350, %v349
      // Predicated region
      $region49: #{decoder_forward.26} parent=43 // pred_check
        %p352 = pneg %p309
      $region50: #{decoder_forward.26} parent=43 // pred_check_branch
        %354 = sbr.rel (%p352) target = $region52
      $region51: #{decoder_forward.26} parent=43 // pred_region
        %v355 = vld [vmem:[#allocation2] sm:$0xff]
        %v356 = vld [vmem:[%s2] sm:$0x1]
        %v358 = vperm.slane %v356, 0
        %v360 = vadd.f32 %v355, %v358
        %v361 = vld [vmem:[%s304] sm:$0xff]
        %v362 = vadd.f32 %v360, %v361
        %v363 = vsel %vm350, %v362, 0.0
        %364 = vadd.xlane.f32.xlu0 %v363
        %v365 = vpop.xlane.xlu0 %364
        %v366 = vrcp.pop 32.0
        %v367 = vmul.f32 32.0, %v366
        %v368 = vsub.f32 1.0, %v367
        %v369 = vmul.f32 %v366, %v368
        %v370 = vadd.f32 %v366, %v369
        %vm371 = vweird.f32 %v366
        %v372 = vsel %vm371, %v366, %v370
        %v373 = vmul.f32 %v365, %v372
        %v374 = vsub.f32 %v362, %v373
        %v375 = vmul.f32 %v374, %v374
        %v376 = vsel %vm350, %v375, 0.0
        %377 = vadd.xlane.f32.xlu0 %v376
        %v378 = vpop.xlane.xlu0 %377
        %v379 = vmul.f32 %v378, %v372
        %v380 = vadd.f32 %v379, 1e-05
        %v381 = vrsqrt.pop %v380
        %v382 = vmul.f32 %v381, %v380
        %v383 = vmul.f32 %v382, %v381
        %v384 = vmul.f32 0.5, %v383
        %v385 = vsub.f32 1.5, %v384
        %v386 = vmul.f32 %v381, %v385
        %vm387 = vweird.f32 %v380
        %vm388 = vweird.f32 %v381
        %vm389 = vmor %vm387, %vm388
        %v390 = vsel %vm389, %v381, %v386
        %v391 = vmul.f32 %v374, %v390
        %v392 = vld [vmem:[%s4] sm:$0x1]
        %v394 = vperm.slane %v392, 0
        %v396 = vmul.f32 %v391, %v394
        %v397 = vld [vmem:[%s5] sm:$0x1]
        %v399 = vperm.slane %v397, 0
        %v401 = vadd.f32 %v396, %v399
        %402 = vst.msk [vmem:[%s308] sm:$0xff] %vm350, %v401
      $region52: #{decoder_forward.26} parent=43 // pred_fallthru
        _
      %p403 = scmp.lt.s32.totalorder %s21, 1
      %s404 = scalar_select %p403, %s21, 1
      %s405 = smul.addr %s404, 8
      %s406 = scalar_lea.vmem %s6, %s405
      // Predicated region
      $region53: #{decoder_forward.26} parent=43 // pred_check
        %p407 = pneg %p190
      $region54: #{decoder_forward.26} parent=43 // pred_check_branch
        %409 = sbr.rel (%p407) target = $region56
      $region55: #{decoder_forward.26} parent=43 // pred_region
        _
      $region56: #{decoder_forward.26} parent=43 // pred_fallthru
        _
    $region44: #{decoder_forward.26} parent=5 // pred_fallthru
      _
    %p410 = scmp.le.s32.totalorder 2, %s12
    // Predicated region
    $region57: #{decoder_forward.26} parent=5 // pred_check
      %p411 = pneg %p410
    $region58: #{decoder_forward.26} parent=5 // pred_check_branch
      %413 = sbr.rel (%p411) target = $region60
    $region59: #{decoder_forward.26} parent=5 // pred_region
      %s414 = ssub.s32 %s12, 2
      // Predicated region
      $region61: #{decoder_forward.26} parent=59 // pred_check
        %p415 = pneg %p196
      $region62: #{decoder_forward.26} parent=59 // pred_check_branch
        %417 = sbr.rel (%p415) target = $region64
      $region63: #{decoder_forward.26} parent=59 // pred_region
        %p418 = scmp.lt.s32.totalorder %s23, 1
        %s419 = scalar_select %p418, %s23, 1
        %s420 = smul.addr %s419, 8
        %s421 = scalar_lea.vmem %s6, %s420
      $region64: #{decoder_forward.26} parent=59 // pred_fallthru
        _
    $region60: #{decoder_forward.26} parent=5 // pred_fallthru
      _
  $region6: #{decoder_forward.26} parent=0 // loop_footer
    %s16 = sadd.s32 1, %s12
  $region7: #{decoder_forward.26} parent=0 // loop_footer_branch
    %11 = sbr.rel target = $region3
  $region8: #{decoder_forward.26} parent=0 // loop_exit
    _

// kernel: decoder_forward.23
$region0: #{decoder_forward.23}
  #allocation0 [shape = 'u32[]', space=smem, size = 0x4, offset = 0x4, fixed_abs, tag = 'smem constant byte address 0x4 - core index']
  #allocation1 [shape = 'u32[72,128]{1,0:T(1,128)}', space=vmem, size = 0x9000, scoped, tag = 'internal scratch']
  #allocation2 [shape = 'f32[4,2,1]{2,1,0:T(2,128)}', space=vmem, size = 0x1000, scoped, tag = 'scratch operand']
  #allocation3 [shape = 'f32[4,2,1]{2,1,0:T(2,128)}', space=vmem, size = 0x1000, scoped, tag = 'scratch operand']
  #allocation4 [shape = 'f32[4,2,8]{2,1,0:T(2,128)}', space=vmem, size = 0x1000, scoped, tag = 'scratch operand']
  %s0 = inlined_call_operand.vmem [shape: f32[2,8,1,4,8], index: 0, kind: input, shape index: {}]
  %s1 = inlined_call_operand.vmem [shape: f32[2,8,2,4,8], index: 1, kind: input, shape index: {}, may-alias: {1,2}]
  %s2 = inlined_call_operand.vmem [shape: f32[2,8,2,4,8], index: 2, kind: input, shape index: {}, may-alias: {1,2}]
  %s3 = inlined_call_operand.vmem [shape: f32[2,8,4,8], index: 3, kind: output, shape index: {}]
  %s4 = sld [smem:[#allocation0]]
  $region213: #{decoder_forward.23} parent=0
    _
  %s6 = ssub.s32 1, %s4
  %s7 = scalar_select 0, %s6, %s4
  $region1: #{decoder_forward.23} parent=0
    #allocation5 [shape = 'u8[8192]{0}', space=vmem, size = 0x2000, scoped, tag = 'input window, operand 0']
    #allocation6 [shape = 'u8[8192]{0}', space=vmem, size = 0x2000, scoped, tag = 'input window, operand 1']
    #allocation7 [shape = 'u8[8192]{0}', space=vmem, size = 0x2000, scoped, tag = 'input window, operand 2']
    #allocation8 [shape = 'u8[8192]{0}', space=vmem, size = 0x2000, scoped, tag = 'output window, operand 0']
    loop: start=0, step=1, limit=10
    $region2: #{decoder_forward.23} parent=1 // loop_pre_header
      _
    $region3: #{decoder_forward.23} parent=1 // loop_header
      %s9 = sphi 0, %s13
      %p10 = scmp.ge.s32.totalorder %s9, 10
      %s16 = sphi 0, %s28
      %s17 = sphi 0, %s24
      %s18 = sphi 0, %s16
      %s19 = sphi 0, %s17
      %s20 = sphi 0, %s18
      %s21 = sphi 0, %s19
      %s31 = sphi 0, %s33
      %s34 = sphi 0, %s31
      %s35 = sphi 0, %s34
      %s51 = sphi 0, %s35
      %s59 = sphi 0, %s61
      %s62 = sphi 0, %s59
      %s63 = sphi 0, %s62
      %s79 = sphi 0, %s63
      %s87 = sphi 0, %s89
      %s90 = sphi 0, %s87
      %s91 = sphi 0, %s90
      %s107 = sphi 0, %s91
      %s113 = sphi 0, %s115
      %s116 = sphi 0, %s113
      %s117 = sphi 0, %s116
      %s133 = sphi 0, %s117
    $region4: #{decoder_forward.23} parent=1 // loop_header_branch
      %12 = sbr.rel (%p10) target = $region8
    $region5: #{decoder_forward.23} parent=1 // loop_body
      %s14 = ssub.s32 %s9, 1
      %s15 = ssub.s32 %s9, 2
      %s22 = sadd.s32 1, %s17
      %p23 = scmp.ge.s32.totalorder %s22, 1
      %s24 = scalar_select %p23, 0, %s22
      %s25 = sadd.s32 1, %s16
      %s26 = scalar_select %p23, %s25, %s16
      %p27 = scmp.ge.s32.totalorder %s26, 8
      %s28 = scalar_select %p27, 0, %s26
      %s29 = ssub.s32 %s16, %s28
      %p30 = scmp.eq.s32.totalorder %s29, 0
      %s32 = sadd.s32 %s31, 1
      %s33 = scalar_select %p30, %s31, %s32
      %p36 = pneg %p30
      %p37 = scmp.eq.s32.totalorder %s9, 7
      %p38 = por %p36, %p37
      %p39 = scmp.ne.s32.totalorder %s31, %s34
      %p40 = scmp.eq.s32.totalorder %s9, 0
      %p41 = por %p39, %p40
      %p42 = scmp.ne.s32.totalorder %s31, %s34
      %p43 = scmp.eq.s32.totalorder %s14, 7
      %p44 = por %p42, %p43
      %p45 = scmp.ne.s32.totalorder %s34, %s35
      %p46 = scmp.eq.s32.totalorder %s14, 0
      %p47 = por %p45, %p46
      %p48 = scmp.ne.s32.totalorder %s34, %s35
      %p49 = scmp.eq.s32.totalorder %s15, 7
      %p50 = por %p48, %p49
      %p52 = scmp.ne.s32.totalorder %s35, %s51
      %p53 = scmp.eq.s32.totalorder %s15, 0
      %p54 = por %p52, %p53
      %s55 = ssub.s32 %s17, %s24
      %s56 = ssub.s32 %s16, %s28
      %s57 = sor.u32 %s55, %s56
      %p58 = scmp.eq.s32.totalorder %s57, 0
      %s60 = sadd.s32 %s59, 1
      %s61 = scalar_select %p58, %s59, %s60
      %p64 = pneg %p58
      %p65 = scmp.eq.s32.totalorder %s9, 7
      %p66 = por %p64, %p65
      %p67 = scmp.ne.s32.totalorder %s59, %s62
      %p68 = scmp.eq.s32.totalorder %s9, 0
      %p69 = por %p67, %p68
      %p70 = scmp.ne.s32.totalorder %s59, %s62
      %p71 = scmp.eq.s32.totalorder %s14, 7
      %p72 = por %p70, %p71
      %p73 = scmp.ne.s32.totalorder %s62, %s63
      %p74 = scmp.eq.s32.totalorder %s14, 0
      %p75 = por %p73, %p74
      %p76 = scmp.ne.s32.totalorder %s62, %s63
      %p77 = scmp.eq.s32.totalorder %s15, 7
      %p78 = por %p76, %p77
      %p80 = scmp.ne.s32.totalorder %s63, %s79
      %p81 = scmp.eq.s32.totalorder %s15, 0
      %p82 = por %p80, %p81
      %s83 = ssub.s32 %s17, %s24
      %s84 = ssub.s32 %s16, %s28
      %s85 = sor.u32 %s83, %s84
      %p86 = scmp.eq.s32.totalorder %s85, 0
      %s88 = sadd.s32 %s87, 1
      %s89 = scalar_select %p86, %s87, %s88
      %p92 = pneg %p86
      %p93 = scmp.eq.s32.totalorder %s9, 7
      %p94 = por %p92, %p93
      %p95 = scmp.ne.s32.totalorder %s87, %s90
      %p96 = scmp.eq.s32.totalorder %s9, 0
      %p97 = por %p95, %p96
      %p98 = scmp.ne.s32.totalorder %s87, %s90
      %p99 = scmp.eq.s32.totalorder %s14, 7
      %p100 = por %p98, %p99
      %p101 = scmp.ne.s32.totalorder %s90, %s91
      %p102 = scmp.eq.s32.totalorder %s14, 0
      %p103 = por %p101, %p102
      %p104 = scmp.ne.s32.totalorder %s90, %s91
      %p105 = scmp.eq.s32.totalorder %s15, 7
      %p106 = por %p104, %p105
      %p108 = scmp.ne.s32.totalorder %s91, %s107
      %p109 = scmp.eq.s32.totalorder %s15, 0
      %p110 = por %p108, %p109
      %s111 = ssub.s32 %s16, %s28
      %p112 = scmp.eq.s32.totalorder %s111, 0
      %s114 = sadd.s32 %s113, 1
      %s115 = scalar_select %p112, %s113, %s114
      %p118 = pneg %p112
      %p119 = scmp.eq.s32.totalorder %s9, 7
      %p120 = por %p118, %p119
      %p121 = scmp.ne.s32.totalorder %s113, %s116
      %p122 = scmp.eq.s32.totalorder %s9, 0
      %p123 = por %p121, %p122
      %p124 = scmp.ne.s32.totalorder %s113, %s116
      %p125 = scmp.eq.s32.totalorder %s14, 7
      %p126 = por %p124, %p125
      %p127 = scmp.ne.s32.totalorder %s116, %s117
      %p128 = scmp.eq.s32.totalorder %s14, 0
      %p129 = por %p127, %p128
      %p130 = scmp.ne.s32.totalorder %s116, %s117
      %p131 = scmp.eq.s32.totalorder %s15, 7
      %p132 = por %p130, %p131
      %p134 = scmp.ne.s32.totalorder %s117, %s133
      %p135 = scmp.eq.s32.totalorder %s15, 0
      %p136 = por %p134, %p135
      %p137 = scmp.le.s32.totalorder 1, %s9
      %p138 = scmp.lt.s32.totalorder %s9, 9
      %p139 = pnand %p137, %p138
      %p140 = pneg %p139
      // Predicated region
      $region9: #{decoder_forward.23} parent=5 // pred_check
        _
      $region10: #{decoder_forward.23} parent=5 // pred_check_branch
        %142 = sbr.rel (%p139) target = $region12
      $region11: #{decoder_forward.23} parent=5 // pred_region
        %s143 = ssub.s32 %s9, 1
      $region12: #{decoder_forward.23} parent=5 // pred_fallthru
        _
      %p144 = scmp.lt.s32.totalorder %s9, 8
      // Predicated region
      $region13: #{decoder_forward.23} parent=5 // pred_check
        %p145 = pneg %p144
      $region14: #{decoder_forward.23} parent=5 // pred_check_branch
        %147 = sbr.rel (%p145) target = $region16
      $region15: #{decoder_forward.23} parent=5 // pred_region
        // Predicated region
        $region17: #{decoder_forward.23} parent=15 // pred_check
          %p148 = pneg %p41
        $region18: #{decoder_forward.23} parent=15 // pred_check_branch
          %150 = sbr.rel (%p148) target = $region20
        $region19: #{decoder_forward.23} parent=15 // pred_region
          %s151 = sand.u32 %s31, 1
          %s152 = sand.u32 %s31, 1
          %s153 = smul.addr %s152, 8
          %s154 = scalar_lea.vmem [#allocation5], %s153
          %s155 = smul.addr %s16, 4
          %s156 = scalar_lea.vmem %s0, %s155
          // Predicated region
          $region21: #{decoder_forward.23} parent=19 // pred_check
            _
          $region22: #{decoder_forward.23} parent=19 // pred_check_branch
            %158 = sbr.rel (0) target = $region24
          $region23: #{decoder_forward.23} parent=19 // pred_region
            // Predicated region
            $region25: #{decoder_forward.23} parent=23 // pred_check
              _
            $region26: #{decoder_forward.23} parent=23 // pred_check_branch
              %160 = sbr.rel target = $region28
            $region27: #{decoder_forward.23} parent=23 // pred_region
              // Predicated region
              $region40: #{decoder_forward.23} parent=27 // pred_check
                _
              $region41: #{decoder_forward.23} parent=27 // pred_check_branch
                %178 = sbr.rel (0) target = $region43
              $region42: #{decoder_forward.23} parent=27 // pred_region
                loop: start=0, step=1, limit=1
                $region44: #{decoder_forward.23} parent=42 // loop_pre_header
                  _
                $region45: #{decoder_forward.23} parent=42 // loop_header
                  %s180 = sphi 0, %s184
                  %p181 = scmp.ge.s32.totalorder %s180, 1
                  %s185 = sphi %s156, %s156
                  %s186 = sphi %s154, %s154
                $region46: #{decoder_forward.23} parent=42 // loop_header_branch
                  %183 = sbr.rel (%p181) target = $region50
                $region47: #{decoder_forward.23} parent=42 // loop_body
                  _
                $region48: #{decoder_forward.23} parent=42 // loop_footer
                  %s184 = sadd.s32 1, %s180
                $region49: #{decoder_forward.23} parent=42 // loop_footer_branch
                  %179 = sbr.rel target = $region45
                $region50: #{decoder_forward.23} parent=42 // loop_exit
                  _
                %s188 = ssub.s32 16, 1
                loop: start=0, step=1, limit=1
                $region51: #{decoder_forward.23} parent=42 // loop_pre_header
                  _
                $region52: #{decoder_forward.23} parent=42 // loop_header
                  %s190 = sphi 0, %s194
                  %p191 = scmp.ge.s32.totalorder %s190, 1
                  %s195 = sphi %s156, %s156
                  %s196 = sphi %s154, %s154
                $region53: #{decoder_forward.23} parent=42 // loop_header_branch
                  %193 = sbr.rel (%p191) target = $region57
                $region54: #{decoder_forward.23} parent=42 // loop_body
                  %v197 = vld [vmem:[%s195] sm:%s188]
                  %198 = vst [vmem:[%s196] sm:%s188] %v197
                  %v199 = vld [vmem:[%s195 + $0x20] sm:%s188]
                  %200 = vst [vmem:[%s196 + $0x4] sm:%s188] %v199
                $region55: #{decoder_forward.23} parent=42 // loop_footer
                  %s194 = sadd.s32 1, %s190
                $region56: #{decoder_forward.23} parent=42 // loop_footer_branch
                  %189 = sbr.rel target = $region52
                $region57: #{decoder_forward.23} parent=42 // loop_exit
                  _
              $region43: #{decoder_forward.23} parent=27 // pred_fallthru
                _
            $region28: #{decoder_forward.23} parent=23 // pred_fallthru
              _
            // Predicated region
            $region29: #{decoder_forward.23} parent=23 // pred_check
              _
            $region30: #{decoder_forward.23} parent=23 // pred_check_branch
              %162 = sbr.rel (0) target = $region32
            $region31: #{decoder_forward.23} parent=23 // pred_region
              %s164 = ssub.s32 16, 1
              loop: start=0, step=1, limit=1
              $region33: #{decoder_forward.23} parent=31 // loop_pre_header
                _
              $region34: #{decoder_forward.23} parent=31 // loop_header
                %s166 = sphi 0, %s170
                %p167 = scmp.ge.s32.totalorder %s166, 1
                %s171 = sphi %s156, %s156
                %s172 = sphi %s154, %s154
              $region35: #{decoder_forward.23} parent=31 // loop_header_branch
                %169 = sbr.rel (%p167) target = $region39
              $region36: #{decoder_forward.23} parent=31 // loop_body
                %v173 = vld [vmem:[%s171] sm:%s164]
                %174 = vst [vmem:[%s172] sm:%s164] %v173
                %v175 = vld [vmem:[%s171 + $0x20] sm:%s164]
                %176 = vst [vmem:[%s172 + $0x4] sm:%s164] %v175
              $region37: #{decoder_forward.23} parent=31 // loop_footer
                %s170 = sadd.s32 1, %s166
              $region38: #{decoder_forward.23} parent=31 // loop_footer_branch
                %165 = sbr.rel target = $region34
              $region39: #{decoder_forward.23} parent=31 // loop_exit
                _
            $region32: #{decoder_forward.23} parent=23 // pred_fallthru
              _
          $region24: #{decoder_forward.23} parent=19 // pred_fallthru
            _
          %201 = vnop
        $region20: #{decoder_forward.23} parent=15 // pred_fallthru
          _
        // Predicated region
        $region58: #{decoder_forward.23} parent=15 // pred_check
          %p202 = pneg %p69
        $region59: #{decoder_forward.23} parent=15 // pred_check_branch
          %204 = sbr.rel (%p202) target = $region61
        $region60: #{decoder_forward.23} parent=15 // pred_region
          %s205 = sand.u32 %s59, 1
          %s206 = sand.u32 %s59, 1
          %s207 = smul.addr %s206, 8
          %s208 = scalar_lea.vmem [#allocation6], %s207
          %s209 = smul.u32 2, %s17
          %s210 = smul.addr %s16, 2
          %s211 = smul.addr %s209, 16
          %s212 = sadd.s32 %s210, %s211
          %s213 = smul.addr %s212, 4
          %s214 = scalar_lea.vmem %s1, %s213
          // Predicated region
          $region62: #{decoder_forward.23} parent=60 // pred_check
            _
          $region63: #{decoder_forward.23} parent=60 // pred_check_branch
            %216 = sbr.rel (0) target = $region65
          $region64: #{decoder_forward.23} parent=60 // pred_region
            // Predicated region
            $region66: #{decoder_forward.23} parent=64 // pred_check
              _
            $region67: #{decoder_forward.23} parent=64 // pred_check_branch
              %218 = sbr.rel target = $region69
            $region68: #{decoder_forward.23} parent=64 // pred_region
              // Predicated region
              $region81: #{decoder_forward.23} parent=68 // pred_check
                _
              $region82: #{decoder_forward.23} parent=68 // pred_check_branch
                %236 = sbr.rel (0) target = $region84
              $region83: #{decoder_forward.23} parent=68 // pred_region
                loop: start=0, step=1, limit=1
                $region85: #{decoder_forward.23} parent=83 // loop_pre_header
                  _
                $region86: #{decoder_forward.23} parent=83 // loop_header
                  %s238 = sphi 0, %s242
                  %p239 = scmp.ge.s32.totalorder %s238, 1
                  %s243 = sphi %s214, %s214
                  %s244 = sphi %s208, %s208
                $region87: #{decoder_forward.23} parent=83 // loop_header_branch
                  %241 = sbr.rel (%p239) target = $region91
                $region88: #{decoder_forward.23} parent=83 // loop_body
                  _
                $region89: #{decoder_forward.23} parent=83 // loop_footer
                  %s242 = sadd.s32 1, %s238
                $region90: #{decoder_forward.23} parent=83 // loop_footer_branch
                  %237 = sbr.rel target = $region86
                $region91: #{decoder_forward.23} parent=83 // loop_exit
                  _
                %s246 = ssub.s32 16, 1
                loop: start=0, step=1, limit=1
                $region92: #{decoder_forward.23} parent=83 // loop_pre_header
                  _
                $region93: #{decoder_forward.23} parent=83 // loop_header
                  %s248 = sphi 0, %s252
                  %p249 = scmp.ge.s32.totalorder %s248, 1
                  %s253 = sphi %s214, %s214
                  %s254 = sphi %s208, %s208
                $region94: #{decoder_forward.23} parent=83 // loop_header_branch
                  %251 = sbr.rel (%p249) target = $region98
                $region95: #{decoder_forward.23} parent=83 // loop_body
                  %v255 = vld [vmem:[%s253] sm:%s246]
                  %256 = vst [vmem:[%s254] sm:%s246] %v255
                  %v257 = vld [vmem:[%s253 + $0x40] sm:%s246]
                  %258 = vst [vmem:[%s254 + $0x4] sm:%s246] %v257
                $region96: #{decoder_forward.23} parent=83 // loop_footer
                  %s252 = sadd.s32 1, %s248
                $region97: #{decoder_forward.23} parent=83 // loop_footer_branch
                  %247 = sbr.rel target = $region93
                $region98: #{decoder_forward.23} parent=83 // loop_exit
                  _
              $region84: #{decoder_forward.23} parent=68 // pred_fallthru
                _
            $region69: #{decoder_forward.23} parent=64 // pred_fallthru
              _
            // Predicated region
            $region70: #{decoder_forward.23} parent=64 // pred_check
              _
            $region71: #{decoder_forward.23} parent=64 // pred_check_branch
              %220 = sbr.rel (0) target = $region73
            $region72: #{decoder_forward.23} parent=64 // pred_region
              %s222 = ssub.s32 16, 1
              loop: start=0, step=1, limit=1
              $region74: #{decoder_forward.23} parent=72 // loop_pre_header
                _
              $region75: #{decoder_forward.23} parent=72 // loop_header
                %s224 = sphi 0, %s228
                %p225 = scmp.ge.s32.totalorder %s224, 1
                %s229 = sphi %s214, %s214
                %s230 = sphi %s208, %s208
              $region76: #{decoder_forward.23} parent=72 // loop_header_branch
                %227 = sbr.rel (%p225) target = $region80
              $region77: #{decoder_forward.23} parent=72 // loop_body
                %v231 = vld [vmem:[%s229] sm:%s222]
                %232 = vst [vmem:[%s230] sm:%s222] %v231
                %v233 = vld [vmem:[%s229 + $0x40] sm:%s222]
                %234 = vst [vmem:[%s230 + $0x4] sm:%s222] %v233
              $region78: #{decoder_forward.23} parent=72 // loop_footer
                %s228 = sadd.s32 1, %s224
              $region79: #{decoder_forward.23} parent=72 // loop_footer_branch
                %223 = sbr.rel target = $region75
              $region80: #{decoder_forward.23} parent=72 // loop_exit
                _
            $region73: #{decoder_forward.23} parent=64 // pred_fallthru
              _
          $region65: #{decoder_forward.23} parent=60 // pred_fallthru
            _
          %259 = vnop
        $region61: #{decoder_forward.23} parent=15 // pred_fallthru
          _
        // Predicated region
        $region99: #{decoder_forward.23} parent=15 // pred_check
          %p260 = pneg %p97
        $region100: #{decoder_forward.23} parent=15 // pred_check_branch
          %262 = sbr.rel (%p260) target = $region102
        $region101: #{decoder_forward.23} parent=15 // pred_region
          %s263 = sand.u32 %s87, 1
          %s264 = sand.u32 %s87, 1
          %s265 = smul.addr %s264, 8
          %s266 = scalar_lea.vmem [#allocation7], %s265
          %s267 = smul.u32 2, %s17
          %s268 = smul.addr %s16, 2
          %s269 = sadd.s32 1, %s268
          %s270 = smul.addr %s267, 16
          %s271 = sadd.s32 %s269, %s270
          %s272 = smul.addr %s271, 4
          %s273 = scalar_lea.vmem %s2, %s272
          // Predicated region
          $region103: #{decoder_forward.23} parent=101 // pred_check
            _
          $region104: #{decoder_forward.23} parent=101 // pred_check_branch
            %275 = sbr.rel (0) target = $region106
          $region105: #{decoder_forward.23} parent=101 // pred_region
            // Predicated region
            $region107: #{decoder_forward.23} parent=105 // pred_check
              _
            $region108: #{decoder_forward.23} parent=105 // pred_check_branch
              %277 = sbr.rel target = $region110
            $region109: #{decoder_forward.23} parent=105 // pred_region
              // Predicated region
              $region122: #{decoder_forward.23} parent=109 // pred_check
                _
              $region123: #{decoder_forward.23} parent=109 // pred_check_branch
                %295 = sbr.rel (0) target = $region125
              $region124: #{decoder_forward.23} parent=109 // pred_region
                loop: start=0, step=1, limit=1
                $region126: #{decoder_forward.23} parent=124 // loop_pre_header
                  _
                $region127: #{decoder_forward.23} parent=124 // loop_header
                  %s297 = sphi 0, %s301
                  %p298 = scmp.ge.s32.totalorder %s297, 1
                  %s302 = sphi %s273, %s273
                  %s303 = sphi %s266, %s266
                $region128: #{decoder_forward.23} parent=124 // loop_header_branch
                  %300 = sbr.rel (%p298) target = $region132
                $region129: #{decoder_forward.23} parent=124 // loop_body
                  _
                $region130: #{decoder_forward.23} parent=124 // loop_footer
                  %s301 = sadd.s32 1, %s297
                $region131: #{decoder_forward.23} parent=124 // loop_footer_branch
                  %296 = sbr.rel target = $region127
                $region132: #{decoder_forward.23} parent=124 // loop_exit
                  _
                %s305 = ssub.s32 16, 1
                loop: start=0, step=1, limit=1
                $region133: #{decoder_forward.23} parent=124 // loop_pre_header
                  _
                $region134: #{decoder_forward.23} parent=124 // loop_header
                  %s307 = sphi 0, %s311
                  %p308 = scmp.ge.s32.totalorder %s307, 1
                  %s312 = sphi %s273, %s273
                  %s313 = sphi %s266, %s266
                $region135: #{decoder_forward.23} parent=124 // loop_header_branch
                  %310 = sbr.rel (%p308) target = $region139
                $region136: #{decoder_forward.23} parent=124 // loop_body
                  %v314 = vld [vmem:[%s312] sm:%s305]
                  %315 = vst [vmem:[%s313] sm:%s305] %v314
                  %v316 = vld [vmem:[%s312 + $0x40] sm:%s305]
                  %317 = vst [vmem:[%s313 + $0x4] sm:%s305] %v316
                $region137: #{decoder_forward.23} parent=124 // loop_footer
                  %s311 = sadd.s32 1, %s307
                $region138: #{decoder_forward.23} parent=124 // loop_footer_branch
                  %306 = sbr.rel target = $region134
                $region139: #{decoder_forward.23} parent=124 // loop_exit
                  _
              $region125: #{decoder_forward.23} parent=109 // pred_fallthru
                _
            $region110: #{decoder_forward.23} parent=105 // pred_fallthru
              _
            // Predicated region
            $region111: #{decoder_forward.23} parent=105 // pred_check
              _
            $region112: #{decoder_forward.23} parent=105 // pred_check_branch
              %279 = sbr.rel (0) target = $region114
            $region113: #{decoder_forward.23} parent=105 // pred_region
              %s281 = ssub.s32 16, 1
              loop: start=0, step=1, limit=1
              $region115: #{decoder_forward.23} parent=113 // loop_pre_header
                _
              $region116: #{decoder_forward.23} parent=113 // loop_header
                %s283 = sphi 0, %s287
                %p284 = scmp.ge.s32.totalorder %s283, 1
                %s288 = sphi %s273, %s273
                %s289 = sphi %s266, %s266
              $region117: #{decoder_forward.23} parent=113 // loop_header_branch
                %286 = sbr.rel (%p284) target = $region121
              $region118: #{decoder_forward.23} parent=113 // loop_body
                %v290 = vld [vmem:[%s288] sm:%s281]
                %291 = vst [vmem:[%s289] sm:%s281] %v290
                %v292 = vld [vmem:[%s288 + $0x40] sm:%s281]
                %293 = vst [vmem:[%s289 + $0x4] sm:%s281] %v292
              $region119: #{decoder_forward.23} parent=113 // loop_footer
                %s287 = sadd.s32 1, %s283
              $region120: #{decoder_forward.23} parent=113 // loop_footer_branch
                %282 = sbr.rel target = $region116
              $region121: #{decoder_forward.23} parent=113 // loop_exit
                _
            $region114: #{decoder_forward.23} parent=105 // pred_fallthru
              _
          $region106: #{decoder_forward.23} parent=101 // pred_fallthru
            _
          %318 = vnop
        $region102: #{decoder_forward.23} parent=15 // pred_fallthru
          _
      $region16: #{decoder_forward.23} parent=5 // pred_fallthru
        _
      %p319 = scmp.le.s32.totalorder 1, %s9
      %p320 = scmp.lt.s32.totalorder %s9, 9
      %p321 = pnand %p319, %p320
      %p322 = pneg %p321
      // Predicated region
      $region140: #{decoder_forward.23} parent=5 // pred_check
        _
      $region141: #{decoder_forward.23} parent=5 // pred_check_branch
        %324 = sbr.rel (%p321) target = $region143
      $region142: #{decoder_forward.23} parent=5 // pred_region
        %s325 = ssub.s32 %s9, 1
        %s326 = sand.u32 %s34, 1
        %s327 = sand.u32 %s34, 1
        %s328 = smul.addr %s327, 8
        %s329 = scalar_lea.vmem [#allocation5], %s328
        // Predicated region
        $region144: #{decoder_forward.23} parent=142 // pred_check
          %p330 = pneg %p47
        $region145: #{decoder_forward.23} parent=142 // pred_check_branch
          %332 = sbr.rel (%p330) target = $region147
        $region146: #{decoder_forward.23} parent=142 // pred_region
          _
        $region147: #{decoder_forward.23} parent=142 // pred_fallthru
          _
        %s333 = sand.u32 %s62, 1
        %s334 = sand.u32 %s62, 1
        %s335 = smul.addr %s334, 8
        %s336 = scalar_lea.vmem [#allocation6], %s335
        // Predicated region
        $region148: #{decoder_forward.23} parent=142 // pred_check
          %p337 = pneg %p75
        $region149: #{decoder_forward.23} parent=142 // pred_check_branch
          %339 = sbr.rel (%p337) target = $region151
        $region150: #{decoder_forward.23} parent=142 // pred_region
          _
        $region151: #{decoder_forward.23} parent=142 // pred_fallthru
          _
        %s340 = sand.u32 %s90, 1
        %s341 = sand.u32 %s90, 1
        %s342 = smul.addr %s341, 8
        %s343 = scalar_lea.vmem [#allocation7], %s342
        // Predicated region
        $region152: #{decoder_forward.23} parent=142 // pred_check
          %p344 = pneg %p103
        $region153: #{decoder_forward.23} parent=142 // pred_check_branch
          %346 = sbr.rel (%p344) target = $region155
        $region154: #{decoder_forward.23} parent=142 // pred_region
          _
        $region155: #{decoder_forward.23} parent=142 // pred_fallthru
          _
        %s347 = sand.u32 %s34, 1
        %s348 = sand.u32 %s34, 1
        %s349 = smul.addr %s348, 8
        %s350 = scalar_lea.vmem [#allocation5], %s349
        %p351 = pneg %p47
        %p352 = pneg %p44
        %s353 = sand.u32 %s62, 1
        %s354 = sand.u32 %s62, 1
        %s355 = smul.addr %s354, 8
        %s356 = scalar_lea.vmem [#allocation6], %s355
        %p357 = pneg %p75
        %p358 = pneg %p72
        %s359 = sand.u32 %s90, 1
        %s360 = sand.u32 %s90, 1
        %s361 = smul.addr %s360, 8
        %s362 = scalar_lea.vmem [#allocation7], %s361
        %p363 = pneg %p103
        %p364 = pneg %p100
        %p365 = pneg %p129
        %p366 = pneg %p126
        %s367 = sand.u32 %s116, 1
        %s368 = sand.u32 %s116, 1
        %s369 = smul.addr %s368, 8
        %s370 = scalar_lea.vmem [#allocation8], %s369
        %s371 = smul.u32 2, %s19
        %s372 = smul.u32 2, %s19
        %p373 = scmp.eq.s32.totalorder %s19, 0
        // Predicated region
        $region156: #{decoder_forward.23} parent=142 // pred_check
          %p374 = pneg %p373
        $region157: #{decoder_forward.23} parent=142 // pred_check_branch
          %376 = sbr.rel (%p374) target = $region159
        $region158: #{decoder_forward.23} parent=142 // pred_region
          %vm377 = vcmask 1024
          %378 = vst.msk [vmem:[#allocation2] sm:$0x3] %vm377, -inf
          %379 = vst.msk [vmem:[#allocation2 + $0x2] sm:$0x3] %vm377, -inf
          %380 = vst.msk [vmem:[#allocation2 + $0x4] sm:$0x3] %vm377, -inf
          %381 = vst.msk [vmem:[#allocation2 + $0x6] sm:$0x3] %vm377, -inf
          %382 = vst.msk [vmem:[#allocation3] sm:$0x3] %vm377, 0.0
          %383 = vst.msk [vmem:[#allocation3 + $0x2] sm:$0x3] %vm377, 0.0
          %384 = vst.msk [vmem:[#allocation3 + $0x4] sm:$0x3] %vm377, 0.0
          %385 = vst.msk [vmem:[#allocation3 + $0x6] sm:$0x3] %vm377, 0.0
          %vm386 = vcmask 58368
          %387 = vst.msk [vmem:[#allocation4] sm:$0x3] %vm386, 0.0
          %388 = vst.msk [vmem:[#allocation4 + $0x2] sm:$0x3] %vm386, 0.0
          %389 = vst.msk [vmem:[#allocation4 + $0x4] sm:$0x3] %vm386, 0.0
          %390 = vst.msk [vmem:[#allocation4 + $0x6] sm:$0x3] %vm386, 0.0
        $region159: #{decoder_forward.23} parent=142 // pred_fallthru
          _
        %v391 = vld [vmem:[%s329] sm:$0x1]
        %v392 = vld [vmem:[%s329 + $0x4] sm:$0x1]
        %v393 = vmul.f32 %v391, 0.35355338
        %v394 = vmul.f32 %v392, 0.35355338
        %v395 = vld [vmem:[%s336] sm:$0x1]
        %v396 = vld [vmem:[%s336 + $0x4] sm:$0x1]
        %v397 = vld [vmem:[%s343] sm:$0x1]
        %v398 = vld [vmem:[%s343 + $0x4] sm:$0x1]
        %v401 = vrot.slane %v394, 7
        %vm402 = vcmask 1041409
        %v403 = vsel %vm402, %v401, %v393
        %v406 = vrot.slane %v396, 7
        %v407 = vsel %vm402, %v406, %v395
        %vm408 = vcmask 64512
        %v409 = vsel %vm408, %v403, 0
        %v411 = vsel %vm408, %v407, 0
        %413 = vmatpush.xpose.msra.mxu0 0.0
        %414 = vmatpush.xpose.msra.mxu0 0.0
        %415 = vmatpush.xpose.msra.mxu0 0.0
        %416 = vmatpush.xpose.msra.mxu0 0.0
        %417 = vmatpush.xpose.msra.mxu0 0.0
        %418 = vmatpush.xpose.msra.mxu0 0.0
        %419 = vmatpush.xpose.msra.mxu0 0.0
        %420 = vmatpush.xpose.msra.mxu0 0.0
        %421 = vmatpush.xpose.msra.mxu0 0.0
        %422 = vmatpush.xpose.msra.mxu0 0.0
        %423 = vmatpush.xpose.msra.mxu0 0.0
        %424 = vmatpush.xpose.msra.mxu0 0.0
        %425 = vmatpush.xpose.msra.mxu0 0.0
        %426 = vmatpush.xpose.msra.mxu0 0.0
        %427 = vmatpush.xpose.msra.mxu0 0.0
        %428 = vmatpush.xpose.msra.mxu0 %v411
        %429 = vmatmul.f32.gmra.mxu0 %v409
        %v430 = vpop.f32.mrf.mxu0
        %v431 = vadd.f32 0.0, %v430
        %432 = vdwg.mxu0
        %v433 = vld [vmem:[#allocation2] sm:$0x3]
        %vm434 = vcmask 9216
        %v435 = vsel %vm434, %v431, -inf
        %436 = vmax.xlane.f32.xlu0 %v435
        %v437 = vpop.xlane.xlu0 %436
        %v438 = vmax.f32 %v433, %v437
        %v439 = vsub.f32 %v433, %v438
        %v440 = vmul.f32 %v439, 1.442695
        %v441 = vpow.pop %v440
        %443 = vset.pattern.permute.xlu0 0
        %444 = vperm.xlu0 %443, %v438
        %v445 = vpop.permute.xlu0 %444
        %v447 = vsub.f32 %v431, %v445
        %v448 = vmul.f32 %v447, 1.442695
        %v449 = vpow.pop %v448
        %v450 = vld [vmem:[#allocation3] sm:$0x3]
        %v451 = vmul.f32 %v441, %v450
        %v452 = vsel %vm434, %v449, 0.0
        %453 = vadd.xlane.f32.xlu0 %v452
        %v454 = vpop.xlane.xlu0 %453
        %v455 = vadd.f32 %v451, %v454
        %vm456 = vcmask 1024
        %457 = vst.msk [vmem:[#allocation3] sm:$0x3] %vm456, %v455
        %v458 = vld [vmem:[#allocation4] sm:$0x3]
        %460 = vset.pattern.permute.xlu0 0
        %461 = vperm.xlu0 %460, %v441
        %v462 = vpop.permute.xlu0 %461
        %v464 = vmul.f32 %v462, %v458
        %v467 = vrot.slane %v398, 7
        %v468 = vsel %vm402, %v467, %v397
        %vm469 = vcmask 15360
        %v471 = vsel %vm469, %v449, 0
        %vm473 = vcmask 1041408
        %v474 = vsel %vm473, %v468, 0
        %476 = vmatpush.msra.mxu0 0.0
        %477 = vmatpush.msra.mxu0 0.0
        %478 = vmatpush.msra.mxu0 0.0
        %479 = vmatpush.msra.mxu0 0.0
        %480 = vmatpush.msra.mxu0 0.0
        %481 = vmatpush.msra.mxu0 0.0
        %482 = vmatpush.msra.mxu0 0.0
        %483 = vmatpush.msra.mxu0 0.0
        %484 = vmatpush.msra.mxu0 0.0
        %485 = vmatpush.msra.mxu0 0.0
        %486 = vmatpush.msra.mxu0 0.0
        %487 = vmatpush.msra.mxu0 0.0
        %488 = vmatpush.msra.mxu0 0.0
        %489 = vmatpush.msra.mxu0 0.0
        %490 = vmatpush.msra.mxu0 0.0
        %491 = vmatpush.msra.mxu0 %v474
        %492 = vmatmul.f32.gmra.mxu0 %v471
        %v493 = vpop.f32.mrf.mxu0
        %v494 = vadd.f32 0.0, %v493
        %495 = vdwg.mxu0
        %v496 = vadd.f32 %v464, %v494
        %vm497 = vcmask 58368
        %498 = vst.msk [vmem:[#allocation4] sm:$0x3] %vm497, %v496
        %499 = vst.msk [vmem:[#allocation2] sm:$0x3] %vm456, %v438
        %v500 = vld [vmem:[%s329 + $0x1] sm:$0x1]
        %v501 = vld [vmem:[%s329 + $0x5] sm:$0x1]
        %v502 = vmul.f32 %v500, 0.35355338
        %v503 = vmul.f32 %v501, 0.35355338
        %v504 = vld [vmem:[%s336 + $0x1] sm:$0x1]
        %v505 = vld [vmem:[%s336 + $0x5] sm:$0x1]
        %v506 = vld [vmem:[%s343 + $0x1] sm:$0x1]
        %v507 = vld [vmem:[%s343 + $0x5] sm:$0x1]
        %v510 = vrot.slane %v503, 7
        %v511 = vsel %vm402, %v510, %v502
        %v514 = vrot.slane %v505, 7
        %v515 = vsel %vm402, %v514, %v504
        %v516 = vsel %vm408, %v511, 0
        %v518 = vsel %vm408, %v515, 0
        %520 = vmatpush.xpose.msra.mxu0 0.0
        %521 = vmatpush.xpose.msra.mxu0 0.0
        %522 = vmatpush.xpose.msra.mxu0 0.0
        %523 = vmatpush.xpose.msra.mxu0 0.0
        %524 = vmatpush.xpose.msra.mxu0 0.0
        %525 = vmatpush.xpose.msra.mxu0 0.0
        %526 = vmatpush.xpose.msra.mxu0 0.0
        %527 = vmatpush.xpose.msra.mxu0 0.0
        %528 = vmatpush.xpose.msra.mxu0 0.0
        %529 = vmatpush.xpose.msra.mxu0 0.0
        %530 = vmatpush.xpose.msra.mxu0 0.0
        %531 = vmatpush.xpose.msra.mxu0 0.0
        %532 = vmatpush.xpose.msra.mxu0 0.0
        %533 = vmatpush.xpose.msra.mxu0 0.0
        %534 = vmatpush.xpose.msra.mxu0 0.0
        %535 = vmatpush.xpose.msra.mxu0 %v518
        %536 = vmatmul.f32.gmra.mxu0 %v516
        %v537 = vpop.f32.mrf.mxu0
        %v538 = vadd.f32 0.0, %v537
        %539 = vdwg.mxu0
        %s540 = scalar_lea.vmem [#allocation2], 2
        %v541 = vld [vmem:[%s540] sm:$0x3]
        %v542 = vsel %vm434, %v538, -inf
        %543 = vmax.xlane.f32.xlu0 %v542
        %v544 = vpop.xlane.xlu0 %543
        %v545 = vmax.f32 %v541, %v544
        %v546 = vsub.f32 %v541, %v545
        %v547 = vmul.f32 %v546, 1.442695
        %v548 = vpow.pop %v547
        %550 = vset.pattern.permute.xlu0 0
        %551 = vperm.xlu0 %550, %v545
        %v552 = vpop.permute.xlu0 %551
        %v554 = vsub.f32 %v538, %v552
        %v555 = vmul.f32 %v554, 1.442695
        %v556 = vpow.pop %v555
        %s557 = scalar_lea.vmem [#allocation3], 2
        %v558 = vld [vmem:[%s557] sm:$0x3]
        %v559 = vmul.f32 %v548, %v558
        %v560 = vsel %vm434, %v556, 0.0
        %561 = vadd.xlane.f32.xlu0 %v560
        %v562 = vpop.xlane.xlu0 %561
        %v563 = vadd.f32 %v559, %v562
        %564 = vst.msk [vmem:[%s557] sm:$0x3] %vm456, %v563
        %s565 = scalar_lea.vmem [#allocation4], 2
        %v566 = vld [vmem:[%s565] sm:$0x3]
        %568 = vset.pattern.permute.xlu0 0
        %569 = vperm.xlu0 %568, %v548
        %v570 = vpop.permute.xlu0 %569
        %v572 = vmul.f32 %v570, %v566
        %v575 = vrot.slane %v507, 7
        %v576 = vsel %vm402, %v575, %v506
        %v578 = vsel %vm469, %v556, 0
        %v580 = vsel %vm473, %v576, 0
        %582 = vmatpush.msra.mxu0 0.0
        %583 = vmatpush.msra.mxu0 0.0
        %584 = vmatpush.msra.mxu0 0.0
        %585 = vmatpush.msra.mxu0 0.0
        %586 = vmatpush.msra.mxu0 0.0
        %587 = vmatpush.msra.mxu0 0.0
        %588 = vmatpush.msra.mxu0 0.0
        %589 = vmatpush.msra.mxu0 0.0
        %590 = vmatpush.msra.mxu0 0.0
        %591 = vmatpush.msra.mxu0 0.0
        %592 = vmatpush.msra.mxu0 0.0
        %593 = vmatpush.msra.mxu0 0.0
        %594 = vmatpush.msra.mxu0 0.0
        %595 = vmatpush.msra.mxu0 0.0
        %596 = vmatpush.msra.mxu0 0.0
        %597 = vmatpush.msra.mxu0 %v580
        %598 = vmatmul.f32.gmra.mxu0 %v578
        %v599 = vpop.f32.mrf.mxu0
        %v600 = vadd.f32 0.0, %v599
        %601 = vdwg.mxu0
        %v602 = vadd.f32 %v572, %v600
        %603 = vst.msk [vmem:[%s565] sm:$0x3] %vm497, %v602
        %604 = vst.msk [vmem:[%s540] sm:$0x3] %vm456, %v545
        %v605 = vld [vmem:[%s329 + $0x2] sm:$0x1]
        %v606 = vld [vmem:[%s329 + $0x6] sm:$0x1]
        %v607 = vmul.f32 %v605, 0.35355338
        %v608 = vmul.f32 %v606, 0.35355338
        %v609 = vld [vmem:[%s336 + $0x2] sm:$0x1]
        %v610 = vld [vmem:[%s336 + $0x6] sm:$0x1]
        %v611 = vld [vmem:[%s343 + $0x2] sm:$0x1]
        %v612 = vld [vmem:[%s343 + $0x6] sm:$0x1]
        %v615 = vrot.slane %v608, 7
        %v616 = vsel %vm402, %v615, %v607
        %v619 = vrot.slane %v610, 7
        %v620 = vsel %vm402, %v619, %v609
        %v621 = vsel %vm408, %v616, 0
        %v623 = vsel %vm408, %v620, 0
        %625 = vmatpush.xpose.msra.mxu0 0.0
        %626 = vmatpush.xpose.msra.mxu0 0.0
        %627 = vmatpush.xpose.msra.mxu0 0.0
        %628 = vmatpush.xpose.msra.mxu0 0.0
        %629 = vmatpush.xpose.msra.mxu0 0.0
        %630 = vmatpush.xpose.msra.mxu0 0.0
        %631 = vmatpush.xpose.msra.mxu0 0.0
        %632 = vmatpush.xpose.msra.mxu0 0.0
        %633 = vmatpush.xpose.msra.mxu0 0.0
        %634 = vmatpush.xpose.msra.mxu0 0.0
        %635 = vmatpush.xpose.msra.mxu0 0.0
        %636 = vmatpush.xpose.msra.mxu0 0.0
        %637 = vmatpush.xpose.msra.mxu0 0.0
        %638 = vmatpush.xpose.msra.mxu0 0.0
        %639 = vmatpush.xpose.msra.mxu0 0.0
        %640 = vmatpush.xpose.msra.mxu0 %v623
        %641 = vmatmul.f32.gmra.mxu0 %v621
        %v642 = vpop.f32.mrf.mxu0
        %v643 = vadd.f32 0.0, %v642
        %644 = vdwg.mxu0
        %s645 = scalar_lea.vmem [#allocation2], 4
        %v646 = vld [vmem:[%s645] sm:$0x3]
        %v647 = vsel %vm434, %v643, -inf
        %648 = vmax.xlane.f32.xlu0 %v647
        %v649 = vpop.xlane.xlu0 %648
        %v650 = vmax.f32 %v646, %v649
        %v651 = vsub.f32 %v646, %v650
        %v652 = vmul.f32 %v651, 1.442695
        %v653 = vpow.pop %v652
        %655 = vset.pattern.permute.xlu0 0
        %656 = vperm.xlu0 %655, %v650
        %v657 = vpop.permute.xlu0 %656
        %v659 = vsub.f32 %v643, %v657
        %v660 = vmul.f32 %v659, 1.442695
        %v661 = vpow.pop %v660
        %s662 = scalar_lea.vmem [#allocation3], 4
        %v663 = vld [vmem:[%s662] sm:$0x3]
        %v664 = vmul.f32 %v653, %v663
        %v665 = vsel %vm434, %v661, 0.0
        %666 = vadd.xlane.f32.xlu0 %v665
        %v667 = vpop.xlane.xlu0 %666
        %v668 = vadd.f32 %v664, %v667
        %669 = vst.msk [vmem:[%s662] sm:$0x3] %vm456, %v668
        %s670 = scalar_lea.vmem [#allocation4], 4
        %v671 = vld [vmem:[%s670] sm:$0x3]
        %673 = vset.pattern.permute.xlu0 0
        %674 = vperm.xlu0 %673, %v653
        %v675 = vpop.permute.xlu0 %674
        %v677 = vmul.f32 %v675, %v671
        %v680 = vrot.slane %v612, 7
        %v681 = vsel %vm402, %v680, %v611
        %v683 = vsel %vm469, %v661, 0
        %v685 = vsel %vm473, %v681, 0
        %687 = vmatpush.msra.mxu0 0.0
        %688 = vmatpush.msra.mxu0 0.0
        %689 = vmatpush.msra.mxu0 0.0
        %690 = vmatpush.msra.mxu0 0.0
        %691 = vmatpush.msra.mxu0 0.0
        %692 = vmatpush.msra.mxu0 0.0
        %693 = vmatpush.msra.mxu0 0.0
        %694 = vmatpush.msra.mxu0 0.0
        %695 = vmatpush.msra.mxu0 0.0
        %696 = vmatpush.msra.mxu0 0.0
        %697 = vmatpush.msra.mxu0 0.0
        %698 = vmatpush.msra.mxu0 0.0
        %699 = vmatpush.msra.mxu0 0.0
        %700 = vmatpush.msra.mxu0 0.0
        %701 = vmatpush.msra.mxu0 0.0
        %702 = vmatpush.msra.mxu0 %v685
        %703 = vmatmul.f32.gmra.mxu0 %v683
        %v704 = vpop.f32.mrf.mxu0
        %v705 = vadd.f32 0.0, %v704
        %706 = vdwg.mxu0
        %v707 = vadd.f32 %v677, %v705
        %708 = vst.msk [vmem:[%s670] sm:$0x3] %vm497, %v707
        %709 = vst.msk [vmem:[%s645] sm:$0x3] %vm456, %v650
        %v710 = vld [vmem:[%s329 + $0x3] sm:$0x1]
        %v711 = vld [vmem:[%s329 + $0x7] sm:$0x1]
        %v712 = vmul.f32 %v710, 0.35355338
        %v713 = vmul.f32 %v711, 0.35355338
        %v714 = vld [vmem:[%s336 + $0x3] sm:$0x1]
        %v715 = vld [vmem:[%s336 + $0x7] sm:$0x1]
        %v716 = vld [vmem:[%s343 + $0x3] sm:$0x1]
        %v717 = vld [vmem:[%s343 + $0x7] sm:$0x1]
        %v720 = vrot.slane %v713, 7
        %v721 = vsel %vm402, %v720, %v712
        %v724 = vrot.slane %v715, 7
        %v725 = vsel %vm402, %v724, %v714
        %v726 = vsel %vm408, %v721, 0
        %v728 = vsel %vm408, %v725, 0
        %730 = vmatpush.xpose.msra.mxu0 0.0
        %731 = vmatpush.xpose.msra.mxu0 0.0
        %732 = vmatpush.xpose.msra.mxu0 0.0
        %733 = vmatpush.xpose.msra.mxu0 0.0
        %734 = vmatpush.xpose.msra.mxu0 0.0
        %735 = vmatpush.xpose.msra.mxu0 0.0
        %736 = vmatpush.xpose.msra.mxu0 0.0
        %737 = vmatpush.xpose.msra.mxu0 0.0
        %738 = vmatpush.xpose.msra.mxu0 0.0
        %739 = vmatpush.xpose.msra.mxu0 0.0
        %740 = vmatpush.xpose.msra.mxu0 0.0
        %741 = vmatpush.xpose.msra.mxu0 0.0
        %742 = vmatpush.xpose.msra.mxu0 0.0
        %743 = vmatpush.xpose.msra.mxu0 0.0
        %744 = vmatpush.xpose.msra.mxu0 0.0
        %745 = vmatpush.xpose.msra.mxu0 %v728
        %746 = vmatmul.f32.gmra.mxu0 %v726
        %v747 = vpop.f32.mrf.mxu0
        %v748 = vadd.f32 0.0, %v747
        %749 = vdwg.mxu0
        %s750 = scalar_lea.vmem [#allocation2], 6
        %v751 = vld [vmem:[%s750] sm:$0x3]
        %v752 = vsel %vm434, %v748, -inf
        %753 = vmax.xlane.f32.xlu0 %v752
        %v754 = vpop.xlane.xlu0 %753
        %v755 = vmax.f32 %v751, %v754
        %v756 = vsub.f32 %v751, %v755
        %v757 = vmul.f32 %v756, 1.442695
        %v758 = vpow.pop %v757
        %760 = vset.pattern.permute.xlu0 0
        %761 = vperm.xlu0 %760, %v755
        %v762 = vpop.permute.xlu0 %761
        %v764 = vsub.f32 %v748, %v762
        %v765 = vmul.f32 %v764, 1.442695
        %v766 = vpow.pop %v765
        %s767 = scalar_lea.vmem [#allocation3], 6
        %v768 = vld [vmem:[%s767] sm:$0x3]
        %v769 = vmul.f32 %v758, %v768
        %v770 = vsel %vm434, %v766, 0.0
        %771 = vadd.xlane.f32.xlu0 %v770
        %v772 = vpop.xlane.xlu0 %771
        %v773 = vadd.f32 %v769, %v772
        %774 = vst.msk [vmem:[%s767] sm:$0x3] %vm456, %v773
        %s775 = scalar_lea.vmem [#allocation4], 6
        %v776 = vld [vmem:[%s775] sm:$0x3]
        %778 = vset.pattern.permute.xlu0 0
        %779 = vperm.xlu0 %778, %v758
        %v780 = vpop.permute.xlu0 %779
        %v782 = vmul.f32 %v780, %v776
        %v785 = vrot.slane %v717, 7
        %v786 = vsel %vm402, %v785, %v716
        %v788 = vsel %vm469, %v766, 0
        %v790 = vsel %vm473, %v786, 0
        %792 = vmatpush.msra.mxu0 0.0
        %793 = vmatpush.msra.mxu0 0.0
        %794 = vmatpush.msra.mxu0 0.0
        %795 = vmatpush.msra.mxu0 0.0
        %796 = vmatpush.msra.mxu0 0.0
        %797 = vmatpush.msra.mxu0 0.0
        %798 = vmatpush.msra.mxu0 0.0
        %799 = vmatpush.msra.mxu0 0.0
        %800 = vmatpush.msra.mxu0 0.0
        %801 = vmatpush.msra.mxu0 0.0
        %802 = vmatpush.msra.mxu0 0.0
        %803 = vmatpush.msra.mxu0 0.0
        %804 = vmatpush.msra.mxu0 0.0
        %805 = vmatpush.msra.mxu0 0.0
        %806 = vmatpush.msra.mxu0 0.0
        %807 = vmatpush.msra.mxu0 %v790
        %808 = vmatmul.f32.gmra.mxu0 %v788
        %v809 = vpop.f32.mrf.mxu0
        %v810 = vadd.f32 0.0, %v809
        %811 = vdwg.mxu0
        %v812 = vadd.f32 %v782, %v810
        %813 = vst.msk [vmem:[%s775] sm:$0x3] %vm497, %v812
        %814 = vst.msk [vmem:[%s750] sm:$0x3] %vm456, %v755
        // Predicated region
        $region160: #{decoder_forward.23} parent=142 // pred_check
          %p815 = pneg %p373
        $region161: #{decoder_forward.23} parent=142 // pred_check_branch
          %817 = sbr.rel (%p815) target = $region163
        $region162: #{decoder_forward.23} parent=142 // pred_region
          %v818 = vld [vmem:[#allocation3] sm:$0x3]
          %v819 = vrcp.pop %v818
          %v820 = vld [vmem:[#allocation4] sm:$0x3]
          %822 = vset.pattern.permute.xlu0 0
          %823 = vperm.xlu0 %822, %v819
          %v824 = vpop.permute.xlu0 %823
          %v826 = vmul.f32 %v820, %v824
          %v828 = vrot.slane %v826, 1
          %vm830 = vcmask 57344
          %831 = vst.msk [vmem:[%s370] sm:$0x1] %vm830, %v826
          %832 = vst.msk [vmem:[%s370 + $0x4] sm:$0x1] %vm830, %v828
          %v833 = vld [vmem:[%s557] sm:$0x3]
          %v834 = vrcp.pop %v833
          %v835 = vld [vmem:[%s565] sm:$0x3]
          %837 = vset.pattern.permute.xlu0 0
          %838 = vperm.xlu0 %837, %v834
          %v839 = vpop.permute.xlu0 %838
          %v841 = vmul.f32 %v835, %v839
          %v843 = vrot.slane %v841, 1
          %845 = vst.msk [vmem:[%s370 + $0x1] sm:$0x1] %vm830, %v841
          %846 = vst.msk [vmem:[%s370 + $0x5] sm:$0x1] %vm830, %v843
          %v847 = vld [vmem:[%s662] sm:$0x3]
          %v848 = vrcp.pop %v847
          %v849 = vld [vmem:[%s670] sm:$0x3]
          %851 = vset.pattern.permute.xlu0 0
          %852 = vperm.xlu0 %851, %v848
          %v853 = vpop.permute.xlu0 %852
          %v855 = vmul.f32 %v849, %v853
          %v857 = vrot.slane %v855, 1
          %859 = vst.msk [vmem:[%s370 + $0x2] sm:$0x1] %vm830, %v855
          %860 = vst.msk [vmem:[%s370 + $0x6] sm:$0x1] %vm830, %v857
          %v861 = vld [vmem:[%s767] sm:$0x3]
          %v862 = vrcp.pop %v861
          %v863 = vld [vmem:[%s775] sm:$0x3]
          %865 = vset.pattern.permute.xlu0 0
          %866 = vperm.xlu0 %865, %v862
          %v867 = vpop.permute.xlu0 %866
          %v869 = vmul.f32 %v863, %v867
          %v871 = vrot.slane %v869, 1
          %873 = vst.msk [vmem:[%s370 + $0x3] sm:$0x1] %vm830, %v869
          %874 = vst.msk [vmem:[%s370 + $0x7] sm:$0x1] %vm830, %v871
        $region163: #{decoder_forward.23} parent=142 // pred_fallthru
          _
        %s875 = sand.u32 %s116, 1
        %s876 = sand.u32 %s116, 1
        %s877 = smul.addr %s876, 8
        %s878 = scalar_lea.vmem [#allocation8], %s877
        // Predicated region
        $region164: #{decoder_forward.23} parent=142 // pred_check
          %p879 = pneg %p126
        $region165: #{decoder_forward.23} parent=142 // pred_check_branch
          %881 = sbr.rel (%p879) target = $region167
        $region166: #{decoder_forward.23} parent=142 // pred_region
          %s882 = smul.addr %s18, 4
          %s883 = scalar_lea.vmem %s3, %s882
          // Predicated region
          $region168: #{decoder_forward.23} parent=166 // pred_check
            _
          $region169: #{decoder_forward.23} parent=166 // pred_check_branch
            %885 = sbr.rel (0) target = $region171
          $region170: #{decoder_forward.23} parent=166 // pred_region
            // Predicated region
            $region172: #{decoder_forward.23} parent=170 // pred_check
              _
            $region173: #{decoder_forward.23} parent=170 // pred_check_branch
              %887 = sbr.rel target = $region175
            $region174: #{decoder_forward.23} parent=170 // pred_region
              // Predicated region
              $region187: #{decoder_forward.23} parent=174 // pred_check
                _
              $region188: #{decoder_forward.23} parent=174 // pred_check_branch
                %905 = sbr.rel (0) target = $region190
              $region189: #{decoder_forward.23} parent=174 // pred_region
                loop: start=0, step=1, limit=1
                $region191: #{decoder_forward.23} parent=189 // loop_pre_header
                  _
                $region192: #{decoder_forward.23} parent=189 // loop_header
                  %s907 = sphi 0, %s911
                  %p908 = scmp.ge.s32.totalorder %s907, 1
                  %s912 = sphi %s878, %s878
                  %s913 = sphi %s883, %s883
                $region193: #{decoder_forward.23} parent=189 // loop_header_branch
                  %910 = sbr.rel (%p908) target = $region197
                $region194: #{decoder_forward.23} parent=189 // loop_body
                  _
                $region195: #{decoder_forward.23} parent=189 // loop_footer
                  %s911 = sadd.s32 1, %s907
                $region196: #{decoder_forward.23} parent=189 // loop_footer_branch
                  %906 = sbr.rel target = $region192
                $region197: #{decoder_forward.23} parent=189 // loop_exit
                  _
                %s915 = ssub.s32 16, 1
                loop: start=0, step=1, limit=1
                $region198: #{decoder_forward.23} parent=189 // loop_pre_header
                  _
                $region199: #{decoder_forward.23} parent=189 // loop_header
                  %s917 = sphi 0, %s921
                  %p918 = scmp.ge.s32.totalorder %s917, 1
                  %s922 = sphi %s878, %s878
                  %s923 = sphi %s883, %s883
                $region200: #{decoder_forward.23} parent=189 // loop_header_branch
                  %920 = sbr.rel (%p918) target = $region204
                $region201: #{decoder_forward.23} parent=189 // loop_body
                  %v924 = vld [vmem:[%s922] sm:%s915]
                  %925 = vst [vmem:[%s923] sm:%s915] %v924
                  %v926 = vld [vmem:[%s922 + $0x4] sm:%s915]
                  %927 = vst [vmem:[%s923 + $0x20] sm:%s915] %v926
                $region202: #{decoder_forward.23} parent=189 // loop_footer
                  %s921 = sadd.s32 1, %s917
                $region203: #{decoder_forward.23} parent=189 // loop_footer_branch
                  %916 = sbr.rel target = $region199
                $region204: #{decoder_forward.23} parent=189 // loop_exit
                  _
              $region190: #{decoder_forward.23} parent=174 // pred_fallthru
                _
            $region175: #{decoder_forward.23} parent=170 // pred_fallthru
              _
            // Predicated region
            $region176: #{decoder_forward.23} parent=170 // pred_check
              _
            $region177: #{decoder_forward.23} parent=170 // pred_check_branch
              %889 = sbr.rel (0) target = $region179
            $region178: #{decoder_forward.23} parent=170 // pred_region
              %s891 = ssub.s32 16, 1
              loop: start=0, step=1, limit=1
              $region180: #{decoder_forward.23} parent=178 // loop_pre_header
                _
              $region181: #{decoder_forward.23} parent=178 // loop_header
                %s893 = sphi 0, %s897
                %p894 = scmp.ge.s32.totalorder %s893, 1
                %s898 = sphi %s878, %s878
                %s899 = sphi %s883, %s883
              $region182: #{decoder_forward.23} parent=178 // loop_header_branch
                %896 = sbr.rel (%p894) target = $region186
              $region183: #{decoder_forward.23} parent=178 // loop_body
                %v900 = vld [vmem:[%s898] sm:%s891]
                %901 = vst [vmem:[%s899] sm:%s891] %v900
                %v902 = vld [vmem:[%s898 + $0x4] sm:%s891]
                %903 = vst [vmem:[%s899 + $0x20] sm:%s891] %v902
              $region184: #{decoder_forward.23} parent=178 // loop_footer
                %s897 = sadd.s32 1, %s893
              $region185: #{decoder_forward.23} parent=178 // loop_footer_branch
                %892 = sbr.rel target = $region181
              $region186: #{decoder_forward.23} parent=178 // loop_exit
                _
            $region179: #{decoder_forward.23} parent=170 // pred_fallthru
              _
          $region171: #{decoder_forward.23} parent=166 // pred_fallthru
            _
          %928 = vnop
        $region167: #{decoder_forward.23} parent=142 // pred_fallthru
          _
      $region143: #{decoder_forward.23} parent=5 // pred_fallthru
        _
      %p929 = scmp.le.s32.totalorder 2, %s9
      // Predicated region
      $region205: #{decoder_forward.23} parent=5 // pred_check
        %p930 = pneg %p929
      $region206: #{decoder_forward.23} parent=5 // pred_check_branch
        %932 = sbr.rel (%p930) target = $region208
      $region207: #{decoder_forward.23} parent=5 // pred_region
        %s933 = ssub.s32 %s9, 2
        // Predicated region
        $region209: #{decoder_forward.23} parent=207 // pred_check
          %p934 = pneg %p132
        $region210: #{decoder_forward.23} parent=207 // pred_check_branch
          %936 = sbr.rel (%p934) target = $region212
        $region211: #{decoder_forward.23} parent=207 // pred_region
          %s937 = sand.u32 %s117, 1
          %s938 = sand.u32 %s117, 1
          %s939 = smul.addr %s938, 8
          %s940 = scalar_lea.vmem [#allocation8], %s939
        $region212: #{decoder_forward.23} parent=207 // pred_fallthru
          _
      $region208: #{decoder_forward.23} parent=5 // pred_fallthru
        _
    $region6: #{decoder_forward.23} parent=1 // loop_footer
      %s13 = sadd.s32 1, %s9
    $region7: #{decoder_forward.23} parent=1 // loop_footer_branch
      %8 = sbr.rel target = $region3
    $region8: #{decoder_forward.23} parent=1 // loop_exit
      _

// kernel: decoder_forward.35
$region0: #{decoder_forward.35}
  #allocation0 [shape = 'u32[]', space=smem, size = 0x4, offset = 0x4, fixed_abs, tag = 'smem constant byte address 0x4 - core index']
  #allocation1 [shape = 'u32[72,128]{1,0:T(1,128)}', space=vmem, size = 0x9000, scoped, tag = 'internal scratch']
  #allocation2 [shape = 'f32[8,32]{1,0:T(8,128)}', space=vmem, size = 0x1000, scoped, tag = 'scratch operand']
  %s0 = inlined_call_operand.vmem [shape: f32[16,64], index: 0, kind: input, shape index: {}]
  %s1 = inlined_call_operand.vmem [shape: f32[64,32], index: 1, kind: input, shape index: {}]
  %s2 = inlined_call_operand.vmem [shape: f32[1,32], index: 2, kind: input, shape index: {}]
  %s3 = inlined_call_operand.vmem [shape: f32[16,32], index: 3, kind: input, shape index: {}]
  %s4 = inlined_call_operand.vmem [shape: f32[1,32], index: 4, kind: input, shape index: {}]
  %s5 = inlined_call_operand.vmem [shape: f32[1,32], index: 5, kind: input, shape index: {}]
  %s6 = inlined_call_operand.hbm [shape: f32[16,32], index: 6, kind: output, shape index: {}]
  %s7 = sld [smem:[#allocation0]]
  $region65: #{decoder_forward.35} parent=0
    _
  %s9 = ssub.s32 1, %s7
  %s10 = scalar_select 0, %s9, %s7
  $region1: #{decoder_forward.35} parent=0
    #allocation3 [shape = 'u8[8192]{0}', space=vmem, size = 0x2000, scoped, tag = 'output window, operand 0']
    #allocation4 [shape = 's32[2]{0}', space=sflag, size = 0x8, scoped, tag = 'scoped memory for decoder_forward.35']
    %11 = vsyncpa [#allocation4], 0
    %s12 = scalar_lea.sflag [#allocation4], 1
    %13 = vsyncpa %s12, 0
    loop: start=0, step=1, limit=4
    $region2: #{decoder_forward.35} parent=1 // loop_pre_header
      _
    $region3: #{decoder_forward.35} parent=1 // loop_header
      %s15 = sphi 0, %s19
      %p16 = scmp.ge.s32.totalorder %s15, 4
      %s22 = sphi 0, %s34
      %s23 = sphi 0, %s30
      %s24 = sphi 0, %s22
      %s25 = sphi 0, %s23
      %s26 = sphi 0, %s24
      %s27 = sphi 0, %s25
      %s39 = sphi 0, %s41
      %s42 = sphi 0, %s39
      %s43 = sphi 0, %s42
      %s59 = sphi 0, %s43
      %s65 = sphi 0, %s67
      %s68 = sphi 0, %s65
      %s69 = sphi 0, %s68
      %s85 = sphi 0, %s69
      %s89 = sphi 0, %s89
      %s91 = sphi 0, %s89
      %s92 = sphi 0, %s91
      %s106 = sphi 0, %s92
      %s112 = sphi 0, %s114
      %s115 = sphi 0, %s112
      %s116 = sphi 0, %s115
      %s132 = sphi 0, %s116
      %s136 = sphi 0, %s136
      %s138 = sphi 0, %s136
      %s139 = sphi 0, %s138
      %s153 = sphi 0, %s139
      %s157 = sphi 0, %s157
      %s159 = sphi 0, %s157
      %s160 = sphi 0, %s159
      %s174 = sphi 0, %s160
      %s180 = sphi 0, %s182
      %s183 = sphi 0, %s180
      %s184 = sphi 0, %s183
      %s200 = sphi 0, %s184
    $region4: #{decoder_forward.35} parent=1 // loop_header_branch
      %18 = sbr.rel (%p16) target = $region8
    $region5: #{decoder_forward.35} parent=1 // loop_body
      %s20 = ssub.s32 %s15, 1
      %s21 = ssub.s32 %s15, 2
      %s28 = sadd.s32 1, %s23
      %p29 = scmp.ge.s32.totalorder %s28, 1
      %s30 = scalar_select %p29, 0, %s28
      %s31 = sadd.s32 1, %s22
      %s32 = scalar_select %p29, %s31, %s22
      %p33 = scmp.ge.s32.totalorder %s32, 2
      %s34 = scalar_select %p33, 0, %s32
      %s35 = ssub.s32 %s22, %s34
      %s36 = ssub.s32 %s23, %s30
      %s37 = sor.u32 %s35, %s36
      %p38 = scmp.eq.s32.totalorder %s37, 0
      %s40 = sadd.s32 %s39, 1
      %s41 = scalar_select %p38, %s39, %s40
      %p44 = pneg %p38
      %p45 = scmp.eq.s32.totalorder %s15, 1
      %p46 = por %p44, %p45
      %p47 = scmp.ne.s32.totalorder %s39, %s42
      %p48 = scmp.eq.s32.totalorder %s15, 0
      %p49 = por %p47, %p48
      %p50 = scmp.ne.s32.totalorder %s39, %s42
      %p51 = scmp.eq.s32.totalorder %s20, 1
      %p52 = por %p50, %p51
      %p53 = scmp.ne.s32.totalorder %s42, %s43
      %p54 = scmp.eq.s32.totalorder %s20, 0
      %p55 = por %p53, %p54
      %p56 = scmp.ne.s32.totalorder %s42, %s43
      %p57 = scmp.eq.s32.totalorder %s21, 1
      %p58 = por %p56, %p57
      %p60 = scmp.ne.s32.totalorder %s43, %s59
      %p61 = scmp.eq.s32.totalorder %s21, 0
      %p62 = por %p60, %p61
      %s63 = ssub.s32 %s23, %s30
      %p64 = scmp.eq.s32.totalorder %s63, 0
      %s66 = sadd.s32 %s65, 1
      %s67 = scalar_select %p64, %s65, %s66
      %p70 = pneg %p64
      %p71 = scmp.eq.s32.totalorder %s15, 1
      %p72 = por %p70, %p71
      %p73 = scmp.ne.s32.totalorder %s65, %s68
      %p74 = scmp.eq.s32.totalorder %s15, 0
      %p75 = por %p73, %p74
      %p76 = scmp.ne.s32.totalorder %s65, %s68
      %p77 = scmp.eq.s32.totalorder %s20, 1
      %p78 = por %p76, %p77
      %p79 = scmp.ne.s32.totalorder %s68, %s69
      %p80 = scmp.eq.s32.totalorder %s20, 0
      %p81 = por %p79, %p80
      %p82 = scmp.ne.s32.totalorder %s68, %s69
      %p83 = scmp.eq.s32.totalorder %s21, 1
      %p84 = por %p82, %p83
      %p86 = scmp.ne.s32.totalorder %s69, %s85
      %p87 = scmp.eq.s32.totalorder %s21, 0
      %p88 = por %p86, %p87
      %s90 = sadd.s32 %s89, 1
      %p93 = scmp.eq.s32.totalorder %s15, 1
      %p94 = scmp.ne.s32.totalorder %s89, %s91
      %p95 = scmp.eq.s32.totalorder %s15, 0
      %p96 = por %p94, %p95
      %p97 = scmp.ne.s32.totalorder %s89, %s91
      %p98 = scmp.eq.s32.totalorder %s20, 1
      %p99 = por %p97, %p98
      %p100 = scmp.ne.s32.totalorder %s91, %s92
      %p101 = scmp.eq.s32.totalorder %s20, 0
      %p102 = por %p100, %p101
      %p103 = scmp.ne.s32.totalorder %s91, %s92
      %p104 = scmp.eq.s32.totalorder %s21, 1
      %p105 = por %p103, %p104
      %p107 = scmp.ne.s32.totalorder %s92, %s106
      %p108 = scmp.eq.s32.totalorder %s21, 0
      %p109 = por %p107, %p108
      %s110 = ssub.s32 %s22, %s34
      %p111 = scmp.eq.s32.totalorder %s110, 0
      %s113 = sadd.s32 %s112, 1
      %s114 = scalar_select %p111, %s112, %s113
      %p117 = pneg %p111
      %p118 = scmp.eq.s32.totalorder %s15, 1
      %p119 = por %p117, %p118
      %p120 = scmp.ne.s32.totalorder %s112, %s115
      %p121 = scmp.eq.s32.totalorder %s15, 0
      %p122 = por %p120, %p121
      %p123 = scmp.ne.s32.totalorder %s112, %s115
      %p124 = scmp.eq.s32.totalorder %s20, 1
      %p125 = por %p123, %p124
      %p126 = scmp.ne.s32.totalorder %s115, %s116
      %p127 = scmp.eq.s32.totalorder %s20, 0
      %p128 = por %p126, %p127
      %p129 = scmp.ne.s32.totalorder %s115, %s116
      %p130 = scmp.eq.s32.totalorder %s21, 1
      %p131 = por %p129, %p130
      %p133 = scmp.ne.s32.totalorder %s116, %s132
      %p134 = scmp.eq.s32.totalorder %s21, 0
      %p135 = por %p133, %p134
      %s137 = sadd.s32 %s136, 1
      %p140 = scmp.eq.s32.totalorder %s15, 1
      %p141 = scmp.ne.s32.totalorder %s136, %s138
      %p142 = scmp.eq.s32.totalorder %s15, 0
      %p143 = por %p141, %p142
      %p144 = scmp.ne.s32.totalorder %s136, %s138
      %p145 = scmp.eq.s32.totalorder %s20, 1
      %p146 = por %p144, %p145
      %p147 = scmp.ne.s32.totalorder %s138, %s139
      %p148 = scmp.eq.s32.totalorder %s20, 0
      %p149 = por %p147, %p148
      %p150 = scmp.ne.s32.totalorder %s138, %s139
      %p151 = scmp.eq.s32.totalorder %s21, 1
      %p152 = por %p150, %p151
      %p154 = scmp.ne.s32.totalorder %s139, %s153
      %p155 = scmp.eq.s32.totalorder %s21, 0
      %p156 = por %p154, %p155
      %s158 = sadd.s32 %s157, 1
      %p161 = scmp.eq.s32.totalorder %s15, 1
      %p162 = scmp.ne.s32.totalorder %s157, %s159
      %p163 = scmp.eq.s32.totalorder %s15, 0
      %p164 = por %p162, %p163
      %p165 = scmp.ne.s32.totalorder %s157, %s159
      %p166 = scmp.eq.s32.totalorder %s20, 1
      %p167 = por %p165, %p166
      %p168 = scmp.ne.s32.totalorder %s159, %s160
      %p169 = scmp.eq.s32.totalorder %s20, 0
      %p170 = por %p168, %p169
      %p171 = scmp.ne.s32.totalorder %s159, %s160
      %p172 = scmp.eq.s32.totalorder %s21, 1
      %p173 = por %p171, %p172
      %p175 = scmp.ne.s32.totalorder %s160, %s174
      %p176 = scmp.eq.s32.totalorder %s21, 0
      %p177 = por %p175, %p176
      %s178 = ssub.s32 %s22, %s34
      %p179 = scmp.eq.s32.totalorder %s178, 0
      %s181 = sadd.s32 %s180, 1
      %s182 = scalar_select %p179, %s180, %s181
      %p185 = pneg %p179
      %p186 = scmp.eq.s32.totalorder %s15, 1
      %p187 = por %p185, %p186
      %p188 = scmp.ne.s32.totalorder %s180, %s183
      %p189 = scmp.eq.s32.totalorder %s15, 0
      %p190 = por %p188, %p189
      %p191 = scmp.ne.s32.totalorder %s180, %s183
      %p192 = scmp.eq.s32.totalorder %s20, 1
      %p193 = por %p191, %p192
      %p194 = scmp.ne.s32.totalorder %s183, %s184
      %p195 = scmp.eq.s32.totalorder %s20, 0
      %p196 = por %p194, %p195
      %p197 = scmp.ne.s32.totalorder %s183, %s184
      %p198 = scmp.eq.s32.totalorder %s21, 1
      %p199 = por %p197, %p198
      %p201 = scmp.ne.s32.totalorder %s184, %s200
      %p202 = scmp.eq.s32.totalorder %s21, 0
      %p203 = por %p201, %p202
      %p204 = scmp.le.s32.totalorder 1, %s15
      %p205 = scmp.lt.s32.totalorder %s15, 3
      %p206 = pnand %p204, %p205
      %p207 = pneg %p206
      // Predicated region
      $region9: #{decoder_forward.35} parent=5 // pred_check
        _
      $region10: #{decoder_forward.35} parent=5 // pred_check_branch
        %209 = sbr.rel (%p206) target = $region12
      $region11: #{decoder_forward.35} parent=5 // pred_region
        %s210 = ssub.s32 %s15, 1
        // Predicated region
        $region13: #{decoder_forward.35} parent=11 // pred_check
          %p211 = pneg %p81
        $region14: #{decoder_forward.35} parent=11 // pred_check_branch
          %213 = sbr.rel (%p211) target = $region16
        $region15: #{decoder_forward.35} parent=11 // pred_region
          %s214 = smul.u32 8, %s25
          %p215 = scmp.lt.s32.totalorder %s214, 7
          %s216 = scalar_select %p215, %s214, 7
          %s217 = smul.addr %s216, 8
          %s218 = scalar_lea.vmem %s1, %s217
          %s219 = smul.u32 8, %s25
        $region16: #{decoder_forward.35} parent=11 // pred_fallthru
          _
        // Predicated region
        $region17: #{decoder_forward.35} parent=11 // pred_check
          %p220 = pneg %p102
        $region18: #{decoder_forward.35} parent=11 // pred_check_branch
          %222 = sbr.rel (%p220) target = $region20
        $region19: #{decoder_forward.35} parent=11 // pred_region
          _
        $region20: #{decoder_forward.35} parent=11 // pred_fallthru
          _
        // Predicated region
        $region21: #{decoder_forward.35} parent=11 // pred_check
          %p223 = pneg %p149
        $region22: #{decoder_forward.35} parent=11 // pred_check_branch
          %225 = sbr.rel (%p223) target = $region24
        $region23: #{decoder_forward.35} parent=11 // pred_region
          _
        $region24: #{decoder_forward.35} parent=11 // pred_fallthru
          _
        // Predicated region
        $region25: #{decoder_forward.35} parent=11 // pred_check
          %p226 = pneg %p170
        $region26: #{decoder_forward.35} parent=11 // pred_check_branch
          %228 = sbr.rel (%p226) target = $region28
        $region27: #{decoder_forward.35} parent=11 // pred_region
          _
        $region28: #{decoder_forward.35} parent=11 // pred_fallthru
          _
      $region12: #{decoder_forward.35} parent=5 // pred_fallthru
        _
      %p229 = scmp.lt.s32.totalorder %s15, 2
      // Predicated region
      $region29: #{decoder_forward.35} parent=5 // pred_check
        %p230 = pneg %p229
      $region30: #{decoder_forward.35} parent=5 // pred_check_branch
        %232 = sbr.rel (%p230) target = $region32
      $region31: #{decoder_forward.35} parent=5 // pred_region
        // Predicated region
        $region33: #{decoder_forward.35} parent=31 // pred_check
          %p233 = pneg %p49
        $region34: #{decoder_forward.35} parent=31 // pred_check_branch
          %235 = sbr.rel (%p233) target = $region36
        $region35: #{decoder_forward.35} parent=31 // pred_region
          %p236 = scmp.lt.s32.totalorder %s22, 1
          %s237 = scalar_select %p236, %s22, 1
          %p238 = scmp.lt.s32.totalorder %s23, 0
          %s239 = scalar_select %p238, %s23, 0
          %s240 = sadd.s32 %s239, %s237
          %s241 = smul.addr %s240, 8
          %s242 = scalar_lea.vmem %s0, %s241
        $region36: #{decoder_forward.35} parent=31 // pred_fallthru
          _
        // Predicated region
        $region37: #{decoder_forward.35} parent=31 // pred_check
          %p243 = pneg %p122
        $region38: #{decoder_forward.35} parent=31 // pred_check_branch
          %245 = sbr.rel (%p243) target = $region40
        $region39: #{decoder_forward.35} parent=31 // pred_region
          %p246 = scmp.lt.s32.totalorder %s22, 1
          %s247 = scalar_select %p246, %s22, 1
          %s248 = smul.addr %s247, 8
          %s249 = scalar_lea.vmem %s3, %s248
        $region40: #{decoder_forward.35} parent=31 // pred_fallthru
          _
      $region32: #{decoder_forward.35} parent=5 // pred_fallthru
        _
      %p250 = scmp.le.s32.totalorder 1, %s15
      %p251 = scmp.lt.s32.totalorder %s15, 3
      %p252 = pnand %p250, %p251
      %p253 = pneg %p252
      // Predicated region
      $region41: #{decoder_forward.35} parent=5 // pred_check
        _
      $region42: #{decoder_forward.35} parent=5 // pred_check_branch
        %255 = sbr.rel (%p252) target = $region44
      $region43: #{decoder_forward.35} parent=5 // pred_region
        %s256 = ssub.s32 %s15, 1
        %p257 = scmp.lt.s32.totalorder %s24, 1
        %s258 = scalar_select %p257, %s24, 1
        %p259 = scmp.lt.s32.totalorder %s25, 0
        %s260 = scalar_select %p259, %s25, 0
        %s261 = sadd.s32 %s260, %s258
        %s262 = smul.addr %s261, 8
        %s263 = scalar_lea.vmem %s0, %s262
        %p264 = pneg %p55
        %p265 = pneg %p52
        %s266 = smul.u32 8, %s25
        %p267 = scmp.lt.s32.totalorder %s266, 7
        %s268 = scalar_select %p267, %s266, 7
        %s269 = smul.addr %s268, 8
        %s270 = scalar_lea.vmem %s1, %s269
        %p271 = pneg %p81
        %p272 = pneg %p78
        %p273 = pneg %p102
        %p274 = pneg %p99
        %p275 = scmp.lt.s32.totalorder %s24, 1
        %s276 = scalar_select %p275, %s24, 1
        %s277 = smul.addr %s276, 8
        %s278 = scalar_lea.vmem %s3, %s277
        %p279 = pneg %p128
        %p280 = pneg %p125
        %p281 = pneg %p149
        %p282 = pneg %p146
        %p283 = pneg %p170
        %p284 = pneg %p167
        %p285 = pneg %p196
        %p286 = pneg %p193
        %s287 = sand.u32 %s183, 1
        %s288 = scalar_lea.sflag [#allocation4], %s287
        %s289 = sand.u32 %s183, 1
        %s290 = smul.addr %s289, 8
        %s291 = scalar_lea.vmem [#allocation3], %s290
        %p292 = scmp.lt.s32.totalorder %s24, 1
        %s293 = scalar_select %p292, %s24, 1
        %p294 = scmp.lt.s32.totalorder %s25, 0
        %s295 = scalar_select %p294, %s25, 0
        %s296 = sadd.s32 %s295, %s293
        %s297 = smul.addr %s296, 8
        %s298 = scalar_lea.vmem %s0, %s297
        %s299 = smul.u32 8, %s25
        %p300 = scmp.lt.s32.totalorder %s299, 7
        %s301 = scalar_select %p300, %s299, 7
        %s302 = smul.addr %s301, 8
        %s303 = scalar_lea.vmem %s1, %s302
        %s304 = smul.u32 8, %s25
        %p305 = scmp.lt.s32.totalorder %s24, 1
        %s306 = scalar_select %p305, %s24, 1
        %s307 = smul.addr %s306, 8
        %s308 = scalar_lea.vmem %s3, %s307
        %p309 = scmp.eq.s32.totalorder %s25, 0
        // Predicated region
        $region45: #{decoder_forward.35} parent=43 // pred_check
          %p310 = pneg %p309
        $region46: #{decoder_forward.35} parent=43 // pred_check_branch
          %312 = sbr.rel (%p310) target = $region48
        $region47: #{decoder_forward.35} parent=43 // pred_region
          %vm313 = vcmask 261120
          %314 = vst.msk [vmem:[#allocation2] sm:$0xff] %vm313, 0.0
        $region48: #{decoder_forward.35} parent=43 // pred_fallthru
          _
        %v315 = vld [vmem:[#allocation2] sm:$0xff]
        %v316 = vld [vmem:[%s298] sm:$0xff]
        %v317 = vld [vmem:[%s303] sm:$0xff]
        %v318 = vld [vmem:[%s303 + $0x8] sm:$0xff]
        %v319 = vld [vmem:[%s303 + $0x10] sm:$0xff]
        %v320 = vld [vmem:[%s303 + $0x18] sm:$0xff]
        %v321 = vld [vmem:[%s303 + $0x20] sm:$0xff]
        %v322 = vld [vmem:[%s303 + $0x28] sm:$0xff]
        %v323 = vld [vmem:[%s303 + $0x30] sm:$0xff]
        %v324 = vld [vmem:[%s303 + $0x38] sm:$0xff]
        %vm325 = vcmask 523264
        %v327 = vsel %vm325, %v316, 0
        %329 = vmatpush.msra.mxu0 0.0
        %330 = vmatpush.msra.mxu0 0.0
        %331 = vmatpush.msra.mxu0 0.0
        %332 = vmatpush.msra.mxu0 0.0
        %333 = vmatpush.msra.mxu0 0.0
        %334 = vmatpush.msra.mxu0 0.0
        %335 = vmatpush.msra.mxu0 0.0
        %336 = vmatpush.msra.mxu0 0.0
        %337 = vmatpush.msra.mxu0 %v324
        %338 = vmatpush.msra.mxu0 %v323
        %339 = vmatpush.msra.mxu0 %v322
        %340 = vmatpush.msra.mxu0 %v321
        %341 = vmatpush.msra.mxu0 %v320
        %342 = vmatpush.msra.mxu0 %v319
        %343 = vmatpush.msra.mxu0 %v318
        %344 = vmatpush.msra.mxu0 %v317
        %345 = vmatmul.f32.gmra.mxu0 %v327
        %v346 = vpop.f32.mrf.mxu0
        %v347 = vadd.f32 0.0, %v346
        %348 = vdwg.mxu0
        %v349 = vadd.f32 %v315, %v347
        %vm350 = vcmask 261120
        %351 = vst.msk [vmem:[#allocation2] sm:$0xff] %vm350, %v349
        // Predicated region
        $region49: #{decoder_forward.35} parent=43 // pred_check
          %p352 = pneg %p309
        $region50: #{decoder_forward.35} parent=43 // pred_check_branch
          %354 = sbr.rel (%p352) target = $region52
        $region51: #{decoder_forward.35} parent=43 // pred_region
          %v355 = vld [vmem:[#allocation2] sm:$0xff]
          %v356 = vld [vmem:[%s2] sm:$0x1]
          %v358 = vperm.slane %v356, 0
          %v360 = vadd.f32 %v355, %v358
          %v361 = vld [vmem:[%s308] sm:$0xff]
          %v362 = vadd.f32 %v360, %v361
          %v363 = vsel %vm350, %v362, 0.0
          %364 = vadd.xlane.f32.xlu0 %v363
          %v365 = vpop.xlane.xlu0 %364
          %v366 = vrcp.pop 32.0
          %v367 = vmul.f32 32.0, %v366
          %v368 = vsub.f32 1.0, %v367
          %v369 = vmul.f32 %v366, %v368
          %v370 = vadd.f32 %v366, %v369
          %vm371 = vweird.f32 %v366
          %v372 = vsel %vm371, %v366, %v370
          %v373 = vmul.f32 %v365, %v372
          %v374 = vsub.f32 %v362, %v373
          %v375 = vmul.f32 %v374, %v374
          %v376 = vsel %vm350, %v375, 0.0
          %377 = vadd.xlane.f32.xlu0 %v376
          %v378 = vpop.xlane.xlu0 %377
          %v379 = vmul.f32 %v378, %v372
          %v380 = vadd.f32 %v379, 1e-05
          %v381 = vrsqrt.pop %v380
          %v382 = vmul.f32 %v381, %v380
          %v383 = vmul.f32 %v382, %v381
          %v384 = vmul.f32 0.5, %v383
          %v385 = vsub.f32 1.5, %v384
          %v386 = vmul.f32 %v381, %v385
          %vm387 = vweird.f32 %v380
          %vm388 = vweird.f32 %v381
          %vm389 = vmor %vm387, %vm388
          %v390 = vsel %vm389, %v381, %v386
          %v391 = vmul.f32 %v374, %v390
          %v392 = vld [vmem:[%s4] sm:$0x1]
          %v394 = vperm.slane %v392, 0
          %v396 = vmul.f32 %v391, %v394
          %v397 = vld [vmem:[%s5] sm:$0x1]
          %v399 = vperm.slane %v397, 0
          %v401 = vadd.f32 %v396, %v399
          %402 = vst.msk [vmem:[%s291] sm:$0xff] %vm350, %v401
        $region52: #{decoder_forward.35} parent=43 // pred_fallthru
          _
        %s403 = sand.u32 %s183, 1
        %s404 = scalar_lea.sflag [#allocation4], %s403
        %s405 = sand.u32 %s183, 1
        %s406 = smul.addr %s405, 8
        %s407 = scalar_lea.vmem [#allocation3], %s406
        // Predicated region
        $region53: #{decoder_forward.35} parent=43 // pred_check
          %p408 = pneg %p193
        $region54: #{decoder_forward.35} parent=43 // pred_check_branch
          %410 = sbr.rel (%p408) target = $region56
        $region55: #{decoder_forward.35} parent=43 // pred_region
          %412 = vsyncadd %s404, 0
          %s413 = smul.addr %s24, 8
          %s414 = scalar_lea.hbm %s6, %s413
          %s416 = sshll.u32 %s407, 4
          %s417 = int_to_ptr.vmem [resolvable:$true] %s416
          %s418 = sshll.u32 %s414, 4
          %s419 = int_to_ptr.hbm [resolvable:$true] %s418
          %421 = dma.vmem_to_hbm [thread:$0]  %s417, 128, %s419, %s404
        $region56: #{decoder_forward.35} parent=43 // pred_fallthru
          _
      $region44: #{decoder_forward.35} parent=5 // pred_fallthru
        _
      %p422 = scmp.le.s32.totalorder 2, %s15
      // Predicated region
      $region57: #{decoder_forward.35} parent=5 // pred_check
        %p423 = pneg %p422
      $region58: #{decoder_forward.35} parent=5 // pred_check_branch
        %425 = sbr.rel (%p423) target = $region60
      $region59: #{decoder_forward.35} parent=5 // pred_region
        %s426 = ssub.s32 %s15, 2
        // Predicated region
        $region61: #{decoder_forward.35} parent=59 // pred_check
          %p427 = pneg %p199
        $region62: #{decoder_forward.35} parent=59 // pred_check_branch
          %429 = sbr.rel (%p427) target = $region64
        $region63: #{decoder_forward.35} parent=59 // pred_region
          %s430 = sand.u32 %s184, 1
          %s431 = scalar_lea.sflag [#allocation4], %s430
          %s432 = sand.u32 %s184, 1
          %s433 = smul.addr %s432, 8
          %s434 = scalar_lea.vmem [#allocation3], %s433
          %436 = dma.done %s431, 128
        $region64: #{decoder_forward.35} parent=59 // pred_fallthru
          _
      $region60: #{decoder_forward.35} parent=5 // pred_fallthru
        _
    $region6: #{decoder_forward.35} parent=1 // loop_footer
      %s19 = sadd.s32 1, %s15
    $region7: #{decoder_forward.35} parent=1 // loop_footer_branch
      %14 = sbr.rel target = $region3
    $region8: #{decoder_forward.35} parent=1 // loop_exit
      _
    %437 = vsyncpa [#allocation4], 1
    %s438 = scalar_lea.sflag [#allocation4], 1
    %439 = vsyncpa %s438, 1

</llo_original>
